<compile_context>
chip_gen: v6e
topology: v6e:2x2x1
jax: 0.10.0
libtpu: 0.0.40
codegen_flags: <defaults>
</compile_context>

<pallas_src>
import functools
import math

import jax
import jax.numpy as jnp
from jax.experimental import pallas as pl
from jax.experimental.pallas import tpu as pltpu


# --------------------------------------------------------------------------- utils
def _round_up(x, m):
    return (x + m - 1) // m * m


def _largest_aligned_divisor(k, cap, align=128):
    """Largest d with d | k, d % align == 0 and d <= cap (k itself if k <= cap)."""
    if k <= cap:
        return k
    best = 0
    d = align
    while d <= cap:
        if k % d == 0:
            best = d
        d += align
    assert best > 0, f"no lane-aligned divisor of K={k} below cap={cap}"
    return best


@functools.lru_cache(maxsize=None)
def _vmem_budget():
    """(weight_block_bytes, vmem_limit_bytes) sized per chip generation.

    v5e/v6e: 128 MiB physical VMEM -> ~16 MiB weight blocks, 64 MiB scoped limit.
    v7x:      64 MiB physical VMEM -> ~8 MiB weight blocks, 44 MiB scoped limit.
    """
    try:
        cap = int(pltpu.get_tpu_info().vmem_capacity_bytes)
    except Exception:
        cap = 64 << 20  # conservative fallback: assume smallest (v7x) VMEM
    if cap >= (100 << 20):
        return 16 << 20, 64 << 20
    return 8 << 20, 44 << 20


# --------------------------------------------------------------------------- kernel
def _linear_kernel(x_ref, w_ref, b_ref, o_ref, acc_ref, *, act, single_k):
    """One (N-tile, K-tile) grid step of  y = act(x @ W + b).

    x_ref:   (n_k, Mp, tk) bf16 — full activation, VMEM-resident; chunk picked by k.
    w_ref:   (1, tk, tn)   bf16 — one contiguous weight tile.
    b_ref:   (1, tn)       f32.
    o_ref:   (Mp, tn)      output dtype (bf16 hidden / f32 logits).
    acc_ref: (Mp, tn)      f32 K-reduction accumulator (unused when single_k).
    """
    k = pl.program_id(1)
    xk = x_ref[k]          # (Mp, tk)
    wk = w_ref[0]          # (tk, tn)
    part = jnp.dot(xk, wk, preferred_element_type=jnp.float32)

    if single_k:
        # K fits a single tile: write straight through, skip the acc round trip.
        y = part + b_ref[...]
        if act == "relu":
            y = jnp.maximum(y, 0.0)
        o_ref[...] = y.astype(o_ref.dtype)
    else:
        @pl.when(k == 0)
        def _():
            acc_ref[...] = jnp.zeros_like(acc_ref)

        acc_ref[...] += part

        @pl.when(k == pl.num_programs(1) - 1)
        def _():
            y = acc_ref[...] + b_ref[...]
            if act == "relu":
                y = jnp.maximum(y, 0.0)
            o_ref[...] = y.astype(o_ref.dtype)


def linear(x, w_blocked, b, n_valid, act="none", *, out_dtype=jnp.float32):
    """y = act(x @ W + b).

    x: (M, K) f32/bf16.  w_blocked: (n_n, K, tn) bf16 — N-blocked so every
    (tk, tn) tile is one contiguous HBM region.  b: (1, n_n*tn) f32.
    Returns (M, n_valid) in out_dtype.
    """
    M, K = x.shape
    n_n, Kw, tn = w_blocked.shape
    assert K == Kw, (K, Kw)
    assert K % 128 == 0 and tn % 128 == 0, (K, tn)
    Npad = n_n * tn

    w_block_bytes, vmem_limit = _vmem_budget()
    tk = _largest_aligned_divisor(K, max(128, w_block_bytes // (tn * 2)))
    n_k = K // tk

    # Pad the tiny batch dim to 8 sublanes; bf16 matmul inputs, f32 accumulation.
    Mp = _round_up(max(M, 8), 8)
    xin = x.astype(jnp.bfloat16)
    if Mp != M:
        xin = jnp.pad(xin, ((0, Mp - M), (0, 0)))
    # Split K onto the leading axis so the whole activation stays VMEM-resident
    # (constant index_map -> single DMA); the kernel indexes the K chunk.
    x_blk = xin.reshape(Mp, n_k, tk).transpose(1, 0, 2)  # (n_k, Mp, tk)

    cost = pl.CostEstimate(
        flops=2 * Mp * K * Npad,
        transcendentals=0,
        bytes_accessed=(w_blocked.size * 2 + x_blk.size * 2 + b.size * 4
                        + Mp * Npad * jnp.dtype(out_dtype).itemsize),
    )

    out = pl.pallas_call(
        functools.partial(_linear_kernel, act=act, single_k=(n_k == 1)),
        out_shape=jax.ShapeDtypeStruct((Mp, Npad), out_dtype),
        grid_spec=pltpu.PrefetchScalarGridSpec(
            num_scalar_prefetch=0,
            grid=(n_n, n_k),  # reduction (K) axis last
            in_specs=[
                pl.BlockSpec((n_k, Mp, tk), lambda j, k: (0, 0, 0)),  # resident acts
                pl.BlockSpec((1, tk, tn), lambda j, k: (j, k, 0)),    # contiguous W tile
                pl.BlockSpec((1, tn), lambda j, k: (0, j)),           # bias
            ],
            out_specs=pl.BlockSpec((Mp, tn), lambda j, k: (0, j)),
            scratch_shapes=[pltpu.VMEM((Mp, tn), jnp.float32)],
        ),
        compiler_params=pltpu.CompilerParams(
            dimension_semantics=("parallel", "arbitrary"),
            vmem_limit_bytes=vmem_limit,
        ),
        cost_estimate=cost,
    )(x_blk, w_blocked, b)
    return out[:M, :n_valid]


# --------------------------------------------------------------------------- model
IN_FEATURES = 512 * 7 * 7  # 25088, fixed by vgg16_bn
HIDDEN = 4096
NUM_CLASSES = 1000


def _linear_params(key, k_in, n_out):
    """PyTorch-Linear-like uniform init.

    Weight stored N-blocked as (n_n, K, tn) bf16 so each kernel weight tile is a
    single contiguous HBM region; bias stored as (1, Npad) f32.
    """
    k1, k2 = jax.random.split(key)
    bound = 1.0 / math.sqrt(k_in)
    n_pad = _round_up(n_out, 256)        # multiple of 256 -> >=2 lane-dense N tiles
    tn = min(n_pad // 2, 2048)
    assert n_pad % tn == 0 and tn % 128 == 0
    n_n = n_pad // tn

    w = jax.random.uniform(k1, (k_in, n_out), jnp.float32, -bound, bound)
    bvec = jax.random.uniform(k2, (n_out,), jnp.float32, -bound, bound)
    w = jnp.pad(w, ((0, 0), (0, n_pad - n_out))).astype(jnp.bfloat16)
    w = w.reshape(k_in, n_n, tn).transpose(1, 0, 2)  # (n_n, K, tn) blocked layout
    b = jnp.pad(bvec, (0, n_pad - n_out)).reshape(1, n_pad).astype(jnp.float32)
    return dict(w=w, b=b, n_valid=n_out)


def init_vgg16_classifier(key):
    # TODO(synk): pretrained torchvision weights are not loadable in-script;
    # deterministic synthetic init with matching shapes is used instead.
    k1, k2, k3 = jax.random.split(key, 3)
    return [
        dict(**_linear_params(k1, IN_FEATURES, HIDDEN), act="relu"),
        dict(**_linear_params(k2, HIDDEN, HIDDEN), act="relu"),
        dict(**_linear_params(k3, HIDDEN, NUM_CLASSES), act="none"),
    ]


def vgg16_classifier_forward(params, x):
    """forward(): Linear-ReLU-Dropout, Linear-ReLU-Dropout, Linear. x:(B, 25088)."""
    h = x
    n = len(params)
    for i, layer in enumerate(params):
        out_dtype = jnp.float32 if i == n - 1 else jnp.bfloat16  # bf16 hidden handoff
        h = linear(h, layer["w"], layer["b"], layer["n_valid"],
                   act=layer["act"], out_dtype=out_dtype)
        # Dropout(p=0.5): eval-mode identity.
        # TODO(synk): training-mode stochastic dropout (pltpu.prng_random_bits) not implemented.
    return h


def vgg16_classifier_get_feature(params, x):
    """get_feature(): layers 0..5 == first two Linear+ReLU(+Dropout) blocks."""
    h = x
    for i, layer in enumerate(params[:2]):
        out_dtype = jnp.float32 if i == 1 else jnp.bfloat16
        h = linear(h, layer["w"], layer["b"], layer["n_valid"],
                   act=layer["act"], out_dtype=out_dtype)
    return h


# --------------------------------------------------------------------------- reference
def _reference_forward(params, x):
    """Pure-JAX mirror of the kernel numerics (bf16 inputs, f32 acc, bf16 handoff)."""
    h = x
    n = len(params)
    for i, layer in enumerate(params):
        n_n, K, tn = layer["w"].shape
        w_full = layer["w"].transpose(1, 0, 2).reshape(K, n_n * tn)
        y = jnp.dot(h.astype(jnp.bfloat16), w_full,
                    preferred_element_type=jnp.float32) + layer["b"]
        if layer["act"] == "relu":
            y = jnp.maximum(y, 0.0)
        if i != n - 1:
            y = y.astype(jnp.bfloat16)
        h = y[:, :layer["n_valid"]]
    return h.astype(jnp.float32)


# --------------------------------------------------------------------------- main
if __name__ == "__main__":
    key = jax.random.PRNGKey(0)
    kp, kx = jax.random.split(key)

    B = 2
    params = init_vgg16_classifier(kp)
    x = jax.random.normal(kx, (B, IN_FEATURES), jnp.float32)

    y = jax.block_until_ready(vgg16_classifier_forward(params, x))
    assert y.shape == (B, NUM_CLASSES), y.shape
    assert bool(jnp.all(jnp.isfinite(y)))

    y_ref = _reference_forward(params, x)
    max_err = float(jnp.max(jnp.abs(y - y_ref)))
    assert max_err < 5e-2, max_err

    feat = jax.block_until_ready(vgg16_classifier_get_feature(params, x))
    assert feat.shape == (B, HIDDEN), feat.shape

    print("KERNEL_OK")
</pallas_src>

<mosaic_0001>
module attributes {stable_mosaic.version = 11 : i64} {
  func.func @_linear_kernel(%arg0: i32, %arg1: i32, %arg2: memref<14x8x1792xbf16, #tpu.memory_space<vmem>>, %arg3: memref<1x1792x2048xbf16, #tpu.memory_space<vmem>>, %arg4: memref<1x2048xf32, #tpu.memory_space<vmem>>, %arg5: memref<8x2048xbf16, #tpu.memory_space<vmem>>, %arg6: memref<8x2048xf32, #tpu.memory_space<vmem>>) attributes {dimension_semantics = [#tpu.dimension_semantics<parallel>, #tpu.dimension_semantics<arbitrary>], iteration_bounds = array<i64: 2, 14>, scalar_prefetch = 0 : i64, scratch_operands = 1 : i64, tpu.core_type = #tpu.core_type<tc>, window_params = [{pipeline_mode = #tpu.pipeline_mode<synchronous>, transform_indices = @transform_0, window_bounds = array<i64: 14, 8, 1792>}, {transform_indices = @transform_1, window_bounds = array<i64: 1, 1792, 2048>}, {transform_indices = @transform_2, window_bounds = array<i64: 1, 2048>}, {transform_indices = @transform_3, window_bounds = array<i64: 8, 2048>}]} {
    %0 = arith.index_cast %arg1 : i32 to index
    %c0 = arith.constant 0 : index
    %c0_0 = arith.constant 0 : index
    %1 = vector.load %arg2[%0, %c0, %c0_0] : memref<14x8x1792xbf16, #tpu.memory_space<vmem>>, vector<1x8x1792xbf16>
    %2 = vector.shape_cast %1 : vector<1x8x1792xbf16> to vector<8x1792xbf16>
    %c0_1 = arith.constant 0 : index
    %c0_2 = arith.constant 0 : index
    %c0_3 = arith.constant 0 : index
    %3 = vector.load %arg3[%c0_1, %c0_2, %c0_3] : memref<1x1792x2048xbf16, #tpu.memory_space<vmem>>, vector<1x1792x2048xbf16>
    %4 = vector.shape_cast %3 : vector<1x1792x2048xbf16> to vector<1792x2048xbf16>
    %cst = arith.constant dense<0.000000e+00> : vector<8x2048xf32>
    %5 = tpu.matmul %2, %4, %cst {dimension_numbers = #tpu.dot_dimension_numbers<[1], [0], [0], [1], [0, 0, 1, 1], [], []>} : vector<8x1792xbf16>, vector<1792x2048xbf16>, vector<8x2048xf32> -> vector<8x2048xf32>
    %c0_i32 = arith.constant 0 : i32
    %6 = arith.cmpi eq, %arg1, %c0_i32 : i32
    %7 = arith.extui %6 : i1 to i32
    %c0_i32_4 = arith.constant 0 : i32
    %8 = arith.cmpi ne, %7, %c0_i32_4 : i32
    scf.if %8 {
      %cst_10 = arith.constant 0.000000e+00 : f32
      %15 = vector.broadcast %cst_10 : f32 to vector<8x2048xf32>
      %c0_11 = arith.constant 0 : index
      %c0_12 = arith.constant 0 : index
      %16 = vector.load %arg6[%c0_11, %c0_12] : memref<8x2048xf32, #tpu.memory_space<vmem>>, vector<8x2048xf32>
      tpu.vector_store %arg6[%c0_11, %c0_12], %15 {strides = array<i32>} : memref<8x2048xf32, #tpu.memory_space<vmem>>, vector<8x2048xf32>,
    } else {
    }
    %c0_5 = arith.constant 0 : index
    %c0_6 = arith.constant 0 : index
    %9 = vector.load %arg6[%c0_5, %c0_6] : memref<8x2048xf32, #tpu.memory_space<vmem>>, vector<8x2048xf32>
    %10 = arith.addf %9, %5 : vector<8x2048xf32>
    %c0_7 = arith.constant 0 : index
    %c0_8 = arith.constant 0 : index
    %11 = vector.load %arg6[%c0_7, %c0_8] : memref<8x2048xf32, #tpu.memory_space<vmem>>, vector<8x2048xf32>
    tpu.vector_store %arg6[%c0_7, %c0_8], %10 {strides = array<i32>} : memref<8x2048xf32, #tpu.memory_space<vmem>>, vector<8x2048xf32>,
    %c13_i32 = arith.constant 13 : i32
    %12 = arith.cmpi eq, %arg1, %c13_i32 : i32
    %13 = arith.extui %12 : i1 to i32
    %c0_i32_9 = arith.constant 0 : i32
    %14 = arith.cmpi ne, %13, %c0_i32_9 : i32
    scf.if %14 {
      %c0_10 = arith.constant 0 : index
      %c0_11 = arith.constant 0 : index
      %15 = vector.load %arg6[%c0_10, %c0_11] : memref<8x2048xf32, #tpu.memory_space<vmem>>, vector<8x2048xf32>
      %c0_12 = arith.constant 0 : index
      %c0_13 = arith.constant 0 : index
      %16 = vector.load %arg4[%c0_12, %c0_13] : memref<1x2048xf32, #tpu.memory_space<vmem>>, vector<1x2048xf32>
      %17 = vector.broadcast %16 : vector<1x2048xf32> to vector<8x2048xf32>
      %18 = arith.addf %15, %17 : vector<8x2048xf32>
      %cst_14 = arith.constant 0.000000e+00 : f32
      %19 = vector.broadcast %cst_14 : f32 to vector<8x2048xf32>
      %20 = arith.maximumf %18, %19 : vector<8x2048xf32>
      %21 = arith.truncf %20 : vector<8x2048xf32> to vector<8x2048xbf16>
      %c0_15 = arith.constant 0 : index
      %c0_16 = arith.constant 0 : index
      %22 = vector.load %arg5[%c0_15, %c0_16] : memref<8x2048xbf16, #tpu.memory_space<vmem>>, vector<8x2048xbf16>
      tpu.vector_store %arg5[%c0_15, %c0_16], %21 {strides = array<i32>} : memref<8x2048xbf16, #tpu.memory_space<vmem>>, vector<8x2048xbf16>,
    } else {
    }
    return
  }
  func.func @transform_0(%arg0: i32, %arg1: i32) -> (i32, i32, i32) {
    %c0_i32 = arith.constant 0 : i32
    %c0_i32_0 = arith.constant 0 : i32
    %c0_i32_1 = arith.constant 0 : i32
    %c0_i32_2 = arith.constant 0 : i32
    return %c0_i32, %c0_i32_0, %c0_i32_1 : i32, i32, i32
  }
  func.func @transform_1(%arg0: i32, %arg1: i32) -> (i32, i32, i32) {
    %c0_i32 = arith.constant 0 : i32
    %c0_i32_0 = arith.constant 0 : i32
    return %arg0, %arg1, %c0_i32 : i32, i32, i32
  }
  func.func @transform_2(%arg0: i32, %arg1: i32) -> (i32, i32) {
    %c0_i32 = arith.constant 0 : i32
    %c0_i32_0 = arith.constant 0 : i32
    return %c0_i32, %arg0 : i32, i32
  }
  func.func @transform_3(%arg0: i32, %arg1: i32) -> (i32, i32) {
    %c0_i32 = arith.constant 0 : i32
    %c0_i32_0 = arith.constant 0 : i32
    return %c0_i32, %arg0 : i32, i32
  }
}

</mosaic_0001>

<llo_original>
// kernel: tpu_custom_call.1
$region0: #{tpu_custom_call.1}
  #allocation0 [shape = 'u32[]', space=smem, size = 0x4, offset = 0x4, fixed_abs, tag = 'smem constant byte address 0x4 - core index']
  #allocation1 [shape = 'u32[144,128]{1,0:T(1,128)}', space=vmem, size = 0x12000, scoped, tag = 'internal scratch']
  #allocation2 [shape = 'f32[8,2048]{1,0:T(8,128)}', space=vmem, size = 0x10000, scoped, tag = 'scratch operand']
  %s0 = inlined_call_operand.hbm [shape: bf16[14,8,1792], index: 0, kind: input, shape index: {}]
  %s1 = inlined_call_operand.hbm [shape: bf16[2,25088,2048], index: 1, kind: input, shape index: {}]
  %s2 = inlined_call_operand.hbm [shape: f32[1,4096], index: 2, kind: input, shape index: {}]
  %s3 = inlined_call_operand.hbm [shape: bf16[8,4096], index: 3, kind: output, shape index: {}]
  %s4 = sld [smem:[#allocation0]]
  $region65: #{tpu_custom_call.1} parent=0
    _
  %s6 = ssub.s32 1, %s4
  %s7 = scalar_select 0, %s6, %s4
  $region1: #{tpu_custom_call.1} parent=0
    #allocation3 [shape = 'u8[401408]{0}', space=vmem, size = 0x62000, scoped, tag = 'input window, operand 0, single buffered']
    #allocation4 [shape = 's32[2]{0}', space=sflag, size = 0x8, scoped, tag = 'scoped memory for tpu_custom_call.1']
    #allocation5 [shape = 's32[2]{0}', space=sflag, size = 0x8, scoped, tag = 'scoped memory for tpu_custom_call.1']
    #allocation6 [shape = 'u8[14680064]{0}', space=vmem, size = 0xe00000, scoped, tag = 'input window, operand 1']
    #allocation7 [shape = 's32[2]{0}', space=sflag, size = 0x8, scoped, tag = 'scoped memory for tpu_custom_call.1']
    #allocation8 [shape = 'u8[16384]{0}', space=vmem, size = 0x4000, scoped, tag = 'input window, operand 2']
    #allocation9 [shape = 'u8[65536]{0}', space=vmem, size = 0x10000, scoped, tag = 'output window, operand 0']
    %8 = vsyncpa [#allocation4], 0
    %9 = vsyncpa [#allocation7], 0
    %s10 = scalar_lea.sflag [#allocation7], 1
    %11 = vsyncpa %s10, 0
    %12 = vsyncpa [#allocation5], 0
    %s13 = scalar_lea.sflag [#allocation5], 1
    %14 = vsyncpa %s13, 0
    loop: start=0, step=1, limit=30
    $region2: #{tpu_custom_call.1} parent=1 // loop_pre_header
      _
    $region3: #{tpu_custom_call.1} parent=1 // loop_header
      %s16 = sphi 0, %s20
      %p17 = scmp.ge.s32.totalorder %s16, 30
      %s23 = sphi 0, %s35
      %s24 = sphi 0, %s31
      %s25 = sphi 0, %s23
      %s26 = sphi 0, %s24
      %s27 = sphi 0, %s25
      %s28 = sphi 0, %s26
      %s36 = sphi 0, %s36
      %s38 = sphi 0, %s36
      %s39 = sphi 0, %s38
      %s53 = sphi 0, %s39
      %s61 = sphi 0, %s63
      %s64 = sphi 0, %s61
      %s65 = sphi 0, %s64
      %s81 = sphi 0, %s65
      %s87 = sphi 0, %s89
      %s90 = sphi 0, %s87
      %s91 = sphi 0, %s90
      %s107 = sphi 0, %s91
      %s113 = sphi 0, %s115
      %s116 = sphi 0, %s113
      %s117 = sphi 0, %s116
      %s133 = sphi 0, %s117
    $region4: #{tpu_custom_call.1} parent=1 // loop_header_branch
      %19 = sbr.rel (%p17) target = $region8
    $region5: #{tpu_custom_call.1} parent=1 // loop_body
      %s21 = ssub.s32 %s16, 1
      %s22 = ssub.s32 %s16, 2
      %s29 = sadd.s32 1, %s24
      %p30 = scmp.ge.s32.totalorder %s29, 14
      %s31 = scalar_select %p30, 0, %s29
      %s32 = sadd.s32 1, %s23
      %s33 = scalar_select %p30, %s32, %s23
      %p34 = scmp.ge.s32.totalorder %s33, 2
      %s35 = scalar_select %p34, 0, %s33
      %s37 = sadd.s32 %s36, 1
      %p40 = scmp.eq.s32.totalorder %s16, 27
      %p41 = scmp.ne.s32.totalorder %s36, %s38
      %p42 = scmp.eq.s32.totalorder %s16, 0
      %p43 = por %p41, %p42
      %p44 = scmp.ne.s32.totalorder %s36, %s38
      %p45 = scmp.eq.s32.totalorder %s21, 27
      %p46 = por %p44, %p45
      %p47 = scmp.ne.s32.totalorder %s38, %s39
      %p48 = scmp.eq.s32.totalorder %s21, 0
      %p49 = por %p47, %p48
      %p50 = scmp.ne.s32.totalorder %s38, %s39
      %p51 = scmp.eq.s32.totalorder %s22, 27
      %p52 = por %p50, %p51
      %p54 = scmp.ne.s32.totalorder %s39, %s53
      %p55 = scmp.eq.s32.totalorder %s22, 0
      %p56 = por %p54, %p55
      %s57 = ssub.s32 %s23, %s35
      %s58 = ssub.s32 %s24, %s31
      %s59 = sor.u32 %s57, %s58
      %p60 = scmp.eq.s32.totalorder %s59, 0
      %s62 = sadd.s32 %s61, 1
      %s63 = scalar_select %p60, %s61, %s62
      %p66 = pneg %p60
      %p67 = scmp.eq.s32.totalorder %s16, 27
      %p68 = por %p66, %p67
      %p69 = scmp.ne.s32.totalorder %s61, %s64
      %p70 = scmp.eq.s32.totalorder %s16, 0
      %p71 = por %p69, %p70
      %p72 = scmp.ne.s32.totalorder %s61, %s64
      %p73 = scmp.eq.s32.totalorder %s21, 27
      %p74 = por %p72, %p73
      %p75 = scmp.ne.s32.totalorder %s64, %s65
      %p76 = scmp.eq.s32.totalorder %s21, 0
      %p77 = por %p75, %p76
      %p78 = scmp.ne.s32.totalorder %s64, %s65
      %p79 = scmp.eq.s32.totalorder %s22, 27
      %p80 = por %p78, %p79
      %p82 = scmp.ne.s32.totalorder %s65, %s81
      %p83 = scmp.eq.s32.totalorder %s22, 0
      %p84 = por %p82, %p83
      %s85 = ssub.s32 %s23, %s35
      %p86 = scmp.eq.s32.totalorder %s85, 0
      %s88 = sadd.s32 %s87, 1
      %s89 = scalar_select %p86, %s87, %s88
      %p92 = pneg %p86
      %p93 = scmp.eq.s32.totalorder %s16, 27
      %p94 = por %p92, %p93
      %p95 = scmp.ne.s32.totalorder %s87, %s90
      %p96 = scmp.eq.s32.totalorder %s16, 0
      %p97 = por %p95, %p96
      %p98 = scmp.ne.s32.totalorder %s87, %s90
      %p99 = scmp.eq.s32.totalorder %s21, 27
      %p100 = por %p98, %p99
      %p101 = scmp.ne.s32.totalorder %s90, %s91
      %p102 = scmp.eq.s32.totalorder %s21, 0
      %p103 = por %p101, %p102
      %p104 = scmp.ne.s32.totalorder %s90, %s91
      %p105 = scmp.eq.s32.totalorder %s22, 27
      %p106 = por %p104, %p105
      %p108 = scmp.ne.s32.totalorder %s91, %s107
      %p109 = scmp.eq.s32.totalorder %s22, 0
      %p110 = por %p108, %p109
      %s111 = ssub.s32 %s23, %s35
      %p112 = scmp.eq.s32.totalorder %s111, 0
      %s114 = sadd.s32 %s113, 1
      %s115 = scalar_select %p112, %s113, %s114
      %p118 = pneg %p112
      %p119 = scmp.eq.s32.totalorder %s16, 27
      %p120 = por %p118, %p119
      %p121 = scmp.ne.s32.totalorder %s113, %s116
      %p122 = scmp.eq.s32.totalorder %s16, 0
      %p123 = por %p121, %p122
      %p124 = scmp.ne.s32.totalorder %s113, %s116
      %p125 = scmp.eq.s32.totalorder %s21, 27
      %p126 = por %p124, %p125
      %p127 = scmp.ne.s32.totalorder %s116, %s117
      %p128 = scmp.eq.s32.totalorder %s21, 0
      %p129 = por %p127, %p128
      %p130 = scmp.ne.s32.totalorder %s116, %s117
      %p131 = scmp.eq.s32.totalorder %s22, 27
      %p132 = por %p130, %p131
      %p134 = scmp.ne.s32.totalorder %s117, %s133
      %p135 = scmp.eq.s32.totalorder %s22, 0
      %p136 = por %p134, %p135
      %p137 = scmp.le.s32.totalorder 1, %s16
      %p138 = scmp.lt.s32.totalorder %s16, 29
      %p139 = pnand %p137, %p138
      %p140 = pneg %p139
      // Predicated region
      $region9: #{tpu_custom_call.1} parent=5 // pred_check
        _
      $region10: #{tpu_custom_call.1} parent=5 // pred_check_branch
        %142 = sbr.rel (%p139) target = $region12
      $region11: #{tpu_custom_call.1} parent=5 // pred_region
        %s143 = ssub.s32 %s16, 1
        // Predicated region
        $region13: #{tpu_custom_call.1} parent=11 // pred_check
          %p144 = pneg %p49
        $region14: #{tpu_custom_call.1} parent=11 // pred_check_branch
          %146 = sbr.rel (%p144) target = $region16
        $region15: #{tpu_custom_call.1} parent=11 // pred_region
          %s148 = ssub.s32 12544, 12544
          %149 = vsyncadd [#allocation4], %s148
          %s150 = sshll.u32 [#allocation3], 4
          %s151 = int_to_ptr.vmem [resolvable:$true] %s150
          %156 = dma.hbm_to_vmem [thread:$0]  %s0, 12544, %s151, [#allocation4], 896, 896, 56
        $region16: #{tpu_custom_call.1} parent=11 // pred_fallthru
          _
      $region12: #{tpu_custom_call.1} parent=5 // pred_fallthru
        _
      %p157 = scmp.lt.s32.totalorder %s16, 28
      // Predicated region
      $region17: #{tpu_custom_call.1} parent=5 // pred_check
        %p158 = pneg %p157
      $region18: #{tpu_custom_call.1} parent=5 // pred_check_branch
        %160 = sbr.rel (%p158) target = $region20
      $region19: #{tpu_custom_call.1} parent=5 // pred_region
        // Predicated region
        $region21: #{tpu_custom_call.1} parent=19 // pred_check
          %p161 = pneg %p71
        $region22: #{tpu_custom_call.1} parent=19 // pred_check_branch
          %163 = sbr.rel (%p161) target = $region24
        $region23: #{tpu_custom_call.1} parent=19 // pred_region
          %s164 = sand.u32 %s16, 1
          %s165 = scalar_lea.sflag [#allocation7], %s164
          %s166 = sand.u32 %s61, 1
          %s167 = smul.addr %s166, 14336
          %s168 = scalar_lea.vmem [#allocation6], %s167
          %s169 = smul.u32 224, %s24
          %s171 = ssub.s32 229376, 229376
          %172 = vsyncadd %s165, %s171
          %s173 = smul.addr %s169, 16
          %s174 = smul.addr %s23, 50176
          %s175 = sadd.s32 %s173, %s174
          %s176 = smul.addr %s175, 64
          %s177 = scalar_lea.hbm %s1, %s176
          %s178 = sshll.u32 %s168, 4
          %s179 = int_to_ptr.vmem [resolvable:$true] %s178
          %184 = dma.hbm_to_vmem [thread:$0]  %s177, 229376, %s179, %s165, 1024, 1024, 64
        $region24: #{tpu_custom_call.1} parent=19 // pred_fallthru
          _
        // Predicated region
        $region25: #{tpu_custom_call.1} parent=19 // pred_check
          %p185 = pneg %p97
        $region26: #{tpu_custom_call.1} parent=19 // pred_check_branch
          %187 = sbr.rel (%p185) target = $region28
        $region27: #{tpu_custom_call.1} parent=19 // pred_region
          %s188 = sand.u32 %s16, 1
          %s189 = scalar_lea.sflag [#allocation7], %s188
          %s190 = sand.u32 %s87, 1
          %s191 = smul.addr %s190, 16
          %s192 = scalar_lea.vmem [#allocation8], %s191
          %s193 = smul.u32 16, %s23
          %s195 = ssub.s32 256, 256
          %196 = vsyncadd %s189, %s195
          %s197 = smul.addr %s193, 16
          %s198 = scalar_lea.hbm %s2, %s197
          %s200 = sshll.u32 %s192, 4
          %s201 = int_to_ptr.vmem [resolvable:$true] %s200
          %203 = dma.hbm_to_vmem [thread:$0]  %s198, 256, %s201, %s189
        $region28: #{tpu_custom_call.1} parent=19 // pred_fallthru
          _
      $region20: #{tpu_custom_call.1} parent=5 // pred_fallthru
        _
      %p204 = scmp.le.s32.totalorder 1, %s16
      %p205 = scmp.lt.s32.totalorder %s16, 29
      %p206 = pnand %p204, %p205
      %p207 = pneg %p206
      // Predicated region
      $region29: #{tpu_custom_call.1} parent=5 // pred_check
        _
      $region30: #{tpu_custom_call.1} parent=5 // pred_check_branch
        %209 = sbr.rel (%p206) target = $region32
      $region31: #{tpu_custom_call.1} parent=5 // pred_region
        %s210 = ssub.s32 %s16, 1
        // Predicated region
        $region33: #{tpu_custom_call.1} parent=31 // pred_check
          %p211 = pneg %p49
        $region34: #{tpu_custom_call.1} parent=31 // pred_check_branch
          %213 = sbr.rel (%p211) target = $region36
        $region35: #{tpu_custom_call.1} parent=31 // pred_region
          %214 = dma.done [#allocation4], 12544
        $region36: #{tpu_custom_call.1} parent=31 // pred_fallthru
          _
        %s215 = sand.u32 %s21, 1
        %s216 = scalar_lea.sflag [#allocation7], %s215
        %s217 = sand.u32 %s64, 1
        %s218 = smul.addr %s217, 14336
        %s219 = scalar_lea.vmem [#allocation6], %s218
        // Predicated region
        $region37: #{tpu_custom_call.1} parent=31 // pred_check
          %p220 = pneg %p77
        $region38: #{tpu_custom_call.1} parent=31 // pred_check_branch
          %222 = sbr.rel (%p220) target = $region40
        $region39: #{tpu_custom_call.1} parent=31 // pred_region
          %223 = dma.done %s216, 229376
        $region40: #{tpu_custom_call.1} parent=31 // pred_fallthru
          _
        %s224 = sand.u32 %s21, 1
        %s225 = scalar_lea.sflag [#allocation7], %s224
        %s226 = sand.u32 %s90, 1
        %s227 = smul.addr %s226, 16
        %s228 = scalar_lea.vmem [#allocation8], %s227
        // Predicated region
        $region41: #{tpu_custom_call.1} parent=31 // pred_check
          %p229 = pneg %p103
        $region42: #{tpu_custom_call.1} parent=31 // pred_check_branch
          %231 = sbr.rel (%p229) target = $region44
        $region43: #{tpu_custom_call.1} parent=31 // pred_region
          %232 = dma.done %s225, 256
        $region44: #{tpu_custom_call.1} parent=31 // pred_fallthru
          _
        %p233 = pneg %p49
        %p234 = pneg %p46
        %s235 = sand.u32 %s21, 1
        %s236 = scalar_lea.sflag [#allocation7], %s235
        %s237 = sand.u32 %s64, 1
        %s238 = smul.addr %s237, 14336
        %s239 = scalar_lea.vmem [#allocation6], %s238
        %p240 = pneg %p77
        %p241 = pneg %p74
        %s242 = sand.u32 %s21, 1
        %s243 = scalar_lea.sflag [#allocation7], %s242
        %s244 = sand.u32 %s90, 1
        %s245 = smul.addr %s244, 16
        %s246 = scalar_lea.vmem [#allocation8], %s245
        %p247 = pneg %p103
        %p248 = pneg %p100
        %p249 = pneg %p129
        %p250 = pneg %p126
        %s251 = sand.u32 %s116, 1
        %s252 = scalar_lea.sflag [#allocation5], %s251
        %s253 = sand.u32 %s116, 1
        %s254 = smul.addr %s253, 64
        %s255 = scalar_lea.vmem [#allocation9], %s254
        %s256 = smul.u32 224, %s26
        %s257 = smul.u32 16, %s25
        %s258 = smul.u32 16, %s25
        %s259 = smul.u32 %s26, 14
        %s260 = smul.addr %s259, 4
        %s261 = scalar_lea.vmem [#allocation3], %s260
        %v262 = vld [vmem:[%s261] sm:$0xff]
        %v263 = vld [vmem:[%s261 + $0x8] sm:$0xff]
        %v264 = vld [vmem:[%s261 + $0x10] sm:$0xff]
        %v265 = vld [vmem:[%s261 + $0x18] sm:$0xff]
        %v266 = vld [vmem:[%s261 + $0x20] sm:$0xff]
        %v267 = vld [vmem:[%s261 + $0x28] sm:$0xff]
        %v268 = vld [vmem:[%s261 + $0x30] sm:$0xff]
        %v269 = vld [vmem:[%s219] sm:$0xff]
        %v270 = vld [vmem:[%s219 + $0x8] sm:$0xff]
        %v271 = vld [vmem:[%s219 + $0x10] sm:$0xff]
        %v272 = vld [vmem:[%s219 + $0x18] sm:$0xff]
        %v273 = vld [vmem:[%s219 + $0x20] sm:$0xff]
        %v274 = vld [vmem:[%s219 + $0x28] sm:$0xff]
        %v275 = vld [vmem:[%s219 + $0x30] sm:$0xff]
        %v276 = vld [vmem:[%s219 + $0x38] sm:$0xff]
        %v277 = vld [vmem:[%s219 + $0x40] sm:$0xff]
        %v278 = vld [vmem:[%s219 + $0x48] sm:$0xff]
        %v279 = vld [vmem:[%s219 + $0x50] sm:$0xff]
        %v280 = vld [vmem:[%s219 + $0x58] sm:$0xff]
        %v281 = vld [vmem:[%s219 + $0x60] sm:$0xff]
        %v282 = vld [vmem:[%s219 + $0x68] sm:$0xff]
        %v283 = vld [vmem:[%s219 + $0x70] sm:$0xff]
        %v284 = vld [vmem:[%s219 + $0x78] sm:$0xff]
        %v285 = vld [vmem:[%s219 + $0x80] sm:$0xff]
        %v286 = vld [vmem:[%s219 + $0x88] sm:$0xff]
        %v287 = vld [vmem:[%s219 + $0x90] sm:$0xff]
        %v288 = vld [vmem:[%s219 + $0x98] sm:$0xff]
        %v289 = vld [vmem:[%s219 + $0xa0] sm:$0xff]
        %v290 = vld [vmem:[%s219 + $0xa8] sm:$0xff]
        %v291 = vld [vmem:[%s219 + $0xb0] sm:$0xff]
        %v292 = vld [vmem:[%s219 + $0xb8] sm:$0xff]
        %v293 = vld [vmem:[%s219 + $0xc0] sm:$0xff]
        %v294 = vld [vmem:[%s219 + $0xc8] sm:$0xff]
        %v295 = vld [vmem:[%s219 + $0xd0] sm:$0xff]
        %v296 = vld [vmem:[%s219 + $0xd8] sm:$0xff]
        %v297 = vld [vmem:[%s219 + $0xe0] sm:$0xff]
        %v298 = vld [vmem:[%s219 + $0xe8] sm:$0xff]
        %v299 = vld [vmem:[%s219 + $0xf0] sm:$0xff]
        %v300 = vld [vmem:[%s219 + $0xf8] sm:$0xff]
        %v301 = vld [vmem:[%s219 + $0x100] sm:$0xff]
        %v302 = vld [vmem:[%s219 + $0x108] sm:$0xff]
        %v303 = vld [vmem:[%s219 + $0x110] sm:$0xff]
        %v304 = vld [vmem:[%s219 + $0x118] sm:$0xff]
        %v305 = vld [vmem:[%s219 + $0x120] sm:$0xff]
        %v306 = vld [vmem:[%s219 + $0x128] sm:$0xff]
        %v307 = vld [vmem:[%s219 + $0x130] sm:$0xff]
        %v308 = vld [vmem:[%s219 + $0x138] sm:$0xff]
        %v309 = vld [vmem:[%s219 + $0x140] sm:$0xff]
        %v310 = vld [vmem:[%s219 + $0x148] sm:$0xff]
        %v311 = vld [vmem:[%s219 + $0x150] sm:$0xff]
        %v312 = vld [vmem:[%s219 + $0x158] sm:$0xff]
        %v313 = vld [vmem:[%s219 + $0x160] sm:$0xff]
        %v314 = vld [vmem:[%s219 + $0x168] sm:$0xff]
        %v315 = vld [vmem:[%s219 + $0x170] sm:$0xff]
        %v316 = vld [vmem:[%s219 + $0x178] sm:$0xff]
        %v317 = vld [vmem:[%s219 + $0x180] sm:$0xff]
        %v318 = vld [vmem:[%s219 + $0x188] sm:$0xff]
        %v319 = vld [vmem:[%s219 + $0x190] sm:$0xff]
        %v320 = vld [vmem:[%s219 + $0x198] sm:$0xff]
        %v321 = vld [vmem:[%s219 + $0x1a0] sm:$0xff]
        %v322 = vld [vmem:[%s219 + $0x1a8] sm:$0xff]
        %v323 = vld [vmem:[%s219 + $0x1b0] sm:$0xff]
        %v324 = vld [vmem:[%s219 + $0x1b8] sm:$0xff]
        %v325 = vld [vmem:[%s219 + $0x1c0] sm:$0xff]
        %v326 = vld [vmem:[%s219 + $0x1c8] sm:$0xff]
        %v327 = vld [vmem:[%s219 + $0x1d0] sm:$0xff]
        %v328 = vld [vmem:[%s219 + $0x1d8] sm:$0xff]
        %v329 = vld [vmem:[%s219 + $0x1e0] sm:$0xff]
        %v330 = vld [vmem:[%s219 + $0x1e8] sm:$0xff]
        %v331 = vld [vmem:[%s219 + $0x1f0] sm:$0xff]
        %v332 = vld [vmem:[%s219 + $0x1f8] sm:$0xff]
        %v333 = vld [vmem:[%s219 + $0x200] sm:$0xff]
        %v334 = vld [vmem:[%s219 + $0x208] sm:$0xff]
        %v335 = vld [vmem:[%s219 + $0x210] sm:$0xff]
        %v336 = vld [vmem:[%s219 + $0x218] sm:$0xff]
        %v337 = vld [vmem:[%s219 + $0x220] sm:$0xff]
        %v338 = vld [vmem:[%s219 + $0x228] sm:$0xff]
        %v339 = vld [vmem:[%s219 + $0x230] sm:$0xff]
        %v340 = vld [vmem:[%s219 + $0x238] sm:$0xff]
        %v341 = vld [vmem:[%s219 + $0x240] sm:$0xff]
        %v342 = vld [vmem:[%s219 + $0x248] sm:$0xff]
        %v343 = vld [vmem:[%s219 + $0x250] sm:$0xff]
        %v344 = vld [vmem:[%s219 + $0x258] sm:$0xff]
        %v345 = vld [vmem:[%s219 + $0x260] sm:$0xff]
        %v346 = vld [vmem:[%s219 + $0x268] sm:$0xff]
        %v347 = vld [vmem:[%s219 + $0x270] sm:$0xff]
        %v348 = vld [vmem:[%s219 + $0x278] sm:$0xff]
        %v349 = vld [vmem:[%s219 + $0x280] sm:$0xff]
        %v350 = vld [vmem:[%s219 + $0x288] sm:$0xff]
        %v351 = vld [vmem:[%s219 + $0x290] sm:$0xff]
        %v352 = vld [vmem:[%s219 + $0x298] sm:$0xff]
        %v353 = vld [vmem:[%s219 + $0x2a0] sm:$0xff]
        %v354 = vld [vmem:[%s219 + $0x2a8] sm:$0xff]
        %v355 = vld [vmem:[%s219 + $0x2b0] sm:$0xff]
        %v356 = vld [vmem:[%s219 + $0x2b8] sm:$0xff]
        %v357 = vld [vmem:[%s219 + $0x2c0] sm:$0xff]
        %v358 = vld [vmem:[%s219 + $0x2c8] sm:$0xff]
        %v359 = vld [vmem:[%s219 + $0x2d0] sm:$0xff]
        %v360 = vld [vmem:[%s219 + $0x2d8] sm:$0xff]
        %v361 = vld [vmem:[%s219 + $0x2e0] sm:$0xff]
        %v362 = vld [vmem:[%s219 + $0x2e8] sm:$0xff]
        %v363 = vld [vmem:[%s219 + $0x2f0] sm:$0xff]
        %v364 = vld [vmem:[%s219 + $0x2f8] sm:$0xff]
        %v365 = vld [vmem:[%s219 + $0x300] sm:$0xff]
        %v366 = vld [vmem:[%s219 + $0x308] sm:$0xff]
        %v367 = vld [vmem:[%s219 + $0x310] sm:$0xff]
        %v368 = vld [vmem:[%s219 + $0x318] sm:$0xff]
        %v369 = vld [vmem:[%s219 + $0x320] sm:$0xff]
        %v370 = vld [vmem:[%s219 + $0x328] sm:$0xff]
        %v371 = vld [vmem:[%s219 + $0x330] sm:$0xff]
        %v372 = vld [vmem:[%s219 + $0x338] sm:$0xff]
        %v373 = vld [vmem:[%s219 + $0x340] sm:$0xff]
        %v374 = vld [vmem:[%s219 + $0x348] sm:$0xff]
        %v375 = vld [vmem:[%s219 + $0x350] sm:$0xff]
        %v376 = vld [vmem:[%s219 + $0x358] sm:$0xff]
        %v377 = vld [vmem:[%s219 + $0x360] sm:$0xff]
        %v378 = vld [vmem:[%s219 + $0x368] sm:$0xff]
        %v379 = vld [vmem:[%s219 + $0x370] sm:$0xff]
        %v380 = vld [vmem:[%s219 + $0x378] sm:$0xff]
        %v381 = vld [vmem:[%s219 + $0x380] sm:$0xff]
        %v382 = vld [vmem:[%s219 + $0x388] sm:$0xff]
        %v383 = vld [vmem:[%s219 + $0x390] sm:$0xff]
        %v384 = vld [vmem:[%s219 + $0x398] sm:$0xff]
        %v385 = vld [vmem:[%s219 + $0x3a0] sm:$0xff]
        %v386 = vld [vmem:[%s219 + $0x3a8] sm:$0xff]
        %v387 = vld [vmem:[%s219 + $0x3b0] sm:$0xff]
        %v388 = vld [vmem:[%s219 + $0x3b8] sm:$0xff]
        %v389 = vld [vmem:[%s219 + $0x3c0] sm:$0xff]
        %v390 = vld [vmem:[%s219 + $0x3c8] sm:$0xff]
        %v391 = vld [vmem:[%s219 + $0x3d0] sm:$0xff]
        %v392 = vld [vmem:[%s219 + $0x3d8] sm:$0xff]
        %v393 = vld [vmem:[%s219 + $0x3e0] sm:$0xff]
        %v394 = vld [vmem:[%s219 + $0x3e8] sm:$0xff]
        %v395 = vld [vmem:[%s219 + $0x3f0] sm:$0xff]
        %v396 = vld [vmem:[%s219 + $0x3f8] sm:$0xff]
        %v397 = vld [vmem:[%s219 + $0x400] sm:$0xff]
        %v398 = vld [vmem:[%s219 + $0x408] sm:$0xff]
        %v399 = vld [vmem:[%s219 + $0x410] sm:$0xff]
        %v400 = vld [vmem:[%s219 + $0x418] sm:$0xff]
        %v401 = vld [vmem:[%s219 + $0x420] sm:$0xff]
        %v402 = vld [vmem:[%s219 + $0x428] sm:$0xff]
        %v403 = vld [vmem:[%s219 + $0x430] sm:$0xff]
        %v404 = vld [vmem:[%s219 + $0x438] sm:$0xff]
        %v405 = vld [vmem:[%s219 + $0x440] sm:$0xff]
        %v406 = vld [vmem:[%s219 + $0x448] sm:$0xff]
        %v407 = vld [vmem:[%s219 + $0x450] sm:$0xff]
        %v408 = vld [vmem:[%s219 + $0x458] sm:$0xff]
        %v409 = vld [vmem:[%s219 + $0x460] sm:$0xff]
        %v410 = vld [vmem:[%s219 + $0x468] sm:$0xff]
        %v411 = vld [vmem:[%s219 + $0x470] sm:$0xff]
        %v412 = vld [vmem:[%s219 + $0x478] sm:$0xff]
        %v413 = vld [vmem:[%s219 + $0x480] sm:$0xff]
        %v414 = vld [vmem:[%s219 + $0x488] sm:$0xff]
        %v415 = vld [vmem:[%s219 + $0x490] sm:$0xff]
        %v416 = vld [vmem:[%s219 + $0x498] sm:$0xff]
        %v417 = vld [vmem:[%s219 + $0x4a0] sm:$0xff]
        %v418 = vld [vmem:[%s219 + $0x4a8] sm:$0xff]
        %v419 = vld [vmem:[%s219 + $0x4b0] sm:$0xff]
        %v420 = vld [vmem:[%s219 + $0x4b8] sm:$0xff]
        %v421 = vld [vmem:[%s219 + $0x4c0] sm:$0xff]
        %v422 = vld [vmem:[%s219 + $0x4c8] sm:$0xff]
        %v423 = vld [vmem:[%s219 + $0x4d0] sm:$0xff]
        %v424 = vld [vmem:[%s219 + $0x4d8] sm:$0xff]
        %v425 = vld [vmem:[%s219 + $0x4e0] sm:$0xff]
        %v426 = vld [vmem:[%s219 + $0x4e8] sm:$0xff]
        %v427 = vld [vmem:[%s219 + $0x4f0] sm:$0xff]
        %v428 = vld [vmem:[%s219 + $0x4f8] sm:$0xff]
        %v429 = vld [vmem:[%s219 + $0x500] sm:$0xff]
        %v430 = vld [vmem:[%s219 + $0x508] sm:$0xff]
        %v431 = vld [vmem:[%s219 + $0x510] sm:$0xff]
        %v432 = vld [vmem:[%s219 + $0x518] sm:$0xff]
        %v433 = vld [vmem:[%s219 + $0x520] sm:$0xff]
        %v434 = vld [vmem:[%s219 + $0x528] sm:$0xff]
        %v435 = vld [vmem:[%s219 + $0x530] sm:$0xff]
        %v436 = vld [vmem:[%s219 + $0x538] sm:$0xff]
        %v437 = vld [vmem:[%s219 + $0x540] sm:$0xff]
        %v438 = vld [vmem:[%s219 + $0x548] sm:$0xff]
        %v439 = vld [vmem:[%s219 + $0x550] sm:$0xff]
        %v440 = vld [vmem:[%s219 + $0x558] sm:$0xff]
        %v441 = vld [vmem:[%s219 + $0x560] sm:$0xff]
        %v442 = vld [vmem:[%s219 + $0x568] sm:$0xff]
        %v443 = vld [vmem:[%s219 + $0x570] sm:$0xff]
        %v444 = vld [vmem:[%s219 + $0x578] sm:$0xff]
        %v445 = vld [vmem:[%s219 + $0x580] sm:$0xff]
        %v446 = vld [vmem:[%s219 + $0x588] sm:$0xff]
        %v447 = vld [vmem:[%s219 + $0x590] sm:$0xff]
        %v448 = vld [vmem:[%s219 + $0x598] sm:$0xff]
        %v449 = vld [vmem:[%s219 + $0x5a0] sm:$0xff]
        %v450 = vld [vmem:[%s219 + $0x5a8] sm:$0xff]
        %v451 = vld [vmem:[%s219 + $0x5b0] sm:$0xff]
        %v452 = vld [vmem:[%s219 + $0x5b8] sm:$0xff]
        %v453 = vld [vmem:[%s219 + $0x5c0] sm:$0xff]
        %v454 = vld [vmem:[%s219 + $0x5c8] sm:$0xff]
        %v455 = vld [vmem:[%s219 + $0x5d0] sm:$0xff]
        %v456 = vld [vmem:[%s219 + $0x5d8] sm:$0xff]
        %v457 = vld [vmem:[%s219 + $0x5e0] sm:$0xff]
        %v458 = vld [vmem:[%s219 + $0x5e8] sm:$0xff]
        %v459 = vld [vmem:[%s219 + $0x5f0] sm:$0xff]
        %v460 = vld [vmem:[%s219 + $0x5f8] sm:$0xff]
        %v461 = vld [vmem:[%s219 + $0x600] sm:$0xff]
        %v462 = vld [vmem:[%s219 + $0x608] sm:$0xff]
        %v463 = vld [vmem:[%s219 + $0x610] sm:$0xff]
        %v464 = vld [vmem:[%s219 + $0x618] sm:$0xff]
        %v465 = vld [vmem:[%s219 + $0x620] sm:$0xff]
        %v466 = vld [vmem:[%s219 + $0x628] sm:$0xff]
        %v467 = vld [vmem:[%s219 + $0x630] sm:$0xff]
        %v468 = vld [vmem:[%s219 + $0x638] sm:$0xff]
        %v469 = vld [vmem:[%s219 + $0x640] sm:$0xff]
        %v470 = vld [vmem:[%s219 + $0x648] sm:$0xff]
        %v471 = vld [vmem:[%s219 + $0x650] sm:$0xff]
        %v472 = vld [vmem:[%s219 + $0x658] sm:$0xff]
        %v473 = vld [vmem:[%s219 + $0x660] sm:$0xff]
        %v474 = vld [vmem:[%s219 + $0x668] sm:$0xff]
        %v475 = vld [vmem:[%s219 + $0x670] sm:$0xff]
        %v476 = vld [vmem:[%s219 + $0x678] sm:$0xff]
        %v477 = vld [vmem:[%s219 + $0x680] sm:$0xff]
        %v478 = vld [vmem:[%s219 + $0x688] sm:$0xff]
        %v479 = vld [vmem:[%s219 + $0x690] sm:$0xff]
        %v480 = vld [vmem:[%s219 + $0x698] sm:$0xff]
        %v481 = vld [vmem:[%s219 + $0x6a0] sm:$0xff]
        %v482 = vld [vmem:[%s219 + $0x6a8] sm:$0xff]
        %v483 = vld [vmem:[%s219 + $0x6b0] sm:$0xff]
        %v484 = vld [vmem:[%s219 + $0x6b8] sm:$0xff]
        %v485 = vld [vmem:[%s219 + $0x6c0] sm:$0xff]
        %v486 = vld [vmem:[%s219 + $0x6c8] sm:$0xff]
        %v487 = vld [vmem:[%s219 + $0x6d0] sm:$0xff]
        %v488 = vld [vmem:[%s219 + $0x6d8] sm:$0xff]
        %v489 = vld [vmem:[%s219 + $0x6e0] sm:$0xff]
        %v490 = vld [vmem:[%s219 + $0x6e8] sm:$0xff]
        %v491 = vld [vmem:[%s219 + $0x6f0] sm:$0xff]
        %v492 = vld [vmem:[%s219 + $0x6f8] sm:$0xff]
        %v493 = vld [vmem:[%s219 + $0x700] sm:$0xff]
        %v494 = vld [vmem:[%s219 + $0x708] sm:$0xff]
        %v495 = vld [vmem:[%s219 + $0x710] sm:$0xff]
        %v496 = vld [vmem:[%s219 + $0x718] sm:$0xff]
        %v497 = vld [vmem:[%s219 + $0x720] sm:$0xff]
        %v498 = vld [vmem:[%s219 + $0x728] sm:$0xff]
        %v499 = vld [vmem:[%s219 + $0x730] sm:$0xff]
        %v500 = vld [vmem:[%s219 + $0x738] sm:$0xff]
        %v501 = vld [vmem:[%s219 + $0x740] sm:$0xff]
        %v502 = vld [vmem:[%s219 + $0x748] sm:$0xff]
        %v503 = vld [vmem:[%s219 + $0x750] sm:$0xff]
        %v504 = vld [vmem:[%s219 + $0x758] sm:$0xff]
        %v505 = vld [vmem:[%s219 + $0x760] sm:$0xff]
        %v506 = vld [vmem:[%s219 + $0x768] sm:$0xff]
        %v507 = vld [vmem:[%s219 + $0x770] sm:$0xff]
        %v508 = vld [vmem:[%s219 + $0x778] sm:$0xff]
        %v509 = vld [vmem:[%s219 + $0x780] sm:$0xff]
        %v510 = vld [vmem:[%s219 + $0x788] sm:$0xff]
        %v511 = vld [vmem:[%s219 + $0x790] sm:$0xff]
        %v512 = vld [vmem:[%s219 + $0x798] sm:$0xff]
        %v513 = vld [vmem:[%s219 + $0x7a0] sm:$0xff]
        %v514 = vld [vmem:[%s219 + $0x7a8] sm:$0xff]
        %v515 = vld [vmem:[%s219 + $0x7b0] sm:$0xff]
        %v516 = vld [vmem:[%s219 + $0x7b8] sm:$0xff]
        %v517 = vld [vmem:[%s219 + $0x7c0] sm:$0xff]
        %v518 = vld [vmem:[%s219 + $0x7c8] sm:$0xff]
        %v519 = vld [vmem:[%s219 + $0x7d0] sm:$0xff]
        %v520 = vld [vmem:[%s219 + $0x7d8] sm:$0xff]
        %v521 = vld [vmem:[%s219 + $0x7e0] sm:$0xff]
        %v522 = vld [vmem:[%s219 + $0x7e8] sm:$0xff]
        %v523 = vld [vmem:[%s219 + $0x7f0] sm:$0xff]
        %v524 = vld [vmem:[%s219 + $0x7f8] sm:$0xff]
        %v525 = vld [vmem:[%s219 + $0x800] sm:$0xff]
        %v526 = vld [vmem:[%s219 + $0x808] sm:$0xff]
        %v527 = vld [vmem:[%s219 + $0x810] sm:$0xff]
        %v528 = vld [vmem:[%s219 + $0x818] sm:$0xff]
        %v529 = vld [vmem:[%s219 + $0x820] sm:$0xff]
        %v530 = vld [vmem:[%s219 + $0x828] sm:$0xff]
        %v531 = vld [vmem:[%s219 + $0x830] sm:$0xff]
        %v532 = vld [vmem:[%s219 + $0x838] sm:$0xff]
        %v533 = vld [vmem:[%s219 + $0x840] sm:$0xff]
        %v534 = vld [vmem:[%s219 + $0x848] sm:$0xff]
        %v535 = vld [vmem:[%s219 + $0x850] sm:$0xff]
        %v536 = vld [vmem:[%s219 + $0x858] sm:$0xff]
        %v537 = vld [vmem:[%s219 + $0x860] sm:$0xff]
        %v538 = vld [vmem:[%s219 + $0x868] sm:$0xff]
        %v539 = vld [vmem:[%s219 + $0x870] sm:$0xff]
        %v540 = vld [vmem:[%s219 + $0x878] sm:$0xff]
        %v541 = vld [vmem:[%s219 + $0x880] sm:$0xff]
        %v542 = vld [vmem:[%s219 + $0x888] sm:$0xff]
        %v543 = vld [vmem:[%s219 + $0x890] sm:$0xff]
        %v544 = vld [vmem:[%s219 + $0x898] sm:$0xff]
        %v545 = vld [vmem:[%s219 + $0x8a0] sm:$0xff]
        %v546 = vld [vmem:[%s219 + $0x8a8] sm:$0xff]
        %v547 = vld [vmem:[%s219 + $0x8b0] sm:$0xff]
        %v548 = vld [vmem:[%s219 + $0x8b8] sm:$0xff]
        %v549 = vld [vmem:[%s219 + $0x8c0] sm:$0xff]
        %v550 = vld [vmem:[%s219 + $0x8c8] sm:$0xff]
        %v551 = vld [vmem:[%s219 + $0x8d0] sm:$0xff]
        %v552 = vld [vmem:[%s219 + $0x8d8] sm:$0xff]
        %v553 = vld [vmem:[%s219 + $0x8e0] sm:$0xff]
        %v554 = vld [vmem:[%s219 + $0x8e8] sm:$0xff]
        %v555 = vld [vmem:[%s219 + $0x8f0] sm:$0xff]
        %v556 = vld [vmem:[%s219 + $0x8f8] sm:$0xff]
        %v557 = vld [vmem:[%s219 + $0x900] sm:$0xff]
        %v558 = vld [vmem:[%s219 + $0x908] sm:$0xff]
        %v559 = vld [vmem:[%s219 + $0x910] sm:$0xff]
        %v560 = vld [vmem:[%s219 + $0x918] sm:$0xff]
        %v561 = vld [vmem:[%s219 + $0x920] sm:$0xff]
        %v562 = vld [vmem:[%s219 + $0x928] sm:$0xff]
        %v563 = vld [vmem:[%s219 + $0x930] sm:$0xff]
        %v564 = vld [vmem:[%s219 + $0x938] sm:$0xff]
        %v565 = vld [vmem:[%s219 + $0x940] sm:$0xff]
        %v566 = vld [vmem:[%s219 + $0x948] sm:$0xff]
        %v567 = vld [vmem:[%s219 + $0x950] sm:$0xff]
        %v568 = vld [vmem:[%s219 + $0x958] sm:$0xff]
        %v569 = vld [vmem:[%s219 + $0x960] sm:$0xff]
        %v570 = vld [vmem:[%s219 + $0x968] sm:$0xff]
        %v571 = vld [vmem:[%s219 + $0x970] sm:$0xff]
        %v572 = vld [vmem:[%s219 + $0x978] sm:$0xff]
        %v573 = vld [vmem:[%s219 + $0x980] sm:$0xff]
        %v574 = vld [vmem:[%s219 + $0x988] sm:$0xff]
        %v575 = vld [vmem:[%s219 + $0x990] sm:$0xff]
        %v576 = vld [vmem:[%s219 + $0x998] sm:$0xff]
        %v577 = vld [vmem:[%s219 + $0x9a0] sm:$0xff]
        %v578 = vld [vmem:[%s219 + $0x9a8] sm:$0xff]
        %v579 = vld [vmem:[%s219 + $0x9b0] sm:$0xff]
        %v580 = vld [vmem:[%s219 + $0x9b8] sm:$0xff]
        %v581 = vld [vmem:[%s219 + $0x9c0] sm:$0xff]
        %v582 = vld [vmem:[%s219 + $0x9c8] sm:$0xff]
        %v583 = vld [vmem:[%s219 + $0x9d0] sm:$0xff]
        %v584 = vld [vmem:[%s219 + $0x9d8] sm:$0xff]
        %v585 = vld [vmem:[%s219 + $0x9e0] sm:$0xff]
        %v586 = vld [vmem:[%s219 + $0x9e8] sm:$0xff]
        %v587 = vld [vmem:[%s219 + $0x9f0] sm:$0xff]
        %v588 = vld [vmem:[%s219 + $0x9f8] sm:$0xff]
        %v589 = vld [vmem:[%s219 + $0xa00] sm:$0xff]
        %v590 = vld [vmem:[%s219 + $0xa08] sm:$0xff]
        %v591 = vld [vmem:[%s219 + $0xa10] sm:$0xff]
        %v592 = vld [vmem:[%s219 + $0xa18] sm:$0xff]
        %v593 = vld [vmem:[%s219 + $0xa20] sm:$0xff]
        %v594 = vld [vmem:[%s219 + $0xa28] sm:$0xff]
        %v595 = vld [vmem:[%s219 + $0xa30] sm:$0xff]
        %v596 = vld [vmem:[%s219 + $0xa38] sm:$0xff]
        %v597 = vld [vmem:[%s219 + $0xa40] sm:$0xff]
        %v598 = vld [vmem:[%s219 + $0xa48] sm:$0xff]
        %v599 = vld [vmem:[%s219 + $0xa50] sm:$0xff]
        %v600 = vld [vmem:[%s219 + $0xa58] sm:$0xff]
        %v601 = vld [vmem:[%s219 + $0xa60] sm:$0xff]
        %v602 = vld [vmem:[%s219 + $0xa68] sm:$0xff]
        %v603 = vld [vmem:[%s219 + $0xa70] sm:$0xff]
        %v604 = vld [vmem:[%s219 + $0xa78] sm:$0xff]
        %v605 = vld [vmem:[%s219 + $0xa80] sm:$0xff]
        %v606 = vld [vmem:[%s219 + $0xa88] sm:$0xff]
        %v607 = vld [vmem:[%s219 + $0xa90] sm:$0xff]
        %v608 = vld [vmem:[%s219 + $0xa98] sm:$0xff]
        %v609 = vld [vmem:[%s219 + $0xaa0] sm:$0xff]
        %v610 = vld [vmem:[%s219 + $0xaa8] sm:$0xff]
        %v611 = vld [vmem:[%s219 + $0xab0] sm:$0xff]
        %v612 = vld [vmem:[%s219 + $0xab8] sm:$0xff]
        %v613 = vld [vmem:[%s219 + $0xac0] sm:$0xff]
        %v614 = vld [vmem:[%s219 + $0xac8] sm:$0xff]
        %v615 = vld [vmem:[%s219 + $0xad0] sm:$0xff]
        %v616 = vld [vmem:[%s219 + $0xad8] sm:$0xff]
        %v617 = vld [vmem:[%s219 + $0xae0] sm:$0xff]
        %v618 = vld [vmem:[%s219 + $0xae8] sm:$0xff]
        %v619 = vld [vmem:[%s219 + $0xaf0] sm:$0xff]
        %v620 = vld [vmem:[%s219 + $0xaf8] sm:$0xff]
        %v621 = vld [vmem:[%s219 + $0xb00] sm:$0xff]
        %v622 = vld [vmem:[%s219 + $0xb08] sm:$0xff]
        %v623 = vld [vmem:[%s219 + $0xb10] sm:$0xff]
        %v624 = vld [vmem:[%s219 + $0xb18] sm:$0xff]
        %v625 = vld [vmem:[%s219 + $0xb20] sm:$0xff]
        %v626 = vld [vmem:[%s219 + $0xb28] sm:$0xff]
        %v627 = vld [vmem:[%s219 + $0xb30] sm:$0xff]
        %v628 = vld [vmem:[%s219 + $0xb38] sm:$0xff]
        %v629 = vld [vmem:[%s219 + $0xb40] sm:$0xff]
        %v630 = vld [vmem:[%s219 + $0xb48] sm:$0xff]
        %v631 = vld [vmem:[%s219 + $0xb50] sm:$0xff]
        %v632 = vld [vmem:[%s219 + $0xb58] sm:$0xff]
        %v633 = vld [vmem:[%s219 + $0xb60] sm:$0xff]
        %v634 = vld [vmem:[%s219 + $0xb68] sm:$0xff]
        %v635 = vld [vmem:[%s219 + $0xb70] sm:$0xff]
        %v636 = vld [vmem:[%s219 + $0xb78] sm:$0xff]
        %v637 = vld [vmem:[%s219 + $0xb80] sm:$0xff]
        %v638 = vld [vmem:[%s219 + $0xb88] sm:$0xff]
        %v639 = vld [vmem:[%s219 + $0xb90] sm:$0xff]
        %v640 = vld [vmem:[%s219 + $0xb98] sm:$0xff]
        %v641 = vld [vmem:[%s219 + $0xba0] sm:$0xff]
        %v642 = vld [vmem:[%s219 + $0xba8] sm:$0xff]
        %v643 = vld [vmem:[%s219 + $0xbb0] sm:$0xff]
        %v644 = vld [vmem:[%s219 + $0xbb8] sm:$0xff]
        %v645 = vld [vmem:[%s219 + $0xbc0] sm:$0xff]
        %v646 = vld [vmem:[%s219 + $0xbc8] sm:$0xff]
        %v647 = vld [vmem:[%s219 + $0xbd0] sm:$0xff]
        %v648 = vld [vmem:[%s219 + $0xbd8] sm:$0xff]
        %v649 = vld [vmem:[%s219 + $0xbe0] sm:$0xff]
        %v650 = vld [vmem:[%s219 + $0xbe8] sm:$0xff]
        %v651 = vld [vmem:[%s219 + $0xbf0] sm:$0xff]
        %v652 = vld [vmem:[%s219 + $0xbf8] sm:$0xff]
        %v653 = vld [vmem:[%s219 + $0xc00] sm:$0xff]
        %v654 = vld [vmem:[%s219 + $0xc08] sm:$0xff]
        %v655 = vld [vmem:[%s219 + $0xc10] sm:$0xff]
        %v656 = vld [vmem:[%s219 + $0xc18] sm:$0xff]
        %v657 = vld [vmem:[%s219 + $0xc20] sm:$0xff]
        %v658 = vld [vmem:[%s219 + $0xc28] sm:$0xff]
        %v659 = vld [vmem:[%s219 + $0xc30] sm:$0xff]
        %v660 = vld [vmem:[%s219 + $0xc38] sm:$0xff]
        %v661 = vld [vmem:[%s219 + $0xc40] sm:$0xff]
        %v662 = vld [vmem:[%s219 + $0xc48] sm:$0xff]
        %v663 = vld [vmem:[%s219 + $0xc50] sm:$0xff]
        %v664 = vld [vmem:[%s219 + $0xc58] sm:$0xff]
        %v665 = vld [vmem:[%s219 + $0xc60] sm:$0xff]
        %v666 = vld [vmem:[%s219 + $0xc68] sm:$0xff]
        %v667 = vld [vmem:[%s219 + $0xc70] sm:$0xff]
        %v668 = vld [vmem:[%s219 + $0xc78] sm:$0xff]
        %v669 = vld [vmem:[%s219 + $0xc80] sm:$0xff]
        %v670 = vld [vmem:[%s219 + $0xc88] sm:$0xff]
        %v671 = vld [vmem:[%s219 + $0xc90] sm:$0xff]
        %v672 = vld [vmem:[%s219 + $0xc98] sm:$0xff]
        %v673 = vld [vmem:[%s219 + $0xca0] sm:$0xff]
        %v674 = vld [vmem:[%s219 + $0xca8] sm:$0xff]
        %v675 = vld [vmem:[%s219 + $0xcb0] sm:$0xff]
        %v676 = vld [vmem:[%s219 + $0xcb8] sm:$0xff]
        %v677 = vld [vmem:[%s219 + $0xcc0] sm:$0xff]
        %v678 = vld [vmem:[%s219 + $0xcc8] sm:$0xff]
        %v679 = vld [vmem:[%s219 + $0xcd0] sm:$0xff]
        %v680 = vld [vmem:[%s219 + $0xcd8] sm:$0xff]
        %v681 = vld [vmem:[%s219 + $0xce0] sm:$0xff]
        %v682 = vld [vmem:[%s219 + $0xce8] sm:$0xff]
        %v683 = vld [vmem:[%s219 + $0xcf0] sm:$0xff]
        %v684 = vld [vmem:[%s219 + $0xcf8] sm:$0xff]
        %v685 = vld [vmem:[%s219 + $0xd00] sm:$0xff]
        %v686 = vld [vmem:[%s219 + $0xd08] sm:$0xff]
        %v687 = vld [vmem:[%s219 + $0xd10] sm:$0xff]
        %v688 = vld [vmem:[%s219 + $0xd18] sm:$0xff]
        %v689 = vld [vmem:[%s219 + $0xd20] sm:$0xff]
        %v690 = vld [vmem:[%s219 + $0xd28] sm:$0xff]
        %v691 = vld [vmem:[%s219 + $0xd30] sm:$0xff]
        %v692 = vld [vmem:[%s219 + $0xd38] sm:$0xff]
        %v693 = vld [vmem:[%s219 + $0xd40] sm:$0xff]
        %v694 = vld [vmem:[%s219 + $0xd48] sm:$0xff]
        %v695 = vld [vmem:[%s219 + $0xd50] sm:$0xff]
        %v696 = vld [vmem:[%s219 + $0xd58] sm:$0xff]
        %v697 = vld [vmem:[%s219 + $0xd60] sm:$0xff]
        %v698 = vld [vmem:[%s219 + $0xd68] sm:$0xff]
        %v699 = vld [vmem:[%s219 + $0xd70] sm:$0xff]
        %v700 = vld [vmem:[%s219 + $0xd78] sm:$0xff]
        %v701 = vld [vmem:[%s219 + $0xd80] sm:$0xff]
        %v702 = vld [vmem:[%s219 + $0xd88] sm:$0xff]
        %v703 = vld [vmem:[%s219 + $0xd90] sm:$0xff]
        %v704 = vld [vmem:[%s219 + $0xd98] sm:$0xff]
        %v705 = vld [vmem:[%s219 + $0xda0] sm:$0xff]
        %v706 = vld [vmem:[%s219 + $0xda8] sm:$0xff]
        %v707 = vld [vmem:[%s219 + $0xdb0] sm:$0xff]
        %v708 = vld [vmem:[%s219 + $0xdb8] sm:$0xff]
        %v709 = vld [vmem:[%s219 + $0xdc0] sm:$0xff]
        %v710 = vld [vmem:[%s219 + $0xdc8] sm:$0xff]
        %v711 = vld [vmem:[%s219 + $0xdd0] sm:$0xff]
        %v712 = vld [vmem:[%s219 + $0xdd8] sm:$0xff]
        %v713 = vld [vmem:[%s219 + $0xde0] sm:$0xff]
        %v714 = vld [vmem:[%s219 + $0xde8] sm:$0xff]
        %v715 = vld [vmem:[%s219 + $0xdf0] sm:$0xff]
        %v716 = vld [vmem:[%s219 + $0xdf8] sm:$0xff]
        %v717 = vld [vmem:[%s219 + $0xe00] sm:$0xff]
        %v718 = vld [vmem:[%s219 + $0xe08] sm:$0xff]
        %v719 = vld [vmem:[%s219 + $0xe10] sm:$0xff]
        %v720 = vld [vmem:[%s219 + $0xe18] sm:$0xff]
        %v721 = vld [vmem:[%s219 + $0xe20] sm:$0xff]
        %v722 = vld [vmem:[%s219 + $0xe28] sm:$0xff]
        %v723 = vld [vmem:[%s219 + $0xe30] sm:$0xff]
        %v724 = vld [vmem:[%s219 + $0xe38] sm:$0xff]
        %v725 = vld [vmem:[%s219 + $0xe40] sm:$0xff]
        %v726 = vld [vmem:[%s219 + $0xe48] sm:$0xff]
        %v727 = vld [vmem:[%s219 + $0xe50] sm:$0xff]
        %v728 = vld [vmem:[%s219 + $0xe58] sm:$0xff]
        %v729 = vld [vmem:[%s219 + $0xe60] sm:$0xff]
        %v730 = vld [vmem:[%s219 + $0xe68] sm:$0xff]
        %v731 = vld [vmem:[%s219 + $0xe70] sm:$0xff]
        %v732 = vld [vmem:[%s219 + $0xe78] sm:$0xff]
        %v733 = vld [vmem:[%s219 + $0xe80] sm:$0xff]
        %v734 = vld [vmem:[%s219 + $0xe88] sm:$0xff]
        %v735 = vld [vmem:[%s219 + $0xe90] sm:$0xff]
        %v736 = vld [vmem:[%s219 + $0xe98] sm:$0xff]
        %v737 = vld [vmem:[%s219 + $0xea0] sm:$0xff]
        %v738 = vld [vmem:[%s219 + $0xea8] sm:$0xff]
        %v739 = vld [vmem:[%s219 + $0xeb0] sm:$0xff]
        %v740 = vld [vmem:[%s219 + $0xeb8] sm:$0xff]
        %v741 = vld [vmem:[%s219 + $0xec0] sm:$0xff]
        %v742 = vld [vmem:[%s219 + $0xec8] sm:$0xff]
        %v743 = vld [vmem:[%s219 + $0xed0] sm:$0xff]
        %v744 = vld [vmem:[%s219 + $0xed8] sm:$0xff]
        %v745 = vld [vmem:[%s219 + $0xee0] sm:$0xff]
        %v746 = vld [vmem:[%s219 + $0xee8] sm:$0xff]
        %v747 = vld [vmem:[%s219 + $0xef0] sm:$0xff]
        %v748 = vld [vmem:[%s219 + $0xef8] sm:$0xff]
        %v749 = vld [vmem:[%s219 + $0xf00] sm:$0xff]
        %v750 = vld [vmem:[%s219 + $0xf08] sm:$0xff]
        %v751 = vld [vmem:[%s219 + $0xf10] sm:$0xff]
        %v752 = vld [vmem:[%s219 + $0xf18] sm:$0xff]
        %v753 = vld [vmem:[%s219 + $0xf20] sm:$0xff]
        %v754 = vld [vmem:[%s219 + $0xf28] sm:$0xff]
        %v755 = vld [vmem:[%s219 + $0xf30] sm:$0xff]
        %v756 = vld [vmem:[%s219 + $0xf38] sm:$0xff]
        %v757 = vld [vmem:[%s219 + $0xf40] sm:$0xff]
        %v758 = vld [vmem:[%s219 + $0xf48] sm:$0xff]
        %v759 = vld [vmem:[%s219 + $0xf50] sm:$0xff]
        %v760 = vld [vmem:[%s219 + $0xf58] sm:$0xff]
        %v761 = vld [vmem:[%s219 + $0xf60] sm:$0xff]
        %v762 = vld [vmem:[%s219 + $0xf68] sm:$0xff]
        %v763 = vld [vmem:[%s219 + $0xf70] sm:$0xff]
        %v764 = vld [vmem:[%s219 + $0xf78] sm:$0xff]
        %v765 = vld [vmem:[%s219 + $0xf80] sm:$0xff]
        %v766 = vld [vmem:[%s219 + $0xf88] sm:$0xff]
        %v767 = vld [vmem:[%s219 + $0xf90] sm:$0xff]
        %v768 = vld [vmem:[%s219 + $0xf98] sm:$0xff]
        %v769 = vld [vmem:[%s219 + $0xfa0] sm:$0xff]
        %v770 = vld [vmem:[%s219 + $0xfa8] sm:$0xff]
        %v771 = vld [vmem:[%s219 + $0xfb0] sm:$0xff]
        %v772 = vld [vmem:[%s219 + $0xfb8] sm:$0xff]
        %v773 = vld [vmem:[%s219 + $0xfc0] sm:$0xff]
        %v774 = vld [vmem:[%s219 + $0xfc8] sm:$0xff]
        %v775 = vld [vmem:[%s219 + $0xfd0] sm:$0xff]
        %v776 = vld [vmem:[%s219 + $0xfd8] sm:$0xff]
        %v777 = vld [vmem:[%s219 + $0xfe0] sm:$0xff]
        %v778 = vld [vmem:[%s219 + $0xfe8] sm:$0xff]
        %v779 = vld [vmem:[%s219 + $0xff0] sm:$0xff]
        %v780 = vld [vmem:[%s219 + $0xff8] sm:$0xff]
        %v781 = vld [vmem:[%s219 + $0x1000] sm:$0xff]
        %v782 = vld [vmem:[%s219 + $0x1008] sm:$0xff]
        %v783 = vld [vmem:[%s219 + $0x1010] sm:$0xff]
        %v784 = vld [vmem:[%s219 + $0x1018] sm:$0xff]
        %v785 = vld [vmem:[%s219 + $0x1020] sm:$0xff]
        %v786 = vld [vmem:[%s219 + $0x1028] sm:$0xff]
        %v787 = vld [vmem:[%s219 + $0x1030] sm:$0xff]
        %v788 = vld [vmem:[%s219 + $0x1038] sm:$0xff]
        %v789 = vld [vmem:[%s219 + $0x1040] sm:$0xff]
        %v790 = vld [vmem:[%s219 + $0x1048] sm:$0xff]
        %v791 = vld [vmem:[%s219 + $0x1050] sm:$0xff]
        %v792 = vld [vmem:[%s219 + $0x1058] sm:$0xff]
        %v793 = vld [vmem:[%s219 + $0x1060] sm:$0xff]
        %v794 = vld [vmem:[%s219 + $0x1068] sm:$0xff]
        %v795 = vld [vmem:[%s219 + $0x1070] sm:$0xff]
        %v796 = vld [vmem:[%s219 + $0x1078] sm:$0xff]
        %v797 = vld [vmem:[%s219 + $0x1080] sm:$0xff]
        %v798 = vld [vmem:[%s219 + $0x1088] sm:$0xff]
        %v799 = vld [vmem:[%s219 + $0x1090] sm:$0xff]
        %v800 = vld [vmem:[%s219 + $0x1098] sm:$0xff]
        %v801 = vld [vmem:[%s219 + $0x10a0] sm:$0xff]
        %v802 = vld [vmem:[%s219 + $0x10a8] sm:$0xff]
        %v803 = vld [vmem:[%s219 + $0x10b0] sm:$0xff]
        %v804 = vld [vmem:[%s219 + $0x10b8] sm:$0xff]
        %v805 = vld [vmem:[%s219 + $0x10c0] sm:$0xff]
        %v806 = vld [vmem:[%s219 + $0x10c8] sm:$0xff]
        %v807 = vld [vmem:[%s219 + $0x10d0] sm:$0xff]
        %v808 = vld [vmem:[%s219 + $0x10d8] sm:$0xff]
        %v809 = vld [vmem:[%s219 + $0x10e0] sm:$0xff]
        %v810 = vld [vmem:[%s219 + $0x10e8] sm:$0xff]
        %v811 = vld [vmem:[%s219 + $0x10f0] sm:$0xff]
        %v812 = vld [vmem:[%s219 + $0x10f8] sm:$0xff]
        %v813 = vld [vmem:[%s219 + $0x1100] sm:$0xff]
        %v814 = vld [vmem:[%s219 + $0x1108] sm:$0xff]
        %v815 = vld [vmem:[%s219 + $0x1110] sm:$0xff]
        %v816 = vld [vmem:[%s219 + $0x1118] sm:$0xff]
        %v817 = vld [vmem:[%s219 + $0x1120] sm:$0xff]
        %v818 = vld [vmem:[%s219 + $0x1128] sm:$0xff]
        %v819 = vld [vmem:[%s219 + $0x1130] sm:$0xff]
        %v820 = vld [vmem:[%s219 + $0x1138] sm:$0xff]
        %v821 = vld [vmem:[%s219 + $0x1140] sm:$0xff]
        %v822 = vld [vmem:[%s219 + $0x1148] sm:$0xff]
        %v823 = vld [vmem:[%s219 + $0x1150] sm:$0xff]
        %v824 = vld [vmem:[%s219 + $0x1158] sm:$0xff]
        %v825 = vld [vmem:[%s219 + $0x1160] sm:$0xff]
        %v826 = vld [vmem:[%s219 + $0x1168] sm:$0xff]
        %v827 = vld [vmem:[%s219 + $0x1170] sm:$0xff]
        %v828 = vld [vmem:[%s219 + $0x1178] sm:$0xff]
        %v829 = vld [vmem:[%s219 + $0x1180] sm:$0xff]
        %v830 = vld [vmem:[%s219 + $0x1188] sm:$0xff]
        %v831 = vld [vmem:[%s219 + $0x1190] sm:$0xff]
        %v832 = vld [vmem:[%s219 + $0x1198] sm:$0xff]
        %v833 = vld [vmem:[%s219 + $0x11a0] sm:$0xff]
        %v834 = vld [vmem:[%s219 + $0x11a8] sm:$0xff]
        %v835 = vld [vmem:[%s219 + $0x11b0] sm:$0xff]
        %v836 = vld [vmem:[%s219 + $0x11b8] sm:$0xff]
        %v837 = vld [vmem:[%s219 + $0x11c0] sm:$0xff]
        %v838 = vld [vmem:[%s219 + $0x11c8] sm:$0xff]
        %v839 = vld [vmem:[%s219 + $0x11d0] sm:$0xff]
        %v840 = vld [vmem:[%s219 + $0x11d8] sm:$0xff]
        %v841 = vld [vmem:[%s219 + $0x11e0] sm:$0xff]
        %v842 = vld [vmem:[%s219 + $0x11e8] sm:$0xff]
        %v843 = vld [vmem:[%s219 + $0x11f0] sm:$0xff]
        %v844 = vld [vmem:[%s219 + $0x11f8] sm:$0xff]
        %v845 = vld [vmem:[%s219 + $0x1200] sm:$0xff]
        %v846 = vld [vmem:[%s219 + $0x1208] sm:$0xff]
        %v847 = vld [vmem:[%s219 + $0x1210] sm:$0xff]
        %v848 = vld [vmem:[%s219 + $0x1218] sm:$0xff]
        %v849 = vld [vmem:[%s219 + $0x1220] sm:$0xff]
        %v850 = vld [vmem:[%s219 + $0x1228] sm:$0xff]
        %v851 = vld [vmem:[%s219 + $0x1230] sm:$0xff]
        %v852 = vld [vmem:[%s219 + $0x1238] sm:$0xff]
        %v853 = vld [vmem:[%s219 + $0x1240] sm:$0xff]
        %v854 = vld [vmem:[%s219 + $0x1248] sm:$0xff]
        %v855 = vld [vmem:[%s219 + $0x1250] sm:$0xff]
        %v856 = vld [vmem:[%s219 + $0x1258] sm:$0xff]
        %v857 = vld [vmem:[%s219 + $0x1260] sm:$0xff]
        %v858 = vld [vmem:[%s219 + $0x1268] sm:$0xff]
        %v859 = vld [vmem:[%s219 + $0x1270] sm:$0xff]
        %v860 = vld [vmem:[%s219 + $0x1278] sm:$0xff]
        %v861 = vld [vmem:[%s219 + $0x1280] sm:$0xff]
        %v862 = vld [vmem:[%s219 + $0x1288] sm:$0xff]
        %v863 = vld [vmem:[%s219 + $0x1290] sm:$0xff]
        %v864 = vld [vmem:[%s219 + $0x1298] sm:$0xff]
        %v865 = vld [vmem:[%s219 + $0x12a0] sm:$0xff]
        %v866 = vld [vmem:[%s219 + $0x12a8] sm:$0xff]
        %v867 = vld [vmem:[%s219 + $0x12b0] sm:$0xff]
        %v868 = vld [vmem:[%s219 + $0x12b8] sm:$0xff]
        %v869 = vld [vmem:[%s219 + $0x12c0] sm:$0xff]
        %v870 = vld [vmem:[%s219 + $0x12c8] sm:$0xff]
        %v871 = vld [vmem:[%s219 + $0x12d0] sm:$0xff]
        %v872 = vld [vmem:[%s219 + $0x12d8] sm:$0xff]
        %v873 = vld [vmem:[%s219 + $0x12e0] sm:$0xff]
        %v874 = vld [vmem:[%s219 + $0x12e8] sm:$0xff]
        %v875 = vld [vmem:[%s219 + $0x12f0] sm:$0xff]
        %v876 = vld [vmem:[%s219 + $0x12f8] sm:$0xff]
        %v877 = vld [vmem:[%s219 + $0x1300] sm:$0xff]
        %v878 = vld [vmem:[%s219 + $0x1308] sm:$0xff]
        %v879 = vld [vmem:[%s219 + $0x1310] sm:$0xff]
        %v880 = vld [vmem:[%s219 + $0x1318] sm:$0xff]
        %v881 = vld [vmem:[%s219 + $0x1320] sm:$0xff]
        %v882 = vld [vmem:[%s219 + $0x1328] sm:$0xff]
        %v883 = vld [vmem:[%s219 + $0x1330] sm:$0xff]
        %v884 = vld [vmem:[%s219 + $0x1338] sm:$0xff]
        %v885 = vld [vmem:[%s219 + $0x1340] sm:$0xff]
        %v886 = vld [vmem:[%s219 + $0x1348] sm:$0xff]
        %v887 = vld [vmem:[%s219 + $0x1350] sm:$0xff]
        %v888 = vld [vmem:[%s219 + $0x1358] sm:$0xff]
        %v889 = vld [vmem:[%s219 + $0x1360] sm:$0xff]
        %v890 = vld [vmem:[%s219 + $0x1368] sm:$0xff]
        %v891 = vld [vmem:[%s219 + $0x1370] sm:$0xff]
        %v892 = vld [vmem:[%s219 + $0x1378] sm:$0xff]
        %v893 = vld [vmem:[%s219 + $0x1380] sm:$0xff]
        %v894 = vld [vmem:[%s219 + $0x1388] sm:$0xff]
        %v895 = vld [vmem:[%s219 + $0x1390] sm:$0xff]
        %v896 = vld [vmem:[%s219 + $0x1398] sm:$0xff]
        %v897 = vld [vmem:[%s219 + $0x13a0] sm:$0xff]
        %v898 = vld [vmem:[%s219 + $0x13a8] sm:$0xff]
        %v899 = vld [vmem:[%s219 + $0x13b0] sm:$0xff]
        %v900 = vld [vmem:[%s219 + $0x13b8] sm:$0xff]
        %v901 = vld [vmem:[%s219 + $0x13c0] sm:$0xff]
        %v902 = vld [vmem:[%s219 + $0x13c8] sm:$0xff]
        %v903 = vld [vmem:[%s219 + $0x13d0] sm:$0xff]
        %v904 = vld [vmem:[%s219 + $0x13d8] sm:$0xff]
        %v905 = vld [vmem:[%s219 + $0x13e0] sm:$0xff]
        %v906 = vld [vmem:[%s219 + $0x13e8] sm:$0xff]
        %v907 = vld [vmem:[%s219 + $0x13f0] sm:$0xff]
        %v908 = vld [vmem:[%s219 + $0x13f8] sm:$0xff]
        %v909 = vld [vmem:[%s219 + $0x1400] sm:$0xff]
        %v910 = vld [vmem:[%s219 + $0x1408] sm:$0xff]
        %v911 = vld [vmem:[%s219 + $0x1410] sm:$0xff]
        %v912 = vld [vmem:[%s219 + $0x1418] sm:$0xff]
        %v913 = vld [vmem:[%s219 + $0x1420] sm:$0xff]
        %v914 = vld [vmem:[%s219 + $0x1428] sm:$0xff]
        %v915 = vld [vmem:[%s219 + $0x1430] sm:$0xff]
        %v916 = vld [vmem:[%s219 + $0x1438] sm:$0xff]
        %v917 = vld [vmem:[%s219 + $0x1440] sm:$0xff]
        %v918 = vld [vmem:[%s219 + $0x1448] sm:$0xff]
        %v919 = vld [vmem:[%s219 + $0x1450] sm:$0xff]
        %v920 = vld [vmem:[%s219 + $0x1458] sm:$0xff]
        %v921 = vld [vmem:[%s219 + $0x1460] sm:$0xff]
        %v922 = vld [vmem:[%s219 + $0x1468] sm:$0xff]
        %v923 = vld [vmem:[%s219 + $0x1470] sm:$0xff]
        %v924 = vld [vmem:[%s219 + $0x1478] sm:$0xff]
        %v925 = vld [vmem:[%s219 + $0x1480] sm:$0xff]
        %v926 = vld [vmem:[%s219 + $0x1488] sm:$0xff]
        %v927 = vld [vmem:[%s219 + $0x1490] sm:$0xff]
        %v928 = vld [vmem:[%s219 + $0x1498] sm:$0xff]
        %v929 = vld [vmem:[%s219 + $0x14a0] sm:$0xff]
        %v930 = vld [vmem:[%s219 + $0x14a8] sm:$0xff]
        %v931 = vld [vmem:[%s219 + $0x14b0] sm:$0xff]
        %v932 = vld [vmem:[%s219 + $0x14b8] sm:$0xff]
        %v933 = vld [vmem:[%s219 + $0x14c0] sm:$0xff]
        %v934 = vld [vmem:[%s219 + $0x14c8] sm:$0xff]
        %v935 = vld [vmem:[%s219 + $0x14d0] sm:$0xff]
        %v936 = vld [vmem:[%s219 + $0x14d8] sm:$0xff]
        %v937 = vld [vmem:[%s219 + $0x14e0] sm:$0xff]
        %v938 = vld [vmem:[%s219 + $0x14e8] sm:$0xff]
        %v939 = vld [vmem:[%s219 + $0x14f0] sm:$0xff]
        %v940 = vld [vmem:[%s219 + $0x14f8] sm:$0xff]
        %v941 = vld [vmem:[%s219 + $0x1500] sm:$0xff]
        %v942 = vld [vmem:[%s219 + $0x1508] sm:$0xff]
        %v943 = vld [vmem:[%s219 + $0x1510] sm:$0xff]
        %v944 = vld [vmem:[%s219 + $0x1518] sm:$0xff]
        %v945 = vld [vmem:[%s219 + $0x1520] sm:$0xff]
        %v946 = vld [vmem:[%s219 + $0x1528] sm:$0xff]
        %v947 = vld [vmem:[%s219 + $0x1530] sm:$0xff]
        %v948 = vld [vmem:[%s219 + $0x1538] sm:$0xff]
        %v949 = vld [vmem:[%s219 + $0x1540] sm:$0xff]
        %v950 = vld [vmem:[%s219 + $0x1548] sm:$0xff]
        %v951 = vld [vmem:[%s219 + $0x1550] sm:$0xff]
        %v952 = vld [vmem:[%s219 + $0x1558] sm:$0xff]
        %v953 = vld [vmem:[%s219 + $0x1560] sm:$0xff]
        %v954 = vld [vmem:[%s219 + $0x1568] sm:$0xff]
        %v955 = vld [vmem:[%s219 + $0x1570] sm:$0xff]
        %v956 = vld [vmem:[%s219 + $0x1578] sm:$0xff]
        %v957 = vld [vmem:[%s219 + $0x1580] sm:$0xff]
        %v958 = vld [vmem:[%s219 + $0x1588] sm:$0xff]
        %v959 = vld [vmem:[%s219 + $0x1590] sm:$0xff]
        %v960 = vld [vmem:[%s219 + $0x1598] sm:$0xff]
        %v961 = vld [vmem:[%s219 + $0x15a0] sm:$0xff]
        %v962 = vld [vmem:[%s219 + $0x15a8] sm:$0xff]
        %v963 = vld [vmem:[%s219 + $0x15b0] sm:$0xff]
        %v964 = vld [vmem:[%s219 + $0x15b8] sm:$0xff]
        %v965 = vld [vmem:[%s219 + $0x15c0] sm:$0xff]
        %v966 = vld [vmem:[%s219 + $0x15c8] sm:$0xff]
        %v967 = vld [vmem:[%s219 + $0x15d0] sm:$0xff]
        %v968 = vld [vmem:[%s219 + $0x15d8] sm:$0xff]
        %v969 = vld [vmem:[%s219 + $0x15e0] sm:$0xff]
        %v970 = vld [vmem:[%s219 + $0x15e8] sm:$0xff]
        %v971 = vld [vmem:[%s219 + $0x15f0] sm:$0xff]
        %v972 = vld [vmem:[%s219 + $0x15f8] sm:$0xff]
        %v973 = vld [vmem:[%s219 + $0x1600] sm:$0xff]
        %v974 = vld [vmem:[%s219 + $0x1608] sm:$0xff]
        %v975 = vld [vmem:[%s219 + $0x1610] sm:$0xff]
        %v976 = vld [vmem:[%s219 + $0x1618] sm:$0xff]
        %v977 = vld [vmem:[%s219 + $0x1620] sm:$0xff]
        %v978 = vld [vmem:[%s219 + $0x1628] sm:$0xff]
        %v979 = vld [vmem:[%s219 + $0x1630] sm:$0xff]
        %v980 = vld [vmem:[%s219 + $0x1638] sm:$0xff]
        %v981 = vld [vmem:[%s219 + $0x1640] sm:$0xff]
        %v982 = vld [vmem:[%s219 + $0x1648] sm:$0xff]
        %v983 = vld [vmem:[%s219 + $0x1650] sm:$0xff]
        %v984 = vld [vmem:[%s219 + $0x1658] sm:$0xff]
        %v985 = vld [vmem:[%s219 + $0x1660] sm:$0xff]
        %v986 = vld [vmem:[%s219 + $0x1668] sm:$0xff]
        %v987 = vld [vmem:[%s219 + $0x1670] sm:$0xff]
        %v988 = vld [vmem:[%s219 + $0x1678] sm:$0xff]
        %v989 = vld [vmem:[%s219 + $0x1680] sm:$0xff]
        %v990 = vld [vmem:[%s219 + $0x1688] sm:$0xff]
        %v991 = vld [vmem:[%s219 + $0x1690] sm:$0xff]
        %v992 = vld [vmem:[%s219 + $0x1698] sm:$0xff]
        %v993 = vld [vmem:[%s219 + $0x16a0] sm:$0xff]
        %v994 = vld [vmem:[%s219 + $0x16a8] sm:$0xff]
        %v995 = vld [vmem:[%s219 + $0x16b0] sm:$0xff]
        %v996 = vld [vmem:[%s219 + $0x16b8] sm:$0xff]
        %v997 = vld [vmem:[%s219 + $0x16c0] sm:$0xff]
        %v998 = vld [vmem:[%s219 + $0x16c8] sm:$0xff]
        %v999 = vld [vmem:[%s219 + $0x16d0] sm:$0xff]
        %v1000 = vld [vmem:[%s219 + $0x16d8] sm:$0xff]
        %v1001 = vld [vmem:[%s219 + $0x16e0] sm:$0xff]
        %v1002 = vld [vmem:[%s219 + $0x16e8] sm:$0xff]
        %v1003 = vld [vmem:[%s219 + $0x16f0] sm:$0xff]
        %v1004 = vld [vmem:[%s219 + $0x16f8] sm:$0xff]
        %v1005 = vld [vmem:[%s219 + $0x1700] sm:$0xff]
        %v1006 = vld [vmem:[%s219 + $0x1708] sm:$0xff]
        %v1007 = vld [vmem:[%s219 + $0x1710] sm:$0xff]
        %v1008 = vld [vmem:[%s219 + $0x1718] sm:$0xff]
        %v1009 = vld [vmem:[%s219 + $0x1720] sm:$0xff]
        %v1010 = vld [vmem:[%s219 + $0x1728] sm:$0xff]
        %v1011 = vld [vmem:[%s219 + $0x1730] sm:$0xff]
        %v1012 = vld [vmem:[%s219 + $0x1738] sm:$0xff]
        %v1013 = vld [vmem:[%s219 + $0x1740] sm:$0xff]
        %v1014 = vld [vmem:[%s219 + $0x1748] sm:$0xff]
        %v1015 = vld [vmem:[%s219 + $0x1750] sm:$0xff]
        %v1016 = vld [vmem:[%s219 + $0x1758] sm:$0xff]
        %v1017 = vld [vmem:[%s219 + $0x1760] sm:$0xff]
        %v1018 = vld [vmem:[%s219 + $0x1768] sm:$0xff]
        %v1019 = vld [vmem:[%s219 + $0x1770] sm:$0xff]
        %v1020 = vld [vmem:[%s219 + $0x1778] sm:$0xff]
        %v1021 = vld [vmem:[%s219 + $0x1780] sm:$0xff]
        %v1022 = vld [vmem:[%s219 + $0x1788] sm:$0xff]
        %v1023 = vld [vmem:[%s219 + $0x1790] sm:$0xff]
        %v1024 = vld [vmem:[%s219 + $0x1798] sm:$0xff]
        %v1025 = vld [vmem:[%s219 + $0x17a0] sm:$0xff]
        %v1026 = vld [vmem:[%s219 + $0x17a8] sm:$0xff]
        %v1027 = vld [vmem:[%s219 + $0x17b0] sm:$0xff]
        %v1028 = vld [vmem:[%s219 + $0x17b8] sm:$0xff]
        %v1029 = vld [vmem:[%s219 + $0x17c0] sm:$0xff]
        %v1030 = vld [vmem:[%s219 + $0x17c8] sm:$0xff]
        %v1031 = vld [vmem:[%s219 + $0x17d0] sm:$0xff]
        %v1032 = vld [vmem:[%s219 + $0x17d8] sm:$0xff]
        %v1033 = vld [vmem:[%s219 + $0x17e0] sm:$0xff]
        %v1034 = vld [vmem:[%s219 + $0x17e8] sm:$0xff]
        %v1035 = vld [vmem:[%s219 + $0x17f0] sm:$0xff]
        %v1036 = vld [vmem:[%s219 + $0x17f8] sm:$0xff]
        %v1037 = vld [vmem:[%s219 + $0x1800] sm:$0xff]
        %v1038 = vld [vmem:[%s219 + $0x1808] sm:$0xff]
        %v1039 = vld [vmem:[%s219 + $0x1810] sm:$0xff]
        %v1040 = vld [vmem:[%s219 + $0x1818] sm:$0xff]
        %v1041 = vld [vmem:[%s219 + $0x1820] sm:$0xff]
        %v1042 = vld [vmem:[%s219 + $0x1828] sm:$0xff]
        %v1043 = vld [vmem:[%s219 + $0x1830] sm:$0xff]
        %v1044 = vld [vmem:[%s219 + $0x1838] sm:$0xff]
        %v1045 = vld [vmem:[%s219 + $0x1840] sm:$0xff]
        %v1046 = vld [vmem:[%s219 + $0x1848] sm:$0xff]
        %v1047 = vld [vmem:[%s219 + $0x1850] sm:$0xff]
        %v1048 = vld [vmem:[%s219 + $0x1858] sm:$0xff]
        %v1049 = vld [vmem:[%s219 + $0x1860] sm:$0xff]
        %v1050 = vld [vmem:[%s219 + $0x1868] sm:$0xff]
        %v1051 = vld [vmem:[%s219 + $0x1870] sm:$0xff]
        %v1052 = vld [vmem:[%s219 + $0x1878] sm:$0xff]
        %v1053 = vld [vmem:[%s219 + $0x1880] sm:$0xff]
        %v1054 = vld [vmem:[%s219 + $0x1888] sm:$0xff]
        %v1055 = vld [vmem:[%s219 + $0x1890] sm:$0xff]
        %v1056 = vld [vmem:[%s219 + $0x1898] sm:$0xff]
        %v1057 = vld [vmem:[%s219 + $0x18a0] sm:$0xff]
        %v1058 = vld [vmem:[%s219 + $0x18a8] sm:$0xff]
        %v1059 = vld [vmem:[%s219 + $0x18b0] sm:$0xff]
        %v1060 = vld [vmem:[%s219 + $0x18b8] sm:$0xff]
        %v1061 = vld [vmem:[%s219 + $0x18c0] sm:$0xff]
        %v1062 = vld [vmem:[%s219 + $0x18c8] sm:$0xff]
        %v1063 = vld [vmem:[%s219 + $0x18d0] sm:$0xff]
        %v1064 = vld [vmem:[%s219 + $0x18d8] sm:$0xff]
        %v1065 = vld [vmem:[%s219 + $0x18e0] sm:$0xff]
        %v1066 = vld [vmem:[%s219 + $0x18e8] sm:$0xff]
        %v1067 = vld [vmem:[%s219 + $0x18f0] sm:$0xff]
        %v1068 = vld [vmem:[%s219 + $0x18f8] sm:$0xff]
        %v1069 = vld [vmem:[%s219 + $0x1900] sm:$0xff]
        %v1070 = vld [vmem:[%s219 + $0x1908] sm:$0xff]
        %v1071 = vld [vmem:[%s219 + $0x1910] sm:$0xff]
        %v1072 = vld [vmem:[%s219 + $0x1918] sm:$0xff]
        %v1073 = vld [vmem:[%s219 + $0x1920] sm:$0xff]
        %v1074 = vld [vmem:[%s219 + $0x1928] sm:$0xff]
        %v1075 = vld [vmem:[%s219 + $0x1930] sm:$0xff]
        %v1076 = vld [vmem:[%s219 + $0x1938] sm:$0xff]
        %v1077 = vld [vmem:[%s219 + $0x1940] sm:$0xff]
        %v1078 = vld [vmem:[%s219 + $0x1948] sm:$0xff]
        %v1079 = vld [vmem:[%s219 + $0x1950] sm:$0xff]
        %v1080 = vld [vmem:[%s219 + $0x1958] sm:$0xff]
        %v1081 = vld [vmem:[%s219 + $0x1960] sm:$0xff]
        %v1082 = vld [vmem:[%s219 + $0x1968] sm:$0xff]
        %v1083 = vld [vmem:[%s219 + $0x1970] sm:$0xff]
        %v1084 = vld [vmem:[%s219 + $0x1978] sm:$0xff]
        %v1085 = vld [vmem:[%s219 + $0x1980] sm:$0xff]
        %v1086 = vld [vmem:[%s219 + $0x1988] sm:$0xff]
        %v1087 = vld [vmem:[%s219 + $0x1990] sm:$0xff]
        %v1088 = vld [vmem:[%s219 + $0x1998] sm:$0xff]
        %v1089 = vld [vmem:[%s219 + $0x19a0] sm:$0xff]
        %v1090 = vld [vmem:[%s219 + $0x19a8] sm:$0xff]
        %v1091 = vld [vmem:[%s219 + $0x19b0] sm:$0xff]
        %v1092 = vld [vmem:[%s219 + $0x19b8] sm:$0xff]
        %v1093 = vld [vmem:[%s219 + $0x19c0] sm:$0xff]
        %v1094 = vld [vmem:[%s219 + $0x19c8] sm:$0xff]
        %v1095 = vld [vmem:[%s219 + $0x19d0] sm:$0xff]
        %v1096 = vld [vmem:[%s219 + $0x19d8] sm:$0xff]
        %v1097 = vld [vmem:[%s219 + $0x19e0] sm:$0xff]
        %v1098 = vld [vmem:[%s219 + $0x19e8] sm:$0xff]
        %v1099 = vld [vmem:[%s219 + $0x19f0] sm:$0xff]
        %v1100 = vld [vmem:[%s219 + $0x19f8] sm:$0xff]
        %v1101 = vld [vmem:[%s219 + $0x1a00] sm:$0xff]
        %v1102 = vld [vmem:[%s219 + $0x1a08] sm:$0xff]
        %v1103 = vld [vmem:[%s219 + $0x1a10] sm:$0xff]
        %v1104 = vld [vmem:[%s219 + $0x1a18] sm:$0xff]
        %v1105 = vld [vmem:[%s219 + $0x1a20] sm:$0xff]
        %v1106 = vld [vmem:[%s219 + $0x1a28] sm:$0xff]
        %v1107 = vld [vmem:[%s219 + $0x1a30] sm:$0xff]
        %v1108 = vld [vmem:[%s219 + $0x1a38] sm:$0xff]
        %v1109 = vld [vmem:[%s219 + $0x1a40] sm:$0xff]
        %v1110 = vld [vmem:[%s219 + $0x1a48] sm:$0xff]
        %v1111 = vld [vmem:[%s219 + $0x1a50] sm:$0xff]
        %v1112 = vld [vmem:[%s219 + $0x1a58] sm:$0xff]
        %v1113 = vld [vmem:[%s219 + $0x1a60] sm:$0xff]
        %v1114 = vld [vmem:[%s219 + $0x1a68] sm:$0xff]
        %v1115 = vld [vmem:[%s219 + $0x1a70] sm:$0xff]
        %v1116 = vld [vmem:[%s219 + $0x1a78] sm:$0xff]
        %v1117 = vld [vmem:[%s219 + $0x1a80] sm:$0xff]
        %v1118 = vld [vmem:[%s219 + $0x1a88] sm:$0xff]
        %v1119 = vld [vmem:[%s219 + $0x1a90] sm:$0xff]
        %v1120 = vld [vmem:[%s219 + $0x1a98] sm:$0xff]
        %v1121 = vld [vmem:[%s219 + $0x1aa0] sm:$0xff]
        %v1122 = vld [vmem:[%s219 + $0x1aa8] sm:$0xff]
        %v1123 = vld [vmem:[%s219 + $0x1ab0] sm:$0xff]
        %v1124 = vld [vmem:[%s219 + $0x1ab8] sm:$0xff]
        %v1125 = vld [vmem:[%s219 + $0x1ac0] sm:$0xff]
        %v1126 = vld [vmem:[%s219 + $0x1ac8] sm:$0xff]
        %v1127 = vld [vmem:[%s219 + $0x1ad0] sm:$0xff]
        %v1128 = vld [vmem:[%s219 + $0x1ad8] sm:$0xff]
        %v1129 = vld [vmem:[%s219 + $0x1ae0] sm:$0xff]
        %v1130 = vld [vmem:[%s219 + $0x1ae8] sm:$0xff]
        %v1131 = vld [vmem:[%s219 + $0x1af0] sm:$0xff]
        %v1132 = vld [vmem:[%s219 + $0x1af8] sm:$0xff]
        %v1133 = vld [vmem:[%s219 + $0x1b00] sm:$0xff]
        %v1134 = vld [vmem:[%s219 + $0x1b08] sm:$0xff]
        %v1135 = vld [vmem:[%s219 + $0x1b10] sm:$0xff]
        %v1136 = vld [vmem:[%s219 + $0x1b18] sm:$0xff]
        %v1137 = vld [vmem:[%s219 + $0x1b20] sm:$0xff]
        %v1138 = vld [vmem:[%s219 + $0x1b28] sm:$0xff]
        %v1139 = vld [vmem:[%s219 + $0x1b30] sm:$0xff]
        %v1140 = vld [vmem:[%s219 + $0x1b38] sm:$0xff]
        %v1141 = vld [vmem:[%s219 + $0x1b40] sm:$0xff]
        %v1142 = vld [vmem:[%s219 + $0x1b48] sm:$0xff]
        %v1143 = vld [vmem:[%s219 + $0x1b50] sm:$0xff]
        %v1144 = vld [vmem:[%s219 + $0x1b58] sm:$0xff]
        %v1145 = vld [vmem:[%s219 + $0x1b60] sm:$0xff]
        %v1146 = vld [vmem:[%s219 + $0x1b68] sm:$0xff]
        %v1147 = vld [vmem:[%s219 + $0x1b70] sm:$0xff]
        %v1148 = vld [vmem:[%s219 + $0x1b78] sm:$0xff]
        %v1149 = vld [vmem:[%s219 + $0x1b80] sm:$0xff]
        %v1150 = vld [vmem:[%s219 + $0x1b88] sm:$0xff]
        %v1151 = vld [vmem:[%s219 + $0x1b90] sm:$0xff]
        %v1152 = vld [vmem:[%s219 + $0x1b98] sm:$0xff]
        %v1153 = vld [vmem:[%s219 + $0x1ba0] sm:$0xff]
        %v1154 = vld [vmem:[%s219 + $0x1ba8] sm:$0xff]
        %v1155 = vld [vmem:[%s219 + $0x1bb0] sm:$0xff]
        %v1156 = vld [vmem:[%s219 + $0x1bb8] sm:$0xff]
        %v1157 = vld [vmem:[%s219 + $0x1bc0] sm:$0xff]
        %v1158 = vld [vmem:[%s219 + $0x1bc8] sm:$0xff]
        %v1159 = vld [vmem:[%s219 + $0x1bd0] sm:$0xff]
        %v1160 = vld [vmem:[%s219 + $0x1bd8] sm:$0xff]
        %v1161 = vld [vmem:[%s219 + $0x1be0] sm:$0xff]
        %v1162 = vld [vmem:[%s219 + $0x1be8] sm:$0xff]
        %v1163 = vld [vmem:[%s219 + $0x1bf0] sm:$0xff]
        %v1164 = vld [vmem:[%s219 + $0x1bf8] sm:$0xff]
        %v1165 = vld [vmem:[%s219 + $0x1c00] sm:$0xff]
        %v1166 = vld [vmem:[%s219 + $0x1c08] sm:$0xff]
        %v1167 = vld [vmem:[%s219 + $0x1c10] sm:$0xff]
        %v1168 = vld [vmem:[%s219 + $0x1c18] sm:$0xff]
        %v1169 = vld [vmem:[%s219 + $0x1c20] sm:$0xff]
        %v1170 = vld [vmem:[%s219 + $0x1c28] sm:$0xff]
        %v1171 = vld [vmem:[%s219 + $0x1c30] sm:$0xff]
        %v1172 = vld [vmem:[%s219 + $0x1c38] sm:$0xff]
        %v1173 = vld [vmem:[%s219 + $0x1c40] sm:$0xff]
        %v1174 = vld [vmem:[%s219 + $0x1c48] sm:$0xff]
        %v1175 = vld [vmem:[%s219 + $0x1c50] sm:$0xff]
        %v1176 = vld [vmem:[%s219 + $0x1c58] sm:$0xff]
        %v1177 = vld [vmem:[%s219 + $0x1c60] sm:$0xff]
        %v1178 = vld [vmem:[%s219 + $0x1c68] sm:$0xff]
        %v1179 = vld [vmem:[%s219 + $0x1c70] sm:$0xff]
        %v1180 = vld [vmem:[%s219 + $0x1c78] sm:$0xff]
        %v1181 = vld [vmem:[%s219 + $0x1c80] sm:$0xff]
        %v1182 = vld [vmem:[%s219 + $0x1c88] sm:$0xff]
        %v1183 = vld [vmem:[%s219 + $0x1c90] sm:$0xff]
        %v1184 = vld [vmem:[%s219 + $0x1c98] sm:$0xff]
        %v1185 = vld [vmem:[%s219 + $0x1ca0] sm:$0xff]
        %v1186 = vld [vmem:[%s219 + $0x1ca8] sm:$0xff]
        %v1187 = vld [vmem:[%s219 + $0x1cb0] sm:$0xff]
        %v1188 = vld [vmem:[%s219 + $0x1cb8] sm:$0xff]
        %v1189 = vld [vmem:[%s219 + $0x1cc0] sm:$0xff]
        %v1190 = vld [vmem:[%s219 + $0x1cc8] sm:$0xff]
        %v1191 = vld [vmem:[%s219 + $0x1cd0] sm:$0xff]
        %v1192 = vld [vmem:[%s219 + $0x1cd8] sm:$0xff]
        %v1193 = vld [vmem:[%s219 + $0x1ce0] sm:$0xff]
        %v1194 = vld [vmem:[%s219 + $0x1ce8] sm:$0xff]
        %v1195 = vld [vmem:[%s219 + $0x1cf0] sm:$0xff]
        %v1196 = vld [vmem:[%s219 + $0x1cf8] sm:$0xff]
        %v1197 = vld [vmem:[%s219 + $0x1d00] sm:$0xff]
        %v1198 = vld [vmem:[%s219 + $0x1d08] sm:$0xff]
        %v1199 = vld [vmem:[%s219 + $0x1d10] sm:$0xff]
        %v1200 = vld [vmem:[%s219 + $0x1d18] sm:$0xff]
        %v1201 = vld [vmem:[%s219 + $0x1d20] sm:$0xff]
        %v1202 = vld [vmem:[%s219 + $0x1d28] sm:$0xff]
        %v1203 = vld [vmem:[%s219 + $0x1d30] sm:$0xff]
        %v1204 = vld [vmem:[%s219 + $0x1d38] sm:$0xff]
        %v1205 = vld [vmem:[%s219 + $0x1d40] sm:$0xff]
        %v1206 = vld [vmem:[%s219 + $0x1d48] sm:$0xff]
        %v1207 = vld [vmem:[%s219 + $0x1d50] sm:$0xff]
        %v1208 = vld [vmem:[%s219 + $0x1d58] sm:$0xff]
        %v1209 = vld [vmem:[%s219 + $0x1d60] sm:$0xff]
        %v1210 = vld [vmem:[%s219 + $0x1d68] sm:$0xff]
        %v1211 = vld [vmem:[%s219 + $0x1d70] sm:$0xff]
        %v1212 = vld [vmem:[%s219 + $0x1d78] sm:$0xff]
        %v1213 = vld [vmem:[%s219 + $0x1d80] sm:$0xff]
        %v1214 = vld [vmem:[%s219 + $0x1d88] sm:$0xff]
        %v1215 = vld [vmem:[%s219 + $0x1d90] sm:$0xff]
        %v1216 = vld [vmem:[%s219 + $0x1d98] sm:$0xff]
        %v1217 = vld [vmem:[%s219 + $0x1da0] sm:$0xff]
        %v1218 = vld [vmem:[%s219 + $0x1da8] sm:$0xff]
        %v1219 = vld [vmem:[%s219 + $0x1db0] sm:$0xff]
        %v1220 = vld [vmem:[%s219 + $0x1db8] sm:$0xff]
        %v1221 = vld [vmem:[%s219 + $0x1dc0] sm:$0xff]
        %v1222 = vld [vmem:[%s219 + $0x1dc8] sm:$0xff]
        %v1223 = vld [vmem:[%s219 + $0x1dd0] sm:$0xff]
        %v1224 = vld [vmem:[%s219 + $0x1dd8] sm:$0xff]
        %v1225 = vld [vmem:[%s219 + $0x1de0] sm:$0xff]
        %v1226 = vld [vmem:[%s219 + $0x1de8] sm:$0xff]
        %v1227 = vld [vmem:[%s219 + $0x1df0] sm:$0xff]
        %v1228 = vld [vmem:[%s219 + $0x1df8] sm:$0xff]
        %v1229 = vld [vmem:[%s219 + $0x1e00] sm:$0xff]
        %v1230 = vld [vmem:[%s219 + $0x1e08] sm:$0xff]
        %v1231 = vld [vmem:[%s219 + $0x1e10] sm:$0xff]
        %v1232 = vld [vmem:[%s219 + $0x1e18] sm:$0xff]
        %v1233 = vld [vmem:[%s219 + $0x1e20] sm:$0xff]
        %v1234 = vld [vmem:[%s219 + $0x1e28] sm:$0xff]
        %v1235 = vld [vmem:[%s219 + $0x1e30] sm:$0xff]
        %v1236 = vld [vmem:[%s219 + $0x1e38] sm:$0xff]
        %v1237 = vld [vmem:[%s219 + $0x1e40] sm:$0xff]
        %v1238 = vld [vmem:[%s219 + $0x1e48] sm:$0xff]
        %v1239 = vld [vmem:[%s219 + $0x1e50] sm:$0xff]
        %v1240 = vld [vmem:[%s219 + $0x1e58] sm:$0xff]
        %v1241 = vld [vmem:[%s219 + $0x1e60] sm:$0xff]
        %v1242 = vld [vmem:[%s219 + $0x1e68] sm:$0xff]
        %v1243 = vld [vmem:[%s219 + $0x1e70] sm:$0xff]
        %v1244 = vld [vmem:[%s219 + $0x1e78] sm:$0xff]
        %v1245 = vld [vmem:[%s219 + $0x1e80] sm:$0xff]
        %v1246 = vld [vmem:[%s219 + $0x1e88] sm:$0xff]
        %v1247 = vld [vmem:[%s219 + $0x1e90] sm:$0xff]
        %v1248 = vld [vmem:[%s219 + $0x1e98] sm:$0xff]
        %v1249 = vld [vmem:[%s219 + $0x1ea0] sm:$0xff]
        %v1250 = vld [vmem:[%s219 + $0x1ea8] sm:$0xff]
        %v1251 = vld [vmem:[%s219 + $0x1eb0] sm:$0xff]
        %v1252 = vld [vmem:[%s219 + $0x1eb8] sm:$0xff]
        %v1253 = vld [vmem:[%s219 + $0x1ec0] sm:$0xff]
        %v1254 = vld [vmem:[%s219 + $0x1ec8] sm:$0xff]
        %v1255 = vld [vmem:[%s219 + $0x1ed0] sm:$0xff]
        %v1256 = vld [vmem:[%s219 + $0x1ed8] sm:$0xff]
        %v1257 = vld [vmem:[%s219 + $0x1ee0] sm:$0xff]
        %v1258 = vld [vmem:[%s219 + $0x1ee8] sm:$0xff]
        %v1259 = vld [vmem:[%s219 + $0x1ef0] sm:$0xff]
        %v1260 = vld [vmem:[%s219 + $0x1ef8] sm:$0xff]
        %v1261 = vld [vmem:[%s219 + $0x1f00] sm:$0xff]
        %v1262 = vld [vmem:[%s219 + $0x1f08] sm:$0xff]
        %v1263 = vld [vmem:[%s219 + $0x1f10] sm:$0xff]
        %v1264 = vld [vmem:[%s219 + $0x1f18] sm:$0xff]
        %v1265 = vld [vmem:[%s219 + $0x1f20] sm:$0xff]
        %v1266 = vld [vmem:[%s219 + $0x1f28] sm:$0xff]
        %v1267 = vld [vmem:[%s219 + $0x1f30] sm:$0xff]
        %v1268 = vld [vmem:[%s219 + $0x1f38] sm:$0xff]
        %v1269 = vld [vmem:[%s219 + $0x1f40] sm:$0xff]
        %v1270 = vld [vmem:[%s219 + $0x1f48] sm:$0xff]
        %v1271 = vld [vmem:[%s219 + $0x1f50] sm:$0xff]
        %v1272 = vld [vmem:[%s219 + $0x1f58] sm:$0xff]
        %v1273 = vld [vmem:[%s219 + $0x1f60] sm:$0xff]
        %v1274 = vld [vmem:[%s219 + $0x1f68] sm:$0xff]
        %v1275 = vld [vmem:[%s219 + $0x1f70] sm:$0xff]
        %v1276 = vld [vmem:[%s219 + $0x1f78] sm:$0xff]
        %v1277 = vld [vmem:[%s219 + $0x1f80] sm:$0xff]
        %v1278 = vld [vmem:[%s219 + $0x1f88] sm:$0xff]
        %v1279 = vld [vmem:[%s219 + $0x1f90] sm:$0xff]
        %v1280 = vld [vmem:[%s219 + $0x1f98] sm:$0xff]
        %v1281 = vld [vmem:[%s219 + $0x1fa0] sm:$0xff]
        %v1282 = vld [vmem:[%s219 + $0x1fa8] sm:$0xff]
        %v1283 = vld [vmem:[%s219 + $0x1fb0] sm:$0xff]
        %v1284 = vld [vmem:[%s219 + $0x1fb8] sm:$0xff]
        %v1285 = vld [vmem:[%s219 + $0x1fc0] sm:$0xff]
        %v1286 = vld [vmem:[%s219 + $0x1fc8] sm:$0xff]
        %v1287 = vld [vmem:[%s219 + $0x1fd0] sm:$0xff]
        %v1288 = vld [vmem:[%s219 + $0x1fd8] sm:$0xff]
        %v1289 = vld [vmem:[%s219 + $0x1fe0] sm:$0xff]
        %v1290 = vld [vmem:[%s219 + $0x1fe8] sm:$0xff]
        %v1291 = vld [vmem:[%s219 + $0x1ff0] sm:$0xff]
        %v1292 = vld [vmem:[%s219 + $0x1ff8] sm:$0xff]
        %v1293 = vld [vmem:[%s219 + $0x2000] sm:$0xff]
        %v1294 = vld [vmem:[%s219 + $0x2008] sm:$0xff]
        %v1295 = vld [vmem:[%s219 + $0x2010] sm:$0xff]
        %v1296 = vld [vmem:[%s219 + $0x2018] sm:$0xff]
        %v1297 = vld [vmem:[%s219 + $0x2020] sm:$0xff]
        %v1298 = vld [vmem:[%s219 + $0x2028] sm:$0xff]
        %v1299 = vld [vmem:[%s219 + $0x2030] sm:$0xff]
        %v1300 = vld [vmem:[%s219 + $0x2038] sm:$0xff]
        %v1301 = vld [vmem:[%s219 + $0x2040] sm:$0xff]
        %v1302 = vld [vmem:[%s219 + $0x2048] sm:$0xff]
        %v1303 = vld [vmem:[%s219 + $0x2050] sm:$0xff]
        %v1304 = vld [vmem:[%s219 + $0x2058] sm:$0xff]
        %v1305 = vld [vmem:[%s219 + $0x2060] sm:$0xff]
        %v1306 = vld [vmem:[%s219 + $0x2068] sm:$0xff]
        %v1307 = vld [vmem:[%s219 + $0x2070] sm:$0xff]
        %v1308 = vld [vmem:[%s219 + $0x2078] sm:$0xff]
        %v1309 = vld [vmem:[%s219 + $0x2080] sm:$0xff]
        %v1310 = vld [vmem:[%s219 + $0x2088] sm:$0xff]
        %v1311 = vld [vmem:[%s219 + $0x2090] sm:$0xff]
        %v1312 = vld [vmem:[%s219 + $0x2098] sm:$0xff]
        %v1313 = vld [vmem:[%s219 + $0x20a0] sm:$0xff]
        %v1314 = vld [vmem:[%s219 + $0x20a8] sm:$0xff]
        %v1315 = vld [vmem:[%s219 + $0x20b0] sm:$0xff]
        %v1316 = vld [vmem:[%s219 + $0x20b8] sm:$0xff]
        %v1317 = vld [vmem:[%s219 + $0x20c0] sm:$0xff]
        %v1318 = vld [vmem:[%s219 + $0x20c8] sm:$0xff]
        %v1319 = vld [vmem:[%s219 + $0x20d0] sm:$0xff]
        %v1320 = vld [vmem:[%s219 + $0x20d8] sm:$0xff]
        %v1321 = vld [vmem:[%s219 + $0x20e0] sm:$0xff]
        %v1322 = vld [vmem:[%s219 + $0x20e8] sm:$0xff]
        %v1323 = vld [vmem:[%s219 + $0x20f0] sm:$0xff]
        %v1324 = vld [vmem:[%s219 + $0x20f8] sm:$0xff]
        %v1325 = vld [vmem:[%s219 + $0x2100] sm:$0xff]
        %v1326 = vld [vmem:[%s219 + $0x2108] sm:$0xff]
        %v1327 = vld [vmem:[%s219 + $0x2110] sm:$0xff]
        %v1328 = vld [vmem:[%s219 + $0x2118] sm:$0xff]
        %v1329 = vld [vmem:[%s219 + $0x2120] sm:$0xff]
        %v1330 = vld [vmem:[%s219 + $0x2128] sm:$0xff]
        %v1331 = vld [vmem:[%s219 + $0x2130] sm:$0xff]
        %v1332 = vld [vmem:[%s219 + $0x2138] sm:$0xff]
        %v1333 = vld [vmem:[%s219 + $0x2140] sm:$0xff]
        %v1334 = vld [vmem:[%s219 + $0x2148] sm:$0xff]
        %v1335 = vld [vmem:[%s219 + $0x2150] sm:$0xff]
        %v1336 = vld [vmem:[%s219 + $0x2158] sm:$0xff]
        %v1337 = vld [vmem:[%s219 + $0x2160] sm:$0xff]
        %v1338 = vld [vmem:[%s219 + $0x2168] sm:$0xff]
        %v1339 = vld [vmem:[%s219 + $0x2170] sm:$0xff]
        %v1340 = vld [vmem:[%s219 + $0x2178] sm:$0xff]
        %v1341 = vld [vmem:[%s219 + $0x2180] sm:$0xff]
        %v1342 = vld [vmem:[%s219 + $0x2188] sm:$0xff]
        %v1343 = vld [vmem:[%s219 + $0x2190] sm:$0xff]
        %v1344 = vld [vmem:[%s219 + $0x2198] sm:$0xff]
        %v1345 = vld [vmem:[%s219 + $0x21a0] sm:$0xff]
        %v1346 = vld [vmem:[%s219 + $0x21a8] sm:$0xff]
        %v1347 = vld [vmem:[%s219 + $0x21b0] sm:$0xff]
        %v1348 = vld [vmem:[%s219 + $0x21b8] sm:$0xff]
        %v1349 = vld [vmem:[%s219 + $0x21c0] sm:$0xff]
        %v1350 = vld [vmem:[%s219 + $0x21c8] sm:$0xff]
        %v1351 = vld [vmem:[%s219 + $0x21d0] sm:$0xff]
        %v1352 = vld [vmem:[%s219 + $0x21d8] sm:$0xff]
        %v1353 = vld [vmem:[%s219 + $0x21e0] sm:$0xff]
        %v1354 = vld [vmem:[%s219 + $0x21e8] sm:$0xff]
        %v1355 = vld [vmem:[%s219 + $0x21f0] sm:$0xff]
        %v1356 = vld [vmem:[%s219 + $0x21f8] sm:$0xff]
        %v1357 = vld [vmem:[%s219 + $0x2200] sm:$0xff]
        %v1358 = vld [vmem:[%s219 + $0x2208] sm:$0xff]
        %v1359 = vld [vmem:[%s219 + $0x2210] sm:$0xff]
        %v1360 = vld [vmem:[%s219 + $0x2218] sm:$0xff]
        %v1361 = vld [vmem:[%s219 + $0x2220] sm:$0xff]
        %v1362 = vld [vmem:[%s219 + $0x2228] sm:$0xff]
        %v1363 = vld [vmem:[%s219 + $0x2230] sm:$0xff]
        %v1364 = vld [vmem:[%s219 + $0x2238] sm:$0xff]
        %v1365 = vld [vmem:[%s219 + $0x2240] sm:$0xff]
        %v1366 = vld [vmem:[%s219 + $0x2248] sm:$0xff]
        %v1367 = vld [vmem:[%s219 + $0x2250] sm:$0xff]
        %v1368 = vld [vmem:[%s219 + $0x2258] sm:$0xff]
        %v1369 = vld [vmem:[%s219 + $0x2260] sm:$0xff]
        %v1370 = vld [vmem:[%s219 + $0x2268] sm:$0xff]
        %v1371 = vld [vmem:[%s219 + $0x2270] sm:$0xff]
        %v1372 = vld [vmem:[%s219 + $0x2278] sm:$0xff]
        %v1373 = vld [vmem:[%s219 + $0x2280] sm:$0xff]
        %v1374 = vld [vmem:[%s219 + $0x2288] sm:$0xff]
        %v1375 = vld [vmem:[%s219 + $0x2290] sm:$0xff]
        %v1376 = vld [vmem:[%s219 + $0x2298] sm:$0xff]
        %v1377 = vld [vmem:[%s219 + $0x22a0] sm:$0xff]
        %v1378 = vld [vmem:[%s219 + $0x22a8] sm:$0xff]
        %v1379 = vld [vmem:[%s219 + $0x22b0] sm:$0xff]
        %v1380 = vld [vmem:[%s219 + $0x22b8] sm:$0xff]
        %v1381 = vld [vmem:[%s219 + $0x22c0] sm:$0xff]
        %v1382 = vld [vmem:[%s219 + $0x22c8] sm:$0xff]
        %v1383 = vld [vmem:[%s219 + $0x22d0] sm:$0xff]
        %v1384 = vld [vmem:[%s219 + $0x22d8] sm:$0xff]
        %v1385 = vld [vmem:[%s219 + $0x22e0] sm:$0xff]
        %v1386 = vld [vmem:[%s219 + $0x22e8] sm:$0xff]
        %v1387 = vld [vmem:[%s219 + $0x22f0] sm:$0xff]
        %v1388 = vld [vmem:[%s219 + $0x22f8] sm:$0xff]
        %v1389 = vld [vmem:[%s219 + $0x2300] sm:$0xff]
        %v1390 = vld [vmem:[%s219 + $0x2308] sm:$0xff]
        %v1391 = vld [vmem:[%s219 + $0x2310] sm:$0xff]
        %v1392 = vld [vmem:[%s219 + $0x2318] sm:$0xff]
        %v1393 = vld [vmem:[%s219 + $0x2320] sm:$0xff]
        %v1394 = vld [vmem:[%s219 + $0x2328] sm:$0xff]
        %v1395 = vld [vmem:[%s219 + $0x2330] sm:$0xff]
        %v1396 = vld [vmem:[%s219 + $0x2338] sm:$0xff]
        %v1397 = vld [vmem:[%s219 + $0x2340] sm:$0xff]
        %v1398 = vld [vmem:[%s219 + $0x2348] sm:$0xff]
        %v1399 = vld [vmem:[%s219 + $0x2350] sm:$0xff]
        %v1400 = vld [vmem:[%s219 + $0x2358] sm:$0xff]
        %v1401 = vld [vmem:[%s219 + $0x2360] sm:$0xff]
        %v1402 = vld [vmem:[%s219 + $0x2368] sm:$0xff]
        %v1403 = vld [vmem:[%s219 + $0x2370] sm:$0xff]
        %v1404 = vld [vmem:[%s219 + $0x2378] sm:$0xff]
        %v1405 = vld [vmem:[%s219 + $0x2380] sm:$0xff]
        %v1406 = vld [vmem:[%s219 + $0x2388] sm:$0xff]
        %v1407 = vld [vmem:[%s219 + $0x2390] sm:$0xff]
        %v1408 = vld [vmem:[%s219 + $0x2398] sm:$0xff]
        %v1409 = vld [vmem:[%s219 + $0x23a0] sm:$0xff]
        %v1410 = vld [vmem:[%s219 + $0x23a8] sm:$0xff]
        %v1411 = vld [vmem:[%s219 + $0x23b0] sm:$0xff]
        %v1412 = vld [vmem:[%s219 + $0x23b8] sm:$0xff]
        %v1413 = vld [vmem:[%s219 + $0x23c0] sm:$0xff]
        %v1414 = vld [vmem:[%s219 + $0x23c8] sm:$0xff]
        %v1415 = vld [vmem:[%s219 + $0x23d0] sm:$0xff]
        %v1416 = vld [vmem:[%s219 + $0x23d8] sm:$0xff]
        %v1417 = vld [vmem:[%s219 + $0x23e0] sm:$0xff]
        %v1418 = vld [vmem:[%s219 + $0x23e8] sm:$0xff]
        %v1419 = vld [vmem:[%s219 + $0x23f0] sm:$0xff]
        %v1420 = vld [vmem:[%s219 + $0x23f8] sm:$0xff]
        %v1421 = vld [vmem:[%s219 + $0x2400] sm:$0xff]
        %v1422 = vld [vmem:[%s219 + $0x2408] sm:$0xff]
        %v1423 = vld [vmem:[%s219 + $0x2410] sm:$0xff]
        %v1424 = vld [vmem:[%s219 + $0x2418] sm:$0xff]
        %v1425 = vld [vmem:[%s219 + $0x2420] sm:$0xff]
        %v1426 = vld [vmem:[%s219 + $0x2428] sm:$0xff]
        %v1427 = vld [vmem:[%s219 + $0x2430] sm:$0xff]
        %v1428 = vld [vmem:[%s219 + $0x2438] sm:$0xff]
        %v1429 = vld [vmem:[%s219 + $0x2440] sm:$0xff]
        %v1430 = vld [vmem:[%s219 + $0x2448] sm:$0xff]
        %v1431 = vld [vmem:[%s219 + $0x2450] sm:$0xff]
        %v1432 = vld [vmem:[%s219 + $0x2458] sm:$0xff]
        %v1433 = vld [vmem:[%s219 + $0x2460] sm:$0xff]
        %v1434 = vld [vmem:[%s219 + $0x2468] sm:$0xff]
        %v1435 = vld [vmem:[%s219 + $0x2470] sm:$0xff]
        %v1436 = vld [vmem:[%s219 + $0x2478] sm:$0xff]
        %v1437 = vld [vmem:[%s219 + $0x2480] sm:$0xff]
        %v1438 = vld [vmem:[%s219 + $0x2488] sm:$0xff]
        %v1439 = vld [vmem:[%s219 + $0x2490] sm:$0xff]
        %v1440 = vld [vmem:[%s219 + $0x2498] sm:$0xff]
        %v1441 = vld [vmem:[%s219 + $0x24a0] sm:$0xff]
        %v1442 = vld [vmem:[%s219 + $0x24a8] sm:$0xff]
        %v1443 = vld [vmem:[%s219 + $0x24b0] sm:$0xff]
        %v1444 = vld [vmem:[%s219 + $0x24b8] sm:$0xff]
        %v1445 = vld [vmem:[%s219 + $0x24c0] sm:$0xff]
        %v1446 = vld [vmem:[%s219 + $0x24c8] sm:$0xff]
        %v1447 = vld [vmem:[%s219 + $0x24d0] sm:$0xff]
        %v1448 = vld [vmem:[%s219 + $0x24d8] sm:$0xff]
        %v1449 = vld [vmem:[%s219 + $0x24e0] sm:$0xff]
        %v1450 = vld [vmem:[%s219 + $0x24e8] sm:$0xff]
        %v1451 = vld [vmem:[%s219 + $0x24f0] sm:$0xff]
        %v1452 = vld [vmem:[%s219 + $0x24f8] sm:$0xff]
        %v1453 = vld [vmem:[%s219 + $0x2500] sm:$0xff]
        %v1454 = vld [vmem:[%s219 + $0x2508] sm:$0xff]
        %v1455 = vld [vmem:[%s219 + $0x2510] sm:$0xff]
        %v1456 = vld [vmem:[%s219 + $0x2518] sm:$0xff]
        %v1457 = vld [vmem:[%s219 + $0x2520] sm:$0xff]
        %v1458 = vld [vmem:[%s219 + $0x2528] sm:$0xff]
        %v1459 = vld [vmem:[%s219 + $0x2530] sm:$0xff]
        %v1460 = vld [vmem:[%s219 + $0x2538] sm:$0xff]
        %v1461 = vld [vmem:[%s219 + $0x2540] sm:$0xff]
        %v1462 = vld [vmem:[%s219 + $0x2548] sm:$0xff]
        %v1463 = vld [vmem:[%s219 + $0x2550] sm:$0xff]
        %v1464 = vld [vmem:[%s219 + $0x2558] sm:$0xff]
        %v1465 = vld [vmem:[%s219 + $0x2560] sm:$0xff]
        %v1466 = vld [vmem:[%s219 + $0x2568] sm:$0xff]
        %v1467 = vld [vmem:[%s219 + $0x2570] sm:$0xff]
        %v1468 = vld [vmem:[%s219 + $0x2578] sm:$0xff]
        %v1469 = vld [vmem:[%s219 + $0x2580] sm:$0xff]
        %v1470 = vld [vmem:[%s219 + $0x2588] sm:$0xff]
        %v1471 = vld [vmem:[%s219 + $0x2590] sm:$0xff]
        %v1472 = vld [vmem:[%s219 + $0x2598] sm:$0xff]
        %v1473 = vld [vmem:[%s219 + $0x25a0] sm:$0xff]
        %v1474 = vld [vmem:[%s219 + $0x25a8] sm:$0xff]
        %v1475 = vld [vmem:[%s219 + $0x25b0] sm:$0xff]
        %v1476 = vld [vmem:[%s219 + $0x25b8] sm:$0xff]
        %v1477 = vld [vmem:[%s219 + $0x25c0] sm:$0xff]
        %v1478 = vld [vmem:[%s219 + $0x25c8] sm:$0xff]
        %v1479 = vld [vmem:[%s219 + $0x25d0] sm:$0xff]
        %v1480 = vld [vmem:[%s219 + $0x25d8] sm:$0xff]
        %v1481 = vld [vmem:[%s219 + $0x25e0] sm:$0xff]
        %v1482 = vld [vmem:[%s219 + $0x25e8] sm:$0xff]
        %v1483 = vld [vmem:[%s219 + $0x25f0] sm:$0xff]
        %v1484 = vld [vmem:[%s219 + $0x25f8] sm:$0xff]
        %v1485 = vld [vmem:[%s219 + $0x2600] sm:$0xff]
        %v1486 = vld [vmem:[%s219 + $0x2608] sm:$0xff]
        %v1487 = vld [vmem:[%s219 + $0x2610] sm:$0xff]
        %v1488 = vld [vmem:[%s219 + $0x2618] sm:$0xff]
        %v1489 = vld [vmem:[%s219 + $0x2620] sm:$0xff]
        %v1490 = vld [vmem:[%s219 + $0x2628] sm:$0xff]
        %v1491 = vld [vmem:[%s219 + $0x2630] sm:$0xff]
        %v1492 = vld [vmem:[%s219 + $0x2638] sm:$0xff]
        %v1493 = vld [vmem:[%s219 + $0x2640] sm:$0xff]
        %v1494 = vld [vmem:[%s219 + $0x2648] sm:$0xff]
        %v1495 = vld [vmem:[%s219 + $0x2650] sm:$0xff]
        %v1496 = vld [vmem:[%s219 + $0x2658] sm:$0xff]
        %v1497 = vld [vmem:[%s219 + $0x2660] sm:$0xff]
        %v1498 = vld [vmem:[%s219 + $0x2668] sm:$0xff]
        %v1499 = vld [vmem:[%s219 + $0x2670] sm:$0xff]
        %v1500 = vld [vmem:[%s219 + $0x2678] sm:$0xff]
        %v1501 = vld [vmem:[%s219 + $0x2680] sm:$0xff]
        %v1502 = vld [vmem:[%s219 + $0x2688] sm:$0xff]
        %v1503 = vld [vmem:[%s219 + $0x2690] sm:$0xff]
        %v1504 = vld [vmem:[%s219 + $0x2698] sm:$0xff]
        %v1505 = vld [vmem:[%s219 + $0x26a0] sm:$0xff]
        %v1506 = vld [vmem:[%s219 + $0x26a8] sm:$0xff]
        %v1507 = vld [vmem:[%s219 + $0x26b0] sm:$0xff]
        %v1508 = vld [vmem:[%s219 + $0x26b8] sm:$0xff]
        %v1509 = vld [vmem:[%s219 + $0x26c0] sm:$0xff]
        %v1510 = vld [vmem:[%s219 + $0x26c8] sm:$0xff]
        %v1511 = vld [vmem:[%s219 + $0x26d0] sm:$0xff]
        %v1512 = vld [vmem:[%s219 + $0x26d8] sm:$0xff]
        %v1513 = vld [vmem:[%s219 + $0x26e0] sm:$0xff]
        %v1514 = vld [vmem:[%s219 + $0x26e8] sm:$0xff]
        %v1515 = vld [vmem:[%s219 + $0x26f0] sm:$0xff]
        %v1516 = vld [vmem:[%s219 + $0x26f8] sm:$0xff]
        %v1517 = vld [vmem:[%s219 + $0x2700] sm:$0xff]
        %v1518 = vld [vmem:[%s219 + $0x2708] sm:$0xff]
        %v1519 = vld [vmem:[%s219 + $0x2710] sm:$0xff]
        %v1520 = vld [vmem:[%s219 + $0x2718] sm:$0xff]
        %v1521 = vld [vmem:[%s219 + $0x2720] sm:$0xff]
        %v1522 = vld [vmem:[%s219 + $0x2728] sm:$0xff]
        %v1523 = vld [vmem:[%s219 + $0x2730] sm:$0xff]
        %v1524 = vld [vmem:[%s219 + $0x2738] sm:$0xff]
        %v1525 = vld [vmem:[%s219 + $0x2740] sm:$0xff]
        %v1526 = vld [vmem:[%s219 + $0x2748] sm:$0xff]
        %v1527 = vld [vmem:[%s219 + $0x2750] sm:$0xff]
        %v1528 = vld [vmem:[%s219 + $0x2758] sm:$0xff]
        %v1529 = vld [vmem:[%s219 + $0x2760] sm:$0xff]
        %v1530 = vld [vmem:[%s219 + $0x2768] sm:$0xff]
        %v1531 = vld [vmem:[%s219 + $0x2770] sm:$0xff]
        %v1532 = vld [vmem:[%s219 + $0x2778] sm:$0xff]
        %v1533 = vld [vmem:[%s219 + $0x2780] sm:$0xff]
        %v1534 = vld [vmem:[%s219 + $0x2788] sm:$0xff]
        %v1535 = vld [vmem:[%s219 + $0x2790] sm:$0xff]
        %v1536 = vld [vmem:[%s219 + $0x2798] sm:$0xff]
        %v1537 = vld [vmem:[%s219 + $0x27a0] sm:$0xff]
        %v1538 = vld [vmem:[%s219 + $0x27a8] sm:$0xff]
        %v1539 = vld [vmem:[%s219 + $0x27b0] sm:$0xff]
        %v1540 = vld [vmem:[%s219 + $0x27b8] sm:$0xff]
        %v1541 = vld [vmem:[%s219 + $0x27c0] sm:$0xff]
        %v1542 = vld [vmem:[%s219 + $0x27c8] sm:$0xff]
        %v1543 = vld [vmem:[%s219 + $0x27d0] sm:$0xff]
        %v1544 = vld [vmem:[%s219 + $0x27d8] sm:$0xff]
        %v1545 = vld [vmem:[%s219 + $0x27e0] sm:$0xff]
        %v1546 = vld [vmem:[%s219 + $0x27e8] sm:$0xff]
        %v1547 = vld [vmem:[%s219 + $0x27f0] sm:$0xff]
        %v1548 = vld [vmem:[%s219 + $0x27f8] sm:$0xff]
        %v1549 = vld [vmem:[%s219 + $0x2800] sm:$0xff]
        %v1550 = vld [vmem:[%s219 + $0x2808] sm:$0xff]
        %v1551 = vld [vmem:[%s219 + $0x2810] sm:$0xff]
        %v1552 = vld [vmem:[%s219 + $0x2818] sm:$0xff]
        %v1553 = vld [vmem:[%s219 + $0x2820] sm:$0xff]
        %v1554 = vld [vmem:[%s219 + $0x2828] sm:$0xff]
        %v1555 = vld [vmem:[%s219 + $0x2830] sm:$0xff]
        %v1556 = vld [vmem:[%s219 + $0x2838] sm:$0xff]
        %v1557 = vld [vmem:[%s219 + $0x2840] sm:$0xff]
        %v1558 = vld [vmem:[%s219 + $0x2848] sm:$0xff]
        %v1559 = vld [vmem:[%s219 + $0x2850] sm:$0xff]
        %v1560 = vld [vmem:[%s219 + $0x2858] sm:$0xff]
        %v1561 = vld [vmem:[%s219 + $0x2860] sm:$0xff]
        %v1562 = vld [vmem:[%s219 + $0x2868] sm:$0xff]
        %v1563 = vld [vmem:[%s219 + $0x2870] sm:$0xff]
        %v1564 = vld [vmem:[%s219 + $0x2878] sm:$0xff]
        %v1565 = vld [vmem:[%s219 + $0x2880] sm:$0xff]
        %v1566 = vld [vmem:[%s219 + $0x2888] sm:$0xff]
        %v1567 = vld [vmem:[%s219 + $0x2890] sm:$0xff]
        %v1568 = vld [vmem:[%s219 + $0x2898] sm:$0xff]
        %v1569 = vld [vmem:[%s219 + $0x28a0] sm:$0xff]
        %v1570 = vld [vmem:[%s219 + $0x28a8] sm:$0xff]
        %v1571 = vld [vmem:[%s219 + $0x28b0] sm:$0xff]
        %v1572 = vld [vmem:[%s219 + $0x28b8] sm:$0xff]
        %v1573 = vld [vmem:[%s219 + $0x28c0] sm:$0xff]
        %v1574 = vld [vmem:[%s219 + $0x28c8] sm:$0xff]
        %v1575 = vld [vmem:[%s219 + $0x28d0] sm:$0xff]
        %v1576 = vld [vmem:[%s219 + $0x28d8] sm:$0xff]
        %v1577 = vld [vmem:[%s219 + $0x28e0] sm:$0xff]
        %v1578 = vld [vmem:[%s219 + $0x28e8] sm:$0xff]
        %v1579 = vld [vmem:[%s219 + $0x28f0] sm:$0xff]
        %v1580 = vld [vmem:[%s219 + $0x28f8] sm:$0xff]
        %v1581 = vld [vmem:[%s219 + $0x2900] sm:$0xff]
        %v1582 = vld [vmem:[%s219 + $0x2908] sm:$0xff]
        %v1583 = vld [vmem:[%s219 + $0x2910] sm:$0xff]
        %v1584 = vld [vmem:[%s219 + $0x2918] sm:$0xff]
        %v1585 = vld [vmem:[%s219 + $0x2920] sm:$0xff]
        %v1586 = vld [vmem:[%s219 + $0x2928] sm:$0xff]
        %v1587 = vld [vmem:[%s219 + $0x2930] sm:$0xff]
        %v1588 = vld [vmem:[%s219 + $0x2938] sm:$0xff]
        %v1589 = vld [vmem:[%s219 + $0x2940] sm:$0xff]
        %v1590 = vld [vmem:[%s219 + $0x2948] sm:$0xff]
        %v1591 = vld [vmem:[%s219 + $0x2950] sm:$0xff]
        %v1592 = vld [vmem:[%s219 + $0x2958] sm:$0xff]
        %v1593 = vld [vmem:[%s219 + $0x2960] sm:$0xff]
        %v1594 = vld [vmem:[%s219 + $0x2968] sm:$0xff]
        %v1595 = vld [vmem:[%s219 + $0x2970] sm:$0xff]
        %v1596 = vld [vmem:[%s219 + $0x2978] sm:$0xff]
        %v1597 = vld [vmem:[%s219 + $0x2980] sm:$0xff]
        %v1598 = vld [vmem:[%s219 + $0x2988] sm:$0xff]
        %v1599 = vld [vmem:[%s219 + $0x2990] sm:$0xff]
        %v1600 = vld [vmem:[%s219 + $0x2998] sm:$0xff]
        %v1601 = vld [vmem:[%s219 + $0x29a0] sm:$0xff]
        %v1602 = vld [vmem:[%s219 + $0x29a8] sm:$0xff]
        %v1603 = vld [vmem:[%s219 + $0x29b0] sm:$0xff]
        %v1604 = vld [vmem:[%s219 + $0x29b8] sm:$0xff]
        %v1605 = vld [vmem:[%s219 + $0x29c0] sm:$0xff]
        %v1606 = vld [vmem:[%s219 + $0x29c8] sm:$0xff]
        %v1607 = vld [vmem:[%s219 + $0x29d0] sm:$0xff]
        %v1608 = vld [vmem:[%s219 + $0x29d8] sm:$0xff]
        %v1609 = vld [vmem:[%s219 + $0x29e0] sm:$0xff]
        %v1610 = vld [vmem:[%s219 + $0x29e8] sm:$0xff]
        %v1611 = vld [vmem:[%s219 + $0x29f0] sm:$0xff]
        %v1612 = vld [vmem:[%s219 + $0x29f8] sm:$0xff]
        %v1613 = vld [vmem:[%s219 + $0x2a00] sm:$0xff]
        %v1614 = vld [vmem:[%s219 + $0x2a08] sm:$0xff]
        %v1615 = vld [vmem:[%s219 + $0x2a10] sm:$0xff]
        %v1616 = vld [vmem:[%s219 + $0x2a18] sm:$0xff]
        %v1617 = vld [vmem:[%s219 + $0x2a20] sm:$0xff]
        %v1618 = vld [vmem:[%s219 + $0x2a28] sm:$0xff]
        %v1619 = vld [vmem:[%s219 + $0x2a30] sm:$0xff]
        %v1620 = vld [vmem:[%s219 + $0x2a38] sm:$0xff]
        %v1621 = vld [vmem:[%s219 + $0x2a40] sm:$0xff]
        %v1622 = vld [vmem:[%s219 + $0x2a48] sm:$0xff]
        %v1623 = vld [vmem:[%s219 + $0x2a50] sm:$0xff]
        %v1624 = vld [vmem:[%s219 + $0x2a58] sm:$0xff]
        %v1625 = vld [vmem:[%s219 + $0x2a60] sm:$0xff]
        %v1626 = vld [vmem:[%s219 + $0x2a68] sm:$0xff]
        %v1627 = vld [vmem:[%s219 + $0x2a70] sm:$0xff]
        %v1628 = vld [vmem:[%s219 + $0x2a78] sm:$0xff]
        %v1629 = vld [vmem:[%s219 + $0x2a80] sm:$0xff]
        %v1630 = vld [vmem:[%s219 + $0x2a88] sm:$0xff]
        %v1631 = vld [vmem:[%s219 + $0x2a90] sm:$0xff]
        %v1632 = vld [vmem:[%s219 + $0x2a98] sm:$0xff]
        %v1633 = vld [vmem:[%s219 + $0x2aa0] sm:$0xff]
        %v1634 = vld [vmem:[%s219 + $0x2aa8] sm:$0xff]
        %v1635 = vld [vmem:[%s219 + $0x2ab0] sm:$0xff]
        %v1636 = vld [vmem:[%s219 + $0x2ab8] sm:$0xff]
        %v1637 = vld [vmem:[%s219 + $0x2ac0] sm:$0xff]
        %v1638 = vld [vmem:[%s219 + $0x2ac8] sm:$0xff]
        %v1639 = vld [vmem:[%s219 + $0x2ad0] sm:$0xff]
        %v1640 = vld [vmem:[%s219 + $0x2ad8] sm:$0xff]
        %v1641 = vld [vmem:[%s219 + $0x2ae0] sm:$0xff]
        %v1642 = vld [vmem:[%s219 + $0x2ae8] sm:$0xff]
        %v1643 = vld [vmem:[%s219 + $0x2af0] sm:$0xff]
        %v1644 = vld [vmem:[%s219 + $0x2af8] sm:$0xff]
        %v1645 = vld [vmem:[%s219 + $0x2b00] sm:$0xff]
        %v1646 = vld [vmem:[%s219 + $0x2b08] sm:$0xff]
        %v1647 = vld [vmem:[%s219 + $0x2b10] sm:$0xff]
        %v1648 = vld [vmem:[%s219 + $0x2b18] sm:$0xff]
        %v1649 = vld [vmem:[%s219 + $0x2b20] sm:$0xff]
        %v1650 = vld [vmem:[%s219 + $0x2b28] sm:$0xff]
        %v1651 = vld [vmem:[%s219 + $0x2b30] sm:$0xff]
        %v1652 = vld [vmem:[%s219 + $0x2b38] sm:$0xff]
        %v1653 = vld [vmem:[%s219 + $0x2b40] sm:$0xff]
        %v1654 = vld [vmem:[%s219 + $0x2b48] sm:$0xff]
        %v1655 = vld [vmem:[%s219 + $0x2b50] sm:$0xff]
        %v1656 = vld [vmem:[%s219 + $0x2b58] sm:$0xff]
        %v1657 = vld [vmem:[%s219 + $0x2b60] sm:$0xff]
        %v1658 = vld [vmem:[%s219 + $0x2b68] sm:$0xff]
        %v1659 = vld [vmem:[%s219 + $0x2b70] sm:$0xff]
        %v1660 = vld [vmem:[%s219 + $0x2b78] sm:$0xff]
        %v1661 = vld [vmem:[%s219 + $0x2b80] sm:$0xff]
        %v1662 = vld [vmem:[%s219 + $0x2b88] sm:$0xff]
        %v1663 = vld [vmem:[%s219 + $0x2b90] sm:$0xff]
        %v1664 = vld [vmem:[%s219 + $0x2b98] sm:$0xff]
        %v1665 = vld [vmem:[%s219 + $0x2ba0] sm:$0xff]
        %v1666 = vld [vmem:[%s219 + $0x2ba8] sm:$0xff]
        %v1667 = vld [vmem:[%s219 + $0x2bb0] sm:$0xff]
        %v1668 = vld [vmem:[%s219 + $0x2bb8] sm:$0xff]
        %v1669 = vld [vmem:[%s219 + $0x2bc0] sm:$0xff]
        %v1670 = vld [vmem:[%s219 + $0x2bc8] sm:$0xff]
        %v1671 = vld [vmem:[%s219 + $0x2bd0] sm:$0xff]
        %v1672 = vld [vmem:[%s219 + $0x2bd8] sm:$0xff]
        %v1673 = vld [vmem:[%s219 + $0x2be0] sm:$0xff]
        %v1674 = vld [vmem:[%s219 + $0x2be8] sm:$0xff]
        %v1675 = vld [vmem:[%s219 + $0x2bf0] sm:$0xff]
        %v1676 = vld [vmem:[%s219 + $0x2bf8] sm:$0xff]
        %v1677 = vld [vmem:[%s219 + $0x2c00] sm:$0xff]
        %v1678 = vld [vmem:[%s219 + $0x2c08] sm:$0xff]
        %v1679 = vld [vmem:[%s219 + $0x2c10] sm:$0xff]
        %v1680 = vld [vmem:[%s219 + $0x2c18] sm:$0xff]
        %v1681 = vld [vmem:[%s219 + $0x2c20] sm:$0xff]
        %v1682 = vld [vmem:[%s219 + $0x2c28] sm:$0xff]
        %v1683 = vld [vmem:[%s219 + $0x2c30] sm:$0xff]
        %v1684 = vld [vmem:[%s219 + $0x2c38] sm:$0xff]
        %v1685 = vld [vmem:[%s219 + $0x2c40] sm:$0xff]
        %v1686 = vld [vmem:[%s219 + $0x2c48] sm:$0xff]
        %v1687 = vld [vmem:[%s219 + $0x2c50] sm:$0xff]
        %v1688 = vld [vmem:[%s219 + $0x2c58] sm:$0xff]
        %v1689 = vld [vmem:[%s219 + $0x2c60] sm:$0xff]
        %v1690 = vld [vmem:[%s219 + $0x2c68] sm:$0xff]
        %v1691 = vld [vmem:[%s219 + $0x2c70] sm:$0xff]
        %v1692 = vld [vmem:[%s219 + $0x2c78] sm:$0xff]
        %v1693 = vld [vmem:[%s219 + $0x2c80] sm:$0xff]
        %v1694 = vld [vmem:[%s219 + $0x2c88] sm:$0xff]
        %v1695 = vld [vmem:[%s219 + $0x2c90] sm:$0xff]
        %v1696 = vld [vmem:[%s219 + $0x2c98] sm:$0xff]
        %v1697 = vld [vmem:[%s219 + $0x2ca0] sm:$0xff]
        %v1698 = vld [vmem:[%s219 + $0x2ca8] sm:$0xff]
        %v1699 = vld [vmem:[%s219 + $0x2cb0] sm:$0xff]
        %v1700 = vld [vmem:[%s219 + $0x2cb8] sm:$0xff]
        %v1701 = vld [vmem:[%s219 + $0x2cc0] sm:$0xff]
        %v1702 = vld [vmem:[%s219 + $0x2cc8] sm:$0xff]
        %v1703 = vld [vmem:[%s219 + $0x2cd0] sm:$0xff]
        %v1704 = vld [vmem:[%s219 + $0x2cd8] sm:$0xff]
        %v1705 = vld [vmem:[%s219 + $0x2ce0] sm:$0xff]
        %v1706 = vld [vmem:[%s219 + $0x2ce8] sm:$0xff]
        %v1707 = vld [vmem:[%s219 + $0x2cf0] sm:$0xff]
        %v1708 = vld [vmem:[%s219 + $0x2cf8] sm:$0xff]
        %v1709 = vld [vmem:[%s219 + $0x2d00] sm:$0xff]
        %v1710 = vld [vmem:[%s219 + $0x2d08] sm:$0xff]
        %v1711 = vld [vmem:[%s219 + $0x2d10] sm:$0xff]
        %v1712 = vld [vmem:[%s219 + $0x2d18] sm:$0xff]
        %v1713 = vld [vmem:[%s219 + $0x2d20] sm:$0xff]
        %v1714 = vld [vmem:[%s219 + $0x2d28] sm:$0xff]
        %v1715 = vld [vmem:[%s219 + $0x2d30] sm:$0xff]
        %v1716 = vld [vmem:[%s219 + $0x2d38] sm:$0xff]
        %v1717 = vld [vmem:[%s219 + $0x2d40] sm:$0xff]
        %v1718 = vld [vmem:[%s219 + $0x2d48] sm:$0xff]
        %v1719 = vld [vmem:[%s219 + $0x2d50] sm:$0xff]
        %v1720 = vld [vmem:[%s219 + $0x2d58] sm:$0xff]
        %v1721 = vld [vmem:[%s219 + $0x2d60] sm:$0xff]
        %v1722 = vld [vmem:[%s219 + $0x2d68] sm:$0xff]
        %v1723 = vld [vmem:[%s219 + $0x2d70] sm:$0xff]
        %v1724 = vld [vmem:[%s219 + $0x2d78] sm:$0xff]
        %v1725 = vld [vmem:[%s219 + $0x2d80] sm:$0xff]
        %v1726 = vld [vmem:[%s219 + $0x2d88] sm:$0xff]
        %v1727 = vld [vmem:[%s219 + $0x2d90] sm:$0xff]
        %v1728 = vld [vmem:[%s219 + $0x2d98] sm:$0xff]
        %v1729 = vld [vmem:[%s219 + $0x2da0] sm:$0xff]
        %v1730 = vld [vmem:[%s219 + $0x2da8] sm:$0xff]
        %v1731 = vld [vmem:[%s219 + $0x2db0] sm:$0xff]
        %v1732 = vld [vmem:[%s219 + $0x2db8] sm:$0xff]
        %v1733 = vld [vmem:[%s219 + $0x2dc0] sm:$0xff]
        %v1734 = vld [vmem:[%s219 + $0x2dc8] sm:$0xff]
        %v1735 = vld [vmem:[%s219 + $0x2dd0] sm:$0xff]
        %v1736 = vld [vmem:[%s219 + $0x2dd8] sm:$0xff]
        %v1737 = vld [vmem:[%s219 + $0x2de0] sm:$0xff]
        %v1738 = vld [vmem:[%s219 + $0x2de8] sm:$0xff]
        %v1739 = vld [vmem:[%s219 + $0x2df0] sm:$0xff]
        %v1740 = vld [vmem:[%s219 + $0x2df8] sm:$0xff]
        %v1741 = vld [vmem:[%s219 + $0x2e00] sm:$0xff]
        %v1742 = vld [vmem:[%s219 + $0x2e08] sm:$0xff]
        %v1743 = vld [vmem:[%s219 + $0x2e10] sm:$0xff]
        %v1744 = vld [vmem:[%s219 + $0x2e18] sm:$0xff]
        %v1745 = vld [vmem:[%s219 + $0x2e20] sm:$0xff]
        %v1746 = vld [vmem:[%s219 + $0x2e28] sm:$0xff]
        %v1747 = vld [vmem:[%s219 + $0x2e30] sm:$0xff]
        %v1748 = vld [vmem:[%s219 + $0x2e38] sm:$0xff]
        %v1749 = vld [vmem:[%s219 + $0x2e40] sm:$0xff]
        %v1750 = vld [vmem:[%s219 + $0x2e48] sm:$0xff]
        %v1751 = vld [vmem:[%s219 + $0x2e50] sm:$0xff]
        %v1752 = vld [vmem:[%s219 + $0x2e58] sm:$0xff]
        %v1753 = vld [vmem:[%s219 + $0x2e60] sm:$0xff]
        %v1754 = vld [vmem:[%s219 + $0x2e68] sm:$0xff]
        %v1755 = vld [vmem:[%s219 + $0x2e70] sm:$0xff]
        %v1756 = vld [vmem:[%s219 + $0x2e78] sm:$0xff]
        %v1757 = vld [vmem:[%s219 + $0x2e80] sm:$0xff]
        %v1758 = vld [vmem:[%s219 + $0x2e88] sm:$0xff]
        %v1759 = vld [vmem:[%s219 + $0x2e90] sm:$0xff]
        %v1760 = vld [vmem:[%s219 + $0x2e98] sm:$0xff]
        %v1761 = vld [vmem:[%s219 + $0x2ea0] sm:$0xff]
        %v1762 = vld [vmem:[%s219 + $0x2ea8] sm:$0xff]
        %v1763 = vld [vmem:[%s219 + $0x2eb0] sm:$0xff]
        %v1764 = vld [vmem:[%s219 + $0x2eb8] sm:$0xff]
        %v1765 = vld [vmem:[%s219 + $0x2ec0] sm:$0xff]
        %v1766 = vld [vmem:[%s219 + $0x2ec8] sm:$0xff]
        %v1767 = vld [vmem:[%s219 + $0x2ed0] sm:$0xff]
        %v1768 = vld [vmem:[%s219 + $0x2ed8] sm:$0xff]
        %v1769 = vld [vmem:[%s219 + $0x2ee0] sm:$0xff]
        %v1770 = vld [vmem:[%s219 + $0x2ee8] sm:$0xff]
        %v1771 = vld [vmem:[%s219 + $0x2ef0] sm:$0xff]
        %v1772 = vld [vmem:[%s219 + $0x2ef8] sm:$0xff]
        %v1773 = vld [vmem:[%s219 + $0x2f00] sm:$0xff]
        %v1774 = vld [vmem:[%s219 + $0x2f08] sm:$0xff]
        %v1775 = vld [vmem:[%s219 + $0x2f10] sm:$0xff]
        %v1776 = vld [vmem:[%s219 + $0x2f18] sm:$0xff]
        %v1777 = vld [vmem:[%s219 + $0x2f20] sm:$0xff]
        %v1778 = vld [vmem:[%s219 + $0x2f28] sm:$0xff]
        %v1779 = vld [vmem:[%s219 + $0x2f30] sm:$0xff]
        %v1780 = vld [vmem:[%s219 + $0x2f38] sm:$0xff]
        %v1781 = vld [vmem:[%s219 + $0x2f40] sm:$0xff]
        %v1782 = vld [vmem:[%s219 + $0x2f48] sm:$0xff]
        %v1783 = vld [vmem:[%s219 + $0x2f50] sm:$0xff]
        %v1784 = vld [vmem:[%s219 + $0x2f58] sm:$0xff]
        %v1785 = vld [vmem:[%s219 + $0x2f60] sm:$0xff]
        %v1786 = vld [vmem:[%s219 + $0x2f68] sm:$0xff]
        %v1787 = vld [vmem:[%s219 + $0x2f70] sm:$0xff]
        %v1788 = vld [vmem:[%s219 + $0x2f78] sm:$0xff]
        %v1789 = vld [vmem:[%s219 + $0x2f80] sm:$0xff]
        %v1790 = vld [vmem:[%s219 + $0x2f88] sm:$0xff]
        %v1791 = vld [vmem:[%s219 + $0x2f90] sm:$0xff]
        %v1792 = vld [vmem:[%s219 + $0x2f98] sm:$0xff]
        %v1793 = vld [vmem:[%s219 + $0x2fa0] sm:$0xff]
        %v1794 = vld [vmem:[%s219 + $0x2fa8] sm:$0xff]
        %v1795 = vld [vmem:[%s219 + $0x2fb0] sm:$0xff]
        %v1796 = vld [vmem:[%s219 + $0x2fb8] sm:$0xff]
        %v1797 = vld [vmem:[%s219 + $0x2fc0] sm:$0xff]
        %v1798 = vld [vmem:[%s219 + $0x2fc8] sm:$0xff]
        %v1799 = vld [vmem:[%s219 + $0x2fd0] sm:$0xff]
        %v1800 = vld [vmem:[%s219 + $0x2fd8] sm:$0xff]
        %v1801 = vld [vmem:[%s219 + $0x2fe0] sm:$0xff]
        %v1802 = vld [vmem:[%s219 + $0x2fe8] sm:$0xff]
        %v1803 = vld [vmem:[%s219 + $0x2ff0] sm:$0xff]
        %v1804 = vld [vmem:[%s219 + $0x2ff8] sm:$0xff]
        %v1805 = vld [vmem:[%s219 + $0x3000] sm:$0xff]
        %v1806 = vld [vmem:[%s219 + $0x3008] sm:$0xff]
        %v1807 = vld [vmem:[%s219 + $0x3010] sm:$0xff]
        %v1808 = vld [vmem:[%s219 + $0x3018] sm:$0xff]
        %v1809 = vld [vmem:[%s219 + $0x3020] sm:$0xff]
        %v1810 = vld [vmem:[%s219 + $0x3028] sm:$0xff]
        %v1811 = vld [vmem:[%s219 + $0x3030] sm:$0xff]
        %v1812 = vld [vmem:[%s219 + $0x3038] sm:$0xff]
        %v1813 = vld [vmem:[%s219 + $0x3040] sm:$0xff]
        %v1814 = vld [vmem:[%s219 + $0x3048] sm:$0xff]
        %v1815 = vld [vmem:[%s219 + $0x3050] sm:$0xff]
        %v1816 = vld [vmem:[%s219 + $0x3058] sm:$0xff]
        %v1817 = vld [vmem:[%s219 + $0x3060] sm:$0xff]
        %v1818 = vld [vmem:[%s219 + $0x3068] sm:$0xff]
        %v1819 = vld [vmem:[%s219 + $0x3070] sm:$0xff]
        %v1820 = vld [vmem:[%s219 + $0x3078] sm:$0xff]
        %v1821 = vld [vmem:[%s219 + $0x3080] sm:$0xff]
        %v1822 = vld [vmem:[%s219 + $0x3088] sm:$0xff]
        %v1823 = vld [vmem:[%s219 + $0x3090] sm:$0xff]
        %v1824 = vld [vmem:[%s219 + $0x3098] sm:$0xff]
        %v1825 = vld [vmem:[%s219 + $0x30a0] sm:$0xff]
        %v1826 = vld [vmem:[%s219 + $0x30a8] sm:$0xff]
        %v1827 = vld [vmem:[%s219 + $0x30b0] sm:$0xff]
        %v1828 = vld [vmem:[%s219 + $0x30b8] sm:$0xff]
        %v1829 = vld [vmem:[%s219 + $0x30c0] sm:$0xff]
        %v1830 = vld [vmem:[%s219 + $0x30c8] sm:$0xff]
        %v1831 = vld [vmem:[%s219 + $0x30d0] sm:$0xff]
        %v1832 = vld [vmem:[%s219 + $0x30d8] sm:$0xff]
        %v1833 = vld [vmem:[%s219 + $0x30e0] sm:$0xff]
        %v1834 = vld [vmem:[%s219 + $0x30e8] sm:$0xff]
        %v1835 = vld [vmem:[%s219 + $0x30f0] sm:$0xff]
        %v1836 = vld [vmem:[%s219 + $0x30f8] sm:$0xff]
        %v1837 = vld [vmem:[%s219 + $0x3100] sm:$0xff]
        %v1838 = vld [vmem:[%s219 + $0x3108] sm:$0xff]
        %v1839 = vld [vmem:[%s219 + $0x3110] sm:$0xff]
        %v1840 = vld [vmem:[%s219 + $0x3118] sm:$0xff]
        %v1841 = vld [vmem:[%s219 + $0x3120] sm:$0xff]
        %v1842 = vld [vmem:[%s219 + $0x3128] sm:$0xff]
        %v1843 = vld [vmem:[%s219 + $0x3130] sm:$0xff]
        %v1844 = vld [vmem:[%s219 + $0x3138] sm:$0xff]
        %v1845 = vld [vmem:[%s219 + $0x3140] sm:$0xff]
        %v1846 = vld [vmem:[%s219 + $0x3148] sm:$0xff]
        %v1847 = vld [vmem:[%s219 + $0x3150] sm:$0xff]
        %v1848 = vld [vmem:[%s219 + $0x3158] sm:$0xff]
        %v1849 = vld [vmem:[%s219 + $0x3160] sm:$0xff]
        %v1850 = vld [vmem:[%s219 + $0x3168] sm:$0xff]
        %v1851 = vld [vmem:[%s219 + $0x3170] sm:$0xff]
        %v1852 = vld [vmem:[%s219 + $0x3178] sm:$0xff]
        %v1853 = vld [vmem:[%s219 + $0x3180] sm:$0xff]
        %v1854 = vld [vmem:[%s219 + $0x3188] sm:$0xff]
        %v1855 = vld [vmem:[%s219 + $0x3190] sm:$0xff]
        %v1856 = vld [vmem:[%s219 + $0x3198] sm:$0xff]
        %v1857 = vld [vmem:[%s219 + $0x31a0] sm:$0xff]
        %v1858 = vld [vmem:[%s219 + $0x31a8] sm:$0xff]
        %v1859 = vld [vmem:[%s219 + $0x31b0] sm:$0xff]
        %v1860 = vld [vmem:[%s219 + $0x31b8] sm:$0xff]
        %v1861 = vld [vmem:[%s219 + $0x31c0] sm:$0xff]
        %v1862 = vld [vmem:[%s219 + $0x31c8] sm:$0xff]
        %v1863 = vld [vmem:[%s219 + $0x31d0] sm:$0xff]
        %v1864 = vld [vmem:[%s219 + $0x31d8] sm:$0xff]
        %v1865 = vld [vmem:[%s219 + $0x31e0] sm:$0xff]
        %v1866 = vld [vmem:[%s219 + $0x31e8] sm:$0xff]
        %v1867 = vld [vmem:[%s219 + $0x31f0] sm:$0xff]
        %v1868 = vld [vmem:[%s219 + $0x31f8] sm:$0xff]
        %v1869 = vld [vmem:[%s219 + $0x3200] sm:$0xff]
        %v1870 = vld [vmem:[%s219 + $0x3208] sm:$0xff]
        %v1871 = vld [vmem:[%s219 + $0x3210] sm:$0xff]
        %v1872 = vld [vmem:[%s219 + $0x3218] sm:$0xff]
        %v1873 = vld [vmem:[%s219 + $0x3220] sm:$0xff]
        %v1874 = vld [vmem:[%s219 + $0x3228] sm:$0xff]
        %v1875 = vld [vmem:[%s219 + $0x3230] sm:$0xff]
        %v1876 = vld [vmem:[%s219 + $0x3238] sm:$0xff]
        %v1877 = vld [vmem:[%s219 + $0x3240] sm:$0xff]
        %v1878 = vld [vmem:[%s219 + $0x3248] sm:$0xff]
        %v1879 = vld [vmem:[%s219 + $0x3250] sm:$0xff]
        %v1880 = vld [vmem:[%s219 + $0x3258] sm:$0xff]
        %v1881 = vld [vmem:[%s219 + $0x3260] sm:$0xff]
        %v1882 = vld [vmem:[%s219 + $0x3268] sm:$0xff]
        %v1883 = vld [vmem:[%s219 + $0x3270] sm:$0xff]
        %v1884 = vld [vmem:[%s219 + $0x3278] sm:$0xff]
        %v1885 = vld [vmem:[%s219 + $0x3280] sm:$0xff]
        %v1886 = vld [vmem:[%s219 + $0x3288] sm:$0xff]
        %v1887 = vld [vmem:[%s219 + $0x3290] sm:$0xff]
        %v1888 = vld [vmem:[%s219 + $0x3298] sm:$0xff]
        %v1889 = vld [vmem:[%s219 + $0x32a0] sm:$0xff]
        %v1890 = vld [vmem:[%s219 + $0x32a8] sm:$0xff]
        %v1891 = vld [vmem:[%s219 + $0x32b0] sm:$0xff]
        %v1892 = vld [vmem:[%s219 + $0x32b8] sm:$0xff]
        %v1893 = vld [vmem:[%s219 + $0x32c0] sm:$0xff]
        %v1894 = vld [vmem:[%s219 + $0x32c8] sm:$0xff]
        %v1895 = vld [vmem:[%s219 + $0x32d0] sm:$0xff]
        %v1896 = vld [vmem:[%s219 + $0x32d8] sm:$0xff]
        %v1897 = vld [vmem:[%s219 + $0x32e0] sm:$0xff]
        %v1898 = vld [vmem:[%s219 + $0x32e8] sm:$0xff]
        %v1899 = vld [vmem:[%s219 + $0x32f0] sm:$0xff]
        %v1900 = vld [vmem:[%s219 + $0x32f8] sm:$0xff]
        %v1901 = vld [vmem:[%s219 + $0x3300] sm:$0xff]
        %v1902 = vld [vmem:[%s219 + $0x3308] sm:$0xff]
        %v1903 = vld [vmem:[%s219 + $0x3310] sm:$0xff]
        %v1904 = vld [vmem:[%s219 + $0x3318] sm:$0xff]
        %v1905 = vld [vmem:[%s219 + $0x3320] sm:$0xff]
        %v1906 = vld [vmem:[%s219 + $0x3328] sm:$0xff]
        %v1907 = vld [vmem:[%s219 + $0x3330] sm:$0xff]
        %v1908 = vld [vmem:[%s219 + $0x3338] sm:$0xff]
        %v1909 = vld [vmem:[%s219 + $0x3340] sm:$0xff]
        %v1910 = vld [vmem:[%s219 + $0x3348] sm:$0xff]
        %v1911 = vld [vmem:[%s219 + $0x3350] sm:$0xff]
        %v1912 = vld [vmem:[%s219 + $0x3358] sm:$0xff]
        %v1913 = vld [vmem:[%s219 + $0x3360] sm:$0xff]
        %v1914 = vld [vmem:[%s219 + $0x3368] sm:$0xff]
        %v1915 = vld [vmem:[%s219 + $0x3370] sm:$0xff]
        %v1916 = vld [vmem:[%s219 + $0x3378] sm:$0xff]
        %v1917 = vld [vmem:[%s219 + $0x3380] sm:$0xff]
        %v1918 = vld [vmem:[%s219 + $0x3388] sm:$0xff]
        %v1919 = vld [vmem:[%s219 + $0x3390] sm:$0xff]
        %v1920 = vld [vmem:[%s219 + $0x3398] sm:$0xff]
        %v1921 = vld [vmem:[%s219 + $0x33a0] sm:$0xff]
        %v1922 = vld [vmem:[%s219 + $0x33a8] sm:$0xff]
        %v1923 = vld [vmem:[%s219 + $0x33b0] sm:$0xff]
        %v1924 = vld [vmem:[%s219 + $0x33b8] sm:$0xff]
        %v1925 = vld [vmem:[%s219 + $0x33c0] sm:$0xff]
        %v1926 = vld [vmem:[%s219 + $0x33c8] sm:$0xff]
        %v1927 = vld [vmem:[%s219 + $0x33d0] sm:$0xff]
        %v1928 = vld [vmem:[%s219 + $0x33d8] sm:$0xff]
        %v1929 = vld [vmem:[%s219 + $0x33e0] sm:$0xff]
        %v1930 = vld [vmem:[%s219 + $0x33e8] sm:$0xff]
        %v1931 = vld [vmem:[%s219 + $0x33f0] sm:$0xff]
        %v1932 = vld [vmem:[%s219 + $0x33f8] sm:$0xff]
        %v1933 = vld [vmem:[%s219 + $0x3400] sm:$0xff]
        %v1934 = vld [vmem:[%s219 + $0x3408] sm:$0xff]
        %v1935 = vld [vmem:[%s219 + $0x3410] sm:$0xff]
        %v1936 = vld [vmem:[%s219 + $0x3418] sm:$0xff]
        %v1937 = vld [vmem:[%s219 + $0x3420] sm:$0xff]
        %v1938 = vld [vmem:[%s219 + $0x3428] sm:$0xff]
        %v1939 = vld [vmem:[%s219 + $0x3430] sm:$0xff]
        %v1940 = vld [vmem:[%s219 + $0x3438] sm:$0xff]
        %v1941 = vld [vmem:[%s219 + $0x3440] sm:$0xff]
        %v1942 = vld [vmem:[%s219 + $0x3448] sm:$0xff]
        %v1943 = vld [vmem:[%s219 + $0x3450] sm:$0xff]
        %v1944 = vld [vmem:[%s219 + $0x3458] sm:$0xff]
        %v1945 = vld [vmem:[%s219 + $0x3460] sm:$0xff]
        %v1946 = vld [vmem:[%s219 + $0x3468] sm:$0xff]
        %v1947 = vld [vmem:[%s219 + $0x3470] sm:$0xff]
        %v1948 = vld [vmem:[%s219 + $0x3478] sm:$0xff]
        %v1949 = vld [vmem:[%s219 + $0x3480] sm:$0xff]
        %v1950 = vld [vmem:[%s219 + $0x3488] sm:$0xff]
        %v1951 = vld [vmem:[%s219 + $0x3490] sm:$0xff]
        %v1952 = vld [vmem:[%s219 + $0x3498] sm:$0xff]
        %v1953 = vld [vmem:[%s219 + $0x34a0] sm:$0xff]
        %v1954 = vld [vmem:[%s219 + $0x34a8] sm:$0xff]
        %v1955 = vld [vmem:[%s219 + $0x34b0] sm:$0xff]
        %v1956 = vld [vmem:[%s219 + $0x34b8] sm:$0xff]
        %v1957 = vld [vmem:[%s219 + $0x34c0] sm:$0xff]
        %v1958 = vld [vmem:[%s219 + $0x34c8] sm:$0xff]
        %v1959 = vld [vmem:[%s219 + $0x34d0] sm:$0xff]
        %v1960 = vld [vmem:[%s219 + $0x34d8] sm:$0xff]
        %v1961 = vld [vmem:[%s219 + $0x34e0] sm:$0xff]
        %v1962 = vld [vmem:[%s219 + $0x34e8] sm:$0xff]
        %v1963 = vld [vmem:[%s219 + $0x34f0] sm:$0xff]
        %v1964 = vld [vmem:[%s219 + $0x34f8] sm:$0xff]
        %v1965 = vld [vmem:[%s219 + $0x3500] sm:$0xff]
        %v1966 = vld [vmem:[%s219 + $0x3508] sm:$0xff]
        %v1967 = vld [vmem:[%s219 + $0x3510] sm:$0xff]
        %v1968 = vld [vmem:[%s219 + $0x3518] sm:$0xff]
        %v1969 = vld [vmem:[%s219 + $0x3520] sm:$0xff]
        %v1970 = vld [vmem:[%s219 + $0x3528] sm:$0xff]
        %v1971 = vld [vmem:[%s219 + $0x3530] sm:$0xff]
        %v1972 = vld [vmem:[%s219 + $0x3538] sm:$0xff]
        %v1973 = vld [vmem:[%s219 + $0x3540] sm:$0xff]
        %v1974 = vld [vmem:[%s219 + $0x3548] sm:$0xff]
        %v1975 = vld [vmem:[%s219 + $0x3550] sm:$0xff]
        %v1976 = vld [vmem:[%s219 + $0x3558] sm:$0xff]
        %v1977 = vld [vmem:[%s219 + $0x3560] sm:$0xff]
        %v1978 = vld [vmem:[%s219 + $0x3568] sm:$0xff]
        %v1979 = vld [vmem:[%s219 + $0x3570] sm:$0xff]
        %v1980 = vld [vmem:[%s219 + $0x3578] sm:$0xff]
        %v1981 = vld [vmem:[%s219 + $0x3580] sm:$0xff]
        %v1982 = vld [vmem:[%s219 + $0x3588] sm:$0xff]
        %v1983 = vld [vmem:[%s219 + $0x3590] sm:$0xff]
        %v1984 = vld [vmem:[%s219 + $0x3598] sm:$0xff]
        %v1985 = vld [vmem:[%s219 + $0x35a0] sm:$0xff]
        %v1986 = vld [vmem:[%s219 + $0x35a8] sm:$0xff]
        %v1987 = vld [vmem:[%s219 + $0x35b0] sm:$0xff]
        %v1988 = vld [vmem:[%s219 + $0x35b8] sm:$0xff]
        %v1989 = vld [vmem:[%s219 + $0x35c0] sm:$0xff]
        %v1990 = vld [vmem:[%s219 + $0x35c8] sm:$0xff]
        %v1991 = vld [vmem:[%s219 + $0x35d0] sm:$0xff]
        %v1992 = vld [vmem:[%s219 + $0x35d8] sm:$0xff]
        %v1993 = vld [vmem:[%s219 + $0x35e0] sm:$0xff]
        %v1994 = vld [vmem:[%s219 + $0x35e8] sm:$0xff]
        %v1995 = vld [vmem:[%s219 + $0x35f0] sm:$0xff]
        %v1996 = vld [vmem:[%s219 + $0x35f8] sm:$0xff]
        %v1997 = vld [vmem:[%s219 + $0x3600] sm:$0xff]
        %v1998 = vld [vmem:[%s219 + $0x3608] sm:$0xff]
        %v1999 = vld [vmem:[%s219 + $0x3610] sm:$0xff]
        %v2000 = vld [vmem:[%s219 + $0x3618] sm:$0xff]
        %v2001 = vld [vmem:[%s219 + $0x3620] sm:$0xff]
        %v2002 = vld [vmem:[%s219 + $0x3628] sm:$0xff]
        %v2003 = vld [vmem:[%s219 + $0x3630] sm:$0xff]
        %v2004 = vld [vmem:[%s219 + $0x3638] sm:$0xff]
        %v2005 = vld [vmem:[%s219 + $0x3640] sm:$0xff]
        %v2006 = vld [vmem:[%s219 + $0x3648] sm:$0xff]
        %v2007 = vld [vmem:[%s219 + $0x3650] sm:$0xff]
        %v2008 = vld [vmem:[%s219 + $0x3658] sm:$0xff]
        %v2009 = vld [vmem:[%s219 + $0x3660] sm:$0xff]
        %v2010 = vld [vmem:[%s219 + $0x3668] sm:$0xff]
        %v2011 = vld [vmem:[%s219 + $0x3670] sm:$0xff]
        %v2012 = vld [vmem:[%s219 + $0x3678] sm:$0xff]
        %v2013 = vld [vmem:[%s219 + $0x3680] sm:$0xff]
        %v2014 = vld [vmem:[%s219 + $0x3688] sm:$0xff]
        %v2015 = vld [vmem:[%s219 + $0x3690] sm:$0xff]
        %v2016 = vld [vmem:[%s219 + $0x3698] sm:$0xff]
        %v2017 = vld [vmem:[%s219 + $0x36a0] sm:$0xff]
        %v2018 = vld [vmem:[%s219 + $0x36a8] sm:$0xff]
        %v2019 = vld [vmem:[%s219 + $0x36b0] sm:$0xff]
        %v2020 = vld [vmem:[%s219 + $0x36b8] sm:$0xff]
        %v2021 = vld [vmem:[%s219 + $0x36c0] sm:$0xff]
        %v2022 = vld [vmem:[%s219 + $0x36c8] sm:$0xff]
        %v2023 = vld [vmem:[%s219 + $0x36d0] sm:$0xff]
        %v2024 = vld [vmem:[%s219 + $0x36d8] sm:$0xff]
        %v2025 = vld [vmem:[%s219 + $0x36e0] sm:$0xff]
        %v2026 = vld [vmem:[%s219 + $0x36e8] sm:$0xff]
        %v2027 = vld [vmem:[%s219 + $0x36f0] sm:$0xff]
        %v2028 = vld [vmem:[%s219 + $0x36f8] sm:$0xff]
        %v2029 = vld [vmem:[%s219 + $0x3700] sm:$0xff]
        %v2030 = vld [vmem:[%s219 + $0x3708] sm:$0xff]
        %v2031 = vld [vmem:[%s219 + $0x3710] sm:$0xff]
        %v2032 = vld [vmem:[%s219 + $0x3718] sm:$0xff]
        %v2033 = vld [vmem:[%s219 + $0x3720] sm:$0xff]
        %v2034 = vld [vmem:[%s219 + $0x3728] sm:$0xff]
        %v2035 = vld [vmem:[%s219 + $0x3730] sm:$0xff]
        %v2036 = vld [vmem:[%s219 + $0x3738] sm:$0xff]
        %v2037 = vld [vmem:[%s219 + $0x3740] sm:$0xff]
        %v2038 = vld [vmem:[%s219 + $0x3748] sm:$0xff]
        %v2039 = vld [vmem:[%s219 + $0x3750] sm:$0xff]
        %v2040 = vld [vmem:[%s219 + $0x3758] sm:$0xff]
        %v2041 = vld [vmem:[%s219 + $0x3760] sm:$0xff]
        %v2042 = vld [vmem:[%s219 + $0x3768] sm:$0xff]
        %v2043 = vld [vmem:[%s219 + $0x3770] sm:$0xff]
        %v2044 = vld [vmem:[%s219 + $0x3778] sm:$0xff]
        %v2045 = vld [vmem:[%s219 + $0x3780] sm:$0xff]
        %v2046 = vld [vmem:[%s219 + $0x3788] sm:$0xff]
        %v2047 = vld [vmem:[%s219 + $0x3790] sm:$0xff]
        %v2048 = vld [vmem:[%s219 + $0x3798] sm:$0xff]
        %v2049 = vld [vmem:[%s219 + $0x37a0] sm:$0xff]
        %v2050 = vld [vmem:[%s219 + $0x37a8] sm:$0xff]
        %v2051 = vld [vmem:[%s219 + $0x37b0] sm:$0xff]
        %v2052 = vld [vmem:[%s219 + $0x37b8] sm:$0xff]
        %v2053 = vld [vmem:[%s219 + $0x37c0] sm:$0xff]
        %v2054 = vld [vmem:[%s219 + $0x37c8] sm:$0xff]
        %v2055 = vld [vmem:[%s219 + $0x37d0] sm:$0xff]
        %v2056 = vld [vmem:[%s219 + $0x37d8] sm:$0xff]
        %v2057 = vld [vmem:[%s219 + $0x37e0] sm:$0xff]
        %v2058 = vld [vmem:[%s219 + $0x37e8] sm:$0xff]
        %v2059 = vld [vmem:[%s219 + $0x37f0] sm:$0xff]
        %v2060 = vld [vmem:[%s219 + $0x37f8] sm:$0xff]
        %v2068 = vunpack.c.l.b16 %v262
        %v2069 = vunpack.c.h.b16 %v262
        %v2070 = vunpack.c.l.b16 %v263
        %v2071 = vunpack.c.h.b16 %v263
        %v2072 = vunpack.c.l.b16 %v264
        %v2073 = vunpack.c.h.b16 %v264
        %v2074 = vunpack.c.l.b16 %v265
        %v2075 = vunpack.c.h.b16 %v265
        %v2076 = vunpack.c.l.b16 %v266
        %v2077 = vunpack.c.h.b16 %v266
        %v2078 = vunpack.c.l.b16 %v267
        %v2079 = vunpack.c.h.b16 %v267
        %v2080 = vunpack.c.l.b16 %v268
        %v2081 = vunpack.c.h.b16 %v268
        %v2082 = vpack.c.b16 %v2068, %v2068
        %v2083 = vpack.c.b16 %v2069, %v2069
        %v2084 = vpack.c.b16 %v2070, %v2070
        %v2085 = vpack.c.b16 %v2071, %v2071
        %v2086 = vpack.c.b16 %v2072, %v2072
        %v2087 = vpack.c.b16 %v2073, %v2073
        %v2088 = vpack.c.b16 %v2074, %v2074
        %v2089 = vpack.c.b16 %v2075, %v2075
        %v2090 = vpack.c.b16 %v2076, %v2076
        %v2091 = vpack.c.b16 %v2077, %v2077
        %v2092 = vpack.c.b16 %v2078, %v2078
        %v2093 = vpack.c.b16 %v2079, %v2079
        %v2094 = vpack.c.b16 %v2080, %v2080
        %v2095 = vpack.c.b16 %v2081, %v2081
        %v3902 = vunpack.c.l.b16 %v269
        %v3903 = vunpack.c.h.b16 %v269
        %v3904 = vunpack.c.l.b16 %v270
        %v3905 = vunpack.c.h.b16 %v270
        %v3906 = vunpack.c.l.b16 %v271
        %v3907 = vunpack.c.h.b16 %v271
        %v3908 = vunpack.c.l.b16 %v272
        %v3909 = vunpack.c.h.b16 %v272
        %v3910 = vunpack.c.l.b16 %v273
        %v3911 = vunpack.c.h.b16 %v273
        %v3912 = vunpack.c.l.b16 %v274
        %v3913 = vunpack.c.h.b16 %v274
        %v3914 = vunpack.c.l.b16 %v275
        %v3915 = vunpack.c.h.b16 %v275
        %v3916 = vunpack.c.l.b16 %v276
        %v3917 = vunpack.c.h.b16 %v276
        %v3918 = vunpack.c.l.b16 %v277
        %v3919 = vunpack.c.h.b16 %v277
        %v3920 = vunpack.c.l.b16 %v278
        %v3921 = vunpack.c.h.b16 %v278
        %v3922 = vunpack.c.l.b16 %v279
        %v3923 = vunpack.c.h.b16 %v279
        %v3924 = vunpack.c.l.b16 %v280
        %v3925 = vunpack.c.h.b16 %v280
        %v3926 = vunpack.c.l.b16 %v281
        %v3927 = vunpack.c.h.b16 %v281
        %v3928 = vunpack.c.l.b16 %v282
        %v3929 = vunpack.c.h.b16 %v282
        %v3930 = vunpack.c.l.b16 %v283
        %v3931 = vunpack.c.h.b16 %v283
        %v3932 = vunpack.c.l.b16 %v284
        %v3933 = vunpack.c.h.b16 %v284
        %v3934 = vunpack.c.l.b16 %v285
        %v3935 = vunpack.c.h.b16 %v285
        %v3936 = vunpack.c.l.b16 %v286
        %v3937 = vunpack.c.h.b16 %v286
        %v3938 = vunpack.c.l.b16 %v287
        %v3939 = vunpack.c.h.b16 %v287
        %v3940 = vunpack.c.l.b16 %v288
        %v3941 = vunpack.c.h.b16 %v288
        %v3942 = vunpack.c.l.b16 %v289
        %v3943 = vunpack.c.h.b16 %v289
        %v3944 = vunpack.c.l.b16 %v290
        %v3945 = vunpack.c.h.b16 %v290
        %v3946 = vunpack.c.l.b16 %v291
        %v3947 = vunpack.c.h.b16 %v291
        %v3948 = vunpack.c.l.b16 %v292
        %v3949 = vunpack.c.h.b16 %v292
        %v3950 = vunpack.c.l.b16 %v293
        %v3951 = vunpack.c.h.b16 %v293
        %v3952 = vunpack.c.l.b16 %v294
        %v3953 = vunpack.c.h.b16 %v294
        %v3954 = vunpack.c.l.b16 %v295
        %v3955 = vunpack.c.h.b16 %v295
        %v3956 = vunpack.c.l.b16 %v296
        %v3957 = vunpack.c.h.b16 %v296
        %v3958 = vunpack.c.l.b16 %v297
        %v3959 = vunpack.c.h.b16 %v297
        %v3960 = vunpack.c.l.b16 %v298
        %v3961 = vunpack.c.h.b16 %v298
        %v3962 = vunpack.c.l.b16 %v299
        %v3963 = vunpack.c.h.b16 %v299
        %v3964 = vunpack.c.l.b16 %v300
        %v3965 = vunpack.c.h.b16 %v300
        %v3966 = vunpack.c.l.b16 %v301
        %v3967 = vunpack.c.h.b16 %v301
        %v3968 = vunpack.c.l.b16 %v302
        %v3969 = vunpack.c.h.b16 %v302
        %v3970 = vunpack.c.l.b16 %v303
        %v3971 = vunpack.c.h.b16 %v303
        %v3972 = vunpack.c.l.b16 %v304
        %v3973 = vunpack.c.h.b16 %v304
        %v3974 = vunpack.c.l.b16 %v305
        %v3975 = vunpack.c.h.b16 %v305
        %v3976 = vunpack.c.l.b16 %v306
        %v3977 = vunpack.c.h.b16 %v306
        %v3978 = vunpack.c.l.b16 %v307
        %v3979 = vunpack.c.h.b16 %v307
        %v3980 = vunpack.c.l.b16 %v308
        %v3981 = vunpack.c.h.b16 %v308
        %v3982 = vunpack.c.l.b16 %v309
        %v3983 = vunpack.c.h.b16 %v309
        %v3984 = vunpack.c.l.b16 %v310
        %v3985 = vunpack.c.h.b16 %v310
        %v3986 = vunpack.c.l.b16 %v311
        %v3987 = vunpack.c.h.b16 %v311
        %v3988 = vunpack.c.l.b16 %v312
        %v3989 = vunpack.c.h.b16 %v312
        %v3990 = vunpack.c.l.b16 %v313
        %v3991 = vunpack.c.h.b16 %v313
        %v3992 = vunpack.c.l.b16 %v314
        %v3993 = vunpack.c.h.b16 %v314
        %v3994 = vunpack.c.l.b16 %v315
        %v3995 = vunpack.c.h.b16 %v315
        %v3996 = vunpack.c.l.b16 %v316
        %v3997 = vunpack.c.h.b16 %v316
        %v3998 = vunpack.c.l.b16 %v317
        %v3999 = vunpack.c.h.b16 %v317
        %v4000 = vunpack.c.l.b16 %v318
        %v4001 = vunpack.c.h.b16 %v318
        %v4002 = vunpack.c.l.b16 %v319
        %v4003 = vunpack.c.h.b16 %v319
        %v4004 = vunpack.c.l.b16 %v320
        %v4005 = vunpack.c.h.b16 %v320
        %v4006 = vunpack.c.l.b16 %v321
        %v4007 = vunpack.c.h.b16 %v321
        %v4008 = vunpack.c.l.b16 %v322
        %v4009 = vunpack.c.h.b16 %v322
        %v4010 = vunpack.c.l.b16 %v323
        %v4011 = vunpack.c.h.b16 %v323
        %v4012 = vunpack.c.l.b16 %v324
        %v4013 = vunpack.c.h.b16 %v324
        %v4014 = vunpack.c.l.b16 %v325
        %v4015 = vunpack.c.h.b16 %v325
        %v4016 = vunpack.c.l.b16 %v326
        %v4017 = vunpack.c.h.b16 %v326
        %v4018 = vunpack.c.l.b16 %v327
        %v4019 = vunpack.c.h.b16 %v327
        %v4020 = vunpack.c.l.b16 %v328
        %v4021 = vunpack.c.h.b16 %v328
        %v4022 = vunpack.c.l.b16 %v329
        %v4023 = vunpack.c.h.b16 %v329
        %v4024 = vunpack.c.l.b16 %v330
        %v4025 = vunpack.c.h.b16 %v330
        %v4026 = vunpack.c.l.b16 %v331
        %v4027 = vunpack.c.h.b16 %v331
        %v4028 = vunpack.c.l.b16 %v332
        %v4029 = vunpack.c.h.b16 %v332
        %v4030 = vunpack.c.l.b16 %v333
        %v4031 = vunpack.c.h.b16 %v333
        %v4032 = vunpack.c.l.b16 %v334
        %v4033 = vunpack.c.h.b16 %v334
        %v4034 = vunpack.c.l.b16 %v335
        %v4035 = vunpack.c.h.b16 %v335
        %v4036 = vunpack.c.l.b16 %v336
        %v4037 = vunpack.c.h.b16 %v336
        %v4038 = vunpack.c.l.b16 %v337
        %v4039 = vunpack.c.h.b16 %v337
        %v4040 = vunpack.c.l.b16 %v338
        %v4041 = vunpack.c.h.b16 %v338
        %v4042 = vunpack.c.l.b16 %v339
        %v4043 = vunpack.c.h.b16 %v339
        %v4044 = vunpack.c.l.b16 %v340
        %v4045 = vunpack.c.h.b16 %v340
        %v4046 = vunpack.c.l.b16 %v341
        %v4047 = vunpack.c.h.b16 %v341
        %v4048 = vunpack.c.l.b16 %v342
        %v4049 = vunpack.c.h.b16 %v342
        %v4050 = vunpack.c.l.b16 %v343
        %v4051 = vunpack.c.h.b16 %v343
        %v4052 = vunpack.c.l.b16 %v344
        %v4053 = vunpack.c.h.b16 %v344
        %v4054 = vunpack.c.l.b16 %v345
        %v4055 = vunpack.c.h.b16 %v345
        %v4056 = vunpack.c.l.b16 %v346
        %v4057 = vunpack.c.h.b16 %v346
        %v4058 = vunpack.c.l.b16 %v347
        %v4059 = vunpack.c.h.b16 %v347
        %v4060 = vunpack.c.l.b16 %v348
        %v4061 = vunpack.c.h.b16 %v348
        %v4062 = vunpack.c.l.b16 %v349
        %v4063 = vunpack.c.h.b16 %v349
        %v4064 = vunpack.c.l.b16 %v350
        %v4065 = vunpack.c.h.b16 %v350
        %v4066 = vunpack.c.l.b16 %v351
        %v4067 = vunpack.c.h.b16 %v351
        %v4068 = vunpack.c.l.b16 %v352
        %v4069 = vunpack.c.h.b16 %v352
        %v4070 = vunpack.c.l.b16 %v353
        %v4071 = vunpack.c.h.b16 %v353
        %v4072 = vunpack.c.l.b16 %v354
        %v4073 = vunpack.c.h.b16 %v354
        %v4074 = vunpack.c.l.b16 %v355
        %v4075 = vunpack.c.h.b16 %v355
        %v4076 = vunpack.c.l.b16 %v356
        %v4077 = vunpack.c.h.b16 %v356
        %v4078 = vunpack.c.l.b16 %v357
        %v4079 = vunpack.c.h.b16 %v357
        %v4080 = vunpack.c.l.b16 %v358
        %v4081 = vunpack.c.h.b16 %v358
        %v4082 = vunpack.c.l.b16 %v359
        %v4083 = vunpack.c.h.b16 %v359
        %v4084 = vunpack.c.l.b16 %v360
        %v4085 = vunpack.c.h.b16 %v360
        %v4086 = vunpack.c.l.b16 %v361
        %v4087 = vunpack.c.h.b16 %v361
        %v4088 = vunpack.c.l.b16 %v362
        %v4089 = vunpack.c.h.b16 %v362
        %v4090 = vunpack.c.l.b16 %v363
        %v4091 = vunpack.c.h.b16 %v363
        %v4092 = vunpack.c.l.b16 %v364
        %v4093 = vunpack.c.h.b16 %v364
        %v4094 = vunpack.c.l.b16 %v365
        %v4095 = vunpack.c.h.b16 %v365
        %v4096 = vunpack.c.l.b16 %v366
        %v4097 = vunpack.c.h.b16 %v366
        %v4098 = vunpack.c.l.b16 %v367
        %v4099 = vunpack.c.h.b16 %v367
        %v4100 = vunpack.c.l.b16 %v368
        %v4101 = vunpack.c.h.b16 %v368
        %v4102 = vunpack.c.l.b16 %v369
        %v4103 = vunpack.c.h.b16 %v369
        %v4104 = vunpack.c.l.b16 %v370
        %v4105 = vunpack.c.h.b16 %v370
        %v4106 = vunpack.c.l.b16 %v371
        %v4107 = vunpack.c.h.b16 %v371
        %v4108 = vunpack.c.l.b16 %v372
        %v4109 = vunpack.c.h.b16 %v372
        %v4110 = vunpack.c.l.b16 %v373
        %v4111 = vunpack.c.h.b16 %v373
        %v4112 = vunpack.c.l.b16 %v374
        %v4113 = vunpack.c.h.b16 %v374
        %v4114 = vunpack.c.l.b16 %v375
        %v4115 = vunpack.c.h.b16 %v375
        %v4116 = vunpack.c.l.b16 %v376
        %v4117 = vunpack.c.h.b16 %v376
        %v4118 = vunpack.c.l.b16 %v377
        %v4119 = vunpack.c.h.b16 %v377
        %v4120 = vunpack.c.l.b16 %v378
        %v4121 = vunpack.c.h.b16 %v378
        %v4122 = vunpack.c.l.b16 %v379
        %v4123 = vunpack.c.h.b16 %v379
        %v4124 = vunpack.c.l.b16 %v380
        %v4125 = vunpack.c.h.b16 %v380
        %v4126 = vunpack.c.l.b16 %v381
        %v4127 = vunpack.c.h.b16 %v381
        %v4128 = vunpack.c.l.b16 %v382
        %v4129 = vunpack.c.h.b16 %v382
        %v4130 = vunpack.c.l.b16 %v383
        %v4131 = vunpack.c.h.b16 %v383
        %v4132 = vunpack.c.l.b16 %v384
        %v4133 = vunpack.c.h.b16 %v384
        %v4134 = vunpack.c.l.b16 %v385
        %v4135 = vunpack.c.h.b16 %v385
        %v4136 = vunpack.c.l.b16 %v386
        %v4137 = vunpack.c.h.b16 %v386
        %v4138 = vunpack.c.l.b16 %v387
        %v4139 = vunpack.c.h.b16 %v387
        %v4140 = vunpack.c.l.b16 %v388
        %v4141 = vunpack.c.h.b16 %v388
        %v4142 = vunpack.c.l.b16 %v389
        %v4143 = vunpack.c.h.b16 %v389
        %v4144 = vunpack.c.l.b16 %v390
        %v4145 = vunpack.c.h.b16 %v390
        %v4146 = vunpack.c.l.b16 %v391
        %v4147 = vunpack.c.h.b16 %v391
        %v4148 = vunpack.c.l.b16 %v392
        %v4149 = vunpack.c.h.b16 %v392
        %v4150 = vunpack.c.l.b16 %v393
        %v4151 = vunpack.c.h.b16 %v393
        %v4152 = vunpack.c.l.b16 %v394
        %v4153 = vunpack.c.h.b16 %v394
        %v4154 = vunpack.c.l.b16 %v395
        %v4155 = vunpack.c.h.b16 %v395
        %v4156 = vunpack.c.l.b16 %v396
        %v4157 = vunpack.c.h.b16 %v396
        %v4158 = vunpack.c.l.b16 %v397
        %v4159 = vunpack.c.h.b16 %v397
        %v4160 = vunpack.c.l.b16 %v398
        %v4161 = vunpack.c.h.b16 %v398
        %v4162 = vunpack.c.l.b16 %v399
        %v4163 = vunpack.c.h.b16 %v399
        %v4164 = vunpack.c.l.b16 %v400
        %v4165 = vunpack.c.h.b16 %v400
        %v4166 = vunpack.c.l.b16 %v401
        %v4167 = vunpack.c.h.b16 %v401
        %v4168 = vunpack.c.l.b16 %v402
        %v4169 = vunpack.c.h.b16 %v402
        %v4170 = vunpack.c.l.b16 %v403
        %v4171 = vunpack.c.h.b16 %v403
        %v4172 = vunpack.c.l.b16 %v404
        %v4173 = vunpack.c.h.b16 %v404
        %v4174 = vunpack.c.l.b16 %v405
        %v4175 = vunpack.c.h.b16 %v405
        %v4176 = vunpack.c.l.b16 %v406
        %v4177 = vunpack.c.h.b16 %v406
        %v4178 = vunpack.c.l.b16 %v407
        %v4179 = vunpack.c.h.b16 %v407
        %v4180 = vunpack.c.l.b16 %v408
        %v4181 = vunpack.c.h.b16 %v408
        %v4182 = vunpack.c.l.b16 %v409
        %v4183 = vunpack.c.h.b16 %v409
        %v4184 = vunpack.c.l.b16 %v410
        %v4185 = vunpack.c.h.b16 %v410
        %v4186 = vunpack.c.l.b16 %v411
        %v4187 = vunpack.c.h.b16 %v411
        %v4188 = vunpack.c.l.b16 %v412
        %v4189 = vunpack.c.h.b16 %v412
        %v4190 = vunpack.c.l.b16 %v413
        %v4191 = vunpack.c.h.b16 %v413
        %v4192 = vunpack.c.l.b16 %v414
        %v4193 = vunpack.c.h.b16 %v414
        %v4194 = vunpack.c.l.b16 %v415
        %v4195 = vunpack.c.h.b16 %v415
        %v4196 = vunpack.c.l.b16 %v416
        %v4197 = vunpack.c.h.b16 %v416
        %v4198 = vunpack.c.l.b16 %v417
        %v4199 = vunpack.c.h.b16 %v417
        %v4200 = vunpack.c.l.b16 %v418
        %v4201 = vunpack.c.h.b16 %v418
        %v4202 = vunpack.c.l.b16 %v419
        %v4203 = vunpack.c.h.b16 %v419
        %v4204 = vunpack.c.l.b16 %v420
        %v4205 = vunpack.c.h.b16 %v420
        %v4206 = vunpack.c.l.b16 %v421
        %v4207 = vunpack.c.h.b16 %v421
        %v4208 = vunpack.c.l.b16 %v422
        %v4209 = vunpack.c.h.b16 %v422
        %v4210 = vunpack.c.l.b16 %v423
        %v4211 = vunpack.c.h.b16 %v423
        %v4212 = vunpack.c.l.b16 %v424
        %v4213 = vunpack.c.h.b16 %v424
        %v4214 = vunpack.c.l.b16 %v425
        %v4215 = vunpack.c.h.b16 %v425
        %v4216 = vunpack.c.l.b16 %v426
        %v4217 = vunpack.c.h.b16 %v426
        %v4218 = vunpack.c.l.b16 %v427
        %v4219 = vunpack.c.h.b16 %v427
        %v4220 = vunpack.c.l.b16 %v428
        %v4221 = vunpack.c.h.b16 %v428
        %v4222 = vunpack.c.l.b16 %v429
        %v4223 = vunpack.c.h.b16 %v429
        %v4224 = vunpack.c.l.b16 %v430
        %v4225 = vunpack.c.h.b16 %v430
        %v4226 = vunpack.c.l.b16 %v431
        %v4227 = vunpack.c.h.b16 %v431
        %v4228 = vunpack.c.l.b16 %v432
        %v4229 = vunpack.c.h.b16 %v432
        %v4230 = vunpack.c.l.b16 %v433
        %v4231 = vunpack.c.h.b16 %v433
        %v4232 = vunpack.c.l.b16 %v434
        %v4233 = vunpack.c.h.b16 %v434
        %v4234 = vunpack.c.l.b16 %v435
        %v4235 = vunpack.c.h.b16 %v435
        %v4236 = vunpack.c.l.b16 %v436
        %v4237 = vunpack.c.h.b16 %v436
        %v4238 = vunpack.c.l.b16 %v437
        %v4239 = vunpack.c.h.b16 %v437
        %v4240 = vunpack.c.l.b16 %v438
        %v4241 = vunpack.c.h.b16 %v438
        %v4242 = vunpack.c.l.b16 %v439
        %v4243 = vunpack.c.h.b16 %v439
        %v4244 = vunpack.c.l.b16 %v440
        %v4245 = vunpack.c.h.b16 %v440
        %v4246 = vunpack.c.l.b16 %v441
        %v4247 = vunpack.c.h.b16 %v441
        %v4248 = vunpack.c.l.b16 %v442
        %v4249 = vunpack.c.h.b16 %v442
        %v4250 = vunpack.c.l.b16 %v443
        %v4251 = vunpack.c.h.b16 %v443
        %v4252 = vunpack.c.l.b16 %v444
        %v4253 = vunpack.c.h.b16 %v444
        %v4254 = vunpack.c.l.b16 %v445
        %v4255 = vunpack.c.h.b16 %v445
        %v4256 = vunpack.c.l.b16 %v446
        %v4257 = vunpack.c.h.b16 %v446
        %v4258 = vunpack.c.l.b16 %v447
        %v4259 = vunpack.c.h.b16 %v447
        %v4260 = vunpack.c.l.b16 %v448
        %v4261 = vunpack.c.h.b16 %v448
        %v4262 = vunpack.c.l.b16 %v449
        %v4263 = vunpack.c.h.b16 %v449
        %v4264 = vunpack.c.l.b16 %v450
        %v4265 = vunpack.c.h.b16 %v450
        %v4266 = vunpack.c.l.b16 %v451
        %v4267 = vunpack.c.h.b16 %v451
        %v4268 = vunpack.c.l.b16 %v452
        %v4269 = vunpack.c.h.b16 %v452
        %v4270 = vunpack.c.l.b16 %v453
        %v4271 = vunpack.c.h.b16 %v453
        %v4272 = vunpack.c.l.b16 %v454
        %v4273 = vunpack.c.h.b16 %v454
        %v4274 = vunpack.c.l.b16 %v455
        %v4275 = vunpack.c.h.b16 %v455
        %v4276 = vunpack.c.l.b16 %v456
        %v4277 = vunpack.c.h.b16 %v456
        %v4278 = vunpack.c.l.b16 %v457
        %v4279 = vunpack.c.h.b16 %v457
        %v4280 = vunpack.c.l.b16 %v458
        %v4281 = vunpack.c.h.b16 %v458
        %v4282 = vunpack.c.l.b16 %v459
        %v4283 = vunpack.c.h.b16 %v459
        %v4284 = vunpack.c.l.b16 %v460
        %v4285 = vunpack.c.h.b16 %v460
        %v4286 = vunpack.c.l.b16 %v461
        %v4287 = vunpack.c.h.b16 %v461
        %v4288 = vunpack.c.l.b16 %v462
        %v4289 = vunpack.c.h.b16 %v462
        %v4290 = vunpack.c.l.b16 %v463
        %v4291 = vunpack.c.h.b16 %v463
        %v4292 = vunpack.c.l.b16 %v464
        %v4293 = vunpack.c.h.b16 %v464
        %v4294 = vunpack.c.l.b16 %v465
        %v4295 = vunpack.c.h.b16 %v465
        %v4296 = vunpack.c.l.b16 %v466
        %v4297 = vunpack.c.h.b16 %v466
        %v4298 = vunpack.c.l.b16 %v467
        %v4299 = vunpack.c.h.b16 %v467
        %v4300 = vunpack.c.l.b16 %v468
        %v4301 = vunpack.c.h.b16 %v468
        %v4302 = vunpack.c.l.b16 %v469
        %v4303 = vunpack.c.h.b16 %v469
        %v4304 = vunpack.c.l.b16 %v470
        %v4305 = vunpack.c.h.b16 %v470
        %v4306 = vunpack.c.l.b16 %v471
        %v4307 = vunpack.c.h.b16 %v471
        %v4308 = vunpack.c.l.b16 %v472
        %v4309 = vunpack.c.h.b16 %v472
        %v4310 = vunpack.c.l.b16 %v473
        %v4311 = vunpack.c.h.b16 %v473
        %v4312 = vunpack.c.l.b16 %v474
        %v4313 = vunpack.c.h.b16 %v474
        %v4314 = vunpack.c.l.b16 %v475
        %v4315 = vunpack.c.h.b16 %v475
        %v4316 = vunpack.c.l.b16 %v476
        %v4317 = vunpack.c.h.b16 %v476
        %v4318 = vunpack.c.l.b16 %v477
        %v4319 = vunpack.c.h.b16 %v477
        %v4320 = vunpack.c.l.b16 %v478
        %v4321 = vunpack.c.h.b16 %v478
        %v4322 = vunpack.c.l.b16 %v479
        %v4323 = vunpack.c.h.b16 %v479
        %v4324 = vunpack.c.l.b16 %v480
        %v4325 = vunpack.c.h.b16 %v480
        %v4326 = vunpack.c.l.b16 %v481
        %v4327 = vunpack.c.h.b16 %v481
        %v4328 = vunpack.c.l.b16 %v482
        %v4329 = vunpack.c.h.b16 %v482
        %v4330 = vunpack.c.l.b16 %v483
        %v4331 = vunpack.c.h.b16 %v483
        %v4332 = vunpack.c.l.b16 %v484
        %v4333 = vunpack.c.h.b16 %v484
        %v4334 = vunpack.c.l.b16 %v485
        %v4335 = vunpack.c.h.b16 %v485
        %v4336 = vunpack.c.l.b16 %v486
        %v4337 = vunpack.c.h.b16 %v486
        %v4338 = vunpack.c.l.b16 %v487
        %v4339 = vunpack.c.h.b16 %v487
        %v4340 = vunpack.c.l.b16 %v488
        %v4341 = vunpack.c.h.b16 %v488
        %v4342 = vunpack.c.l.b16 %v489
        %v4343 = vunpack.c.h.b16 %v489
        %v4344 = vunpack.c.l.b16 %v490
        %v4345 = vunpack.c.h.b16 %v490
        %v4346 = vunpack.c.l.b16 %v491
        %v4347 = vunpack.c.h.b16 %v491
        %v4348 = vunpack.c.l.b16 %v492
        %v4349 = vunpack.c.h.b16 %v492
        %v4350 = vunpack.c.l.b16 %v493
        %v4351 = vunpack.c.h.b16 %v493
        %v4352 = vunpack.c.l.b16 %v494
        %v4353 = vunpack.c.h.b16 %v494
        %v4354 = vunpack.c.l.b16 %v495
        %v4355 = vunpack.c.h.b16 %v495
        %v4356 = vunpack.c.l.b16 %v496
        %v4357 = vunpack.c.h.b16 %v496
        %v4358 = vunpack.c.l.b16 %v497
        %v4359 = vunpack.c.h.b16 %v497
        %v4360 = vunpack.c.l.b16 %v498
        %v4361 = vunpack.c.h.b16 %v498
        %v4362 = vunpack.c.l.b16 %v499
        %v4363 = vunpack.c.h.b16 %v499
        %v4364 = vunpack.c.l.b16 %v500
        %v4365 = vunpack.c.h.b16 %v500
        %v4366 = vunpack.c.l.b16 %v501
        %v4367 = vunpack.c.h.b16 %v501
        %v4368 = vunpack.c.l.b16 %v502
        %v4369 = vunpack.c.h.b16 %v502
        %v4370 = vunpack.c.l.b16 %v503
        %v4371 = vunpack.c.h.b16 %v503
        %v4372 = vunpack.c.l.b16 %v504
        %v4373 = vunpack.c.h.b16 %v504
        %v4374 = vunpack.c.l.b16 %v505
        %v4375 = vunpack.c.h.b16 %v505
        %v4376 = vunpack.c.l.b16 %v506
        %v4377 = vunpack.c.h.b16 %v506
        %v4378 = vunpack.c.l.b16 %v507
        %v4379 = vunpack.c.h.b16 %v507
        %v4380 = vunpack.c.l.b16 %v508
        %v4381 = vunpack.c.h.b16 %v508
        %v4382 = vunpack.c.l.b16 %v509
        %v4383 = vunpack.c.h.b16 %v509
        %v4384 = vunpack.c.l.b16 %v510
        %v4385 = vunpack.c.h.b16 %v510
        %v4386 = vunpack.c.l.b16 %v511
        %v4387 = vunpack.c.h.b16 %v511
        %v4388 = vunpack.c.l.b16 %v512
        %v4389 = vunpack.c.h.b16 %v512
        %v4390 = vunpack.c.l.b16 %v513
        %v4391 = vunpack.c.h.b16 %v513
        %v4392 = vunpack.c.l.b16 %v514
        %v4393 = vunpack.c.h.b16 %v514
        %v4394 = vunpack.c.l.b16 %v515
        %v4395 = vunpack.c.h.b16 %v515
        %v4396 = vunpack.c.l.b16 %v516
        %v4397 = vunpack.c.h.b16 %v516
        %v4398 = vunpack.c.l.b16 %v517
        %v4399 = vunpack.c.h.b16 %v517
        %v4400 = vunpack.c.l.b16 %v518
        %v4401 = vunpack.c.h.b16 %v518
        %v4402 = vunpack.c.l.b16 %v519
        %v4403 = vunpack.c.h.b16 %v519
        %v4404 = vunpack.c.l.b16 %v520
        %v4405 = vunpack.c.h.b16 %v520
        %v4406 = vunpack.c.l.b16 %v521
        %v4407 = vunpack.c.h.b16 %v521
        %v4408 = vunpack.c.l.b16 %v522
        %v4409 = vunpack.c.h.b16 %v522
        %v4410 = vunpack.c.l.b16 %v523
        %v4411 = vunpack.c.h.b16 %v523
        %v4412 = vunpack.c.l.b16 %v524
        %v4413 = vunpack.c.h.b16 %v524
        %v4414 = vunpack.c.l.b16 %v525
        %v4415 = vunpack.c.h.b16 %v525
        %v4416 = vunpack.c.l.b16 %v526
        %v4417 = vunpack.c.h.b16 %v526
        %v4418 = vunpack.c.l.b16 %v527
        %v4419 = vunpack.c.h.b16 %v527
        %v4420 = vunpack.c.l.b16 %v528
        %v4421 = vunpack.c.h.b16 %v528
        %v4422 = vunpack.c.l.b16 %v529
        %v4423 = vunpack.c.h.b16 %v529
        %v4424 = vunpack.c.l.b16 %v530
        %v4425 = vunpack.c.h.b16 %v530
        %v4426 = vunpack.c.l.b16 %v531
        %v4427 = vunpack.c.h.b16 %v531
        %v4428 = vunpack.c.l.b16 %v532
        %v4429 = vunpack.c.h.b16 %v532
        %v4430 = vunpack.c.l.b16 %v533
        %v4431 = vunpack.c.h.b16 %v533
        %v4432 = vunpack.c.l.b16 %v534
        %v4433 = vunpack.c.h.b16 %v534
        %v4434 = vunpack.c.l.b16 %v535
        %v4435 = vunpack.c.h.b16 %v535
        %v4436 = vunpack.c.l.b16 %v536
        %v4437 = vunpack.c.h.b16 %v536
        %v4438 = vunpack.c.l.b16 %v537
        %v4439 = vunpack.c.h.b16 %v537
        %v4440 = vunpack.c.l.b16 %v538
        %v4441 = vunpack.c.h.b16 %v538
        %v4442 = vunpack.c.l.b16 %v539
        %v4443 = vunpack.c.h.b16 %v539
        %v4444 = vunpack.c.l.b16 %v540
        %v4445 = vunpack.c.h.b16 %v540
        %v4446 = vunpack.c.l.b16 %v541
        %v4447 = vunpack.c.h.b16 %v541
        %v4448 = vunpack.c.l.b16 %v542
        %v4449 = vunpack.c.h.b16 %v542
        %v4450 = vunpack.c.l.b16 %v543
        %v4451 = vunpack.c.h.b16 %v543
        %v4452 = vunpack.c.l.b16 %v544
        %v4453 = vunpack.c.h.b16 %v544
        %v4454 = vunpack.c.l.b16 %v545
        %v4455 = vunpack.c.h.b16 %v545
        %v4456 = vunpack.c.l.b16 %v546
        %v4457 = vunpack.c.h.b16 %v546
        %v4458 = vunpack.c.l.b16 %v547
        %v4459 = vunpack.c.h.b16 %v547
        %v4460 = vunpack.c.l.b16 %v548
        %v4461 = vunpack.c.h.b16 %v548
        %v4462 = vunpack.c.l.b16 %v549
        %v4463 = vunpack.c.h.b16 %v549
        %v4464 = vunpack.c.l.b16 %v550
        %v4465 = vunpack.c.h.b16 %v550
        %v4466 = vunpack.c.l.b16 %v551
        %v4467 = vunpack.c.h.b16 %v551
        %v4468 = vunpack.c.l.b16 %v552
        %v4469 = vunpack.c.h.b16 %v552
        %v4470 = vunpack.c.l.b16 %v553
        %v4471 = vunpack.c.h.b16 %v553
        %v4472 = vunpack.c.l.b16 %v554
        %v4473 = vunpack.c.h.b16 %v554
        %v4474 = vunpack.c.l.b16 %v555
        %v4475 = vunpack.c.h.b16 %v555
        %v4476 = vunpack.c.l.b16 %v556
        %v4477 = vunpack.c.h.b16 %v556
        %v4478 = vunpack.c.l.b16 %v557
        %v4479 = vunpack.c.h.b16 %v557
        %v4480 = vunpack.c.l.b16 %v558
        %v4481 = vunpack.c.h.b16 %v558
        %v4482 = vunpack.c.l.b16 %v559
        %v4483 = vunpack.c.h.b16 %v559
        %v4484 = vunpack.c.l.b16 %v560
        %v4485 = vunpack.c.h.b16 %v560
        %v4486 = vunpack.c.l.b16 %v561
        %v4487 = vunpack.c.h.b16 %v561
        %v4488 = vunpack.c.l.b16 %v562
        %v4489 = vunpack.c.h.b16 %v562
        %v4490 = vunpack.c.l.b16 %v563
        %v4491 = vunpack.c.h.b16 %v563
        %v4492 = vunpack.c.l.b16 %v564
        %v4493 = vunpack.c.h.b16 %v564
        %v4494 = vunpack.c.l.b16 %v565
        %v4495 = vunpack.c.h.b16 %v565
        %v4496 = vunpack.c.l.b16 %v566
        %v4497 = vunpack.c.h.b16 %v566
        %v4498 = vunpack.c.l.b16 %v567
        %v4499 = vunpack.c.h.b16 %v567
        %v4500 = vunpack.c.l.b16 %v568
        %v4501 = vunpack.c.h.b16 %v568
        %v4502 = vunpack.c.l.b16 %v569
        %v4503 = vunpack.c.h.b16 %v569
        %v4504 = vunpack.c.l.b16 %v570
        %v4505 = vunpack.c.h.b16 %v570
        %v4506 = vunpack.c.l.b16 %v571
        %v4507 = vunpack.c.h.b16 %v571
        %v4508 = vunpack.c.l.b16 %v572
        %v4509 = vunpack.c.h.b16 %v572
        %v4510 = vunpack.c.l.b16 %v573
        %v4511 = vunpack.c.h.b16 %v573
        %v4512 = vunpack.c.l.b16 %v574
        %v4513 = vunpack.c.h.b16 %v574
        %v4514 = vunpack.c.l.b16 %v575
        %v4515 = vunpack.c.h.b16 %v575
        %v4516 = vunpack.c.l.b16 %v576
        %v4517 = vunpack.c.h.b16 %v576
        %v4518 = vunpack.c.l.b16 %v577
        %v4519 = vunpack.c.h.b16 %v577
        %v4520 = vunpack.c.l.b16 %v578
        %v4521 = vunpack.c.h.b16 %v578
        %v4522 = vunpack.c.l.b16 %v579
        %v4523 = vunpack.c.h.b16 %v579
        %v4524 = vunpack.c.l.b16 %v580
        %v4525 = vunpack.c.h.b16 %v580
        %v4526 = vunpack.c.l.b16 %v581
        %v4527 = vunpack.c.h.b16 %v581
        %v4528 = vunpack.c.l.b16 %v582
        %v4529 = vunpack.c.h.b16 %v582
        %v4530 = vunpack.c.l.b16 %v583
        %v4531 = vunpack.c.h.b16 %v583
        %v4532 = vunpack.c.l.b16 %v584
        %v4533 = vunpack.c.h.b16 %v584
        %v4534 = vunpack.c.l.b16 %v585
        %v4535 = vunpack.c.h.b16 %v585
        %v4536 = vunpack.c.l.b16 %v586
        %v4537 = vunpack.c.h.b16 %v586
        %v4538 = vunpack.c.l.b16 %v587
        %v4539 = vunpack.c.h.b16 %v587
        %v4540 = vunpack.c.l.b16 %v588
        %v4541 = vunpack.c.h.b16 %v588
        %v4542 = vunpack.c.l.b16 %v589
        %v4543 = vunpack.c.h.b16 %v589
        %v4544 = vunpack.c.l.b16 %v590
        %v4545 = vunpack.c.h.b16 %v590
        %v4546 = vunpack.c.l.b16 %v591
        %v4547 = vunpack.c.h.b16 %v591
        %v4548 = vunpack.c.l.b16 %v592
        %v4549 = vunpack.c.h.b16 %v592
        %v4550 = vunpack.c.l.b16 %v593
        %v4551 = vunpack.c.h.b16 %v593
        %v4552 = vunpack.c.l.b16 %v594
        %v4553 = vunpack.c.h.b16 %v594
        %v4554 = vunpack.c.l.b16 %v595
        %v4555 = vunpack.c.h.b16 %v595
        %v4556 = vunpack.c.l.b16 %v596
        %v4557 = vunpack.c.h.b16 %v596
        %v4558 = vunpack.c.l.b16 %v597
        %v4559 = vunpack.c.h.b16 %v597
        %v4560 = vunpack.c.l.b16 %v598
        %v4561 = vunpack.c.h.b16 %v598
        %v4562 = vunpack.c.l.b16 %v599
        %v4563 = vunpack.c.h.b16 %v599
        %v4564 = vunpack.c.l.b16 %v600
        %v4565 = vunpack.c.h.b16 %v600
        %v4566 = vunpack.c.l.b16 %v601
        %v4567 = vunpack.c.h.b16 %v601
        %v4568 = vunpack.c.l.b16 %v602
        %v4569 = vunpack.c.h.b16 %v602
        %v4570 = vunpack.c.l.b16 %v603
        %v4571 = vunpack.c.h.b16 %v603
        %v4572 = vunpack.c.l.b16 %v604
        %v4573 = vunpack.c.h.b16 %v604
        %v4574 = vunpack.c.l.b16 %v605
        %v4575 = vunpack.c.h.b16 %v605
        %v4576 = vunpack.c.l.b16 %v606
        %v4577 = vunpack.c.h.b16 %v606
        %v4578 = vunpack.c.l.b16 %v607
        %v4579 = vunpack.c.h.b16 %v607
        %v4580 = vunpack.c.l.b16 %v608
        %v4581 = vunpack.c.h.b16 %v608
        %v4582 = vunpack.c.l.b16 %v609
        %v4583 = vunpack.c.h.b16 %v609
        %v4584 = vunpack.c.l.b16 %v610
        %v4585 = vunpack.c.h.b16 %v610
        %v4586 = vunpack.c.l.b16 %v611
        %v4587 = vunpack.c.h.b16 %v611
        %v4588 = vunpack.c.l.b16 %v612
        %v4589 = vunpack.c.h.b16 %v612
        %v4590 = vunpack.c.l.b16 %v613
        %v4591 = vunpack.c.h.b16 %v613
        %v4592 = vunpack.c.l.b16 %v614
        %v4593 = vunpack.c.h.b16 %v614
        %v4594 = vunpack.c.l.b16 %v615
        %v4595 = vunpack.c.h.b16 %v615
        %v4596 = vunpack.c.l.b16 %v616
        %v4597 = vunpack.c.h.b16 %v616
        %v4598 = vunpack.c.l.b16 %v617
        %v4599 = vunpack.c.h.b16 %v617
        %v4600 = vunpack.c.l.b16 %v618
        %v4601 = vunpack.c.h.b16 %v618
        %v4602 = vunpack.c.l.b16 %v619
        %v4603 = vunpack.c.h.b16 %v619
        %v4604 = vunpack.c.l.b16 %v620
        %v4605 = vunpack.c.h.b16 %v620
        %v4606 = vunpack.c.l.b16 %v621
        %v4607 = vunpack.c.h.b16 %v621
        %v4608 = vunpack.c.l.b16 %v622
        %v4609 = vunpack.c.h.b16 %v622
        %v4610 = vunpack.c.l.b16 %v623
        %v4611 = vunpack.c.h.b16 %v623
        %v4612 = vunpack.c.l.b16 %v624
        %v4613 = vunpack.c.h.b16 %v624
        %v4614 = vunpack.c.l.b16 %v625
        %v4615 = vunpack.c.h.b16 %v625
        %v4616 = vunpack.c.l.b16 %v626
        %v4617 = vunpack.c.h.b16 %v626
        %v4618 = vunpack.c.l.b16 %v627
        %v4619 = vunpack.c.h.b16 %v627
        %v4620 = vunpack.c.l.b16 %v628
        %v4621 = vunpack.c.h.b16 %v628
        %v4622 = vunpack.c.l.b16 %v629
        %v4623 = vunpack.c.h.b16 %v629
        %v4624 = vunpack.c.l.b16 %v630
        %v4625 = vunpack.c.h.b16 %v630
        %v4626 = vunpack.c.l.b16 %v631
        %v4627 = vunpack.c.h.b16 %v631
        %v4628 = vunpack.c.l.b16 %v632
        %v4629 = vunpack.c.h.b16 %v632
        %v4630 = vunpack.c.l.b16 %v633
        %v4631 = vunpack.c.h.b16 %v633
        %v4632 = vunpack.c.l.b16 %v634
        %v4633 = vunpack.c.h.b16 %v634
        %v4634 = vunpack.c.l.b16 %v635
        %v4635 = vunpack.c.h.b16 %v635
        %v4636 = vunpack.c.l.b16 %v636
        %v4637 = vunpack.c.h.b16 %v636
        %v4638 = vunpack.c.l.b16 %v637
        %v4639 = vunpack.c.h.b16 %v637
        %v4640 = vunpack.c.l.b16 %v638
        %v4641 = vunpack.c.h.b16 %v638
        %v4642 = vunpack.c.l.b16 %v639
        %v4643 = vunpack.c.h.b16 %v639
        %v4644 = vunpack.c.l.b16 %v640
        %v4645 = vunpack.c.h.b16 %v640
        %v4646 = vunpack.c.l.b16 %v641
        %v4647 = vunpack.c.h.b16 %v641
        %v4648 = vunpack.c.l.b16 %v642
        %v4649 = vunpack.c.h.b16 %v642
        %v4650 = vunpack.c.l.b16 %v643
        %v4651 = vunpack.c.h.b16 %v643
        %v4652 = vunpack.c.l.b16 %v644
        %v4653 = vunpack.c.h.b16 %v644
        %v4654 = vunpack.c.l.b16 %v645
        %v4655 = vunpack.c.h.b16 %v645
        %v4656 = vunpack.c.l.b16 %v646
        %v4657 = vunpack.c.h.b16 %v646
        %v4658 = vunpack.c.l.b16 %v647
        %v4659 = vunpack.c.h.b16 %v647
        %v4660 = vunpack.c.l.b16 %v648
        %v4661 = vunpack.c.h.b16 %v648
        %v4662 = vunpack.c.l.b16 %v649
        %v4663 = vunpack.c.h.b16 %v649
        %v4664 = vunpack.c.l.b16 %v650
        %v4665 = vunpack.c.h.b16 %v650
        %v4666 = vunpack.c.l.b16 %v651
        %v4667 = vunpack.c.h.b16 %v651
        %v4668 = vunpack.c.l.b16 %v652
        %v4669 = vunpack.c.h.b16 %v652
        %v4670 = vunpack.c.l.b16 %v653
        %v4671 = vunpack.c.h.b16 %v653
        %v4672 = vunpack.c.l.b16 %v654
        %v4673 = vunpack.c.h.b16 %v654
        %v4674 = vunpack.c.l.b16 %v655
        %v4675 = vunpack.c.h.b16 %v655
        %v4676 = vunpack.c.l.b16 %v656
        %v4677 = vunpack.c.h.b16 %v656
        %v4678 = vunpack.c.l.b16 %v657
        %v4679 = vunpack.c.h.b16 %v657
        %v4680 = vunpack.c.l.b16 %v658
        %v4681 = vunpack.c.h.b16 %v658
        %v4682 = vunpack.c.l.b16 %v659
        %v4683 = vunpack.c.h.b16 %v659
        %v4684 = vunpack.c.l.b16 %v660
        %v4685 = vunpack.c.h.b16 %v660
        %v4686 = vunpack.c.l.b16 %v661
        %v4687 = vunpack.c.h.b16 %v661
        %v4688 = vunpack.c.l.b16 %v662
        %v4689 = vunpack.c.h.b16 %v662
        %v4690 = vunpack.c.l.b16 %v663
        %v4691 = vunpack.c.h.b16 %v663
        %v4692 = vunpack.c.l.b16 %v664
        %v4693 = vunpack.c.h.b16 %v664
        %v4694 = vunpack.c.l.b16 %v665
        %v4695 = vunpack.c.h.b16 %v665
        %v4696 = vunpack.c.l.b16 %v666
        %v4697 = vunpack.c.h.b16 %v666
        %v4698 = vunpack.c.l.b16 %v667
        %v4699 = vunpack.c.h.b16 %v667
        %v4700 = vunpack.c.l.b16 %v668
        %v4701 = vunpack.c.h.b16 %v668
        %v4702 = vunpack.c.l.b16 %v669
        %v4703 = vunpack.c.h.b16 %v669
        %v4704 = vunpack.c.l.b16 %v670
        %v4705 = vunpack.c.h.b16 %v670
        %v4706 = vunpack.c.l.b16 %v671
        %v4707 = vunpack.c.h.b16 %v671
        %v4708 = vunpack.c.l.b16 %v672
        %v4709 = vunpack.c.h.b16 %v672
        %v4710 = vunpack.c.l.b16 %v673
        %v4711 = vunpack.c.h.b16 %v673
        %v4712 = vunpack.c.l.b16 %v674
        %v4713 = vunpack.c.h.b16 %v674
        %v4714 = vunpack.c.l.b16 %v675
        %v4715 = vunpack.c.h.b16 %v675
        %v4716 = vunpack.c.l.b16 %v676
        %v4717 = vunpack.c.h.b16 %v676
        %v4718 = vunpack.c.l.b16 %v677
        %v4719 = vunpack.c.h.b16 %v677
        %v4720 = vunpack.c.l.b16 %v678
        %v4721 = vunpack.c.h.b16 %v678
        %v4722 = vunpack.c.l.b16 %v679
        %v4723 = vunpack.c.h.b16 %v679
        %v4724 = vunpack.c.l.b16 %v680
        %v4725 = vunpack.c.h.b16 %v680
        %v4726 = vunpack.c.l.b16 %v681
        %v4727 = vunpack.c.h.b16 %v681
        %v4728 = vunpack.c.l.b16 %v682
        %v4729 = vunpack.c.h.b16 %v682
        %v4730 = vunpack.c.l.b16 %v683
        %v4731 = vunpack.c.h.b16 %v683
        %v4732 = vunpack.c.l.b16 %v684
        %v4733 = vunpack.c.h.b16 %v684
        %v4734 = vunpack.c.l.b16 %v685
        %v4735 = vunpack.c.h.b16 %v685
        %v4736 = vunpack.c.l.b16 %v686
        %v4737 = vunpack.c.h.b16 %v686
        %v4738 = vunpack.c.l.b16 %v687
        %v4739 = vunpack.c.h.b16 %v687
        %v4740 = vunpack.c.l.b16 %v688
        %v4741 = vunpack.c.h.b16 %v688
        %v4742 = vunpack.c.l.b16 %v689
        %v4743 = vunpack.c.h.b16 %v689
        %v4744 = vunpack.c.l.b16 %v690
        %v4745 = vunpack.c.h.b16 %v690
        %v4746 = vunpack.c.l.b16 %v691
        %v4747 = vunpack.c.h.b16 %v691
        %v4748 = vunpack.c.l.b16 %v692
        %v4749 = vunpack.c.h.b16 %v692
        %v4750 = vunpack.c.l.b16 %v693
        %v4751 = vunpack.c.h.b16 %v693
        %v4752 = vunpack.c.l.b16 %v694
        %v4753 = vunpack.c.h.b16 %v694
        %v4754 = vunpack.c.l.b16 %v695
        %v4755 = vunpack.c.h.b16 %v695
        %v4756 = vunpack.c.l.b16 %v696
        %v4757 = vunpack.c.h.b16 %v696
        %v4758 = vunpack.c.l.b16 %v697
        %v4759 = vunpack.c.h.b16 %v697
        %v4760 = vunpack.c.l.b16 %v698
        %v4761 = vunpack.c.h.b16 %v698
        %v4762 = vunpack.c.l.b16 %v699
        %v4763 = vunpack.c.h.b16 %v699
        %v4764 = vunpack.c.l.b16 %v700
        %v4765 = vunpack.c.h.b16 %v700
        %v4766 = vunpack.c.l.b16 %v701
        %v4767 = vunpack.c.h.b16 %v701
        %v4768 = vunpack.c.l.b16 %v702
        %v4769 = vunpack.c.h.b16 %v702
        %v4770 = vunpack.c.l.b16 %v703
        %v4771 = vunpack.c.h.b16 %v703
        %v4772 = vunpack.c.l.b16 %v704
        %v4773 = vunpack.c.h.b16 %v704
        %v4774 = vunpack.c.l.b16 %v705
        %v4775 = vunpack.c.h.b16 %v705
        %v4776 = vunpack.c.l.b16 %v706
        %v4777 = vunpack.c.h.b16 %v706
        %v4778 = vunpack.c.l.b16 %v707
        %v4779 = vunpack.c.h.b16 %v707
        %v4780 = vunpack.c.l.b16 %v708
        %v4781 = vunpack.c.h.b16 %v708
        %v4782 = vunpack.c.l.b16 %v709
        %v4783 = vunpack.c.h.b16 %v709
        %v4784 = vunpack.c.l.b16 %v710
        %v4785 = vunpack.c.h.b16 %v710
        %v4786 = vunpack.c.l.b16 %v711
        %v4787 = vunpack.c.h.b16 %v711
        %v4788 = vunpack.c.l.b16 %v712
        %v4789 = vunpack.c.h.b16 %v712
        %v4790 = vunpack.c.l.b16 %v713
        %v4791 = vunpack.c.h.b16 %v713
        %v4792 = vunpack.c.l.b16 %v714
        %v4793 = vunpack.c.h.b16 %v714
        %v4794 = vunpack.c.l.b16 %v715
        %v4795 = vunpack.c.h.b16 %v715
        %v4796 = vunpack.c.l.b16 %v716
        %v4797 = vunpack.c.h.b16 %v716
        %v4798 = vunpack.c.l.b16 %v717
        %v4799 = vunpack.c.h.b16 %v717
        %v4800 = vunpack.c.l.b16 %v718
        %v4801 = vunpack.c.h.b16 %v718
        %v4802 = vunpack.c.l.b16 %v719
        %v4803 = vunpack.c.h.b16 %v719
        %v4804 = vunpack.c.l.b16 %v720
        %v4805 = vunpack.c.h.b16 %v720
        %v4806 = vunpack.c.l.b16 %v721
        %v4807 = vunpack.c.h.b16 %v721
        %v4808 = vunpack.c.l.b16 %v722
        %v4809 = vunpack.c.h.b16 %v722
        %v4810 = vunpack.c.l.b16 %v723
        %v4811 = vunpack.c.h.b16 %v723
        %v4812 = vunpack.c.l.b16 %v724
        %v4813 = vunpack.c.h.b16 %v724
        %v4814 = vunpack.c.l.b16 %v725
        %v4815 = vunpack.c.h.b16 %v725
        %v4816 = vunpack.c.l.b16 %v726
        %v4817 = vunpack.c.h.b16 %v726
        %v4818 = vunpack.c.l.b16 %v727
        %v4819 = vunpack.c.h.b16 %v727
        %v4820 = vunpack.c.l.b16 %v728
        %v4821 = vunpack.c.h.b16 %v728
        %v4822 = vunpack.c.l.b16 %v729
        %v4823 = vunpack.c.h.b16 %v729
        %v4824 = vunpack.c.l.b16 %v730
        %v4825 = vunpack.c.h.b16 %v730
        %v4826 = vunpack.c.l.b16 %v731
        %v4827 = vunpack.c.h.b16 %v731
        %v4828 = vunpack.c.l.b16 %v732
        %v4829 = vunpack.c.h.b16 %v732
        %v4830 = vunpack.c.l.b16 %v733
        %v4831 = vunpack.c.h.b16 %v733
        %v4832 = vunpack.c.l.b16 %v734
        %v4833 = vunpack.c.h.b16 %v734
        %v4834 = vunpack.c.l.b16 %v735
        %v4835 = vunpack.c.h.b16 %v735
        %v4836 = vunpack.c.l.b16 %v736
        %v4837 = vunpack.c.h.b16 %v736
        %v4838 = vunpack.c.l.b16 %v737
        %v4839 = vunpack.c.h.b16 %v737
        %v4840 = vunpack.c.l.b16 %v738
        %v4841 = vunpack.c.h.b16 %v738
        %v4842 = vunpack.c.l.b16 %v739
        %v4843 = vunpack.c.h.b16 %v739
        %v4844 = vunpack.c.l.b16 %v740
        %v4845 = vunpack.c.h.b16 %v740
        %v4846 = vunpack.c.l.b16 %v741
        %v4847 = vunpack.c.h.b16 %v741
        %v4848 = vunpack.c.l.b16 %v742
        %v4849 = vunpack.c.h.b16 %v742
        %v4850 = vunpack.c.l.b16 %v743
        %v4851 = vunpack.c.h.b16 %v743
        %v4852 = vunpack.c.l.b16 %v744
        %v4853 = vunpack.c.h.b16 %v744
        %v4854 = vunpack.c.l.b16 %v745
        %v4855 = vunpack.c.h.b16 %v745
        %v4856 = vunpack.c.l.b16 %v746
        %v4857 = vunpack.c.h.b16 %v746
        %v4858 = vunpack.c.l.b16 %v747
        %v4859 = vunpack.c.h.b16 %v747
        %v4860 = vunpack.c.l.b16 %v748
        %v4861 = vunpack.c.h.b16 %v748
        %v4862 = vunpack.c.l.b16 %v749
        %v4863 = vunpack.c.h.b16 %v749
        %v4864 = vunpack.c.l.b16 %v750
        %v4865 = vunpack.c.h.b16 %v750
        %v4866 = vunpack.c.l.b16 %v751
        %v4867 = vunpack.c.h.b16 %v751
        %v4868 = vunpack.c.l.b16 %v752
        %v4869 = vunpack.c.h.b16 %v752
        %v4870 = vunpack.c.l.b16 %v753
        %v4871 = vunpack.c.h.b16 %v753
        %v4872 = vunpack.c.l.b16 %v754
        %v4873 = vunpack.c.h.b16 %v754
        %v4874 = vunpack.c.l.b16 %v755
        %v4875 = vunpack.c.h.b16 %v755
        %v4876 = vunpack.c.l.b16 %v756
        %v4877 = vunpack.c.h.b16 %v756
        %v4878 = vunpack.c.l.b16 %v757
        %v4879 = vunpack.c.h.b16 %v757
        %v4880 = vunpack.c.l.b16 %v758
        %v4881 = vunpack.c.h.b16 %v758
        %v4882 = vunpack.c.l.b16 %v759
        %v4883 = vunpack.c.h.b16 %v759
        %v4884 = vunpack.c.l.b16 %v760
        %v4885 = vunpack.c.h.b16 %v760
        %v4886 = vunpack.c.l.b16 %v761
        %v4887 = vunpack.c.h.b16 %v761
        %v4888 = vunpack.c.l.b16 %v762
        %v4889 = vunpack.c.h.b16 %v762
        %v4890 = vunpack.c.l.b16 %v763
        %v4891 = vunpack.c.h.b16 %v763
        %v4892 = vunpack.c.l.b16 %v764
        %v4893 = vunpack.c.h.b16 %v764
        %v4894 = vunpack.c.l.b16 %v765
        %v4895 = vunpack.c.h.b16 %v765
        %v4896 = vunpack.c.l.b16 %v766
        %v4897 = vunpack.c.h.b16 %v766
        %v4898 = vunpack.c.l.b16 %v767
        %v4899 = vunpack.c.h.b16 %v767
        %v4900 = vunpack.c.l.b16 %v768
        %v4901 = vunpack.c.h.b16 %v768
        %v4902 = vunpack.c.l.b16 %v769
        %v4903 = vunpack.c.h.b16 %v769
        %v4904 = vunpack.c.l.b16 %v770
        %v4905 = vunpack.c.h.b16 %v770
        %v4906 = vunpack.c.l.b16 %v771
        %v4907 = vunpack.c.h.b16 %v771
        %v4908 = vunpack.c.l.b16 %v772
        %v4909 = vunpack.c.h.b16 %v772
        %v4910 = vunpack.c.l.b16 %v773
        %v4911 = vunpack.c.h.b16 %v773
        %v4912 = vunpack.c.l.b16 %v774
        %v4913 = vunpack.c.h.b16 %v774
        %v4914 = vunpack.c.l.b16 %v775
        %v4915 = vunpack.c.h.b16 %v775
        %v4916 = vunpack.c.l.b16 %v776
        %v4917 = vunpack.c.h.b16 %v776
        %v4918 = vunpack.c.l.b16 %v777
        %v4919 = vunpack.c.h.b16 %v777
        %v4920 = vunpack.c.l.b16 %v778
        %v4921 = vunpack.c.h.b16 %v778
        %v4922 = vunpack.c.l.b16 %v779
        %v4923 = vunpack.c.h.b16 %v779
        %v4924 = vunpack.c.l.b16 %v780
        %v4925 = vunpack.c.h.b16 %v780
        %v4926 = vunpack.c.l.b16 %v781
        %v4927 = vunpack.c.h.b16 %v781
        %v4928 = vunpack.c.l.b16 %v782
        %v4929 = vunpack.c.h.b16 %v782
        %v4930 = vunpack.c.l.b16 %v783
        %v4931 = vunpack.c.h.b16 %v783
        %v4932 = vunpack.c.l.b16 %v784
        %v4933 = vunpack.c.h.b16 %v784
        %v4934 = vunpack.c.l.b16 %v785
        %v4935 = vunpack.c.h.b16 %v785
        %v4936 = vunpack.c.l.b16 %v786
        %v4937 = vunpack.c.h.b16 %v786
        %v4938 = vunpack.c.l.b16 %v787
        %v4939 = vunpack.c.h.b16 %v787
        %v4940 = vunpack.c.l.b16 %v788
        %v4941 = vunpack.c.h.b16 %v788
        %v4942 = vunpack.c.l.b16 %v789
        %v4943 = vunpack.c.h.b16 %v789
        %v4944 = vunpack.c.l.b16 %v790
        %v4945 = vunpack.c.h.b16 %v790
        %v4946 = vunpack.c.l.b16 %v791
        %v4947 = vunpack.c.h.b16 %v791
        %v4948 = vunpack.c.l.b16 %v792
        %v4949 = vunpack.c.h.b16 %v792
        %v4950 = vunpack.c.l.b16 %v793
        %v4951 = vunpack.c.h.b16 %v793
        %v4952 = vunpack.c.l.b16 %v794
        %v4953 = vunpack.c.h.b16 %v794
        %v4954 = vunpack.c.l.b16 %v795
        %v4955 = vunpack.c.h.b16 %v795
        %v4956 = vunpack.c.l.b16 %v796
        %v4957 = vunpack.c.h.b16 %v796
        %v4958 = vunpack.c.l.b16 %v797
        %v4959 = vunpack.c.h.b16 %v797
        %v4960 = vunpack.c.l.b16 %v798
        %v4961 = vunpack.c.h.b16 %v798
        %v4962 = vunpack.c.l.b16 %v799
        %v4963 = vunpack.c.h.b16 %v799
        %v4964 = vunpack.c.l.b16 %v800
        %v4965 = vunpack.c.h.b16 %v800
        %v4966 = vunpack.c.l.b16 %v801
        %v4967 = vunpack.c.h.b16 %v801
        %v4968 = vunpack.c.l.b16 %v802
        %v4969 = vunpack.c.h.b16 %v802
        %v4970 = vunpack.c.l.b16 %v803
        %v4971 = vunpack.c.h.b16 %v803
        %v4972 = vunpack.c.l.b16 %v804
        %v4973 = vunpack.c.h.b16 %v804
        %v4974 = vunpack.c.l.b16 %v805
        %v4975 = vunpack.c.h.b16 %v805
        %v4976 = vunpack.c.l.b16 %v806
        %v4977 = vunpack.c.h.b16 %v806
        %v4978 = vunpack.c.l.b16 %v807
        %v4979 = vunpack.c.h.b16 %v807
        %v4980 = vunpack.c.l.b16 %v808
        %v4981 = vunpack.c.h.b16 %v808
        %v4982 = vunpack.c.l.b16 %v809
        %v4983 = vunpack.c.h.b16 %v809
        %v4984 = vunpack.c.l.b16 %v810
        %v4985 = vunpack.c.h.b16 %v810
        %v4986 = vunpack.c.l.b16 %v811
        %v4987 = vunpack.c.h.b16 %v811
        %v4988 = vunpack.c.l.b16 %v812
        %v4989 = vunpack.c.h.b16 %v812
        %v4990 = vunpack.c.l.b16 %v813
        %v4991 = vunpack.c.h.b16 %v813
        %v4992 = vunpack.c.l.b16 %v814
        %v4993 = vunpack.c.h.b16 %v814
        %v4994 = vunpack.c.l.b16 %v815
        %v4995 = vunpack.c.h.b16 %v815
        %v4996 = vunpack.c.l.b16 %v816
        %v4997 = vunpack.c.h.b16 %v816
        %v4998 = vunpack.c.l.b16 %v817
        %v4999 = vunpack.c.h.b16 %v817
        %v5000 = vunpack.c.l.b16 %v818
        %v5001 = vunpack.c.h.b16 %v818
        %v5002 = vunpack.c.l.b16 %v819
        %v5003 = vunpack.c.h.b16 %v819
        %v5004 = vunpack.c.l.b16 %v820
        %v5005 = vunpack.c.h.b16 %v820
        %v5006 = vunpack.c.l.b16 %v821
        %v5007 = vunpack.c.h.b16 %v821
        %v5008 = vunpack.c.l.b16 %v822
        %v5009 = vunpack.c.h.b16 %v822
        %v5010 = vunpack.c.l.b16 %v823
        %v5011 = vunpack.c.h.b16 %v823
        %v5012 = vunpack.c.l.b16 %v824
        %v5013 = vunpack.c.h.b16 %v824
        %v5014 = vunpack.c.l.b16 %v825
        %v5015 = vunpack.c.h.b16 %v825
        %v5016 = vunpack.c.l.b16 %v826
        %v5017 = vunpack.c.h.b16 %v826
        %v5018 = vunpack.c.l.b16 %v827
        %v5019 = vunpack.c.h.b16 %v827
        %v5020 = vunpack.c.l.b16 %v828
        %v5021 = vunpack.c.h.b16 %v828
        %v5022 = vunpack.c.l.b16 %v829
        %v5023 = vunpack.c.h.b16 %v829
        %v5024 = vunpack.c.l.b16 %v830
        %v5025 = vunpack.c.h.b16 %v830
        %v5026 = vunpack.c.l.b16 %v831
        %v5027 = vunpack.c.h.b16 %v831
        %v5028 = vunpack.c.l.b16 %v832
        %v5029 = vunpack.c.h.b16 %v832
        %v5030 = vunpack.c.l.b16 %v833
        %v5031 = vunpack.c.h.b16 %v833
        %v5032 = vunpack.c.l.b16 %v834
        %v5033 = vunpack.c.h.b16 %v834
        %v5034 = vunpack.c.l.b16 %v835
        %v5035 = vunpack.c.h.b16 %v835
        %v5036 = vunpack.c.l.b16 %v836
        %v5037 = vunpack.c.h.b16 %v836
        %v5038 = vunpack.c.l.b16 %v837
        %v5039 = vunpack.c.h.b16 %v837
        %v5040 = vunpack.c.l.b16 %v838
        %v5041 = vunpack.c.h.b16 %v838
        %v5042 = vunpack.c.l.b16 %v839
        %v5043 = vunpack.c.h.b16 %v839
        %v5044 = vunpack.c.l.b16 %v840
        %v5045 = vunpack.c.h.b16 %v840
        %v5046 = vunpack.c.l.b16 %v841
        %v5047 = vunpack.c.h.b16 %v841
        %v5048 = vunpack.c.l.b16 %v842
        %v5049 = vunpack.c.h.b16 %v842
        %v5050 = vunpack.c.l.b16 %v843
        %v5051 = vunpack.c.h.b16 %v843
        %v5052 = vunpack.c.l.b16 %v844
        %v5053 = vunpack.c.h.b16 %v844
        %v5054 = vunpack.c.l.b16 %v845
        %v5055 = vunpack.c.h.b16 %v845
        %v5056 = vunpack.c.l.b16 %v846
        %v5057 = vunpack.c.h.b16 %v846
        %v5058 = vunpack.c.l.b16 %v847
        %v5059 = vunpack.c.h.b16 %v847
        %v5060 = vunpack.c.l.b16 %v848
        %v5061 = vunpack.c.h.b16 %v848
        %v5062 = vunpack.c.l.b16 %v849
        %v5063 = vunpack.c.h.b16 %v849
        %v5064 = vunpack.c.l.b16 %v850
        %v5065 = vunpack.c.h.b16 %v850
        %v5066 = vunpack.c.l.b16 %v851
        %v5067 = vunpack.c.h.b16 %v851
        %v5068 = vunpack.c.l.b16 %v852
        %v5069 = vunpack.c.h.b16 %v852
        %v5070 = vunpack.c.l.b16 %v853
        %v5071 = vunpack.c.h.b16 %v853
        %v5072 = vunpack.c.l.b16 %v854
        %v5073 = vunpack.c.h.b16 %v854
        %v5074 = vunpack.c.l.b16 %v855
        %v5075 = vunpack.c.h.b16 %v855
        %v5076 = vunpack.c.l.b16 %v856
        %v5077 = vunpack.c.h.b16 %v856
        %v5078 = vunpack.c.l.b16 %v857
        %v5079 = vunpack.c.h.b16 %v857
        %v5080 = vunpack.c.l.b16 %v858
        %v5081 = vunpack.c.h.b16 %v858
        %v5082 = vunpack.c.l.b16 %v859
        %v5083 = vunpack.c.h.b16 %v859
        %v5084 = vunpack.c.l.b16 %v860
        %v5085 = vunpack.c.h.b16 %v860
        %v5086 = vunpack.c.l.b16 %v861
        %v5087 = vunpack.c.h.b16 %v861
        %v5088 = vunpack.c.l.b16 %v862
        %v5089 = vunpack.c.h.b16 %v862
        %v5090 = vunpack.c.l.b16 %v863
        %v5091 = vunpack.c.h.b16 %v863
        %v5092 = vunpack.c.l.b16 %v864
        %v5093 = vunpack.c.h.b16 %v864
        %v5094 = vunpack.c.l.b16 %v865
        %v5095 = vunpack.c.h.b16 %v865
        %v5096 = vunpack.c.l.b16 %v866
        %v5097 = vunpack.c.h.b16 %v866
        %v5098 = vunpack.c.l.b16 %v867
        %v5099 = vunpack.c.h.b16 %v867
        %v5100 = vunpack.c.l.b16 %v868
        %v5101 = vunpack.c.h.b16 %v868
        %v5102 = vunpack.c.l.b16 %v869
        %v5103 = vunpack.c.h.b16 %v869
        %v5104 = vunpack.c.l.b16 %v870
        %v5105 = vunpack.c.h.b16 %v870
        %v5106 = vunpack.c.l.b16 %v871
        %v5107 = vunpack.c.h.b16 %v871
        %v5108 = vunpack.c.l.b16 %v872
        %v5109 = vunpack.c.h.b16 %v872
        %v5110 = vunpack.c.l.b16 %v873
        %v5111 = vunpack.c.h.b16 %v873
        %v5112 = vunpack.c.l.b16 %v874
        %v5113 = vunpack.c.h.b16 %v874
        %v5114 = vunpack.c.l.b16 %v875
        %v5115 = vunpack.c.h.b16 %v875
        %v5116 = vunpack.c.l.b16 %v876
        %v5117 = vunpack.c.h.b16 %v876
        %v5118 = vunpack.c.l.b16 %v877
        %v5119 = vunpack.c.h.b16 %v877
        %v5120 = vunpack.c.l.b16 %v878
        %v5121 = vunpack.c.h.b16 %v878
        %v5122 = vunpack.c.l.b16 %v879
        %v5123 = vunpack.c.h.b16 %v879
        %v5124 = vunpack.c.l.b16 %v880
        %v5125 = vunpack.c.h.b16 %v880
        %v5126 = vunpack.c.l.b16 %v881
        %v5127 = vunpack.c.h.b16 %v881
        %v5128 = vunpack.c.l.b16 %v882
        %v5129 = vunpack.c.h.b16 %v882
        %v5130 = vunpack.c.l.b16 %v883
        %v5131 = vunpack.c.h.b16 %v883
        %v5132 = vunpack.c.l.b16 %v884
        %v5133 = vunpack.c.h.b16 %v884
        %v5134 = vunpack.c.l.b16 %v885
        %v5135 = vunpack.c.h.b16 %v885
        %v5136 = vunpack.c.l.b16 %v886
        %v5137 = vunpack.c.h.b16 %v886
        %v5138 = vunpack.c.l.b16 %v887
        %v5139 = vunpack.c.h.b16 %v887
        %v5140 = vunpack.c.l.b16 %v888
        %v5141 = vunpack.c.h.b16 %v888
        %v5142 = vunpack.c.l.b16 %v889
        %v5143 = vunpack.c.h.b16 %v889
        %v5144 = vunpack.c.l.b16 %v890
        %v5145 = vunpack.c.h.b16 %v890
        %v5146 = vunpack.c.l.b16 %v891
        %v5147 = vunpack.c.h.b16 %v891
        %v5148 = vunpack.c.l.b16 %v892
        %v5149 = vunpack.c.h.b16 %v892
        %v5150 = vunpack.c.l.b16 %v893
        %v5151 = vunpack.c.h.b16 %v893
        %v5152 = vunpack.c.l.b16 %v894
        %v5153 = vunpack.c.h.b16 %v894
        %v5154 = vunpack.c.l.b16 %v895
        %v5155 = vunpack.c.h.b16 %v895
        %v5156 = vunpack.c.l.b16 %v896
        %v5157 = vunpack.c.h.b16 %v896
        %v5158 = vunpack.c.l.b16 %v897
        %v5159 = vunpack.c.h.b16 %v897
        %v5160 = vunpack.c.l.b16 %v898
        %v5161 = vunpack.c.h.b16 %v898
        %v5162 = vunpack.c.l.b16 %v899
        %v5163 = vunpack.c.h.b16 %v899
        %v5164 = vunpack.c.l.b16 %v900
        %v5165 = vunpack.c.h.b16 %v900
        %v5166 = vunpack.c.l.b16 %v901
        %v5167 = vunpack.c.h.b16 %v901
        %v5168 = vunpack.c.l.b16 %v902
        %v5169 = vunpack.c.h.b16 %v902
        %v5170 = vunpack.c.l.b16 %v903
        %v5171 = vunpack.c.h.b16 %v903
        %v5172 = vunpack.c.l.b16 %v904
        %v5173 = vunpack.c.h.b16 %v904
        %v5174 = vunpack.c.l.b16 %v905
        %v5175 = vunpack.c.h.b16 %v905
        %v5176 = vunpack.c.l.b16 %v906
        %v5177 = vunpack.c.h.b16 %v906
        %v5178 = vunpack.c.l.b16 %v907
        %v5179 = vunpack.c.h.b16 %v907
        %v5180 = vunpack.c.l.b16 %v908
        %v5181 = vunpack.c.h.b16 %v908
        %v5182 = vunpack.c.l.b16 %v909
        %v5183 = vunpack.c.h.b16 %v909
        %v5184 = vunpack.c.l.b16 %v910
        %v5185 = vunpack.c.h.b16 %v910
        %v5186 = vunpack.c.l.b16 %v911
        %v5187 = vunpack.c.h.b16 %v911
        %v5188 = vunpack.c.l.b16 %v912
        %v5189 = vunpack.c.h.b16 %v912
        %v5190 = vunpack.c.l.b16 %v913
        %v5191 = vunpack.c.h.b16 %v913
        %v5192 = vunpack.c.l.b16 %v914
        %v5193 = vunpack.c.h.b16 %v914
        %v5194 = vunpack.c.l.b16 %v915
        %v5195 = vunpack.c.h.b16 %v915
        %v5196 = vunpack.c.l.b16 %v916
        %v5197 = vunpack.c.h.b16 %v916
        %v5198 = vunpack.c.l.b16 %v917
        %v5199 = vunpack.c.h.b16 %v917
        %v5200 = vunpack.c.l.b16 %v918
        %v5201 = vunpack.c.h.b16 %v918
        %v5202 = vunpack.c.l.b16 %v919
        %v5203 = vunpack.c.h.b16 %v919
        %v5204 = vunpack.c.l.b16 %v920
        %v5205 = vunpack.c.h.b16 %v920
        %v5206 = vunpack.c.l.b16 %v921
        %v5207 = vunpack.c.h.b16 %v921
        %v5208 = vunpack.c.l.b16 %v922
        %v5209 = vunpack.c.h.b16 %v922
        %v5210 = vunpack.c.l.b16 %v923
        %v5211 = vunpack.c.h.b16 %v923
        %v5212 = vunpack.c.l.b16 %v924
        %v5213 = vunpack.c.h.b16 %v924
        %v5214 = vunpack.c.l.b16 %v925
        %v5215 = vunpack.c.h.b16 %v925
        %v5216 = vunpack.c.l.b16 %v926
        %v5217 = vunpack.c.h.b16 %v926
        %v5218 = vunpack.c.l.b16 %v927
        %v5219 = vunpack.c.h.b16 %v927
        %v5220 = vunpack.c.l.b16 %v928
        %v5221 = vunpack.c.h.b16 %v928
        %v5222 = vunpack.c.l.b16 %v929
        %v5223 = vunpack.c.h.b16 %v929
        %v5224 = vunpack.c.l.b16 %v930
        %v5225 = vunpack.c.h.b16 %v930
        %v5226 = vunpack.c.l.b16 %v931
        %v5227 = vunpack.c.h.b16 %v931
        %v5228 = vunpack.c.l.b16 %v932
        %v5229 = vunpack.c.h.b16 %v932
        %v5230 = vunpack.c.l.b16 %v933
        %v5231 = vunpack.c.h.b16 %v933
        %v5232 = vunpack.c.l.b16 %v934
        %v5233 = vunpack.c.h.b16 %v934
        %v5234 = vunpack.c.l.b16 %v935
        %v5235 = vunpack.c.h.b16 %v935
        %v5236 = vunpack.c.l.b16 %v936
        %v5237 = vunpack.c.h.b16 %v936
        %v5238 = vunpack.c.l.b16 %v937
        %v5239 = vunpack.c.h.b16 %v937
        %v5240 = vunpack.c.l.b16 %v938
        %v5241 = vunpack.c.h.b16 %v938
        %v5242 = vunpack.c.l.b16 %v939
        %v5243 = vunpack.c.h.b16 %v939
        %v5244 = vunpack.c.l.b16 %v940
        %v5245 = vunpack.c.h.b16 %v940
        %v5246 = vunpack.c.l.b16 %v941
        %v5247 = vunpack.c.h.b16 %v941
        %v5248 = vunpack.c.l.b16 %v942
        %v5249 = vunpack.c.h.b16 %v942
        %v5250 = vunpack.c.l.b16 %v943
        %v5251 = vunpack.c.h.b16 %v943
        %v5252 = vunpack.c.l.b16 %v944
        %v5253 = vunpack.c.h.b16 %v944
        %v5254 = vunpack.c.l.b16 %v945
        %v5255 = vunpack.c.h.b16 %v945
        %v5256 = vunpack.c.l.b16 %v946
        %v5257 = vunpack.c.h.b16 %v946
        %v5258 = vunpack.c.l.b16 %v947
        %v5259 = vunpack.c.h.b16 %v947
        %v5260 = vunpack.c.l.b16 %v948
        %v5261 = vunpack.c.h.b16 %v948
        %v5262 = vunpack.c.l.b16 %v949
        %v5263 = vunpack.c.h.b16 %v949
        %v5264 = vunpack.c.l.b16 %v950
        %v5265 = vunpack.c.h.b16 %v950
        %v5266 = vunpack.c.l.b16 %v951
        %v5267 = vunpack.c.h.b16 %v951
        %v5268 = vunpack.c.l.b16 %v952
        %v5269 = vunpack.c.h.b16 %v952
        %v5270 = vunpack.c.l.b16 %v953
        %v5271 = vunpack.c.h.b16 %v953
        %v5272 = vunpack.c.l.b16 %v954
        %v5273 = vunpack.c.h.b16 %v954
        %v5274 = vunpack.c.l.b16 %v955
        %v5275 = vunpack.c.h.b16 %v955
        %v5276 = vunpack.c.l.b16 %v956
        %v5277 = vunpack.c.h.b16 %v956
        %v5278 = vunpack.c.l.b16 %v957
        %v5279 = vunpack.c.h.b16 %v957
        %v5280 = vunpack.c.l.b16 %v958
        %v5281 = vunpack.c.h.b16 %v958
        %v5282 = vunpack.c.l.b16 %v959
        %v5283 = vunpack.c.h.b16 %v959
        %v5284 = vunpack.c.l.b16 %v960
        %v5285 = vunpack.c.h.b16 %v960
        %v5286 = vunpack.c.l.b16 %v961
        %v5287 = vunpack.c.h.b16 %v961
        %v5288 = vunpack.c.l.b16 %v962
        %v5289 = vunpack.c.h.b16 %v962
        %v5290 = vunpack.c.l.b16 %v963
        %v5291 = vunpack.c.h.b16 %v963
        %v5292 = vunpack.c.l.b16 %v964
        %v5293 = vunpack.c.h.b16 %v964
        %v5294 = vunpack.c.l.b16 %v965
        %v5295 = vunpack.c.h.b16 %v965
        %v5296 = vunpack.c.l.b16 %v966
        %v5297 = vunpack.c.h.b16 %v966
        %v5298 = vunpack.c.l.b16 %v967
        %v5299 = vunpack.c.h.b16 %v967
        %v5300 = vunpack.c.l.b16 %v968
        %v5301 = vunpack.c.h.b16 %v968
        %v5302 = vunpack.c.l.b16 %v969
        %v5303 = vunpack.c.h.b16 %v969
        %v5304 = vunpack.c.l.b16 %v970
        %v5305 = vunpack.c.h.b16 %v970
        %v5306 = vunpack.c.l.b16 %v971
        %v5307 = vunpack.c.h.b16 %v971
        %v5308 = vunpack.c.l.b16 %v972
        %v5309 = vunpack.c.h.b16 %v972
        %v5310 = vunpack.c.l.b16 %v973
        %v5311 = vunpack.c.h.b16 %v973
        %v5312 = vunpack.c.l.b16 %v974
        %v5313 = vunpack.c.h.b16 %v974
        %v5314 = vunpack.c.l.b16 %v975
        %v5315 = vunpack.c.h.b16 %v975
        %v5316 = vunpack.c.l.b16 %v976
        %v5317 = vunpack.c.h.b16 %v976
        %v5318 = vunpack.c.l.b16 %v977
        %v5319 = vunpack.c.h.b16 %v977
        %v5320 = vunpack.c.l.b16 %v978
        %v5321 = vunpack.c.h.b16 %v978
        %v5322 = vunpack.c.l.b16 %v979
        %v5323 = vunpack.c.h.b16 %v979
        %v5324 = vunpack.c.l.b16 %v980
        %v5325 = vunpack.c.h.b16 %v980
        %v5326 = vunpack.c.l.b16 %v981
        %v5327 = vunpack.c.h.b16 %v981
        %v5328 = vunpack.c.l.b16 %v982
        %v5329 = vunpack.c.h.b16 %v982
        %v5330 = vunpack.c.l.b16 %v983
        %v5331 = vunpack.c.h.b16 %v983
        %v5332 = vunpack.c.l.b16 %v984
        %v5333 = vunpack.c.h.b16 %v984
        %v5334 = vunpack.c.l.b16 %v985
        %v5335 = vunpack.c.h.b16 %v985
        %v5336 = vunpack.c.l.b16 %v986
        %v5337 = vunpack.c.h.b16 %v986
        %v5338 = vunpack.c.l.b16 %v987
        %v5339 = vunpack.c.h.b16 %v987
        %v5340 = vunpack.c.l.b16 %v988
        %v5341 = vunpack.c.h.b16 %v988
        %v5342 = vunpack.c.l.b16 %v989
        %v5343 = vunpack.c.h.b16 %v989
        %v5344 = vunpack.c.l.b16 %v990
        %v5345 = vunpack.c.h.b16 %v990
        %v5346 = vunpack.c.l.b16 %v991
        %v5347 = vunpack.c.h.b16 %v991
        %v5348 = vunpack.c.l.b16 %v992
        %v5349 = vunpack.c.h.b16 %v992
        %v5350 = vunpack.c.l.b16 %v993
        %v5351 = vunpack.c.h.b16 %v993
        %v5352 = vunpack.c.l.b16 %v994
        %v5353 = vunpack.c.h.b16 %v994
        %v5354 = vunpack.c.l.b16 %v995
        %v5355 = vunpack.c.h.b16 %v995
        %v5356 = vunpack.c.l.b16 %v996
        %v5357 = vunpack.c.h.b16 %v996
        %v5358 = vunpack.c.l.b16 %v997
        %v5359 = vunpack.c.h.b16 %v997
        %v5360 = vunpack.c.l.b16 %v998
        %v5361 = vunpack.c.h.b16 %v998
        %v5362 = vunpack.c.l.b16 %v999
        %v5363 = vunpack.c.h.b16 %v999
        %v5364 = vunpack.c.l.b16 %v1000
        %v5365 = vunpack.c.h.b16 %v1000
        %v5366 = vunpack.c.l.b16 %v1001
        %v5367 = vunpack.c.h.b16 %v1001
        %v5368 = vunpack.c.l.b16 %v1002
        %v5369 = vunpack.c.h.b16 %v1002
        %v5370 = vunpack.c.l.b16 %v1003
        %v5371 = vunpack.c.h.b16 %v1003
        %v5372 = vunpack.c.l.b16 %v1004
        %v5373 = vunpack.c.h.b16 %v1004
        %v5374 = vunpack.c.l.b16 %v1005
        %v5375 = vunpack.c.h.b16 %v1005
        %v5376 = vunpack.c.l.b16 %v1006
        %v5377 = vunpack.c.h.b16 %v1006
        %v5378 = vunpack.c.l.b16 %v1007
        %v5379 = vunpack.c.h.b16 %v1007
        %v5380 = vunpack.c.l.b16 %v1008
        %v5381 = vunpack.c.h.b16 %v1008
        %v5382 = vunpack.c.l.b16 %v1009
        %v5383 = vunpack.c.h.b16 %v1009
        %v5384 = vunpack.c.l.b16 %v1010
        %v5385 = vunpack.c.h.b16 %v1010
        %v5386 = vunpack.c.l.b16 %v1011
        %v5387 = vunpack.c.h.b16 %v1011
        %v5388 = vunpack.c.l.b16 %v1012
        %v5389 = vunpack.c.h.b16 %v1012
        %v5390 = vunpack.c.l.b16 %v1013
        %v5391 = vunpack.c.h.b16 %v1013
        %v5392 = vunpack.c.l.b16 %v1014
        %v5393 = vunpack.c.h.b16 %v1014
        %v5394 = vunpack.c.l.b16 %v1015
        %v5395 = vunpack.c.h.b16 %v1015
        %v5396 = vunpack.c.l.b16 %v1016
        %v5397 = vunpack.c.h.b16 %v1016
        %v5398 = vunpack.c.l.b16 %v1017
        %v5399 = vunpack.c.h.b16 %v1017
        %v5400 = vunpack.c.l.b16 %v1018
        %v5401 = vunpack.c.h.b16 %v1018
        %v5402 = vunpack.c.l.b16 %v1019
        %v5403 = vunpack.c.h.b16 %v1019
        %v5404 = vunpack.c.l.b16 %v1020
        %v5405 = vunpack.c.h.b16 %v1020
        %v5406 = vunpack.c.l.b16 %v1021
        %v5407 = vunpack.c.h.b16 %v1021
        %v5408 = vunpack.c.l.b16 %v1022
        %v5409 = vunpack.c.h.b16 %v1022
        %v5410 = vunpack.c.l.b16 %v1023
        %v5411 = vunpack.c.h.b16 %v1023
        %v5412 = vunpack.c.l.b16 %v1024
        %v5413 = vunpack.c.h.b16 %v1024
        %v5414 = vunpack.c.l.b16 %v1025
        %v5415 = vunpack.c.h.b16 %v1025
        %v5416 = vunpack.c.l.b16 %v1026
        %v5417 = vunpack.c.h.b16 %v1026
        %v5418 = vunpack.c.l.b16 %v1027
        %v5419 = vunpack.c.h.b16 %v1027
        %v5420 = vunpack.c.l.b16 %v1028
        %v5421 = vunpack.c.h.b16 %v1028
        %v5422 = vunpack.c.l.b16 %v1029
        %v5423 = vunpack.c.h.b16 %v1029
        %v5424 = vunpack.c.l.b16 %v1030
        %v5425 = vunpack.c.h.b16 %v1030
        %v5426 = vunpack.c.l.b16 %v1031
        %v5427 = vunpack.c.h.b16 %v1031
        %v5428 = vunpack.c.l.b16 %v1032
        %v5429 = vunpack.c.h.b16 %v1032
        %v5430 = vunpack.c.l.b16 %v1033
        %v5431 = vunpack.c.h.b16 %v1033
        %v5432 = vunpack.c.l.b16 %v1034
        %v5433 = vunpack.c.h.b16 %v1034
        %v5434 = vunpack.c.l.b16 %v1035
        %v5435 = vunpack.c.h.b16 %v1035
        %v5436 = vunpack.c.l.b16 %v1036
        %v5437 = vunpack.c.h.b16 %v1036
        %v5438 = vunpack.c.l.b16 %v1037
        %v5439 = vunpack.c.h.b16 %v1037
        %v5440 = vunpack.c.l.b16 %v1038
        %v5441 = vunpack.c.h.b16 %v1038
        %v5442 = vunpack.c.l.b16 %v1039
        %v5443 = vunpack.c.h.b16 %v1039
        %v5444 = vunpack.c.l.b16 %v1040
        %v5445 = vunpack.c.h.b16 %v1040
        %v5446 = vunpack.c.l.b16 %v1041
        %v5447 = vunpack.c.h.b16 %v1041
        %v5448 = vunpack.c.l.b16 %v1042
        %v5449 = vunpack.c.h.b16 %v1042
        %v5450 = vunpack.c.l.b16 %v1043
        %v5451 = vunpack.c.h.b16 %v1043
        %v5452 = vunpack.c.l.b16 %v1044
        %v5453 = vunpack.c.h.b16 %v1044
        %v5454 = vunpack.c.l.b16 %v1045
        %v5455 = vunpack.c.h.b16 %v1045
        %v5456 = vunpack.c.l.b16 %v1046
        %v5457 = vunpack.c.h.b16 %v1046
        %v5458 = vunpack.c.l.b16 %v1047
        %v5459 = vunpack.c.h.b16 %v1047
        %v5460 = vunpack.c.l.b16 %v1048
        %v5461 = vunpack.c.h.b16 %v1048
        %v5462 = vunpack.c.l.b16 %v1049
        %v5463 = vunpack.c.h.b16 %v1049
        %v5464 = vunpack.c.l.b16 %v1050
        %v5465 = vunpack.c.h.b16 %v1050
        %v5466 = vunpack.c.l.b16 %v1051
        %v5467 = vunpack.c.h.b16 %v1051
        %v5468 = vunpack.c.l.b16 %v1052
        %v5469 = vunpack.c.h.b16 %v1052
        %v5470 = vunpack.c.l.b16 %v1053
        %v5471 = vunpack.c.h.b16 %v1053
        %v5472 = vunpack.c.l.b16 %v1054
        %v5473 = vunpack.c.h.b16 %v1054
        %v5474 = vunpack.c.l.b16 %v1055
        %v5475 = vunpack.c.h.b16 %v1055
        %v5476 = vunpack.c.l.b16 %v1056
        %v5477 = vunpack.c.h.b16 %v1056
        %v5478 = vunpack.c.l.b16 %v1057
        %v5479 = vunpack.c.h.b16 %v1057
        %v5480 = vunpack.c.l.b16 %v1058
        %v5481 = vunpack.c.h.b16 %v1058
        %v5482 = vunpack.c.l.b16 %v1059
        %v5483 = vunpack.c.h.b16 %v1059
        %v5484 = vunpack.c.l.b16 %v1060
        %v5485 = vunpack.c.h.b16 %v1060
        %v5486 = vunpack.c.l.b16 %v1061
        %v5487 = vunpack.c.h.b16 %v1061
        %v5488 = vunpack.c.l.b16 %v1062
        %v5489 = vunpack.c.h.b16 %v1062
        %v5490 = vunpack.c.l.b16 %v1063
        %v5491 = vunpack.c.h.b16 %v1063
        %v5492 = vunpack.c.l.b16 %v1064
        %v5493 = vunpack.c.h.b16 %v1064
        %v5494 = vunpack.c.l.b16 %v1065
        %v5495 = vunpack.c.h.b16 %v1065
        %v5496 = vunpack.c.l.b16 %v1066
        %v5497 = vunpack.c.h.b16 %v1066
        %v5498 = vunpack.c.l.b16 %v1067
        %v5499 = vunpack.c.h.b16 %v1067
        %v5500 = vunpack.c.l.b16 %v1068
        %v5501 = vunpack.c.h.b16 %v1068
        %v5502 = vunpack.c.l.b16 %v1069
        %v5503 = vunpack.c.h.b16 %v1069
        %v5504 = vunpack.c.l.b16 %v1070
        %v5505 = vunpack.c.h.b16 %v1070
        %v5506 = vunpack.c.l.b16 %v1071
        %v5507 = vunpack.c.h.b16 %v1071
        %v5508 = vunpack.c.l.b16 %v1072
        %v5509 = vunpack.c.h.b16 %v1072
        %v5510 = vunpack.c.l.b16 %v1073
        %v5511 = vunpack.c.h.b16 %v1073
        %v5512 = vunpack.c.l.b16 %v1074
        %v5513 = vunpack.c.h.b16 %v1074
        %v5514 = vunpack.c.l.b16 %v1075
        %v5515 = vunpack.c.h.b16 %v1075
        %v5516 = vunpack.c.l.b16 %v1076
        %v5517 = vunpack.c.h.b16 %v1076
        %v5518 = vunpack.c.l.b16 %v1077
        %v5519 = vunpack.c.h.b16 %v1077
        %v5520 = vunpack.c.l.b16 %v1078
        %v5521 = vunpack.c.h.b16 %v1078
        %v5522 = vunpack.c.l.b16 %v1079
        %v5523 = vunpack.c.h.b16 %v1079
        %v5524 = vunpack.c.l.b16 %v1080
        %v5525 = vunpack.c.h.b16 %v1080
        %v5526 = vunpack.c.l.b16 %v1081
        %v5527 = vunpack.c.h.b16 %v1081
        %v5528 = vunpack.c.l.b16 %v1082
        %v5529 = vunpack.c.h.b16 %v1082
        %v5530 = vunpack.c.l.b16 %v1083
        %v5531 = vunpack.c.h.b16 %v1083
        %v5532 = vunpack.c.l.b16 %v1084
        %v5533 = vunpack.c.h.b16 %v1084
        %v5534 = vunpack.c.l.b16 %v1085
        %v5535 = vunpack.c.h.b16 %v1085
        %v5536 = vunpack.c.l.b16 %v1086
        %v5537 = vunpack.c.h.b16 %v1086
        %v5538 = vunpack.c.l.b16 %v1087
        %v5539 = vunpack.c.h.b16 %v1087
        %v5540 = vunpack.c.l.b16 %v1088
        %v5541 = vunpack.c.h.b16 %v1088
        %v5542 = vunpack.c.l.b16 %v1089
        %v5543 = vunpack.c.h.b16 %v1089
        %v5544 = vunpack.c.l.b16 %v1090
        %v5545 = vunpack.c.h.b16 %v1090
        %v5546 = vunpack.c.l.b16 %v1091
        %v5547 = vunpack.c.h.b16 %v1091
        %v5548 = vunpack.c.l.b16 %v1092
        %v5549 = vunpack.c.h.b16 %v1092
        %v5550 = vunpack.c.l.b16 %v1093
        %v5551 = vunpack.c.h.b16 %v1093
        %v5552 = vunpack.c.l.b16 %v1094
        %v5553 = vunpack.c.h.b16 %v1094
        %v5554 = vunpack.c.l.b16 %v1095
        %v5555 = vunpack.c.h.b16 %v1095
        %v5556 = vunpack.c.l.b16 %v1096
        %v5557 = vunpack.c.h.b16 %v1096
        %v5558 = vunpack.c.l.b16 %v1097
        %v5559 = vunpack.c.h.b16 %v1097
        %v5560 = vunpack.c.l.b16 %v1098
        %v5561 = vunpack.c.h.b16 %v1098
        %v5562 = vunpack.c.l.b16 %v1099
        %v5563 = vunpack.c.h.b16 %v1099
        %v5564 = vunpack.c.l.b16 %v1100
        %v5565 = vunpack.c.h.b16 %v1100
        %v5566 = vunpack.c.l.b16 %v1101
        %v5567 = vunpack.c.h.b16 %v1101
        %v5568 = vunpack.c.l.b16 %v1102
        %v5569 = vunpack.c.h.b16 %v1102
        %v5570 = vunpack.c.l.b16 %v1103
        %v5571 = vunpack.c.h.b16 %v1103
        %v5572 = vunpack.c.l.b16 %v1104
        %v5573 = vunpack.c.h.b16 %v1104
        %v5574 = vunpack.c.l.b16 %v1105
        %v5575 = vunpack.c.h.b16 %v1105
        %v5576 = vunpack.c.l.b16 %v1106
        %v5577 = vunpack.c.h.b16 %v1106
        %v5578 = vunpack.c.l.b16 %v1107
        %v5579 = vunpack.c.h.b16 %v1107
        %v5580 = vunpack.c.l.b16 %v1108
        %v5581 = vunpack.c.h.b16 %v1108
        %v5582 = vunpack.c.l.b16 %v1109
        %v5583 = vunpack.c.h.b16 %v1109
        %v5584 = vunpack.c.l.b16 %v1110
        %v5585 = vunpack.c.h.b16 %v1110
        %v5586 = vunpack.c.l.b16 %v1111
        %v5587 = vunpack.c.h.b16 %v1111
        %v5588 = vunpack.c.l.b16 %v1112
        %v5589 = vunpack.c.h.b16 %v1112
        %v5590 = vunpack.c.l.b16 %v1113
        %v5591 = vunpack.c.h.b16 %v1113
        %v5592 = vunpack.c.l.b16 %v1114
        %v5593 = vunpack.c.h.b16 %v1114
        %v5594 = vunpack.c.l.b16 %v1115
        %v5595 = vunpack.c.h.b16 %v1115
        %v5596 = vunpack.c.l.b16 %v1116
        %v5597 = vunpack.c.h.b16 %v1116
        %v5598 = vunpack.c.l.b16 %v1117
        %v5599 = vunpack.c.h.b16 %v1117
        %v5600 = vunpack.c.l.b16 %v1118
        %v5601 = vunpack.c.h.b16 %v1118
        %v5602 = vunpack.c.l.b16 %v1119
        %v5603 = vunpack.c.h.b16 %v1119
        %v5604 = vunpack.c.l.b16 %v1120
        %v5605 = vunpack.c.h.b16 %v1120
        %v5606 = vunpack.c.l.b16 %v1121
        %v5607 = vunpack.c.h.b16 %v1121
        %v5608 = vunpack.c.l.b16 %v1122
        %v5609 = vunpack.c.h.b16 %v1122
        %v5610 = vunpack.c.l.b16 %v1123
        %v5611 = vunpack.c.h.b16 %v1123
        %v5612 = vunpack.c.l.b16 %v1124
        %v5613 = vunpack.c.h.b16 %v1124
        %v5614 = vunpack.c.l.b16 %v1125
        %v5615 = vunpack.c.h.b16 %v1125
        %v5616 = vunpack.c.l.b16 %v1126
        %v5617 = vunpack.c.h.b16 %v1126
        %v5618 = vunpack.c.l.b16 %v1127
        %v5619 = vunpack.c.h.b16 %v1127
        %v5620 = vunpack.c.l.b16 %v1128
        %v5621 = vunpack.c.h.b16 %v1128
        %v5622 = vunpack.c.l.b16 %v1129
        %v5623 = vunpack.c.h.b16 %v1129
        %v5624 = vunpack.c.l.b16 %v1130
        %v5625 = vunpack.c.h.b16 %v1130
        %v5626 = vunpack.c.l.b16 %v1131
        %v5627 = vunpack.c.h.b16 %v1131
        %v5628 = vunpack.c.l.b16 %v1132
        %v5629 = vunpack.c.h.b16 %v1132
        %v5630 = vunpack.c.l.b16 %v1133
        %v5631 = vunpack.c.h.b16 %v1133
        %v5632 = vunpack.c.l.b16 %v1134
        %v5633 = vunpack.c.h.b16 %v1134
        %v5634 = vunpack.c.l.b16 %v1135
        %v5635 = vunpack.c.h.b16 %v1135
        %v5636 = vunpack.c.l.b16 %v1136
        %v5637 = vunpack.c.h.b16 %v1136
        %v5638 = vunpack.c.l.b16 %v1137
        %v5639 = vunpack.c.h.b16 %v1137
        %v5640 = vunpack.c.l.b16 %v1138
        %v5641 = vunpack.c.h.b16 %v1138
        %v5642 = vunpack.c.l.b16 %v1139
        %v5643 = vunpack.c.h.b16 %v1139
        %v5644 = vunpack.c.l.b16 %v1140
        %v5645 = vunpack.c.h.b16 %v1140
        %v5646 = vunpack.c.l.b16 %v1141
        %v5647 = vunpack.c.h.b16 %v1141
        %v5648 = vunpack.c.l.b16 %v1142
        %v5649 = vunpack.c.h.b16 %v1142
        %v5650 = vunpack.c.l.b16 %v1143
        %v5651 = vunpack.c.h.b16 %v1143
        %v5652 = vunpack.c.l.b16 %v1144
        %v5653 = vunpack.c.h.b16 %v1144
        %v5654 = vunpack.c.l.b16 %v1145
        %v5655 = vunpack.c.h.b16 %v1145
        %v5656 = vunpack.c.l.b16 %v1146
        %v5657 = vunpack.c.h.b16 %v1146
        %v5658 = vunpack.c.l.b16 %v1147
        %v5659 = vunpack.c.h.b16 %v1147
        %v5660 = vunpack.c.l.b16 %v1148
        %v5661 = vunpack.c.h.b16 %v1148
        %v5662 = vunpack.c.l.b16 %v1149
        %v5663 = vunpack.c.h.b16 %v1149
        %v5664 = vunpack.c.l.b16 %v1150
        %v5665 = vunpack.c.h.b16 %v1150
        %v5666 = vunpack.c.l.b16 %v1151
        %v5667 = vunpack.c.h.b16 %v1151
        %v5668 = vunpack.c.l.b16 %v1152
        %v5669 = vunpack.c.h.b16 %v1152
        %v5670 = vunpack.c.l.b16 %v1153
        %v5671 = vunpack.c.h.b16 %v1153
        %v5672 = vunpack.c.l.b16 %v1154
        %v5673 = vunpack.c.h.b16 %v1154
        %v5674 = vunpack.c.l.b16 %v1155
        %v5675 = vunpack.c.h.b16 %v1155
        %v5676 = vunpack.c.l.b16 %v1156
        %v5677 = vunpack.c.h.b16 %v1156
        %v5678 = vunpack.c.l.b16 %v1157
        %v5679 = vunpack.c.h.b16 %v1157
        %v5680 = vunpack.c.l.b16 %v1158
        %v5681 = vunpack.c.h.b16 %v1158
        %v5682 = vunpack.c.l.b16 %v1159
        %v5683 = vunpack.c.h.b16 %v1159
        %v5684 = vunpack.c.l.b16 %v1160
        %v5685 = vunpack.c.h.b16 %v1160
        %v5686 = vunpack.c.l.b16 %v1161
        %v5687 = vunpack.c.h.b16 %v1161
        %v5688 = vunpack.c.l.b16 %v1162
        %v5689 = vunpack.c.h.b16 %v1162
        %v5690 = vunpack.c.l.b16 %v1163
        %v5691 = vunpack.c.h.b16 %v1163
        %v5692 = vunpack.c.l.b16 %v1164
        %v5693 = vunpack.c.h.b16 %v1164
        %v5694 = vunpack.c.l.b16 %v1165
        %v5695 = vunpack.c.h.b16 %v1165
        %v5696 = vunpack.c.l.b16 %v1166
        %v5697 = vunpack.c.h.b16 %v1166
        %v5698 = vunpack.c.l.b16 %v1167
        %v5699 = vunpack.c.h.b16 %v1167
        %v5700 = vunpack.c.l.b16 %v1168
        %v5701 = vunpack.c.h.b16 %v1168
        %v5702 = vunpack.c.l.b16 %v1169
        %v5703 = vunpack.c.h.b16 %v1169
        %v5704 = vunpack.c.l.b16 %v1170
        %v5705 = vunpack.c.h.b16 %v1170
        %v5706 = vunpack.c.l.b16 %v1171
        %v5707 = vunpack.c.h.b16 %v1171
        %v5708 = vunpack.c.l.b16 %v1172
        %v5709 = vunpack.c.h.b16 %v1172
        %v5710 = vunpack.c.l.b16 %v1173
        %v5711 = vunpack.c.h.b16 %v1173
        %v5712 = vunpack.c.l.b16 %v1174
        %v5713 = vunpack.c.h.b16 %v1174
        %v5714 = vunpack.c.l.b16 %v1175
        %v5715 = vunpack.c.h.b16 %v1175
        %v5716 = vunpack.c.l.b16 %v1176
        %v5717 = vunpack.c.h.b16 %v1176
        %v5718 = vunpack.c.l.b16 %v1177
        %v5719 = vunpack.c.h.b16 %v1177
        %v5720 = vunpack.c.l.b16 %v1178
        %v5721 = vunpack.c.h.b16 %v1178
        %v5722 = vunpack.c.l.b16 %v1179
        %v5723 = vunpack.c.h.b16 %v1179
        %v5724 = vunpack.c.l.b16 %v1180
        %v5725 = vunpack.c.h.b16 %v1180
        %v5726 = vunpack.c.l.b16 %v1181
        %v5727 = vunpack.c.h.b16 %v1181
        %v5728 = vunpack.c.l.b16 %v1182
        %v5729 = vunpack.c.h.b16 %v1182
        %v5730 = vunpack.c.l.b16 %v1183
        %v5731 = vunpack.c.h.b16 %v1183
        %v5732 = vunpack.c.l.b16 %v1184
        %v5733 = vunpack.c.h.b16 %v1184
        %v5734 = vunpack.c.l.b16 %v1185
        %v5735 = vunpack.c.h.b16 %v1185
        %v5736 = vunpack.c.l.b16 %v1186
        %v5737 = vunpack.c.h.b16 %v1186
        %v5738 = vunpack.c.l.b16 %v1187
        %v5739 = vunpack.c.h.b16 %v1187
        %v5740 = vunpack.c.l.b16 %v1188
        %v5741 = vunpack.c.h.b16 %v1188
        %v5742 = vunpack.c.l.b16 %v1189
        %v5743 = vunpack.c.h.b16 %v1189
        %v5744 = vunpack.c.l.b16 %v1190
        %v5745 = vunpack.c.h.b16 %v1190
        %v5746 = vunpack.c.l.b16 %v1191
        %v5747 = vunpack.c.h.b16 %v1191
        %v5748 = vunpack.c.l.b16 %v1192
        %v5749 = vunpack.c.h.b16 %v1192
        %v5750 = vunpack.c.l.b16 %v1193
        %v5751 = vunpack.c.h.b16 %v1193
        %v5752 = vunpack.c.l.b16 %v1194
        %v5753 = vunpack.c.h.b16 %v1194
        %v5754 = vunpack.c.l.b16 %v1195
        %v5755 = vunpack.c.h.b16 %v1195
        %v5756 = vunpack.c.l.b16 %v1196
        %v5757 = vunpack.c.h.b16 %v1196
        %v5758 = vunpack.c.l.b16 %v1197
        %v5759 = vunpack.c.h.b16 %v1197
        %v5760 = vunpack.c.l.b16 %v1198
        %v5761 = vunpack.c.h.b16 %v1198
        %v5762 = vunpack.c.l.b16 %v1199
        %v5763 = vunpack.c.h.b16 %v1199
        %v5764 = vunpack.c.l.b16 %v1200
        %v5765 = vunpack.c.h.b16 %v1200
        %v5766 = vunpack.c.l.b16 %v1201
        %v5767 = vunpack.c.h.b16 %v1201
        %v5768 = vunpack.c.l.b16 %v1202
        %v5769 = vunpack.c.h.b16 %v1202
        %v5770 = vunpack.c.l.b16 %v1203
        %v5771 = vunpack.c.h.b16 %v1203
        %v5772 = vunpack.c.l.b16 %v1204
        %v5773 = vunpack.c.h.b16 %v1204
        %v5774 = vunpack.c.l.b16 %v1205
        %v5775 = vunpack.c.h.b16 %v1205
        %v5776 = vunpack.c.l.b16 %v1206
        %v5777 = vunpack.c.h.b16 %v1206
        %v5778 = vunpack.c.l.b16 %v1207
        %v5779 = vunpack.c.h.b16 %v1207
        %v5780 = vunpack.c.l.b16 %v1208
        %v5781 = vunpack.c.h.b16 %v1208
        %v5782 = vunpack.c.l.b16 %v1209
        %v5783 = vunpack.c.h.b16 %v1209
        %v5784 = vunpack.c.l.b16 %v1210
        %v5785 = vunpack.c.h.b16 %v1210
        %v5786 = vunpack.c.l.b16 %v1211
        %v5787 = vunpack.c.h.b16 %v1211
        %v5788 = vunpack.c.l.b16 %v1212
        %v5789 = vunpack.c.h.b16 %v1212
        %v5790 = vunpack.c.l.b16 %v1213
        %v5791 = vunpack.c.h.b16 %v1213
        %v5792 = vunpack.c.l.b16 %v1214
        %v5793 = vunpack.c.h.b16 %v1214
        %v5794 = vunpack.c.l.b16 %v1215
        %v5795 = vunpack.c.h.b16 %v1215
        %v5796 = vunpack.c.l.b16 %v1216
        %v5797 = vunpack.c.h.b16 %v1216
        %v5798 = vunpack.c.l.b16 %v1217
        %v5799 = vunpack.c.h.b16 %v1217
        %v5800 = vunpack.c.l.b16 %v1218
        %v5801 = vunpack.c.h.b16 %v1218
        %v5802 = vunpack.c.l.b16 %v1219
        %v5803 = vunpack.c.h.b16 %v1219
        %v5804 = vunpack.c.l.b16 %v1220
        %v5805 = vunpack.c.h.b16 %v1220
        %v5806 = vunpack.c.l.b16 %v1221
        %v5807 = vunpack.c.h.b16 %v1221
        %v5808 = vunpack.c.l.b16 %v1222
        %v5809 = vunpack.c.h.b16 %v1222
        %v5810 = vunpack.c.l.b16 %v1223
        %v5811 = vunpack.c.h.b16 %v1223
        %v5812 = vunpack.c.l.b16 %v1224
        %v5813 = vunpack.c.h.b16 %v1224
        %v5814 = vunpack.c.l.b16 %v1225
        %v5815 = vunpack.c.h.b16 %v1225
        %v5816 = vunpack.c.l.b16 %v1226
        %v5817 = vunpack.c.h.b16 %v1226
        %v5818 = vunpack.c.l.b16 %v1227
        %v5819 = vunpack.c.h.b16 %v1227
        %v5820 = vunpack.c.l.b16 %v1228
        %v5821 = vunpack.c.h.b16 %v1228
        %v5822 = vunpack.c.l.b16 %v1229
        %v5823 = vunpack.c.h.b16 %v1229
        %v5824 = vunpack.c.l.b16 %v1230
        %v5825 = vunpack.c.h.b16 %v1230
        %v5826 = vunpack.c.l.b16 %v1231
        %v5827 = vunpack.c.h.b16 %v1231
        %v5828 = vunpack.c.l.b16 %v1232
        %v5829 = vunpack.c.h.b16 %v1232
        %v5830 = vunpack.c.l.b16 %v1233
        %v5831 = vunpack.c.h.b16 %v1233
        %v5832 = vunpack.c.l.b16 %v1234
        %v5833 = vunpack.c.h.b16 %v1234
        %v5834 = vunpack.c.l.b16 %v1235
        %v5835 = vunpack.c.h.b16 %v1235
        %v5836 = vunpack.c.l.b16 %v1236
        %v5837 = vunpack.c.h.b16 %v1236
        %v5838 = vunpack.c.l.b16 %v1237
        %v5839 = vunpack.c.h.b16 %v1237
        %v5840 = vunpack.c.l.b16 %v1238
        %v5841 = vunpack.c.h.b16 %v1238
        %v5842 = vunpack.c.l.b16 %v1239
        %v5843 = vunpack.c.h.b16 %v1239
        %v5844 = vunpack.c.l.b16 %v1240
        %v5845 = vunpack.c.h.b16 %v1240
        %v5846 = vunpack.c.l.b16 %v1241
        %v5847 = vunpack.c.h.b16 %v1241
        %v5848 = vunpack.c.l.b16 %v1242
        %v5849 = vunpack.c.h.b16 %v1242
        %v5850 = vunpack.c.l.b16 %v1243
        %v5851 = vunpack.c.h.b16 %v1243
        %v5852 = vunpack.c.l.b16 %v1244
        %v5853 = vunpack.c.h.b16 %v1244
        %v5854 = vunpack.c.l.b16 %v1245
        %v5855 = vunpack.c.h.b16 %v1245
        %v5856 = vunpack.c.l.b16 %v1246
        %v5857 = vunpack.c.h.b16 %v1246
        %v5858 = vunpack.c.l.b16 %v1247
        %v5859 = vunpack.c.h.b16 %v1247
        %v5860 = vunpack.c.l.b16 %v1248
        %v5861 = vunpack.c.h.b16 %v1248
        %v5862 = vunpack.c.l.b16 %v1249
        %v5863 = vunpack.c.h.b16 %v1249
        %v5864 = vunpack.c.l.b16 %v1250
        %v5865 = vunpack.c.h.b16 %v1250
        %v5866 = vunpack.c.l.b16 %v1251
        %v5867 = vunpack.c.h.b16 %v1251
        %v5868 = vunpack.c.l.b16 %v1252
        %v5869 = vunpack.c.h.b16 %v1252
        %v5870 = vunpack.c.l.b16 %v1253
        %v5871 = vunpack.c.h.b16 %v1253
        %v5872 = vunpack.c.l.b16 %v1254
        %v5873 = vunpack.c.h.b16 %v1254
        %v5874 = vunpack.c.l.b16 %v1255
        %v5875 = vunpack.c.h.b16 %v1255
        %v5876 = vunpack.c.l.b16 %v1256
        %v5877 = vunpack.c.h.b16 %v1256
        %v5878 = vunpack.c.l.b16 %v1257
        %v5879 = vunpack.c.h.b16 %v1257
        %v5880 = vunpack.c.l.b16 %v1258
        %v5881 = vunpack.c.h.b16 %v1258
        %v5882 = vunpack.c.l.b16 %v1259
        %v5883 = vunpack.c.h.b16 %v1259
        %v5884 = vunpack.c.l.b16 %v1260
        %v5885 = vunpack.c.h.b16 %v1260
        %v5886 = vunpack.c.l.b16 %v1261
        %v5887 = vunpack.c.h.b16 %v1261
        %v5888 = vunpack.c.l.b16 %v1262
        %v5889 = vunpack.c.h.b16 %v1262
        %v5890 = vunpack.c.l.b16 %v1263
        %v5891 = vunpack.c.h.b16 %v1263
        %v5892 = vunpack.c.l.b16 %v1264
        %v5893 = vunpack.c.h.b16 %v1264
        %v5894 = vunpack.c.l.b16 %v1265
        %v5895 = vunpack.c.h.b16 %v1265
        %v5896 = vunpack.c.l.b16 %v1266
        %v5897 = vunpack.c.h.b16 %v1266
        %v5898 = vunpack.c.l.b16 %v1267
        %v5899 = vunpack.c.h.b16 %v1267
        %v5900 = vunpack.c.l.b16 %v1268
        %v5901 = vunpack.c.h.b16 %v1268
        %v5902 = vunpack.c.l.b16 %v1269
        %v5903 = vunpack.c.h.b16 %v1269
        %v5904 = vunpack.c.l.b16 %v1270
        %v5905 = vunpack.c.h.b16 %v1270
        %v5906 = vunpack.c.l.b16 %v1271
        %v5907 = vunpack.c.h.b16 %v1271
        %v5908 = vunpack.c.l.b16 %v1272
        %v5909 = vunpack.c.h.b16 %v1272
        %v5910 = vunpack.c.l.b16 %v1273
        %v5911 = vunpack.c.h.b16 %v1273
        %v5912 = vunpack.c.l.b16 %v1274
        %v5913 = vunpack.c.h.b16 %v1274
        %v5914 = vunpack.c.l.b16 %v1275
        %v5915 = vunpack.c.h.b16 %v1275
        %v5916 = vunpack.c.l.b16 %v1276
        %v5917 = vunpack.c.h.b16 %v1276
        %v5918 = vunpack.c.l.b16 %v1277
        %v5919 = vunpack.c.h.b16 %v1277
        %v5920 = vunpack.c.l.b16 %v1278
        %v5921 = vunpack.c.h.b16 %v1278
        %v5922 = vunpack.c.l.b16 %v1279
        %v5923 = vunpack.c.h.b16 %v1279
        %v5924 = vunpack.c.l.b16 %v1280
        %v5925 = vunpack.c.h.b16 %v1280
        %v5926 = vunpack.c.l.b16 %v1281
        %v5927 = vunpack.c.h.b16 %v1281
        %v5928 = vunpack.c.l.b16 %v1282
        %v5929 = vunpack.c.h.b16 %v1282
        %v5930 = vunpack.c.l.b16 %v1283
        %v5931 = vunpack.c.h.b16 %v1283
        %v5932 = vunpack.c.l.b16 %v1284
        %v5933 = vunpack.c.h.b16 %v1284
        %v5934 = vunpack.c.l.b16 %v1285
        %v5935 = vunpack.c.h.b16 %v1285
        %v5936 = vunpack.c.l.b16 %v1286
        %v5937 = vunpack.c.h.b16 %v1286
        %v5938 = vunpack.c.l.b16 %v1287
        %v5939 = vunpack.c.h.b16 %v1287
        %v5940 = vunpack.c.l.b16 %v1288
        %v5941 = vunpack.c.h.b16 %v1288
        %v5942 = vunpack.c.l.b16 %v1289
        %v5943 = vunpack.c.h.b16 %v1289
        %v5944 = vunpack.c.l.b16 %v1290
        %v5945 = vunpack.c.h.b16 %v1290
        %v5946 = vunpack.c.l.b16 %v1291
        %v5947 = vunpack.c.h.b16 %v1291
        %v5948 = vunpack.c.l.b16 %v1292
        %v5949 = vunpack.c.h.b16 %v1292
        %v5950 = vunpack.c.l.b16 %v1293
        %v5951 = vunpack.c.h.b16 %v1293
        %v5952 = vunpack.c.l.b16 %v1294
        %v5953 = vunpack.c.h.b16 %v1294
        %v5954 = vunpack.c.l.b16 %v1295
        %v5955 = vunpack.c.h.b16 %v1295
        %v5956 = vunpack.c.l.b16 %v1296
        %v5957 = vunpack.c.h.b16 %v1296
        %v5958 = vunpack.c.l.b16 %v1297
        %v5959 = vunpack.c.h.b16 %v1297
        %v5960 = vunpack.c.l.b16 %v1298
        %v5961 = vunpack.c.h.b16 %v1298
        %v5962 = vunpack.c.l.b16 %v1299
        %v5963 = vunpack.c.h.b16 %v1299
        %v5964 = vunpack.c.l.b16 %v1300
        %v5965 = vunpack.c.h.b16 %v1300
        %v5966 = vunpack.c.l.b16 %v1301
        %v5967 = vunpack.c.h.b16 %v1301
        %v5968 = vunpack.c.l.b16 %v1302
        %v5969 = vunpack.c.h.b16 %v1302
        %v5970 = vunpack.c.l.b16 %v1303
        %v5971 = vunpack.c.h.b16 %v1303
        %v5972 = vunpack.c.l.b16 %v1304
        %v5973 = vunpack.c.h.b16 %v1304
        %v5974 = vunpack.c.l.b16 %v1305
        %v5975 = vunpack.c.h.b16 %v1305
        %v5976 = vunpack.c.l.b16 %v1306
        %v5977 = vunpack.c.h.b16 %v1306
        %v5978 = vunpack.c.l.b16 %v1307
        %v5979 = vunpack.c.h.b16 %v1307
        %v5980 = vunpack.c.l.b16 %v1308
        %v5981 = vunpack.c.h.b16 %v1308
        %v5982 = vunpack.c.l.b16 %v1309
        %v5983 = vunpack.c.h.b16 %v1309
        %v5984 = vunpack.c.l.b16 %v1310
        %v5985 = vunpack.c.h.b16 %v1310
        %v5986 = vunpack.c.l.b16 %v1311
        %v5987 = vunpack.c.h.b16 %v1311
        %v5988 = vunpack.c.l.b16 %v1312
        %v5989 = vunpack.c.h.b16 %v1312
        %v5990 = vunpack.c.l.b16 %v1313
        %v5991 = vunpack.c.h.b16 %v1313
        %v5992 = vunpack.c.l.b16 %v1314
        %v5993 = vunpack.c.h.b16 %v1314
        %v5994 = vunpack.c.l.b16 %v1315
        %v5995 = vunpack.c.h.b16 %v1315
        %v5996 = vunpack.c.l.b16 %v1316
        %v5997 = vunpack.c.h.b16 %v1316
        %v5998 = vunpack.c.l.b16 %v1317
        %v5999 = vunpack.c.h.b16 %v1317
        %v6000 = vunpack.c.l.b16 %v1318
        %v6001 = vunpack.c.h.b16 %v1318
        %v6002 = vunpack.c.l.b16 %v1319
        %v6003 = vunpack.c.h.b16 %v1319
        %v6004 = vunpack.c.l.b16 %v1320
        %v6005 = vunpack.c.h.b16 %v1320
        %v6006 = vunpack.c.l.b16 %v1321
        %v6007 = vunpack.c.h.b16 %v1321
        %v6008 = vunpack.c.l.b16 %v1322
        %v6009 = vunpack.c.h.b16 %v1322
        %v6010 = vunpack.c.l.b16 %v1323
        %v6011 = vunpack.c.h.b16 %v1323
        %v6012 = vunpack.c.l.b16 %v1324
        %v6013 = vunpack.c.h.b16 %v1324
        %v6014 = vunpack.c.l.b16 %v1325
        %v6015 = vunpack.c.h.b16 %v1325
        %v6016 = vunpack.c.l.b16 %v1326
        %v6017 = vunpack.c.h.b16 %v1326
        %v6018 = vunpack.c.l.b16 %v1327
        %v6019 = vunpack.c.h.b16 %v1327
        %v6020 = vunpack.c.l.b16 %v1328
        %v6021 = vunpack.c.h.b16 %v1328
        %v6022 = vunpack.c.l.b16 %v1329
        %v6023 = vunpack.c.h.b16 %v1329
        %v6024 = vunpack.c.l.b16 %v1330
        %v6025 = vunpack.c.h.b16 %v1330
        %v6026 = vunpack.c.l.b16 %v1331
        %v6027 = vunpack.c.h.b16 %v1331
        %v6028 = vunpack.c.l.b16 %v1332
        %v6029 = vunpack.c.h.b16 %v1332
        %v6030 = vunpack.c.l.b16 %v1333
        %v6031 = vunpack.c.h.b16 %v1333
        %v6032 = vunpack.c.l.b16 %v1334
        %v6033 = vunpack.c.h.b16 %v1334
        %v6034 = vunpack.c.l.b16 %v1335
        %v6035 = vunpack.c.h.b16 %v1335
        %v6036 = vunpack.c.l.b16 %v1336
        %v6037 = vunpack.c.h.b16 %v1336
        %v6038 = vunpack.c.l.b16 %v1337
        %v6039 = vunpack.c.h.b16 %v1337
        %v6040 = vunpack.c.l.b16 %v1338
        %v6041 = vunpack.c.h.b16 %v1338
        %v6042 = vunpack.c.l.b16 %v1339
        %v6043 = vunpack.c.h.b16 %v1339
        %v6044 = vunpack.c.l.b16 %v1340
        %v6045 = vunpack.c.h.b16 %v1340
        %v6046 = vunpack.c.l.b16 %v1341
        %v6047 = vunpack.c.h.b16 %v1341
        %v6048 = vunpack.c.l.b16 %v1342
        %v6049 = vunpack.c.h.b16 %v1342
        %v6050 = vunpack.c.l.b16 %v1343
        %v6051 = vunpack.c.h.b16 %v1343
        %v6052 = vunpack.c.l.b16 %v1344
        %v6053 = vunpack.c.h.b16 %v1344
        %v6054 = vunpack.c.l.b16 %v1345
        %v6055 = vunpack.c.h.b16 %v1345
        %v6056 = vunpack.c.l.b16 %v1346
        %v6057 = vunpack.c.h.b16 %v1346
        %v6058 = vunpack.c.l.b16 %v1347
        %v6059 = vunpack.c.h.b16 %v1347
        %v6060 = vunpack.c.l.b16 %v1348
        %v6061 = vunpack.c.h.b16 %v1348
        %v6062 = vunpack.c.l.b16 %v1349
        %v6063 = vunpack.c.h.b16 %v1349
        %v6064 = vunpack.c.l.b16 %v1350
        %v6065 = vunpack.c.h.b16 %v1350
        %v6066 = vunpack.c.l.b16 %v1351
        %v6067 = vunpack.c.h.b16 %v1351
        %v6068 = vunpack.c.l.b16 %v1352
        %v6069 = vunpack.c.h.b16 %v1352
        %v6070 = vunpack.c.l.b16 %v1353
        %v6071 = vunpack.c.h.b16 %v1353
        %v6072 = vunpack.c.l.b16 %v1354
        %v6073 = vunpack.c.h.b16 %v1354
        %v6074 = vunpack.c.l.b16 %v1355
        %v6075 = vunpack.c.h.b16 %v1355
        %v6076 = vunpack.c.l.b16 %v1356
        %v6077 = vunpack.c.h.b16 %v1356
        %v6078 = vunpack.c.l.b16 %v1357
        %v6079 = vunpack.c.h.b16 %v1357
        %v6080 = vunpack.c.l.b16 %v1358
        %v6081 = vunpack.c.h.b16 %v1358
        %v6082 = vunpack.c.l.b16 %v1359
        %v6083 = vunpack.c.h.b16 %v1359
        %v6084 = vunpack.c.l.b16 %v1360
        %v6085 = vunpack.c.h.b16 %v1360
        %v6086 = vunpack.c.l.b16 %v1361
        %v6087 = vunpack.c.h.b16 %v1361
        %v6088 = vunpack.c.l.b16 %v1362
        %v6089 = vunpack.c.h.b16 %v1362
        %v6090 = vunpack.c.l.b16 %v1363
        %v6091 = vunpack.c.h.b16 %v1363
        %v6092 = vunpack.c.l.b16 %v1364
        %v6093 = vunpack.c.h.b16 %v1364
        %v6094 = vunpack.c.l.b16 %v1365
        %v6095 = vunpack.c.h.b16 %v1365
        %v6096 = vunpack.c.l.b16 %v1366
        %v6097 = vunpack.c.h.b16 %v1366
        %v6098 = vunpack.c.l.b16 %v1367
        %v6099 = vunpack.c.h.b16 %v1367
        %v6100 = vunpack.c.l.b16 %v1368
        %v6101 = vunpack.c.h.b16 %v1368
        %v6102 = vunpack.c.l.b16 %v1369
        %v6103 = vunpack.c.h.b16 %v1369
        %v6104 = vunpack.c.l.b16 %v1370
        %v6105 = vunpack.c.h.b16 %v1370
        %v6106 = vunpack.c.l.b16 %v1371
        %v6107 = vunpack.c.h.b16 %v1371
        %v6108 = vunpack.c.l.b16 %v1372
        %v6109 = vunpack.c.h.b16 %v1372
        %v6110 = vunpack.c.l.b16 %v1373
        %v6111 = vunpack.c.h.b16 %v1373
        %v6112 = vunpack.c.l.b16 %v1374
        %v6113 = vunpack.c.h.b16 %v1374
        %v6114 = vunpack.c.l.b16 %v1375
        %v6115 = vunpack.c.h.b16 %v1375
        %v6116 = vunpack.c.l.b16 %v1376
        %v6117 = vunpack.c.h.b16 %v1376
        %v6118 = vunpack.c.l.b16 %v1377
        %v6119 = vunpack.c.h.b16 %v1377
        %v6120 = vunpack.c.l.b16 %v1378
        %v6121 = vunpack.c.h.b16 %v1378
        %v6122 = vunpack.c.l.b16 %v1379
        %v6123 = vunpack.c.h.b16 %v1379
        %v6124 = vunpack.c.l.b16 %v1380
        %v6125 = vunpack.c.h.b16 %v1380
        %v6126 = vunpack.c.l.b16 %v1381
        %v6127 = vunpack.c.h.b16 %v1381
        %v6128 = vunpack.c.l.b16 %v1382
        %v6129 = vunpack.c.h.b16 %v1382
        %v6130 = vunpack.c.l.b16 %v1383
        %v6131 = vunpack.c.h.b16 %v1383
        %v6132 = vunpack.c.l.b16 %v1384
        %v6133 = vunpack.c.h.b16 %v1384
        %v6134 = vunpack.c.l.b16 %v1385
        %v6135 = vunpack.c.h.b16 %v1385
        %v6136 = vunpack.c.l.b16 %v1386
        %v6137 = vunpack.c.h.b16 %v1386
        %v6138 = vunpack.c.l.b16 %v1387
        %v6139 = vunpack.c.h.b16 %v1387
        %v6140 = vunpack.c.l.b16 %v1388
        %v6141 = vunpack.c.h.b16 %v1388
        %v6142 = vunpack.c.l.b16 %v1389
        %v6143 = vunpack.c.h.b16 %v1389
        %v6144 = vunpack.c.l.b16 %v1390
        %v6145 = vunpack.c.h.b16 %v1390
        %v6146 = vunpack.c.l.b16 %v1391
        %v6147 = vunpack.c.h.b16 %v1391
        %v6148 = vunpack.c.l.b16 %v1392
        %v6149 = vunpack.c.h.b16 %v1392
        %v6150 = vunpack.c.l.b16 %v1393
        %v6151 = vunpack.c.h.b16 %v1393
        %v6152 = vunpack.c.l.b16 %v1394
        %v6153 = vunpack.c.h.b16 %v1394
        %v6154 = vunpack.c.l.b16 %v1395
        %v6155 = vunpack.c.h.b16 %v1395
        %v6156 = vunpack.c.l.b16 %v1396
        %v6157 = vunpack.c.h.b16 %v1396
        %v6158 = vunpack.c.l.b16 %v1397
        %v6159 = vunpack.c.h.b16 %v1397
        %v6160 = vunpack.c.l.b16 %v1398
        %v6161 = vunpack.c.h.b16 %v1398
        %v6162 = vunpack.c.l.b16 %v1399
        %v6163 = vunpack.c.h.b16 %v1399
        %v6164 = vunpack.c.l.b16 %v1400
        %v6165 = vunpack.c.h.b16 %v1400
        %v6166 = vunpack.c.l.b16 %v1401
        %v6167 = vunpack.c.h.b16 %v1401
        %v6168 = vunpack.c.l.b16 %v1402
        %v6169 = vunpack.c.h.b16 %v1402
        %v6170 = vunpack.c.l.b16 %v1403
        %v6171 = vunpack.c.h.b16 %v1403
        %v6172 = vunpack.c.l.b16 %v1404
        %v6173 = vunpack.c.h.b16 %v1404
        %v6174 = vunpack.c.l.b16 %v1405
        %v6175 = vunpack.c.h.b16 %v1405
        %v6176 = vunpack.c.l.b16 %v1406
        %v6177 = vunpack.c.h.b16 %v1406
        %v6178 = vunpack.c.l.b16 %v1407
        %v6179 = vunpack.c.h.b16 %v1407
        %v6180 = vunpack.c.l.b16 %v1408
        %v6181 = vunpack.c.h.b16 %v1408
        %v6182 = vunpack.c.l.b16 %v1409
        %v6183 = vunpack.c.h.b16 %v1409
        %v6184 = vunpack.c.l.b16 %v1410
        %v6185 = vunpack.c.h.b16 %v1410
        %v6186 = vunpack.c.l.b16 %v1411
        %v6187 = vunpack.c.h.b16 %v1411
        %v6188 = vunpack.c.l.b16 %v1412
        %v6189 = vunpack.c.h.b16 %v1412
        %v6190 = vunpack.c.l.b16 %v1413
        %v6191 = vunpack.c.h.b16 %v1413
        %v6192 = vunpack.c.l.b16 %v1414
        %v6193 = vunpack.c.h.b16 %v1414
        %v6194 = vunpack.c.l.b16 %v1415
        %v6195 = vunpack.c.h.b16 %v1415
        %v6196 = vunpack.c.l.b16 %v1416
        %v6197 = vunpack.c.h.b16 %v1416
        %v6198 = vunpack.c.l.b16 %v1417
        %v6199 = vunpack.c.h.b16 %v1417
        %v6200 = vunpack.c.l.b16 %v1418
        %v6201 = vunpack.c.h.b16 %v1418
        %v6202 = vunpack.c.l.b16 %v1419
        %v6203 = vunpack.c.h.b16 %v1419
        %v6204 = vunpack.c.l.b16 %v1420
        %v6205 = vunpack.c.h.b16 %v1420
        %v6206 = vunpack.c.l.b16 %v1421
        %v6207 = vunpack.c.h.b16 %v1421
        %v6208 = vunpack.c.l.b16 %v1422
        %v6209 = vunpack.c.h.b16 %v1422
        %v6210 = vunpack.c.l.b16 %v1423
        %v6211 = vunpack.c.h.b16 %v1423
        %v6212 = vunpack.c.l.b16 %v1424
        %v6213 = vunpack.c.h.b16 %v1424
        %v6214 = vunpack.c.l.b16 %v1425
        %v6215 = vunpack.c.h.b16 %v1425
        %v6216 = vunpack.c.l.b16 %v1426
        %v6217 = vunpack.c.h.b16 %v1426
        %v6218 = vunpack.c.l.b16 %v1427
        %v6219 = vunpack.c.h.b16 %v1427
        %v6220 = vunpack.c.l.b16 %v1428
        %v6221 = vunpack.c.h.b16 %v1428
        %v6222 = vunpack.c.l.b16 %v1429
        %v6223 = vunpack.c.h.b16 %v1429
        %v6224 = vunpack.c.l.b16 %v1430
        %v6225 = vunpack.c.h.b16 %v1430
        %v6226 = vunpack.c.l.b16 %v1431
        %v6227 = vunpack.c.h.b16 %v1431
        %v6228 = vunpack.c.l.b16 %v1432
        %v6229 = vunpack.c.h.b16 %v1432
        %v6230 = vunpack.c.l.b16 %v1433
        %v6231 = vunpack.c.h.b16 %v1433
        %v6232 = vunpack.c.l.b16 %v1434
        %v6233 = vunpack.c.h.b16 %v1434
        %v6234 = vunpack.c.l.b16 %v1435
        %v6235 = vunpack.c.h.b16 %v1435
        %v6236 = vunpack.c.l.b16 %v1436
        %v6237 = vunpack.c.h.b16 %v1436
        %v6238 = vunpack.c.l.b16 %v1437
        %v6239 = vunpack.c.h.b16 %v1437
        %v6240 = vunpack.c.l.b16 %v1438
        %v6241 = vunpack.c.h.b16 %v1438
        %v6242 = vunpack.c.l.b16 %v1439
        %v6243 = vunpack.c.h.b16 %v1439
        %v6244 = vunpack.c.l.b16 %v1440
        %v6245 = vunpack.c.h.b16 %v1440
        %v6246 = vunpack.c.l.b16 %v1441
        %v6247 = vunpack.c.h.b16 %v1441
        %v6248 = vunpack.c.l.b16 %v1442
        %v6249 = vunpack.c.h.b16 %v1442
        %v6250 = vunpack.c.l.b16 %v1443
        %v6251 = vunpack.c.h.b16 %v1443
        %v6252 = vunpack.c.l.b16 %v1444
        %v6253 = vunpack.c.h.b16 %v1444
        %v6254 = vunpack.c.l.b16 %v1445
        %v6255 = vunpack.c.h.b16 %v1445
        %v6256 = vunpack.c.l.b16 %v1446
        %v6257 = vunpack.c.h.b16 %v1446
        %v6258 = vunpack.c.l.b16 %v1447
        %v6259 = vunpack.c.h.b16 %v1447
        %v6260 = vunpack.c.l.b16 %v1448
        %v6261 = vunpack.c.h.b16 %v1448
        %v6262 = vunpack.c.l.b16 %v1449
        %v6263 = vunpack.c.h.b16 %v1449
        %v6264 = vunpack.c.l.b16 %v1450
        %v6265 = vunpack.c.h.b16 %v1450
        %v6266 = vunpack.c.l.b16 %v1451
        %v6267 = vunpack.c.h.b16 %v1451
        %v6268 = vunpack.c.l.b16 %v1452
        %v6269 = vunpack.c.h.b16 %v1452
        %v6270 = vunpack.c.l.b16 %v1453
        %v6271 = vunpack.c.h.b16 %v1453
        %v6272 = vunpack.c.l.b16 %v1454
        %v6273 = vunpack.c.h.b16 %v1454
        %v6274 = vunpack.c.l.b16 %v1455
        %v6275 = vunpack.c.h.b16 %v1455
        %v6276 = vunpack.c.l.b16 %v1456
        %v6277 = vunpack.c.h.b16 %v1456
        %v6278 = vunpack.c.l.b16 %v1457
        %v6279 = vunpack.c.h.b16 %v1457
        %v6280 = vunpack.c.l.b16 %v1458
        %v6281 = vunpack.c.h.b16 %v1458
        %v6282 = vunpack.c.l.b16 %v1459
        %v6283 = vunpack.c.h.b16 %v1459
        %v6284 = vunpack.c.l.b16 %v1460
        %v6285 = vunpack.c.h.b16 %v1460
        %v6286 = vunpack.c.l.b16 %v1461
        %v6287 = vunpack.c.h.b16 %v1461
        %v6288 = vunpack.c.l.b16 %v1462
        %v6289 = vunpack.c.h.b16 %v1462
        %v6290 = vunpack.c.l.b16 %v1463
        %v6291 = vunpack.c.h.b16 %v1463
        %v6292 = vunpack.c.l.b16 %v1464
        %v6293 = vunpack.c.h.b16 %v1464
        %v6294 = vunpack.c.l.b16 %v1465
        %v6295 = vunpack.c.h.b16 %v1465
        %v6296 = vunpack.c.l.b16 %v1466
        %v6297 = vunpack.c.h.b16 %v1466
        %v6298 = vunpack.c.l.b16 %v1467
        %v6299 = vunpack.c.h.b16 %v1467
        %v6300 = vunpack.c.l.b16 %v1468
        %v6301 = vunpack.c.h.b16 %v1468
        %v6302 = vunpack.c.l.b16 %v1469
        %v6303 = vunpack.c.h.b16 %v1469
        %v6304 = vunpack.c.l.b16 %v1470
        %v6305 = vunpack.c.h.b16 %v1470
        %v6306 = vunpack.c.l.b16 %v1471
        %v6307 = vunpack.c.h.b16 %v1471
        %v6308 = vunpack.c.l.b16 %v1472
        %v6309 = vunpack.c.h.b16 %v1472
        %v6310 = vunpack.c.l.b16 %v1473
        %v6311 = vunpack.c.h.b16 %v1473
        %v6312 = vunpack.c.l.b16 %v1474
        %v6313 = vunpack.c.h.b16 %v1474
        %v6314 = vunpack.c.l.b16 %v1475
        %v6315 = vunpack.c.h.b16 %v1475
        %v6316 = vunpack.c.l.b16 %v1476
        %v6317 = vunpack.c.h.b16 %v1476
        %v6318 = vunpack.c.l.b16 %v1477
        %v6319 = vunpack.c.h.b16 %v1477
        %v6320 = vunpack.c.l.b16 %v1478
        %v6321 = vunpack.c.h.b16 %v1478
        %v6322 = vunpack.c.l.b16 %v1479
        %v6323 = vunpack.c.h.b16 %v1479
        %v6324 = vunpack.c.l.b16 %v1480
        %v6325 = vunpack.c.h.b16 %v1480
        %v6326 = vunpack.c.l.b16 %v1481
        %v6327 = vunpack.c.h.b16 %v1481
        %v6328 = vunpack.c.l.b16 %v1482
        %v6329 = vunpack.c.h.b16 %v1482
        %v6330 = vunpack.c.l.b16 %v1483
        %v6331 = vunpack.c.h.b16 %v1483
        %v6332 = vunpack.c.l.b16 %v1484
        %v6333 = vunpack.c.h.b16 %v1484
        %v6334 = vunpack.c.l.b16 %v1485
        %v6335 = vunpack.c.h.b16 %v1485
        %v6336 = vunpack.c.l.b16 %v1486
        %v6337 = vunpack.c.h.b16 %v1486
        %v6338 = vunpack.c.l.b16 %v1487
        %v6339 = vunpack.c.h.b16 %v1487
        %v6340 = vunpack.c.l.b16 %v1488
        %v6341 = vunpack.c.h.b16 %v1488
        %v6342 = vunpack.c.l.b16 %v1489
        %v6343 = vunpack.c.h.b16 %v1489
        %v6344 = vunpack.c.l.b16 %v1490
        %v6345 = vunpack.c.h.b16 %v1490
        %v6346 = vunpack.c.l.b16 %v1491
        %v6347 = vunpack.c.h.b16 %v1491
        %v6348 = vunpack.c.l.b16 %v1492
        %v6349 = vunpack.c.h.b16 %v1492
        %v6350 = vunpack.c.l.b16 %v1493
        %v6351 = vunpack.c.h.b16 %v1493
        %v6352 = vunpack.c.l.b16 %v1494
        %v6353 = vunpack.c.h.b16 %v1494
        %v6354 = vunpack.c.l.b16 %v1495
        %v6355 = vunpack.c.h.b16 %v1495
        %v6356 = vunpack.c.l.b16 %v1496
        %v6357 = vunpack.c.h.b16 %v1496
        %v6358 = vunpack.c.l.b16 %v1497
        %v6359 = vunpack.c.h.b16 %v1497
        %v6360 = vunpack.c.l.b16 %v1498
        %v6361 = vunpack.c.h.b16 %v1498
        %v6362 = vunpack.c.l.b16 %v1499
        %v6363 = vunpack.c.h.b16 %v1499
        %v6364 = vunpack.c.l.b16 %v1500
        %v6365 = vunpack.c.h.b16 %v1500
        %v6366 = vunpack.c.l.b16 %v1501
        %v6367 = vunpack.c.h.b16 %v1501
        %v6368 = vunpack.c.l.b16 %v1502
        %v6369 = vunpack.c.h.b16 %v1502
        %v6370 = vunpack.c.l.b16 %v1503
        %v6371 = vunpack.c.h.b16 %v1503
        %v6372 = vunpack.c.l.b16 %v1504
        %v6373 = vunpack.c.h.b16 %v1504
        %v6374 = vunpack.c.l.b16 %v1505
        %v6375 = vunpack.c.h.b16 %v1505
        %v6376 = vunpack.c.l.b16 %v1506
        %v6377 = vunpack.c.h.b16 %v1506
        %v6378 = vunpack.c.l.b16 %v1507
        %v6379 = vunpack.c.h.b16 %v1507
        %v6380 = vunpack.c.l.b16 %v1508
        %v6381 = vunpack.c.h.b16 %v1508
        %v6382 = vunpack.c.l.b16 %v1509
        %v6383 = vunpack.c.h.b16 %v1509
        %v6384 = vunpack.c.l.b16 %v1510
        %v6385 = vunpack.c.h.b16 %v1510
        %v6386 = vunpack.c.l.b16 %v1511
        %v6387 = vunpack.c.h.b16 %v1511
        %v6388 = vunpack.c.l.b16 %v1512
        %v6389 = vunpack.c.h.b16 %v1512
        %v6390 = vunpack.c.l.b16 %v1513
        %v6391 = vunpack.c.h.b16 %v1513
        %v6392 = vunpack.c.l.b16 %v1514
        %v6393 = vunpack.c.h.b16 %v1514
        %v6394 = vunpack.c.l.b16 %v1515
        %v6395 = vunpack.c.h.b16 %v1515
        %v6396 = vunpack.c.l.b16 %v1516
        %v6397 = vunpack.c.h.b16 %v1516
        %v6398 = vunpack.c.l.b16 %v1517
        %v6399 = vunpack.c.h.b16 %v1517
        %v6400 = vunpack.c.l.b16 %v1518
        %v6401 = vunpack.c.h.b16 %v1518
        %v6402 = vunpack.c.l.b16 %v1519
        %v6403 = vunpack.c.h.b16 %v1519
        %v6404 = vunpack.c.l.b16 %v1520
        %v6405 = vunpack.c.h.b16 %v1520
        %v6406 = vunpack.c.l.b16 %v1521
        %v6407 = vunpack.c.h.b16 %v1521
        %v6408 = vunpack.c.l.b16 %v1522
        %v6409 = vunpack.c.h.b16 %v1522
        %v6410 = vunpack.c.l.b16 %v1523
        %v6411 = vunpack.c.h.b16 %v1523
        %v6412 = vunpack.c.l.b16 %v1524
        %v6413 = vunpack.c.h.b16 %v1524
        %v6414 = vunpack.c.l.b16 %v1525
        %v6415 = vunpack.c.h.b16 %v1525
        %v6416 = vunpack.c.l.b16 %v1526
        %v6417 = vunpack.c.h.b16 %v1526
        %v6418 = vunpack.c.l.b16 %v1527
        %v6419 = vunpack.c.h.b16 %v1527
        %v6420 = vunpack.c.l.b16 %v1528
        %v6421 = vunpack.c.h.b16 %v1528
        %v6422 = vunpack.c.l.b16 %v1529
        %v6423 = vunpack.c.h.b16 %v1529
        %v6424 = vunpack.c.l.b16 %v1530
        %v6425 = vunpack.c.h.b16 %v1530
        %v6426 = vunpack.c.l.b16 %v1531
        %v6427 = vunpack.c.h.b16 %v1531
        %v6428 = vunpack.c.l.b16 %v1532
        %v6429 = vunpack.c.h.b16 %v1532
        %v6430 = vunpack.c.l.b16 %v1533
        %v6431 = vunpack.c.h.b16 %v1533
        %v6432 = vunpack.c.l.b16 %v1534
        %v6433 = vunpack.c.h.b16 %v1534
        %v6434 = vunpack.c.l.b16 %v1535
        %v6435 = vunpack.c.h.b16 %v1535
        %v6436 = vunpack.c.l.b16 %v1536
        %v6437 = vunpack.c.h.b16 %v1536
        %v6438 = vunpack.c.l.b16 %v1537
        %v6439 = vunpack.c.h.b16 %v1537
        %v6440 = vunpack.c.l.b16 %v1538
        %v6441 = vunpack.c.h.b16 %v1538
        %v6442 = vunpack.c.l.b16 %v1539
        %v6443 = vunpack.c.h.b16 %v1539
        %v6444 = vunpack.c.l.b16 %v1540
        %v6445 = vunpack.c.h.b16 %v1540
        %v6446 = vunpack.c.l.b16 %v1541
        %v6447 = vunpack.c.h.b16 %v1541
        %v6448 = vunpack.c.l.b16 %v1542
        %v6449 = vunpack.c.h.b16 %v1542
        %v6450 = vunpack.c.l.b16 %v1543
        %v6451 = vunpack.c.h.b16 %v1543
        %v6452 = vunpack.c.l.b16 %v1544
        %v6453 = vunpack.c.h.b16 %v1544
        %v6454 = vunpack.c.l.b16 %v1545
        %v6455 = vunpack.c.h.b16 %v1545
        %v6456 = vunpack.c.l.b16 %v1546
        %v6457 = vunpack.c.h.b16 %v1546
        %v6458 = vunpack.c.l.b16 %v1547
        %v6459 = vunpack.c.h.b16 %v1547
        %v6460 = vunpack.c.l.b16 %v1548
        %v6461 = vunpack.c.h.b16 %v1548
        %v6462 = vunpack.c.l.b16 %v1549
        %v6463 = vunpack.c.h.b16 %v1549
        %v6464 = vunpack.c.l.b16 %v1550
        %v6465 = vunpack.c.h.b16 %v1550
        %v6466 = vunpack.c.l.b16 %v1551
        %v6467 = vunpack.c.h.b16 %v1551
        %v6468 = vunpack.c.l.b16 %v1552
        %v6469 = vunpack.c.h.b16 %v1552
        %v6470 = vunpack.c.l.b16 %v1553
        %v6471 = vunpack.c.h.b16 %v1553
        %v6472 = vunpack.c.l.b16 %v1554
        %v6473 = vunpack.c.h.b16 %v1554
        %v6474 = vunpack.c.l.b16 %v1555
        %v6475 = vunpack.c.h.b16 %v1555
        %v6476 = vunpack.c.l.b16 %v1556
        %v6477 = vunpack.c.h.b16 %v1556
        %v6478 = vunpack.c.l.b16 %v1557
        %v6479 = vunpack.c.h.b16 %v1557
        %v6480 = vunpack.c.l.b16 %v1558
        %v6481 = vunpack.c.h.b16 %v1558
        %v6482 = vunpack.c.l.b16 %v1559
        %v6483 = vunpack.c.h.b16 %v1559
        %v6484 = vunpack.c.l.b16 %v1560
        %v6485 = vunpack.c.h.b16 %v1560
        %v6486 = vunpack.c.l.b16 %v1561
        %v6487 = vunpack.c.h.b16 %v1561
        %v6488 = vunpack.c.l.b16 %v1562
        %v6489 = vunpack.c.h.b16 %v1562
        %v6490 = vunpack.c.l.b16 %v1563
        %v6491 = vunpack.c.h.b16 %v1563
        %v6492 = vunpack.c.l.b16 %v1564
        %v6493 = vunpack.c.h.b16 %v1564
        %v6494 = vunpack.c.l.b16 %v1565
        %v6495 = vunpack.c.h.b16 %v1565
        %v6496 = vunpack.c.l.b16 %v1566
        %v6497 = vunpack.c.h.b16 %v1566
        %v6498 = vunpack.c.l.b16 %v1567
        %v6499 = vunpack.c.h.b16 %v1567
        %v6500 = vunpack.c.l.b16 %v1568
        %v6501 = vunpack.c.h.b16 %v1568
        %v6502 = vunpack.c.l.b16 %v1569
        %v6503 = vunpack.c.h.b16 %v1569
        %v6504 = vunpack.c.l.b16 %v1570
        %v6505 = vunpack.c.h.b16 %v1570
        %v6506 = vunpack.c.l.b16 %v1571
        %v6507 = vunpack.c.h.b16 %v1571
        %v6508 = vunpack.c.l.b16 %v1572
        %v6509 = vunpack.c.h.b16 %v1572
        %v6510 = vunpack.c.l.b16 %v1573
        %v6511 = vunpack.c.h.b16 %v1573
        %v6512 = vunpack.c.l.b16 %v1574
        %v6513 = vunpack.c.h.b16 %v1574
        %v6514 = vunpack.c.l.b16 %v1575
        %v6515 = vunpack.c.h.b16 %v1575
        %v6516 = vunpack.c.l.b16 %v1576
        %v6517 = vunpack.c.h.b16 %v1576
        %v6518 = vunpack.c.l.b16 %v1577
        %v6519 = vunpack.c.h.b16 %v1577
        %v6520 = vunpack.c.l.b16 %v1578
        %v6521 = vunpack.c.h.b16 %v1578
        %v6522 = vunpack.c.l.b16 %v1579
        %v6523 = vunpack.c.h.b16 %v1579
        %v6524 = vunpack.c.l.b16 %v1580
        %v6525 = vunpack.c.h.b16 %v1580
        %v6526 = vunpack.c.l.b16 %v1581
        %v6527 = vunpack.c.h.b16 %v1581
        %v6528 = vunpack.c.l.b16 %v1582
        %v6529 = vunpack.c.h.b16 %v1582
        %v6530 = vunpack.c.l.b16 %v1583
        %v6531 = vunpack.c.h.b16 %v1583
        %v6532 = vunpack.c.l.b16 %v1584
        %v6533 = vunpack.c.h.b16 %v1584
        %v6534 = vunpack.c.l.b16 %v1585
        %v6535 = vunpack.c.h.b16 %v1585
        %v6536 = vunpack.c.l.b16 %v1586
        %v6537 = vunpack.c.h.b16 %v1586
        %v6538 = vunpack.c.l.b16 %v1587
        %v6539 = vunpack.c.h.b16 %v1587
        %v6540 = vunpack.c.l.b16 %v1588
        %v6541 = vunpack.c.h.b16 %v1588
        %v6542 = vunpack.c.l.b16 %v1589
        %v6543 = vunpack.c.h.b16 %v1589
        %v6544 = vunpack.c.l.b16 %v1590
        %v6545 = vunpack.c.h.b16 %v1590
        %v6546 = vunpack.c.l.b16 %v1591
        %v6547 = vunpack.c.h.b16 %v1591
        %v6548 = vunpack.c.l.b16 %v1592
        %v6549 = vunpack.c.h.b16 %v1592
        %v6550 = vunpack.c.l.b16 %v1593
        %v6551 = vunpack.c.h.b16 %v1593
        %v6552 = vunpack.c.l.b16 %v1594
        %v6553 = vunpack.c.h.b16 %v1594
        %v6554 = vunpack.c.l.b16 %v1595
        %v6555 = vunpack.c.h.b16 %v1595
        %v6556 = vunpack.c.l.b16 %v1596
        %v6557 = vunpack.c.h.b16 %v1596
        %v6558 = vunpack.c.l.b16 %v1597
        %v6559 = vunpack.c.h.b16 %v1597
        %v6560 = vunpack.c.l.b16 %v1598
        %v6561 = vunpack.c.h.b16 %v1598
        %v6562 = vunpack.c.l.b16 %v1599
        %v6563 = vunpack.c.h.b16 %v1599
        %v6564 = vunpack.c.l.b16 %v1600
        %v6565 = vunpack.c.h.b16 %v1600
        %v6566 = vunpack.c.l.b16 %v1601
        %v6567 = vunpack.c.h.b16 %v1601
        %v6568 = vunpack.c.l.b16 %v1602
        %v6569 = vunpack.c.h.b16 %v1602
        %v6570 = vunpack.c.l.b16 %v1603
        %v6571 = vunpack.c.h.b16 %v1603
        %v6572 = vunpack.c.l.b16 %v1604
        %v6573 = vunpack.c.h.b16 %v1604
        %v6574 = vunpack.c.l.b16 %v1605
        %v6575 = vunpack.c.h.b16 %v1605
        %v6576 = vunpack.c.l.b16 %v1606
        %v6577 = vunpack.c.h.b16 %v1606
        %v6578 = vunpack.c.l.b16 %v1607
        %v6579 = vunpack.c.h.b16 %v1607
        %v6580 = vunpack.c.l.b16 %v1608
        %v6581 = vunpack.c.h.b16 %v1608
        %v6582 = vunpack.c.l.b16 %v1609
        %v6583 = vunpack.c.h.b16 %v1609
        %v6584 = vunpack.c.l.b16 %v1610
        %v6585 = vunpack.c.h.b16 %v1610
        %v6586 = vunpack.c.l.b16 %v1611
        %v6587 = vunpack.c.h.b16 %v1611
        %v6588 = vunpack.c.l.b16 %v1612
        %v6589 = vunpack.c.h.b16 %v1612
        %v6590 = vunpack.c.l.b16 %v1613
        %v6591 = vunpack.c.h.b16 %v1613
        %v6592 = vunpack.c.l.b16 %v1614
        %v6593 = vunpack.c.h.b16 %v1614
        %v6594 = vunpack.c.l.b16 %v1615
        %v6595 = vunpack.c.h.b16 %v1615
        %v6596 = vunpack.c.l.b16 %v1616
        %v6597 = vunpack.c.h.b16 %v1616
        %v6598 = vunpack.c.l.b16 %v1617
        %v6599 = vunpack.c.h.b16 %v1617
        %v6600 = vunpack.c.l.b16 %v1618
        %v6601 = vunpack.c.h.b16 %v1618
        %v6602 = vunpack.c.l.b16 %v1619
        %v6603 = vunpack.c.h.b16 %v1619
        %v6604 = vunpack.c.l.b16 %v1620
        %v6605 = vunpack.c.h.b16 %v1620
        %v6606 = vunpack.c.l.b16 %v1621
        %v6607 = vunpack.c.h.b16 %v1621
        %v6608 = vunpack.c.l.b16 %v1622
        %v6609 = vunpack.c.h.b16 %v1622
        %v6610 = vunpack.c.l.b16 %v1623
        %v6611 = vunpack.c.h.b16 %v1623
        %v6612 = vunpack.c.l.b16 %v1624
        %v6613 = vunpack.c.h.b16 %v1624
        %v6614 = vunpack.c.l.b16 %v1625
        %v6615 = vunpack.c.h.b16 %v1625
        %v6616 = vunpack.c.l.b16 %v1626
        %v6617 = vunpack.c.h.b16 %v1626
        %v6618 = vunpack.c.l.b16 %v1627
        %v6619 = vunpack.c.h.b16 %v1627
        %v6620 = vunpack.c.l.b16 %v1628
        %v6621 = vunpack.c.h.b16 %v1628
        %v6622 = vunpack.c.l.b16 %v1629
        %v6623 = vunpack.c.h.b16 %v1629
        %v6624 = vunpack.c.l.b16 %v1630
        %v6625 = vunpack.c.h.b16 %v1630
        %v6626 = vunpack.c.l.b16 %v1631
        %v6627 = vunpack.c.h.b16 %v1631
        %v6628 = vunpack.c.l.b16 %v1632
        %v6629 = vunpack.c.h.b16 %v1632
        %v6630 = vunpack.c.l.b16 %v1633
        %v6631 = vunpack.c.h.b16 %v1633
        %v6632 = vunpack.c.l.b16 %v1634
        %v6633 = vunpack.c.h.b16 %v1634
        %v6634 = vunpack.c.l.b16 %v1635
        %v6635 = vunpack.c.h.b16 %v1635
        %v6636 = vunpack.c.l.b16 %v1636
        %v6637 = vunpack.c.h.b16 %v1636
        %v6638 = vunpack.c.l.b16 %v1637
        %v6639 = vunpack.c.h.b16 %v1637
        %v6640 = vunpack.c.l.b16 %v1638
        %v6641 = vunpack.c.h.b16 %v1638
        %v6642 = vunpack.c.l.b16 %v1639
        %v6643 = vunpack.c.h.b16 %v1639
        %v6644 = vunpack.c.l.b16 %v1640
        %v6645 = vunpack.c.h.b16 %v1640
        %v6646 = vunpack.c.l.b16 %v1641
        %v6647 = vunpack.c.h.b16 %v1641
        %v6648 = vunpack.c.l.b16 %v1642
        %v6649 = vunpack.c.h.b16 %v1642
        %v6650 = vunpack.c.l.b16 %v1643
        %v6651 = vunpack.c.h.b16 %v1643
        %v6652 = vunpack.c.l.b16 %v1644
        %v6653 = vunpack.c.h.b16 %v1644
        %v6654 = vunpack.c.l.b16 %v1645
        %v6655 = vunpack.c.h.b16 %v1645
        %v6656 = vunpack.c.l.b16 %v1646
        %v6657 = vunpack.c.h.b16 %v1646
        %v6658 = vunpack.c.l.b16 %v1647
        %v6659 = vunpack.c.h.b16 %v1647
        %v6660 = vunpack.c.l.b16 %v1648
        %v6661 = vunpack.c.h.b16 %v1648
        %v6662 = vunpack.c.l.b16 %v1649
        %v6663 = vunpack.c.h.b16 %v1649
        %v6664 = vunpack.c.l.b16 %v1650
        %v6665 = vunpack.c.h.b16 %v1650
        %v6666 = vunpack.c.l.b16 %v1651
        %v6667 = vunpack.c.h.b16 %v1651
        %v6668 = vunpack.c.l.b16 %v1652
        %v6669 = vunpack.c.h.b16 %v1652
        %v6670 = vunpack.c.l.b16 %v1653
        %v6671 = vunpack.c.h.b16 %v1653
        %v6672 = vunpack.c.l.b16 %v1654
        %v6673 = vunpack.c.h.b16 %v1654
        %v6674 = vunpack.c.l.b16 %v1655
        %v6675 = vunpack.c.h.b16 %v1655
        %v6676 = vunpack.c.l.b16 %v1656
        %v6677 = vunpack.c.h.b16 %v1656
        %v6678 = vunpack.c.l.b16 %v1657
        %v6679 = vunpack.c.h.b16 %v1657
        %v6680 = vunpack.c.l.b16 %v1658
        %v6681 = vunpack.c.h.b16 %v1658
        %v6682 = vunpack.c.l.b16 %v1659
        %v6683 = vunpack.c.h.b16 %v1659
        %v6684 = vunpack.c.l.b16 %v1660
        %v6685 = vunpack.c.h.b16 %v1660
        %v6686 = vunpack.c.l.b16 %v1661
        %v6687 = vunpack.c.h.b16 %v1661
        %v6688 = vunpack.c.l.b16 %v1662
        %v6689 = vunpack.c.h.b16 %v1662
        %v6690 = vunpack.c.l.b16 %v1663
        %v6691 = vunpack.c.h.b16 %v1663
        %v6692 = vunpack.c.l.b16 %v1664
        %v6693 = vunpack.c.h.b16 %v1664
        %v6694 = vunpack.c.l.b16 %v1665
        %v6695 = vunpack.c.h.b16 %v1665
        %v6696 = vunpack.c.l.b16 %v1666
        %v6697 = vunpack.c.h.b16 %v1666
        %v6698 = vunpack.c.l.b16 %v1667
        %v6699 = vunpack.c.h.b16 %v1667
        %v6700 = vunpack.c.l.b16 %v1668
        %v6701 = vunpack.c.h.b16 %v1668
        %v6702 = vunpack.c.l.b16 %v1669
        %v6703 = vunpack.c.h.b16 %v1669
        %v6704 = vunpack.c.l.b16 %v1670
        %v6705 = vunpack.c.h.b16 %v1670
        %v6706 = vunpack.c.l.b16 %v1671
        %v6707 = vunpack.c.h.b16 %v1671
        %v6708 = vunpack.c.l.b16 %v1672
        %v6709 = vunpack.c.h.b16 %v1672
        %v6710 = vunpack.c.l.b16 %v1673
        %v6711 = vunpack.c.h.b16 %v1673
        %v6712 = vunpack.c.l.b16 %v1674
        %v6713 = vunpack.c.h.b16 %v1674
        %v6714 = vunpack.c.l.b16 %v1675
        %v6715 = vunpack.c.h.b16 %v1675
        %v6716 = vunpack.c.l.b16 %v1676
        %v6717 = vunpack.c.h.b16 %v1676
        %v6718 = vunpack.c.l.b16 %v1677
        %v6719 = vunpack.c.h.b16 %v1677
        %v6720 = vunpack.c.l.b16 %v1678
        %v6721 = vunpack.c.h.b16 %v1678
        %v6722 = vunpack.c.l.b16 %v1679
        %v6723 = vunpack.c.h.b16 %v1679
        %v6724 = vunpack.c.l.b16 %v1680
        %v6725 = vunpack.c.h.b16 %v1680
        %v6726 = vunpack.c.l.b16 %v1681
        %v6727 = vunpack.c.h.b16 %v1681
        %v6728 = vunpack.c.l.b16 %v1682
        %v6729 = vunpack.c.h.b16 %v1682
        %v6730 = vunpack.c.l.b16 %v1683
        %v6731 = vunpack.c.h.b16 %v1683
        %v6732 = vunpack.c.l.b16 %v1684
        %v6733 = vunpack.c.h.b16 %v1684
        %v6734 = vunpack.c.l.b16 %v1685
        %v6735 = vunpack.c.h.b16 %v1685
        %v6736 = vunpack.c.l.b16 %v1686
        %v6737 = vunpack.c.h.b16 %v1686
        %v6738 = vunpack.c.l.b16 %v1687
        %v6739 = vunpack.c.h.b16 %v1687
        %v6740 = vunpack.c.l.b16 %v1688
        %v6741 = vunpack.c.h.b16 %v1688
        %v6742 = vunpack.c.l.b16 %v1689
        %v6743 = vunpack.c.h.b16 %v1689
        %v6744 = vunpack.c.l.b16 %v1690
        %v6745 = vunpack.c.h.b16 %v1690
        %v6746 = vunpack.c.l.b16 %v1691
        %v6747 = vunpack.c.h.b16 %v1691
        %v6748 = vunpack.c.l.b16 %v1692
        %v6749 = vunpack.c.h.b16 %v1692
        %v6750 = vunpack.c.l.b16 %v1693
        %v6751 = vunpack.c.h.b16 %v1693
        %v6752 = vunpack.c.l.b16 %v1694
        %v6753 = vunpack.c.h.b16 %v1694
        %v6754 = vunpack.c.l.b16 %v1695
        %v6755 = vunpack.c.h.b16 %v1695
        %v6756 = vunpack.c.l.b16 %v1696
        %v6757 = vunpack.c.h.b16 %v1696
        %v6758 = vunpack.c.l.b16 %v1697
        %v6759 = vunpack.c.h.b16 %v1697
        %v6760 = vunpack.c.l.b16 %v1698
        %v6761 = vunpack.c.h.b16 %v1698
        %v6762 = vunpack.c.l.b16 %v1699
        %v6763 = vunpack.c.h.b16 %v1699
        %v6764 = vunpack.c.l.b16 %v1700
        %v6765 = vunpack.c.h.b16 %v1700
        %v6766 = vunpack.c.l.b16 %v1701
        %v6767 = vunpack.c.h.b16 %v1701
        %v6768 = vunpack.c.l.b16 %v1702
        %v6769 = vunpack.c.h.b16 %v1702
        %v6770 = vunpack.c.l.b16 %v1703
        %v6771 = vunpack.c.h.b16 %v1703
        %v6772 = vunpack.c.l.b16 %v1704
        %v6773 = vunpack.c.h.b16 %v1704
        %v6774 = vunpack.c.l.b16 %v1705
        %v6775 = vunpack.c.h.b16 %v1705
        %v6776 = vunpack.c.l.b16 %v1706
        %v6777 = vunpack.c.h.b16 %v1706
        %v6778 = vunpack.c.l.b16 %v1707
        %v6779 = vunpack.c.h.b16 %v1707
        %v6780 = vunpack.c.l.b16 %v1708
        %v6781 = vunpack.c.h.b16 %v1708
        %v6782 = vunpack.c.l.b16 %v1709
        %v6783 = vunpack.c.h.b16 %v1709
        %v6784 = vunpack.c.l.b16 %v1710
        %v6785 = vunpack.c.h.b16 %v1710
        %v6786 = vunpack.c.l.b16 %v1711
        %v6787 = vunpack.c.h.b16 %v1711
        %v6788 = vunpack.c.l.b16 %v1712
        %v6789 = vunpack.c.h.b16 %v1712
        %v6790 = vunpack.c.l.b16 %v1713
        %v6791 = vunpack.c.h.b16 %v1713
        %v6792 = vunpack.c.l.b16 %v1714
        %v6793 = vunpack.c.h.b16 %v1714
        %v6794 = vunpack.c.l.b16 %v1715
        %v6795 = vunpack.c.h.b16 %v1715
        %v6796 = vunpack.c.l.b16 %v1716
        %v6797 = vunpack.c.h.b16 %v1716
        %v6798 = vunpack.c.l.b16 %v1717
        %v6799 = vunpack.c.h.b16 %v1717
        %v6800 = vunpack.c.l.b16 %v1718
        %v6801 = vunpack.c.h.b16 %v1718
        %v6802 = vunpack.c.l.b16 %v1719
        %v6803 = vunpack.c.h.b16 %v1719
        %v6804 = vunpack.c.l.b16 %v1720
        %v6805 = vunpack.c.h.b16 %v1720
        %v6806 = vunpack.c.l.b16 %v1721
        %v6807 = vunpack.c.h.b16 %v1721
        %v6808 = vunpack.c.l.b16 %v1722
        %v6809 = vunpack.c.h.b16 %v1722
        %v6810 = vunpack.c.l.b16 %v1723
        %v6811 = vunpack.c.h.b16 %v1723
        %v6812 = vunpack.c.l.b16 %v1724
        %v6813 = vunpack.c.h.b16 %v1724
        %v6814 = vunpack.c.l.b16 %v1725
        %v6815 = vunpack.c.h.b16 %v1725
        %v6816 = vunpack.c.l.b16 %v1726
        %v6817 = vunpack.c.h.b16 %v1726
        %v6818 = vunpack.c.l.b16 %v1727
        %v6819 = vunpack.c.h.b16 %v1727
        %v6820 = vunpack.c.l.b16 %v1728
        %v6821 = vunpack.c.h.b16 %v1728
        %v6822 = vunpack.c.l.b16 %v1729
        %v6823 = vunpack.c.h.b16 %v1729
        %v6824 = vunpack.c.l.b16 %v1730
        %v6825 = vunpack.c.h.b16 %v1730
        %v6826 = vunpack.c.l.b16 %v1731
        %v6827 = vunpack.c.h.b16 %v1731
        %v6828 = vunpack.c.l.b16 %v1732
        %v6829 = vunpack.c.h.b16 %v1732
        %v6830 = vunpack.c.l.b16 %v1733
        %v6831 = vunpack.c.h.b16 %v1733
        %v6832 = vunpack.c.l.b16 %v1734
        %v6833 = vunpack.c.h.b16 %v1734
        %v6834 = vunpack.c.l.b16 %v1735
        %v6835 = vunpack.c.h.b16 %v1735
        %v6836 = vunpack.c.l.b16 %v1736
        %v6837 = vunpack.c.h.b16 %v1736
        %v6838 = vunpack.c.l.b16 %v1737
        %v6839 = vunpack.c.h.b16 %v1737
        %v6840 = vunpack.c.l.b16 %v1738
        %v6841 = vunpack.c.h.b16 %v1738
        %v6842 = vunpack.c.l.b16 %v1739
        %v6843 = vunpack.c.h.b16 %v1739
        %v6844 = vunpack.c.l.b16 %v1740
        %v6845 = vunpack.c.h.b16 %v1740
        %v6846 = vunpack.c.l.b16 %v1741
        %v6847 = vunpack.c.h.b16 %v1741
        %v6848 = vunpack.c.l.b16 %v1742
        %v6849 = vunpack.c.h.b16 %v1742
        %v6850 = vunpack.c.l.b16 %v1743
        %v6851 = vunpack.c.h.b16 %v1743
        %v6852 = vunpack.c.l.b16 %v1744
        %v6853 = vunpack.c.h.b16 %v1744
        %v6854 = vunpack.c.l.b16 %v1745
        %v6855 = vunpack.c.h.b16 %v1745
        %v6856 = vunpack.c.l.b16 %v1746
        %v6857 = vunpack.c.h.b16 %v1746
        %v6858 = vunpack.c.l.b16 %v1747
        %v6859 = vunpack.c.h.b16 %v1747
        %v6860 = vunpack.c.l.b16 %v1748
        %v6861 = vunpack.c.h.b16 %v1748
        %v6862 = vunpack.c.l.b16 %v1749
        %v6863 = vunpack.c.h.b16 %v1749
        %v6864 = vunpack.c.l.b16 %v1750
        %v6865 = vunpack.c.h.b16 %v1750
        %v6866 = vunpack.c.l.b16 %v1751
        %v6867 = vunpack.c.h.b16 %v1751
        %v6868 = vunpack.c.l.b16 %v1752
        %v6869 = vunpack.c.h.b16 %v1752
        %v6870 = vunpack.c.l.b16 %v1753
        %v6871 = vunpack.c.h.b16 %v1753
        %v6872 = vunpack.c.l.b16 %v1754
        %v6873 = vunpack.c.h.b16 %v1754
        %v6874 = vunpack.c.l.b16 %v1755
        %v6875 = vunpack.c.h.b16 %v1755
        %v6876 = vunpack.c.l.b16 %v1756
        %v6877 = vunpack.c.h.b16 %v1756
        %v6878 = vunpack.c.l.b16 %v1757
        %v6879 = vunpack.c.h.b16 %v1757
        %v6880 = vunpack.c.l.b16 %v1758
        %v6881 = vunpack.c.h.b16 %v1758
        %v6882 = vunpack.c.l.b16 %v1759
        %v6883 = vunpack.c.h.b16 %v1759
        %v6884 = vunpack.c.l.b16 %v1760
        %v6885 = vunpack.c.h.b16 %v1760
        %v6886 = vunpack.c.l.b16 %v1761
        %v6887 = vunpack.c.h.b16 %v1761
        %v6888 = vunpack.c.l.b16 %v1762
        %v6889 = vunpack.c.h.b16 %v1762
        %v6890 = vunpack.c.l.b16 %v1763
        %v6891 = vunpack.c.h.b16 %v1763
        %v6892 = vunpack.c.l.b16 %v1764
        %v6893 = vunpack.c.h.b16 %v1764
        %v6894 = vunpack.c.l.b16 %v1765
        %v6895 = vunpack.c.h.b16 %v1765
        %v6896 = vunpack.c.l.b16 %v1766
        %v6897 = vunpack.c.h.b16 %v1766
        %v6898 = vunpack.c.l.b16 %v1767
        %v6899 = vunpack.c.h.b16 %v1767
        %v6900 = vunpack.c.l.b16 %v1768
        %v6901 = vunpack.c.h.b16 %v1768
        %v6902 = vunpack.c.l.b16 %v1769
        %v6903 = vunpack.c.h.b16 %v1769
        %v6904 = vunpack.c.l.b16 %v1770
        %v6905 = vunpack.c.h.b16 %v1770
        %v6906 = vunpack.c.l.b16 %v1771
        %v6907 = vunpack.c.h.b16 %v1771
        %v6908 = vunpack.c.l.b16 %v1772
        %v6909 = vunpack.c.h.b16 %v1772
        %v6910 = vunpack.c.l.b16 %v1773
        %v6911 = vunpack.c.h.b16 %v1773
        %v6912 = vunpack.c.l.b16 %v1774
        %v6913 = vunpack.c.h.b16 %v1774
        %v6914 = vunpack.c.l.b16 %v1775
        %v6915 = vunpack.c.h.b16 %v1775
        %v6916 = vunpack.c.l.b16 %v1776
        %v6917 = vunpack.c.h.b16 %v1776
        %v6918 = vunpack.c.l.b16 %v1777
        %v6919 = vunpack.c.h.b16 %v1777
        %v6920 = vunpack.c.l.b16 %v1778
        %v6921 = vunpack.c.h.b16 %v1778
        %v6922 = vunpack.c.l.b16 %v1779
        %v6923 = vunpack.c.h.b16 %v1779
        %v6924 = vunpack.c.l.b16 %v1780
        %v6925 = vunpack.c.h.b16 %v1780
        %v6926 = vunpack.c.l.b16 %v1781
        %v6927 = vunpack.c.h.b16 %v1781
        %v6928 = vunpack.c.l.b16 %v1782
        %v6929 = vunpack.c.h.b16 %v1782
        %v6930 = vunpack.c.l.b16 %v1783
        %v6931 = vunpack.c.h.b16 %v1783
        %v6932 = vunpack.c.l.b16 %v1784
        %v6933 = vunpack.c.h.b16 %v1784
        %v6934 = vunpack.c.l.b16 %v1785
        %v6935 = vunpack.c.h.b16 %v1785
        %v6936 = vunpack.c.l.b16 %v1786
        %v6937 = vunpack.c.h.b16 %v1786
        %v6938 = vunpack.c.l.b16 %v1787
        %v6939 = vunpack.c.h.b16 %v1787
        %v6940 = vunpack.c.l.b16 %v1788
        %v6941 = vunpack.c.h.b16 %v1788
        %v6942 = vunpack.c.l.b16 %v1789
        %v6943 = vunpack.c.h.b16 %v1789
        %v6944 = vunpack.c.l.b16 %v1790
        %v6945 = vunpack.c.h.b16 %v1790
        %v6946 = vunpack.c.l.b16 %v1791
        %v6947 = vunpack.c.h.b16 %v1791
        %v6948 = vunpack.c.l.b16 %v1792
        %v6949 = vunpack.c.h.b16 %v1792
        %v6950 = vunpack.c.l.b16 %v1793
        %v6951 = vunpack.c.h.b16 %v1793
        %v6952 = vunpack.c.l.b16 %v1794
        %v6953 = vunpack.c.h.b16 %v1794
        %v6954 = vunpack.c.l.b16 %v1795
        %v6955 = vunpack.c.h.b16 %v1795
        %v6956 = vunpack.c.l.b16 %v1796
        %v6957 = vunpack.c.h.b16 %v1796
        %v6958 = vunpack.c.l.b16 %v1797
        %v6959 = vunpack.c.h.b16 %v1797
        %v6960 = vunpack.c.l.b16 %v1798
        %v6961 = vunpack.c.h.b16 %v1798
        %v6962 = vunpack.c.l.b16 %v1799
        %v6963 = vunpack.c.h.b16 %v1799
        %v6964 = vunpack.c.l.b16 %v1800
        %v6965 = vunpack.c.h.b16 %v1800
        %v6966 = vunpack.c.l.b16 %v1801
        %v6967 = vunpack.c.h.b16 %v1801
        %v6968 = vunpack.c.l.b16 %v1802
        %v6969 = vunpack.c.h.b16 %v1802
        %v6970 = vunpack.c.l.b16 %v1803
        %v6971 = vunpack.c.h.b16 %v1803
        %v6972 = vunpack.c.l.b16 %v1804
        %v6973 = vunpack.c.h.b16 %v1804
        %v6974 = vunpack.c.l.b16 %v1805
        %v6975 = vunpack.c.h.b16 %v1805
        %v6976 = vunpack.c.l.b16 %v1806
        %v6977 = vunpack.c.h.b16 %v1806
        %v6978 = vunpack.c.l.b16 %v1807
        %v6979 = vunpack.c.h.b16 %v1807
        %v6980 = vunpack.c.l.b16 %v1808
        %v6981 = vunpack.c.h.b16 %v1808
        %v6982 = vunpack.c.l.b16 %v1809
        %v6983 = vunpack.c.h.b16 %v1809
        %v6984 = vunpack.c.l.b16 %v1810
        %v6985 = vunpack.c.h.b16 %v1810
        %v6986 = vunpack.c.l.b16 %v1811
        %v6987 = vunpack.c.h.b16 %v1811
        %v6988 = vunpack.c.l.b16 %v1812
        %v6989 = vunpack.c.h.b16 %v1812
        %v6990 = vunpack.c.l.b16 %v1813
        %v6991 = vunpack.c.h.b16 %v1813
        %v6992 = vunpack.c.l.b16 %v1814
        %v6993 = vunpack.c.h.b16 %v1814
        %v6994 = vunpack.c.l.b16 %v1815
        %v6995 = vunpack.c.h.b16 %v1815
        %v6996 = vunpack.c.l.b16 %v1816
        %v6997 = vunpack.c.h.b16 %v1816
        %v6998 = vunpack.c.l.b16 %v1817
        %v6999 = vunpack.c.h.b16 %v1817
        %v7000 = vunpack.c.l.b16 %v1818
        %v7001 = vunpack.c.h.b16 %v1818
        %v7002 = vunpack.c.l.b16 %v1819
        %v7003 = vunpack.c.h.b16 %v1819
        %v7004 = vunpack.c.l.b16 %v1820
        %v7005 = vunpack.c.h.b16 %v1820
        %v7006 = vunpack.c.l.b16 %v1821
        %v7007 = vunpack.c.h.b16 %v1821
        %v7008 = vunpack.c.l.b16 %v1822
        %v7009 = vunpack.c.h.b16 %v1822
        %v7010 = vunpack.c.l.b16 %v1823
        %v7011 = vunpack.c.h.b16 %v1823
        %v7012 = vunpack.c.l.b16 %v1824
        %v7013 = vunpack.c.h.b16 %v1824
        %v7014 = vunpack.c.l.b16 %v1825
        %v7015 = vunpack.c.h.b16 %v1825
        %v7016 = vunpack.c.l.b16 %v1826
        %v7017 = vunpack.c.h.b16 %v1826
        %v7018 = vunpack.c.l.b16 %v1827
        %v7019 = vunpack.c.h.b16 %v1827
        %v7020 = vunpack.c.l.b16 %v1828
        %v7021 = vunpack.c.h.b16 %v1828
        %v7022 = vunpack.c.l.b16 %v1829
        %v7023 = vunpack.c.h.b16 %v1829
        %v7024 = vunpack.c.l.b16 %v1830
        %v7025 = vunpack.c.h.b16 %v1830
        %v7026 = vunpack.c.l.b16 %v1831
        %v7027 = vunpack.c.h.b16 %v1831
        %v7028 = vunpack.c.l.b16 %v1832
        %v7029 = vunpack.c.h.b16 %v1832
        %v7030 = vunpack.c.l.b16 %v1833
        %v7031 = vunpack.c.h.b16 %v1833
        %v7032 = vunpack.c.l.b16 %v1834
        %v7033 = vunpack.c.h.b16 %v1834
        %v7034 = vunpack.c.l.b16 %v1835
        %v7035 = vunpack.c.h.b16 %v1835
        %v7036 = vunpack.c.l.b16 %v1836
        %v7037 = vunpack.c.h.b16 %v1836
        %v7038 = vunpack.c.l.b16 %v1837
        %v7039 = vunpack.c.h.b16 %v1837
        %v7040 = vunpack.c.l.b16 %v1838
        %v7041 = vunpack.c.h.b16 %v1838
        %v7042 = vunpack.c.l.b16 %v1839
        %v7043 = vunpack.c.h.b16 %v1839
        %v7044 = vunpack.c.l.b16 %v1840
        %v7045 = vunpack.c.h.b16 %v1840
        %v7046 = vunpack.c.l.b16 %v1841
        %v7047 = vunpack.c.h.b16 %v1841
        %v7048 = vunpack.c.l.b16 %v1842
        %v7049 = vunpack.c.h.b16 %v1842
        %v7050 = vunpack.c.l.b16 %v1843
        %v7051 = vunpack.c.h.b16 %v1843
        %v7052 = vunpack.c.l.b16 %v1844
        %v7053 = vunpack.c.h.b16 %v1844
        %v7054 = vunpack.c.l.b16 %v1845
        %v7055 = vunpack.c.h.b16 %v1845
        %v7056 = vunpack.c.l.b16 %v1846
        %v7057 = vunpack.c.h.b16 %v1846
        %v7058 = vunpack.c.l.b16 %v1847
        %v7059 = vunpack.c.h.b16 %v1847
        %v7060 = vunpack.c.l.b16 %v1848
        %v7061 = vunpack.c.h.b16 %v1848
        %v7062 = vunpack.c.l.b16 %v1849
        %v7063 = vunpack.c.h.b16 %v1849
        %v7064 = vunpack.c.l.b16 %v1850
        %v7065 = vunpack.c.h.b16 %v1850
        %v7066 = vunpack.c.l.b16 %v1851
        %v7067 = vunpack.c.h.b16 %v1851
        %v7068 = vunpack.c.l.b16 %v1852
        %v7069 = vunpack.c.h.b16 %v1852
        %v7070 = vunpack.c.l.b16 %v1853
        %v7071 = vunpack.c.h.b16 %v1853
        %v7072 = vunpack.c.l.b16 %v1854
        %v7073 = vunpack.c.h.b16 %v1854
        %v7074 = vunpack.c.l.b16 %v1855
        %v7075 = vunpack.c.h.b16 %v1855
        %v7076 = vunpack.c.l.b16 %v1856
        %v7077 = vunpack.c.h.b16 %v1856
        %v7078 = vunpack.c.l.b16 %v1857
        %v7079 = vunpack.c.h.b16 %v1857
        %v7080 = vunpack.c.l.b16 %v1858
        %v7081 = vunpack.c.h.b16 %v1858
        %v7082 = vunpack.c.l.b16 %v1859
        %v7083 = vunpack.c.h.b16 %v1859
        %v7084 = vunpack.c.l.b16 %v1860
        %v7085 = vunpack.c.h.b16 %v1860
        %v7086 = vunpack.c.l.b16 %v1861
        %v7087 = vunpack.c.h.b16 %v1861
        %v7088 = vunpack.c.l.b16 %v1862
        %v7089 = vunpack.c.h.b16 %v1862
        %v7090 = vunpack.c.l.b16 %v1863
        %v7091 = vunpack.c.h.b16 %v1863
        %v7092 = vunpack.c.l.b16 %v1864
        %v7093 = vunpack.c.h.b16 %v1864
        %v7094 = vunpack.c.l.b16 %v1865
        %v7095 = vunpack.c.h.b16 %v1865
        %v7096 = vunpack.c.l.b16 %v1866
        %v7097 = vunpack.c.h.b16 %v1866
        %v7098 = vunpack.c.l.b16 %v1867
        %v7099 = vunpack.c.h.b16 %v1867
        %v7100 = vunpack.c.l.b16 %v1868
        %v7101 = vunpack.c.h.b16 %v1868
        %v7102 = vunpack.c.l.b16 %v1869
        %v7103 = vunpack.c.h.b16 %v1869
        %v7104 = vunpack.c.l.b16 %v1870
        %v7105 = vunpack.c.h.b16 %v1870
        %v7106 = vunpack.c.l.b16 %v1871
        %v7107 = vunpack.c.h.b16 %v1871
        %v7108 = vunpack.c.l.b16 %v1872
        %v7109 = vunpack.c.h.b16 %v1872
        %v7110 = vunpack.c.l.b16 %v1873
        %v7111 = vunpack.c.h.b16 %v1873
        %v7112 = vunpack.c.l.b16 %v1874
        %v7113 = vunpack.c.h.b16 %v1874
        %v7114 = vunpack.c.l.b16 %v1875
        %v7115 = vunpack.c.h.b16 %v1875
        %v7116 = vunpack.c.l.b16 %v1876
        %v7117 = vunpack.c.h.b16 %v1876
        %v7118 = vunpack.c.l.b16 %v1877
        %v7119 = vunpack.c.h.b16 %v1877
        %v7120 = vunpack.c.l.b16 %v1878
        %v7121 = vunpack.c.h.b16 %v1878
        %v7122 = vunpack.c.l.b16 %v1879
        %v7123 = vunpack.c.h.b16 %v1879
        %v7124 = vunpack.c.l.b16 %v1880
        %v7125 = vunpack.c.h.b16 %v1880
        %v7126 = vunpack.c.l.b16 %v1881
        %v7127 = vunpack.c.h.b16 %v1881
        %v7128 = vunpack.c.l.b16 %v1882
        %v7129 = vunpack.c.h.b16 %v1882
        %v7130 = vunpack.c.l.b16 %v1883
        %v7131 = vunpack.c.h.b16 %v1883
        %v7132 = vunpack.c.l.b16 %v1884
        %v7133 = vunpack.c.h.b16 %v1884
        %v7134 = vunpack.c.l.b16 %v1885
        %v7135 = vunpack.c.h.b16 %v1885
        %v7136 = vunpack.c.l.b16 %v1886
        %v7137 = vunpack.c.h.b16 %v1886
        %v7138 = vunpack.c.l.b16 %v1887
        %v7139 = vunpack.c.h.b16 %v1887
        %v7140 = vunpack.c.l.b16 %v1888
        %v7141 = vunpack.c.h.b16 %v1888
        %v7142 = vunpack.c.l.b16 %v1889
        %v7143 = vunpack.c.h.b16 %v1889
        %v7144 = vunpack.c.l.b16 %v1890
        %v7145 = vunpack.c.h.b16 %v1890
        %v7146 = vunpack.c.l.b16 %v1891
        %v7147 = vunpack.c.h.b16 %v1891
        %v7148 = vunpack.c.l.b16 %v1892
        %v7149 = vunpack.c.h.b16 %v1892
        %v7150 = vunpack.c.l.b16 %v1893
        %v7151 = vunpack.c.h.b16 %v1893
        %v7152 = vunpack.c.l.b16 %v1894
        %v7153 = vunpack.c.h.b16 %v1894
        %v7154 = vunpack.c.l.b16 %v1895
        %v7155 = vunpack.c.h.b16 %v1895
        %v7156 = vunpack.c.l.b16 %v1896
        %v7157 = vunpack.c.h.b16 %v1896
        %v7158 = vunpack.c.l.b16 %v1897
        %v7159 = vunpack.c.h.b16 %v1897
        %v7160 = vunpack.c.l.b16 %v1898
        %v7161 = vunpack.c.h.b16 %v1898
        %v7162 = vunpack.c.l.b16 %v1899
        %v7163 = vunpack.c.h.b16 %v1899
        %v7164 = vunpack.c.l.b16 %v1900
        %v7165 = vunpack.c.h.b16 %v1900
        %v7166 = vunpack.c.l.b16 %v1901
        %v7167 = vunpack.c.h.b16 %v1901
        %v7168 = vunpack.c.l.b16 %v1902
        %v7169 = vunpack.c.h.b16 %v1902
        %v7170 = vunpack.c.l.b16 %v1903
        %v7171 = vunpack.c.h.b16 %v1903
        %v7172 = vunpack.c.l.b16 %v1904
        %v7173 = vunpack.c.h.b16 %v1904
        %v7174 = vunpack.c.l.b16 %v1905
        %v7175 = vunpack.c.h.b16 %v1905
        %v7176 = vunpack.c.l.b16 %v1906
        %v7177 = vunpack.c.h.b16 %v1906
        %v7178 = vunpack.c.l.b16 %v1907
        %v7179 = vunpack.c.h.b16 %v1907
        %v7180 = vunpack.c.l.b16 %v1908
        %v7181 = vunpack.c.h.b16 %v1908
        %v7182 = vunpack.c.l.b16 %v1909
        %v7183 = vunpack.c.h.b16 %v1909
        %v7184 = vunpack.c.l.b16 %v1910
        %v7185 = vunpack.c.h.b16 %v1910
        %v7186 = vunpack.c.l.b16 %v1911
        %v7187 = vunpack.c.h.b16 %v1911
        %v7188 = vunpack.c.l.b16 %v1912
        %v7189 = vunpack.c.h.b16 %v1912
        %v7190 = vunpack.c.l.b16 %v1913
        %v7191 = vunpack.c.h.b16 %v1913
        %v7192 = vunpack.c.l.b16 %v1914
        %v7193 = vunpack.c.h.b16 %v1914
        %v7194 = vunpack.c.l.b16 %v1915
        %v7195 = vunpack.c.h.b16 %v1915
        %v7196 = vunpack.c.l.b16 %v1916
        %v7197 = vunpack.c.h.b16 %v1916
        %v7198 = vunpack.c.l.b16 %v1917
        %v7199 = vunpack.c.h.b16 %v1917
        %v7200 = vunpack.c.l.b16 %v1918
        %v7201 = vunpack.c.h.b16 %v1918
        %v7202 = vunpack.c.l.b16 %v1919
        %v7203 = vunpack.c.h.b16 %v1919
        %v7204 = vunpack.c.l.b16 %v1920
        %v7205 = vunpack.c.h.b16 %v1920
        %v7206 = vunpack.c.l.b16 %v1921
        %v7207 = vunpack.c.h.b16 %v1921
        %v7208 = vunpack.c.l.b16 %v1922
        %v7209 = vunpack.c.h.b16 %v1922
        %v7210 = vunpack.c.l.b16 %v1923
        %v7211 = vunpack.c.h.b16 %v1923
        %v7212 = vunpack.c.l.b16 %v1924
        %v7213 = vunpack.c.h.b16 %v1924
        %v7214 = vunpack.c.l.b16 %v1925
        %v7215 = vunpack.c.h.b16 %v1925
        %v7216 = vunpack.c.l.b16 %v1926
        %v7217 = vunpack.c.h.b16 %v1926
        %v7218 = vunpack.c.l.b16 %v1927
        %v7219 = vunpack.c.h.b16 %v1927
        %v7220 = vunpack.c.l.b16 %v1928
        %v7221 = vunpack.c.h.b16 %v1928
        %v7222 = vunpack.c.l.b16 %v1929
        %v7223 = vunpack.c.h.b16 %v1929
        %v7224 = vunpack.c.l.b16 %v1930
        %v7225 = vunpack.c.h.b16 %v1930
        %v7226 = vunpack.c.l.b16 %v1931
        %v7227 = vunpack.c.h.b16 %v1931
        %v7228 = vunpack.c.l.b16 %v1932
        %v7229 = vunpack.c.h.b16 %v1932
        %v7230 = vunpack.c.l.b16 %v1933
        %v7231 = vunpack.c.h.b16 %v1933
        %v7232 = vunpack.c.l.b16 %v1934
        %v7233 = vunpack.c.h.b16 %v1934
        %v7234 = vunpack.c.l.b16 %v1935
        %v7235 = vunpack.c.h.b16 %v1935
        %v7236 = vunpack.c.l.b16 %v1936
        %v7237 = vunpack.c.h.b16 %v1936
        %v7238 = vunpack.c.l.b16 %v1937
        %v7239 = vunpack.c.h.b16 %v1937
        %v7240 = vunpack.c.l.b16 %v1938
        %v7241 = vunpack.c.h.b16 %v1938
        %v7242 = vunpack.c.l.b16 %v1939
        %v7243 = vunpack.c.h.b16 %v1939
        %v7244 = vunpack.c.l.b16 %v1940
        %v7245 = vunpack.c.h.b16 %v1940
        %v7246 = vunpack.c.l.b16 %v1941
        %v7247 = vunpack.c.h.b16 %v1941
        %v7248 = vunpack.c.l.b16 %v1942
        %v7249 = vunpack.c.h.b16 %v1942
        %v7250 = vunpack.c.l.b16 %v1943
        %v7251 = vunpack.c.h.b16 %v1943
        %v7252 = vunpack.c.l.b16 %v1944
        %v7253 = vunpack.c.h.b16 %v1944
        %v7254 = vunpack.c.l.b16 %v1945
        %v7255 = vunpack.c.h.b16 %v1945
        %v7256 = vunpack.c.l.b16 %v1946
        %v7257 = vunpack.c.h.b16 %v1946
        %v7258 = vunpack.c.l.b16 %v1947
        %v7259 = vunpack.c.h.b16 %v1947
        %v7260 = vunpack.c.l.b16 %v1948
        %v7261 = vunpack.c.h.b16 %v1948
        %v7262 = vunpack.c.l.b16 %v1949
        %v7263 = vunpack.c.h.b16 %v1949
        %v7264 = vunpack.c.l.b16 %v1950
        %v7265 = vunpack.c.h.b16 %v1950
        %v7266 = vunpack.c.l.b16 %v1951
        %v7267 = vunpack.c.h.b16 %v1951
        %v7268 = vunpack.c.l.b16 %v1952
        %v7269 = vunpack.c.h.b16 %v1952
        %v7270 = vunpack.c.l.b16 %v1953
        %v7271 = vunpack.c.h.b16 %v1953
        %v7272 = vunpack.c.l.b16 %v1954
        %v7273 = vunpack.c.h.b16 %v1954
        %v7274 = vunpack.c.l.b16 %v1955
        %v7275 = vunpack.c.h.b16 %v1955
        %v7276 = vunpack.c.l.b16 %v1956
        %v7277 = vunpack.c.h.b16 %v1956
        %v7278 = vunpack.c.l.b16 %v1957
        %v7279 = vunpack.c.h.b16 %v1957
        %v7280 = vunpack.c.l.b16 %v1958
        %v7281 = vunpack.c.h.b16 %v1958
        %v7282 = vunpack.c.l.b16 %v1959
        %v7283 = vunpack.c.h.b16 %v1959
        %v7284 = vunpack.c.l.b16 %v1960
        %v7285 = vunpack.c.h.b16 %v1960
        %v7286 = vunpack.c.l.b16 %v1961
        %v7287 = vunpack.c.h.b16 %v1961
        %v7288 = vunpack.c.l.b16 %v1962
        %v7289 = vunpack.c.h.b16 %v1962
        %v7290 = vunpack.c.l.b16 %v1963
        %v7291 = vunpack.c.h.b16 %v1963
        %v7292 = vunpack.c.l.b16 %v1964
        %v7293 = vunpack.c.h.b16 %v1964
        %v7294 = vunpack.c.l.b16 %v1965
        %v7295 = vunpack.c.h.b16 %v1965
        %v7296 = vunpack.c.l.b16 %v1966
        %v7297 = vunpack.c.h.b16 %v1966
        %v7298 = vunpack.c.l.b16 %v1967
        %v7299 = vunpack.c.h.b16 %v1967
        %v7300 = vunpack.c.l.b16 %v1968
        %v7301 = vunpack.c.h.b16 %v1968
        %v7302 = vunpack.c.l.b16 %v1969
        %v7303 = vunpack.c.h.b16 %v1969
        %v7304 = vunpack.c.l.b16 %v1970
        %v7305 = vunpack.c.h.b16 %v1970
        %v7306 = vunpack.c.l.b16 %v1971
        %v7307 = vunpack.c.h.b16 %v1971
        %v7308 = vunpack.c.l.b16 %v1972
        %v7309 = vunpack.c.h.b16 %v1972
        %v7310 = vunpack.c.l.b16 %v1973
        %v7311 = vunpack.c.h.b16 %v1973
        %v7312 = vunpack.c.l.b16 %v1974
        %v7313 = vunpack.c.h.b16 %v1974
        %v7314 = vunpack.c.l.b16 %v1975
        %v7315 = vunpack.c.h.b16 %v1975
        %v7316 = vunpack.c.l.b16 %v1976
        %v7317 = vunpack.c.h.b16 %v1976
        %v7318 = vunpack.c.l.b16 %v1977
        %v7319 = vunpack.c.h.b16 %v1977
        %v7320 = vunpack.c.l.b16 %v1978
        %v7321 = vunpack.c.h.b16 %v1978
        %v7322 = vunpack.c.l.b16 %v1979
        %v7323 = vunpack.c.h.b16 %v1979
        %v7324 = vunpack.c.l.b16 %v1980
        %v7325 = vunpack.c.h.b16 %v1980
        %v7326 = vunpack.c.l.b16 %v1981
        %v7327 = vunpack.c.h.b16 %v1981
        %v7328 = vunpack.c.l.b16 %v1982
        %v7329 = vunpack.c.h.b16 %v1982
        %v7330 = vunpack.c.l.b16 %v1983
        %v7331 = vunpack.c.h.b16 %v1983
        %v7332 = vunpack.c.l.b16 %v1984
        %v7333 = vunpack.c.h.b16 %v1984
        %v7334 = vunpack.c.l.b16 %v1985
        %v7335 = vunpack.c.h.b16 %v1985
        %v7336 = vunpack.c.l.b16 %v1986
        %v7337 = vunpack.c.h.b16 %v1986
        %v7338 = vunpack.c.l.b16 %v1987
        %v7339 = vunpack.c.h.b16 %v1987
        %v7340 = vunpack.c.l.b16 %v1988
        %v7341 = vunpack.c.h.b16 %v1988
        %v7342 = vunpack.c.l.b16 %v1989
        %v7343 = vunpack.c.h.b16 %v1989
        %v7344 = vunpack.c.l.b16 %v1990
        %v7345 = vunpack.c.h.b16 %v1990
        %v7346 = vunpack.c.l.b16 %v1991
        %v7347 = vunpack.c.h.b16 %v1991
        %v7348 = vunpack.c.l.b16 %v1992
        %v7349 = vunpack.c.h.b16 %v1992
        %v7350 = vunpack.c.l.b16 %v1993
        %v7351 = vunpack.c.h.b16 %v1993
        %v7352 = vunpack.c.l.b16 %v1994
        %v7353 = vunpack.c.h.b16 %v1994
        %v7354 = vunpack.c.l.b16 %v1995
        %v7355 = vunpack.c.h.b16 %v1995
        %v7356 = vunpack.c.l.b16 %v1996
        %v7357 = vunpack.c.h.b16 %v1996
        %v7358 = vunpack.c.l.b16 %v1997
        %v7359 = vunpack.c.h.b16 %v1997
        %v7360 = vunpack.c.l.b16 %v1998
        %v7361 = vunpack.c.h.b16 %v1998
        %v7362 = vunpack.c.l.b16 %v1999
        %v7363 = vunpack.c.h.b16 %v1999
        %v7364 = vunpack.c.l.b16 %v2000
        %v7365 = vunpack.c.h.b16 %v2000
        %v7366 = vunpack.c.l.b16 %v2001
        %v7367 = vunpack.c.h.b16 %v2001
        %v7368 = vunpack.c.l.b16 %v2002
        %v7369 = vunpack.c.h.b16 %v2002
        %v7370 = vunpack.c.l.b16 %v2003
        %v7371 = vunpack.c.h.b16 %v2003
        %v7372 = vunpack.c.l.b16 %v2004
        %v7373 = vunpack.c.h.b16 %v2004
        %v7374 = vunpack.c.l.b16 %v2005
        %v7375 = vunpack.c.h.b16 %v2005
        %v7376 = vunpack.c.l.b16 %v2006
        %v7377 = vunpack.c.h.b16 %v2006
        %v7378 = vunpack.c.l.b16 %v2007
        %v7379 = vunpack.c.h.b16 %v2007
        %v7380 = vunpack.c.l.b16 %v2008
        %v7381 = vunpack.c.h.b16 %v2008
        %v7382 = vunpack.c.l.b16 %v2009
        %v7383 = vunpack.c.h.b16 %v2009
        %v7384 = vunpack.c.l.b16 %v2010
        %v7385 = vunpack.c.h.b16 %v2010
        %v7386 = vunpack.c.l.b16 %v2011
        %v7387 = vunpack.c.h.b16 %v2011
        %v7388 = vunpack.c.l.b16 %v2012
        %v7389 = vunpack.c.h.b16 %v2012
        %v7390 = vunpack.c.l.b16 %v2013
        %v7391 = vunpack.c.h.b16 %v2013
        %v7392 = vunpack.c.l.b16 %v2014
        %v7393 = vunpack.c.h.b16 %v2014
        %v7394 = vunpack.c.l.b16 %v2015
        %v7395 = vunpack.c.h.b16 %v2015
        %v7396 = vunpack.c.l.b16 %v2016
        %v7397 = vunpack.c.h.b16 %v2016
        %v7398 = vunpack.c.l.b16 %v2017
        %v7399 = vunpack.c.h.b16 %v2017
        %v7400 = vunpack.c.l.b16 %v2018
        %v7401 = vunpack.c.h.b16 %v2018
        %v7402 = vunpack.c.l.b16 %v2019
        %v7403 = vunpack.c.h.b16 %v2019
        %v7404 = vunpack.c.l.b16 %v2020
        %v7405 = vunpack.c.h.b16 %v2020
        %v7406 = vunpack.c.l.b16 %v2021
        %v7407 = vunpack.c.h.b16 %v2021
        %v7408 = vunpack.c.l.b16 %v2022
        %v7409 = vunpack.c.h.b16 %v2022
        %v7410 = vunpack.c.l.b16 %v2023
        %v7411 = vunpack.c.h.b16 %v2023
        %v7412 = vunpack.c.l.b16 %v2024
        %v7413 = vunpack.c.h.b16 %v2024
        %v7414 = vunpack.c.l.b16 %v2025
        %v7415 = vunpack.c.h.b16 %v2025
        %v7416 = vunpack.c.l.b16 %v2026
        %v7417 = vunpack.c.h.b16 %v2026
        %v7418 = vunpack.c.l.b16 %v2027
        %v7419 = vunpack.c.h.b16 %v2027
        %v7420 = vunpack.c.l.b16 %v2028
        %v7421 = vunpack.c.h.b16 %v2028
        %v7422 = vunpack.c.l.b16 %v2029
        %v7423 = vunpack.c.h.b16 %v2029
        %v7424 = vunpack.c.l.b16 %v2030
        %v7425 = vunpack.c.h.b16 %v2030
        %v7426 = vunpack.c.l.b16 %v2031
        %v7427 = vunpack.c.h.b16 %v2031
        %v7428 = vunpack.c.l.b16 %v2032
        %v7429 = vunpack.c.h.b16 %v2032
        %v7430 = vunpack.c.l.b16 %v2033
        %v7431 = vunpack.c.h.b16 %v2033
        %v7432 = vunpack.c.l.b16 %v2034
        %v7433 = vunpack.c.h.b16 %v2034
        %v7434 = vunpack.c.l.b16 %v2035
        %v7435 = vunpack.c.h.b16 %v2035
        %v7436 = vunpack.c.l.b16 %v2036
        %v7437 = vunpack.c.h.b16 %v2036
        %v7438 = vunpack.c.l.b16 %v2037
        %v7439 = vunpack.c.h.b16 %v2037
        %v7440 = vunpack.c.l.b16 %v2038
        %v7441 = vunpack.c.h.b16 %v2038
        %v7442 = vunpack.c.l.b16 %v2039
        %v7443 = vunpack.c.h.b16 %v2039
        %v7444 = vunpack.c.l.b16 %v2040
        %v7445 = vunpack.c.h.b16 %v2040
        %v7446 = vunpack.c.l.b16 %v2041
        %v7447 = vunpack.c.h.b16 %v2041
        %v7448 = vunpack.c.l.b16 %v2042
        %v7449 = vunpack.c.h.b16 %v2042
        %v7450 = vunpack.c.l.b16 %v2043
        %v7451 = vunpack.c.h.b16 %v2043
        %v7452 = vunpack.c.l.b16 %v2044
        %v7453 = vunpack.c.h.b16 %v2044
        %v7454 = vunpack.c.l.b16 %v2045
        %v7455 = vunpack.c.h.b16 %v2045
        %v7456 = vunpack.c.l.b16 %v2046
        %v7457 = vunpack.c.h.b16 %v2046
        %v7458 = vunpack.c.l.b16 %v2047
        %v7459 = vunpack.c.h.b16 %v2047
        %v7460 = vunpack.c.l.b16 %v2048
        %v7461 = vunpack.c.h.b16 %v2048
        %v7462 = vunpack.c.l.b16 %v2049
        %v7463 = vunpack.c.h.b16 %v2049
        %v7464 = vunpack.c.l.b16 %v2050
        %v7465 = vunpack.c.h.b16 %v2050
        %v7466 = vunpack.c.l.b16 %v2051
        %v7467 = vunpack.c.h.b16 %v2051
        %v7468 = vunpack.c.l.b16 %v2052
        %v7469 = vunpack.c.h.b16 %v2052
        %v7470 = vunpack.c.l.b16 %v2053
        %v7471 = vunpack.c.h.b16 %v2053
        %v7472 = vunpack.c.l.b16 %v2054
        %v7473 = vunpack.c.h.b16 %v2054
        %v7474 = vunpack.c.l.b16 %v2055
        %v7475 = vunpack.c.h.b16 %v2055
        %v7476 = vunpack.c.l.b16 %v2056
        %v7477 = vunpack.c.h.b16 %v2056
        %v7478 = vunpack.c.l.b16 %v2057
        %v7479 = vunpack.c.h.b16 %v2057
        %v7480 = vunpack.c.l.b16 %v2058
        %v7481 = vunpack.c.h.b16 %v2058
        %v7482 = vunpack.c.l.b16 %v2059
        %v7483 = vunpack.c.h.b16 %v2059
        %v7484 = vunpack.c.l.b16 %v2060
        %v7485 = vunpack.c.h.b16 %v2060
        %v7486 = vpack.c.b16 %v3918, %v3902
        %v7487 = vpack.c.b16 %v3919, %v3903
        %v7488 = vpack.c.b16 %v3920, %v3904
        %v7489 = vpack.c.b16 %v3921, %v3905
        %v7490 = vpack.c.b16 %v3922, %v3906
        %v7491 = vpack.c.b16 %v3923, %v3907
        %v7492 = vpack.c.b16 %v3924, %v3908
        %v7493 = vpack.c.b16 %v3925, %v3909
        %v7494 = vpack.c.b16 %v3926, %v3910
        %v7495 = vpack.c.b16 %v3927, %v3911
        %v7496 = vpack.c.b16 %v3928, %v3912
        %v7497 = vpack.c.b16 %v3929, %v3913
        %v7498 = vpack.c.b16 %v3930, %v3914
        %v7499 = vpack.c.b16 %v3931, %v3915
        %v7500 = vpack.c.b16 %v3932, %v3916
        %v7501 = vpack.c.b16 %v3933, %v3917
        %v7502 = vpack.c.b16 %v3950, %v3934
        %v7503 = vpack.c.b16 %v3951, %v3935
        %v7504 = vpack.c.b16 %v3952, %v3936
        %v7505 = vpack.c.b16 %v3953, %v3937
        %v7506 = vpack.c.b16 %v3954, %v3938
        %v7507 = vpack.c.b16 %v3955, %v3939
        %v7508 = vpack.c.b16 %v3956, %v3940
        %v7509 = vpack.c.b16 %v3957, %v3941
        %v7510 = vpack.c.b16 %v3958, %v3942
        %v7511 = vpack.c.b16 %v3959, %v3943
        %v7512 = vpack.c.b16 %v3960, %v3944
        %v7513 = vpack.c.b16 %v3961, %v3945
        %v7514 = vpack.c.b16 %v3962, %v3946
        %v7515 = vpack.c.b16 %v3963, %v3947
        %v7516 = vpack.c.b16 %v3964, %v3948
        %v7517 = vpack.c.b16 %v3965, %v3949
        %v7518 = vpack.c.b16 %v3982, %v3966
        %v7519 = vpack.c.b16 %v3983, %v3967
        %v7520 = vpack.c.b16 %v3984, %v3968
        %v7521 = vpack.c.b16 %v3985, %v3969
        %v7522 = vpack.c.b16 %v3986, %v3970
        %v7523 = vpack.c.b16 %v3987, %v3971
        %v7524 = vpack.c.b16 %v3988, %v3972
        %v7525 = vpack.c.b16 %v3989, %v3973
        %v7526 = vpack.c.b16 %v3990, %v3974
        %v7527 = vpack.c.b16 %v3991, %v3975
        %v7528 = vpack.c.b16 %v3992, %v3976
        %v7529 = vpack.c.b16 %v3993, %v3977
        %v7530 = vpack.c.b16 %v3994, %v3978
        %v7531 = vpack.c.b16 %v3995, %v3979
        %v7532 = vpack.c.b16 %v3996, %v3980
        %v7533 = vpack.c.b16 %v3997, %v3981
        %v7534 = vpack.c.b16 %v4014, %v3998
        %v7535 = vpack.c.b16 %v4015, %v3999
        %v7536 = vpack.c.b16 %v4016, %v4000
        %v7537 = vpack.c.b16 %v4017, %v4001
        %v7538 = vpack.c.b16 %v4018, %v4002
        %v7539 = vpack.c.b16 %v4019, %v4003
        %v7540 = vpack.c.b16 %v4020, %v4004
        %v7541 = vpack.c.b16 %v4021, %v4005
        %v7542 = vpack.c.b16 %v4022, %v4006
        %v7543 = vpack.c.b16 %v4023, %v4007
        %v7544 = vpack.c.b16 %v4024, %v4008
        %v7545 = vpack.c.b16 %v4025, %v4009
        %v7546 = vpack.c.b16 %v4026, %v4010
        %v7547 = vpack.c.b16 %v4027, %v4011
        %v7548 = vpack.c.b16 %v4028, %v4012
        %v7549 = vpack.c.b16 %v4029, %v4013
        %v7550 = vpack.c.b16 %v4046, %v4030
        %v7551 = vpack.c.b16 %v4047, %v4031
        %v7552 = vpack.c.b16 %v4048, %v4032
        %v7553 = vpack.c.b16 %v4049, %v4033
        %v7554 = vpack.c.b16 %v4050, %v4034
        %v7555 = vpack.c.b16 %v4051, %v4035
        %v7556 = vpack.c.b16 %v4052, %v4036
        %v7557 = vpack.c.b16 %v4053, %v4037
        %v7558 = vpack.c.b16 %v4054, %v4038
        %v7559 = vpack.c.b16 %v4055, %v4039
        %v7560 = vpack.c.b16 %v4056, %v4040
        %v7561 = vpack.c.b16 %v4057, %v4041
        %v7562 = vpack.c.b16 %v4058, %v4042
        %v7563 = vpack.c.b16 %v4059, %v4043
        %v7564 = vpack.c.b16 %v4060, %v4044
        %v7565 = vpack.c.b16 %v4061, %v4045
        %v7566 = vpack.c.b16 %v4078, %v4062
        %v7567 = vpack.c.b16 %v4079, %v4063
        %v7568 = vpack.c.b16 %v4080, %v4064
        %v7569 = vpack.c.b16 %v4081, %v4065
        %v7570 = vpack.c.b16 %v4082, %v4066
        %v7571 = vpack.c.b16 %v4083, %v4067
        %v7572 = vpack.c.b16 %v4084, %v4068
        %v7573 = vpack.c.b16 %v4085, %v4069
        %v7574 = vpack.c.b16 %v4086, %v4070
        %v7575 = vpack.c.b16 %v4087, %v4071
        %v7576 = vpack.c.b16 %v4088, %v4072
        %v7577 = vpack.c.b16 %v4089, %v4073
        %v7578 = vpack.c.b16 %v4090, %v4074
        %v7579 = vpack.c.b16 %v4091, %v4075
        %v7580 = vpack.c.b16 %v4092, %v4076
        %v7581 = vpack.c.b16 %v4093, %v4077
        %v7582 = vpack.c.b16 %v4110, %v4094
        %v7583 = vpack.c.b16 %v4111, %v4095
        %v7584 = vpack.c.b16 %v4112, %v4096
        %v7585 = vpack.c.b16 %v4113, %v4097
        %v7586 = vpack.c.b16 %v4114, %v4098
        %v7587 = vpack.c.b16 %v4115, %v4099
        %v7588 = vpack.c.b16 %v4116, %v4100
        %v7589 = vpack.c.b16 %v4117, %v4101
        %v7590 = vpack.c.b16 %v4118, %v4102
        %v7591 = vpack.c.b16 %v4119, %v4103
        %v7592 = vpack.c.b16 %v4120, %v4104
        %v7593 = vpack.c.b16 %v4121, %v4105
        %v7594 = vpack.c.b16 %v4122, %v4106
        %v7595 = vpack.c.b16 %v4123, %v4107
        %v7596 = vpack.c.b16 %v4124, %v4108
        %v7597 = vpack.c.b16 %v4125, %v4109
        %v7598 = vpack.c.b16 %v4142, %v4126
        %v7599 = vpack.c.b16 %v4143, %v4127
        %v7600 = vpack.c.b16 %v4144, %v4128
        %v7601 = vpack.c.b16 %v4145, %v4129
        %v7602 = vpack.c.b16 %v4146, %v4130
        %v7603 = vpack.c.b16 %v4147, %v4131
        %v7604 = vpack.c.b16 %v4148, %v4132
        %v7605 = vpack.c.b16 %v4149, %v4133
        %v7606 = vpack.c.b16 %v4150, %v4134
        %v7607 = vpack.c.b16 %v4151, %v4135
        %v7608 = vpack.c.b16 %v4152, %v4136
        %v7609 = vpack.c.b16 %v4153, %v4137
        %v7610 = vpack.c.b16 %v4154, %v4138
        %v7611 = vpack.c.b16 %v4155, %v4139
        %v7612 = vpack.c.b16 %v4156, %v4140
        %v7613 = vpack.c.b16 %v4157, %v4141
        %v7614 = vpack.c.b16 %v4174, %v4158
        %v7615 = vpack.c.b16 %v4175, %v4159
        %v7616 = vpack.c.b16 %v4176, %v4160
        %v7617 = vpack.c.b16 %v4177, %v4161
        %v7618 = vpack.c.b16 %v4178, %v4162
        %v7619 = vpack.c.b16 %v4179, %v4163
        %v7620 = vpack.c.b16 %v4180, %v4164
        %v7621 = vpack.c.b16 %v4181, %v4165
        %v7622 = vpack.c.b16 %v4182, %v4166
        %v7623 = vpack.c.b16 %v4183, %v4167
        %v7624 = vpack.c.b16 %v4184, %v4168
        %v7625 = vpack.c.b16 %v4185, %v4169
        %v7626 = vpack.c.b16 %v4186, %v4170
        %v7627 = vpack.c.b16 %v4187, %v4171
        %v7628 = vpack.c.b16 %v4188, %v4172
        %v7629 = vpack.c.b16 %v4189, %v4173
        %v7630 = vpack.c.b16 %v4206, %v4190
        %v7631 = vpack.c.b16 %v4207, %v4191
        %v7632 = vpack.c.b16 %v4208, %v4192
        %v7633 = vpack.c.b16 %v4209, %v4193
        %v7634 = vpack.c.b16 %v4210, %v4194
        %v7635 = vpack.c.b16 %v4211, %v4195
        %v7636 = vpack.c.b16 %v4212, %v4196
        %v7637 = vpack.c.b16 %v4213, %v4197
        %v7638 = vpack.c.b16 %v4214, %v4198
        %v7639 = vpack.c.b16 %v4215, %v4199
        %v7640 = vpack.c.b16 %v4216, %v4200
        %v7641 = vpack.c.b16 %v4217, %v4201
        %v7642 = vpack.c.b16 %v4218, %v4202
        %v7643 = vpack.c.b16 %v4219, %v4203
        %v7644 = vpack.c.b16 %v4220, %v4204
        %v7645 = vpack.c.b16 %v4221, %v4205
        %v7646 = vpack.c.b16 %v4238, %v4222
        %v7647 = vpack.c.b16 %v4239, %v4223
        %v7648 = vpack.c.b16 %v4240, %v4224
        %v7649 = vpack.c.b16 %v4241, %v4225
        %v7650 = vpack.c.b16 %v4242, %v4226
        %v7651 = vpack.c.b16 %v4243, %v4227
        %v7652 = vpack.c.b16 %v4244, %v4228
        %v7653 = vpack.c.b16 %v4245, %v4229
        %v7654 = vpack.c.b16 %v4246, %v4230
        %v7655 = vpack.c.b16 %v4247, %v4231
        %v7656 = vpack.c.b16 %v4248, %v4232
        %v7657 = vpack.c.b16 %v4249, %v4233
        %v7658 = vpack.c.b16 %v4250, %v4234
        %v7659 = vpack.c.b16 %v4251, %v4235
        %v7660 = vpack.c.b16 %v4252, %v4236
        %v7661 = vpack.c.b16 %v4253, %v4237
        %v7662 = vpack.c.b16 %v4270, %v4254
        %v7663 = vpack.c.b16 %v4271, %v4255
        %v7664 = vpack.c.b16 %v4272, %v4256
        %v7665 = vpack.c.b16 %v4273, %v4257
        %v7666 = vpack.c.b16 %v4274, %v4258
        %v7667 = vpack.c.b16 %v4275, %v4259
        %v7668 = vpack.c.b16 %v4276, %v4260
        %v7669 = vpack.c.b16 %v4277, %v4261
        %v7670 = vpack.c.b16 %v4278, %v4262
        %v7671 = vpack.c.b16 %v4279, %v4263
        %v7672 = vpack.c.b16 %v4280, %v4264
        %v7673 = vpack.c.b16 %v4281, %v4265
        %v7674 = vpack.c.b16 %v4282, %v4266
        %v7675 = vpack.c.b16 %v4283, %v4267
        %v7676 = vpack.c.b16 %v4284, %v4268
        %v7677 = vpack.c.b16 %v4285, %v4269
        %v7678 = vpack.c.b16 %v4302, %v4286
        %v7679 = vpack.c.b16 %v4303, %v4287
        %v7680 = vpack.c.b16 %v4304, %v4288
        %v7681 = vpack.c.b16 %v4305, %v4289
        %v7682 = vpack.c.b16 %v4306, %v4290
        %v7683 = vpack.c.b16 %v4307, %v4291
        %v7684 = vpack.c.b16 %v4308, %v4292
        %v7685 = vpack.c.b16 %v4309, %v4293
        %v7686 = vpack.c.b16 %v4310, %v4294
        %v7687 = vpack.c.b16 %v4311, %v4295
        %v7688 = vpack.c.b16 %v4312, %v4296
        %v7689 = vpack.c.b16 %v4313, %v4297
        %v7690 = vpack.c.b16 %v4314, %v4298
        %v7691 = vpack.c.b16 %v4315, %v4299
        %v7692 = vpack.c.b16 %v4316, %v4300
        %v7693 = vpack.c.b16 %v4317, %v4301
        %v7694 = vpack.c.b16 %v4334, %v4318
        %v7695 = vpack.c.b16 %v4335, %v4319
        %v7696 = vpack.c.b16 %v4336, %v4320
        %v7697 = vpack.c.b16 %v4337, %v4321
        %v7698 = vpack.c.b16 %v4338, %v4322
        %v7699 = vpack.c.b16 %v4339, %v4323
        %v7700 = vpack.c.b16 %v4340, %v4324
        %v7701 = vpack.c.b16 %v4341, %v4325
        %v7702 = vpack.c.b16 %v4342, %v4326
        %v7703 = vpack.c.b16 %v4343, %v4327
        %v7704 = vpack.c.b16 %v4344, %v4328
        %v7705 = vpack.c.b16 %v4345, %v4329
        %v7706 = vpack.c.b16 %v4346, %v4330
        %v7707 = vpack.c.b16 %v4347, %v4331
        %v7708 = vpack.c.b16 %v4348, %v4332
        %v7709 = vpack.c.b16 %v4349, %v4333
        %v7710 = vpack.c.b16 %v4366, %v4350
        %v7711 = vpack.c.b16 %v4367, %v4351
        %v7712 = vpack.c.b16 %v4368, %v4352
        %v7713 = vpack.c.b16 %v4369, %v4353
        %v7714 = vpack.c.b16 %v4370, %v4354
        %v7715 = vpack.c.b16 %v4371, %v4355
        %v7716 = vpack.c.b16 %v4372, %v4356
        %v7717 = vpack.c.b16 %v4373, %v4357
        %v7718 = vpack.c.b16 %v4374, %v4358
        %v7719 = vpack.c.b16 %v4375, %v4359
        %v7720 = vpack.c.b16 %v4376, %v4360
        %v7721 = vpack.c.b16 %v4377, %v4361
        %v7722 = vpack.c.b16 %v4378, %v4362
        %v7723 = vpack.c.b16 %v4379, %v4363
        %v7724 = vpack.c.b16 %v4380, %v4364
        %v7725 = vpack.c.b16 %v4381, %v4365
        %v7726 = vpack.c.b16 %v4398, %v4382
        %v7727 = vpack.c.b16 %v4399, %v4383
        %v7728 = vpack.c.b16 %v4400, %v4384
        %v7729 = vpack.c.b16 %v4401, %v4385
        %v7730 = vpack.c.b16 %v4402, %v4386
        %v7731 = vpack.c.b16 %v4403, %v4387
        %v7732 = vpack.c.b16 %v4404, %v4388
        %v7733 = vpack.c.b16 %v4405, %v4389
        %v7734 = vpack.c.b16 %v4406, %v4390
        %v7735 = vpack.c.b16 %v4407, %v4391
        %v7736 = vpack.c.b16 %v4408, %v4392
        %v7737 = vpack.c.b16 %v4409, %v4393
        %v7738 = vpack.c.b16 %v4410, %v4394
        %v7739 = vpack.c.b16 %v4411, %v4395
        %v7740 = vpack.c.b16 %v4412, %v4396
        %v7741 = vpack.c.b16 %v4413, %v4397
        %v7742 = vpack.c.b16 %v4430, %v4414
        %v7743 = vpack.c.b16 %v4431, %v4415
        %v7744 = vpack.c.b16 %v4432, %v4416
        %v7745 = vpack.c.b16 %v4433, %v4417
        %v7746 = vpack.c.b16 %v4434, %v4418
        %v7747 = vpack.c.b16 %v4435, %v4419
        %v7748 = vpack.c.b16 %v4436, %v4420
        %v7749 = vpack.c.b16 %v4437, %v4421
        %v7750 = vpack.c.b16 %v4438, %v4422
        %v7751 = vpack.c.b16 %v4439, %v4423
        %v7752 = vpack.c.b16 %v4440, %v4424
        %v7753 = vpack.c.b16 %v4441, %v4425
        %v7754 = vpack.c.b16 %v4442, %v4426
        %v7755 = vpack.c.b16 %v4443, %v4427
        %v7756 = vpack.c.b16 %v4444, %v4428
        %v7757 = vpack.c.b16 %v4445, %v4429
        %v7758 = vpack.c.b16 %v4462, %v4446
        %v7759 = vpack.c.b16 %v4463, %v4447
        %v7760 = vpack.c.b16 %v4464, %v4448
        %v7761 = vpack.c.b16 %v4465, %v4449
        %v7762 = vpack.c.b16 %v4466, %v4450
        %v7763 = vpack.c.b16 %v4467, %v4451
        %v7764 = vpack.c.b16 %v4468, %v4452
        %v7765 = vpack.c.b16 %v4469, %v4453
        %v7766 = vpack.c.b16 %v4470, %v4454
        %v7767 = vpack.c.b16 %v4471, %v4455
        %v7768 = vpack.c.b16 %v4472, %v4456
        %v7769 = vpack.c.b16 %v4473, %v4457
        %v7770 = vpack.c.b16 %v4474, %v4458
        %v7771 = vpack.c.b16 %v4475, %v4459
        %v7772 = vpack.c.b16 %v4476, %v4460
        %v7773 = vpack.c.b16 %v4477, %v4461
        %v7774 = vpack.c.b16 %v4494, %v4478
        %v7775 = vpack.c.b16 %v4495, %v4479
        %v7776 = vpack.c.b16 %v4496, %v4480
        %v7777 = vpack.c.b16 %v4497, %v4481
        %v7778 = vpack.c.b16 %v4498, %v4482
        %v7779 = vpack.c.b16 %v4499, %v4483
        %v7780 = vpack.c.b16 %v4500, %v4484
        %v7781 = vpack.c.b16 %v4501, %v4485
        %v7782 = vpack.c.b16 %v4502, %v4486
        %v7783 = vpack.c.b16 %v4503, %v4487
        %v7784 = vpack.c.b16 %v4504, %v4488
        %v7785 = vpack.c.b16 %v4505, %v4489
        %v7786 = vpack.c.b16 %v4506, %v4490
        %v7787 = vpack.c.b16 %v4507, %v4491
        %v7788 = vpack.c.b16 %v4508, %v4492
        %v7789 = vpack.c.b16 %v4509, %v4493
        %v7790 = vpack.c.b16 %v4526, %v4510
        %v7791 = vpack.c.b16 %v4527, %v4511
        %v7792 = vpack.c.b16 %v4528, %v4512
        %v7793 = vpack.c.b16 %v4529, %v4513
        %v7794 = vpack.c.b16 %v4530, %v4514
        %v7795 = vpack.c.b16 %v4531, %v4515
        %v7796 = vpack.c.b16 %v4532, %v4516
        %v7797 = vpack.c.b16 %v4533, %v4517
        %v7798 = vpack.c.b16 %v4534, %v4518
        %v7799 = vpack.c.b16 %v4535, %v4519
        %v7800 = vpack.c.b16 %v4536, %v4520
        %v7801 = vpack.c.b16 %v4537, %v4521
        %v7802 = vpack.c.b16 %v4538, %v4522
        %v7803 = vpack.c.b16 %v4539, %v4523
        %v7804 = vpack.c.b16 %v4540, %v4524
        %v7805 = vpack.c.b16 %v4541, %v4525
        %v7806 = vpack.c.b16 %v4558, %v4542
        %v7807 = vpack.c.b16 %v4559, %v4543
        %v7808 = vpack.c.b16 %v4560, %v4544
        %v7809 = vpack.c.b16 %v4561, %v4545
        %v7810 = vpack.c.b16 %v4562, %v4546
        %v7811 = vpack.c.b16 %v4563, %v4547
        %v7812 = vpack.c.b16 %v4564, %v4548
        %v7813 = vpack.c.b16 %v4565, %v4549
        %v7814 = vpack.c.b16 %v4566, %v4550
        %v7815 = vpack.c.b16 %v4567, %v4551
        %v7816 = vpack.c.b16 %v4568, %v4552
        %v7817 = vpack.c.b16 %v4569, %v4553
        %v7818 = vpack.c.b16 %v4570, %v4554
        %v7819 = vpack.c.b16 %v4571, %v4555
        %v7820 = vpack.c.b16 %v4572, %v4556
        %v7821 = vpack.c.b16 %v4573, %v4557
        %v7822 = vpack.c.b16 %v4590, %v4574
        %v7823 = vpack.c.b16 %v4591, %v4575
        %v7824 = vpack.c.b16 %v4592, %v4576
        %v7825 = vpack.c.b16 %v4593, %v4577
        %v7826 = vpack.c.b16 %v4594, %v4578
        %v7827 = vpack.c.b16 %v4595, %v4579
        %v7828 = vpack.c.b16 %v4596, %v4580
        %v7829 = vpack.c.b16 %v4597, %v4581
        %v7830 = vpack.c.b16 %v4598, %v4582
        %v7831 = vpack.c.b16 %v4599, %v4583
        %v7832 = vpack.c.b16 %v4600, %v4584
        %v7833 = vpack.c.b16 %v4601, %v4585
        %v7834 = vpack.c.b16 %v4602, %v4586
        %v7835 = vpack.c.b16 %v4603, %v4587
        %v7836 = vpack.c.b16 %v4604, %v4588
        %v7837 = vpack.c.b16 %v4605, %v4589
        %v7838 = vpack.c.b16 %v4622, %v4606
        %v7839 = vpack.c.b16 %v4623, %v4607
        %v7840 = vpack.c.b16 %v4624, %v4608
        %v7841 = vpack.c.b16 %v4625, %v4609
        %v7842 = vpack.c.b16 %v4626, %v4610
        %v7843 = vpack.c.b16 %v4627, %v4611
        %v7844 = vpack.c.b16 %v4628, %v4612
        %v7845 = vpack.c.b16 %v4629, %v4613
        %v7846 = vpack.c.b16 %v4630, %v4614
        %v7847 = vpack.c.b16 %v4631, %v4615
        %v7848 = vpack.c.b16 %v4632, %v4616
        %v7849 = vpack.c.b16 %v4633, %v4617
        %v7850 = vpack.c.b16 %v4634, %v4618
        %v7851 = vpack.c.b16 %v4635, %v4619
        %v7852 = vpack.c.b16 %v4636, %v4620
        %v7853 = vpack.c.b16 %v4637, %v4621
        %v7854 = vpack.c.b16 %v4654, %v4638
        %v7855 = vpack.c.b16 %v4655, %v4639
        %v7856 = vpack.c.b16 %v4656, %v4640
        %v7857 = vpack.c.b16 %v4657, %v4641
        %v7858 = vpack.c.b16 %v4658, %v4642
        %v7859 = vpack.c.b16 %v4659, %v4643
        %v7860 = vpack.c.b16 %v4660, %v4644
        %v7861 = vpack.c.b16 %v4661, %v4645
        %v7862 = vpack.c.b16 %v4662, %v4646
        %v7863 = vpack.c.b16 %v4663, %v4647
        %v7864 = vpack.c.b16 %v4664, %v4648
        %v7865 = vpack.c.b16 %v4665, %v4649
        %v7866 = vpack.c.b16 %v4666, %v4650
        %v7867 = vpack.c.b16 %v4667, %v4651
        %v7868 = vpack.c.b16 %v4668, %v4652
        %v7869 = vpack.c.b16 %v4669, %v4653
        %v7870 = vpack.c.b16 %v4686, %v4670
        %v7871 = vpack.c.b16 %v4687, %v4671
        %v7872 = vpack.c.b16 %v4688, %v4672
        %v7873 = vpack.c.b16 %v4689, %v4673
        %v7874 = vpack.c.b16 %v4690, %v4674
        %v7875 = vpack.c.b16 %v4691, %v4675
        %v7876 = vpack.c.b16 %v4692, %v4676
        %v7877 = vpack.c.b16 %v4693, %v4677
        %v7878 = vpack.c.b16 %v4694, %v4678
        %v7879 = vpack.c.b16 %v4695, %v4679
        %v7880 = vpack.c.b16 %v4696, %v4680
        %v7881 = vpack.c.b16 %v4697, %v4681
        %v7882 = vpack.c.b16 %v4698, %v4682
        %v7883 = vpack.c.b16 %v4699, %v4683
        %v7884 = vpack.c.b16 %v4700, %v4684
        %v7885 = vpack.c.b16 %v4701, %v4685
        %v7886 = vpack.c.b16 %v4718, %v4702
        %v7887 = vpack.c.b16 %v4719, %v4703
        %v7888 = vpack.c.b16 %v4720, %v4704
        %v7889 = vpack.c.b16 %v4721, %v4705
        %v7890 = vpack.c.b16 %v4722, %v4706
        %v7891 = vpack.c.b16 %v4723, %v4707
        %v7892 = vpack.c.b16 %v4724, %v4708
        %v7893 = vpack.c.b16 %v4725, %v4709
        %v7894 = vpack.c.b16 %v4726, %v4710
        %v7895 = vpack.c.b16 %v4727, %v4711
        %v7896 = vpack.c.b16 %v4728, %v4712
        %v7897 = vpack.c.b16 %v4729, %v4713
        %v7898 = vpack.c.b16 %v4730, %v4714
        %v7899 = vpack.c.b16 %v4731, %v4715
        %v7900 = vpack.c.b16 %v4732, %v4716
        %v7901 = vpack.c.b16 %v4733, %v4717
        %v7902 = vpack.c.b16 %v4750, %v4734
        %v7903 = vpack.c.b16 %v4751, %v4735
        %v7904 = vpack.c.b16 %v4752, %v4736
        %v7905 = vpack.c.b16 %v4753, %v4737
        %v7906 = vpack.c.b16 %v4754, %v4738
        %v7907 = vpack.c.b16 %v4755, %v4739
        %v7908 = vpack.c.b16 %v4756, %v4740
        %v7909 = vpack.c.b16 %v4757, %v4741
        %v7910 = vpack.c.b16 %v4758, %v4742
        %v7911 = vpack.c.b16 %v4759, %v4743
        %v7912 = vpack.c.b16 %v4760, %v4744
        %v7913 = vpack.c.b16 %v4761, %v4745
        %v7914 = vpack.c.b16 %v4762, %v4746
        %v7915 = vpack.c.b16 %v4763, %v4747
        %v7916 = vpack.c.b16 %v4764, %v4748
        %v7917 = vpack.c.b16 %v4765, %v4749
        %v7918 = vpack.c.b16 %v4782, %v4766
        %v7919 = vpack.c.b16 %v4783, %v4767
        %v7920 = vpack.c.b16 %v4784, %v4768
        %v7921 = vpack.c.b16 %v4785, %v4769
        %v7922 = vpack.c.b16 %v4786, %v4770
        %v7923 = vpack.c.b16 %v4787, %v4771
        %v7924 = vpack.c.b16 %v4788, %v4772
        %v7925 = vpack.c.b16 %v4789, %v4773
        %v7926 = vpack.c.b16 %v4790, %v4774
        %v7927 = vpack.c.b16 %v4791, %v4775
        %v7928 = vpack.c.b16 %v4792, %v4776
        %v7929 = vpack.c.b16 %v4793, %v4777
        %v7930 = vpack.c.b16 %v4794, %v4778
        %v7931 = vpack.c.b16 %v4795, %v4779
        %v7932 = vpack.c.b16 %v4796, %v4780
        %v7933 = vpack.c.b16 %v4797, %v4781
        %v7934 = vpack.c.b16 %v4814, %v4798
        %v7935 = vpack.c.b16 %v4815, %v4799
        %v7936 = vpack.c.b16 %v4816, %v4800
        %v7937 = vpack.c.b16 %v4817, %v4801
        %v7938 = vpack.c.b16 %v4818, %v4802
        %v7939 = vpack.c.b16 %v4819, %v4803
        %v7940 = vpack.c.b16 %v4820, %v4804
        %v7941 = vpack.c.b16 %v4821, %v4805
        %v7942 = vpack.c.b16 %v4822, %v4806
        %v7943 = vpack.c.b16 %v4823, %v4807
        %v7944 = vpack.c.b16 %v4824, %v4808
        %v7945 = vpack.c.b16 %v4825, %v4809
        %v7946 = vpack.c.b16 %v4826, %v4810
        %v7947 = vpack.c.b16 %v4827, %v4811
        %v7948 = vpack.c.b16 %v4828, %v4812
        %v7949 = vpack.c.b16 %v4829, %v4813
        %v7950 = vpack.c.b16 %v4846, %v4830
        %v7951 = vpack.c.b16 %v4847, %v4831
        %v7952 = vpack.c.b16 %v4848, %v4832
        %v7953 = vpack.c.b16 %v4849, %v4833
        %v7954 = vpack.c.b16 %v4850, %v4834
        %v7955 = vpack.c.b16 %v4851, %v4835
        %v7956 = vpack.c.b16 %v4852, %v4836
        %v7957 = vpack.c.b16 %v4853, %v4837
        %v7958 = vpack.c.b16 %v4854, %v4838
        %v7959 = vpack.c.b16 %v4855, %v4839
        %v7960 = vpack.c.b16 %v4856, %v4840
        %v7961 = vpack.c.b16 %v4857, %v4841
        %v7962 = vpack.c.b16 %v4858, %v4842
        %v7963 = vpack.c.b16 %v4859, %v4843
        %v7964 = vpack.c.b16 %v4860, %v4844
        %v7965 = vpack.c.b16 %v4861, %v4845
        %v7966 = vpack.c.b16 %v4878, %v4862
        %v7967 = vpack.c.b16 %v4879, %v4863
        %v7968 = vpack.c.b16 %v4880, %v4864
        %v7969 = vpack.c.b16 %v4881, %v4865
        %v7970 = vpack.c.b16 %v4882, %v4866
        %v7971 = vpack.c.b16 %v4883, %v4867
        %v7972 = vpack.c.b16 %v4884, %v4868
        %v7973 = vpack.c.b16 %v4885, %v4869
        %v7974 = vpack.c.b16 %v4886, %v4870
        %v7975 = vpack.c.b16 %v4887, %v4871
        %v7976 = vpack.c.b16 %v4888, %v4872
        %v7977 = vpack.c.b16 %v4889, %v4873
        %v7978 = vpack.c.b16 %v4890, %v4874
        %v7979 = vpack.c.b16 %v4891, %v4875
        %v7980 = vpack.c.b16 %v4892, %v4876
        %v7981 = vpack.c.b16 %v4893, %v4877
        %v7982 = vpack.c.b16 %v4910, %v4894
        %v7983 = vpack.c.b16 %v4911, %v4895
        %v7984 = vpack.c.b16 %v4912, %v4896
        %v7985 = vpack.c.b16 %v4913, %v4897
        %v7986 = vpack.c.b16 %v4914, %v4898
        %v7987 = vpack.c.b16 %v4915, %v4899
        %v7988 = vpack.c.b16 %v4916, %v4900
        %v7989 = vpack.c.b16 %v4917, %v4901
        %v7990 = vpack.c.b16 %v4918, %v4902
        %v7991 = vpack.c.b16 %v4919, %v4903
        %v7992 = vpack.c.b16 %v4920, %v4904
        %v7993 = vpack.c.b16 %v4921, %v4905
        %v7994 = vpack.c.b16 %v4922, %v4906
        %v7995 = vpack.c.b16 %v4923, %v4907
        %v7996 = vpack.c.b16 %v4924, %v4908
        %v7997 = vpack.c.b16 %v4925, %v4909
        %v7998 = vpack.c.b16 %v4942, %v4926
        %v7999 = vpack.c.b16 %v4943, %v4927
        %v8000 = vpack.c.b16 %v4944, %v4928
        %v8001 = vpack.c.b16 %v4945, %v4929
        %v8002 = vpack.c.b16 %v4946, %v4930
        %v8003 = vpack.c.b16 %v4947, %v4931
        %v8004 = vpack.c.b16 %v4948, %v4932
        %v8005 = vpack.c.b16 %v4949, %v4933
        %v8006 = vpack.c.b16 %v4950, %v4934
        %v8007 = vpack.c.b16 %v4951, %v4935
        %v8008 = vpack.c.b16 %v4952, %v4936
        %v8009 = vpack.c.b16 %v4953, %v4937
        %v8010 = vpack.c.b16 %v4954, %v4938
        %v8011 = vpack.c.b16 %v4955, %v4939
        %v8012 = vpack.c.b16 %v4956, %v4940
        %v8013 = vpack.c.b16 %v4957, %v4941
        %v8014 = vpack.c.b16 %v4974, %v4958
        %v8015 = vpack.c.b16 %v4975, %v4959
        %v8016 = vpack.c.b16 %v4976, %v4960
        %v8017 = vpack.c.b16 %v4977, %v4961
        %v8018 = vpack.c.b16 %v4978, %v4962
        %v8019 = vpack.c.b16 %v4979, %v4963
        %v8020 = vpack.c.b16 %v4980, %v4964
        %v8021 = vpack.c.b16 %v4981, %v4965
        %v8022 = vpack.c.b16 %v4982, %v4966
        %v8023 = vpack.c.b16 %v4983, %v4967
        %v8024 = vpack.c.b16 %v4984, %v4968
        %v8025 = vpack.c.b16 %v4985, %v4969
        %v8026 = vpack.c.b16 %v4986, %v4970
        %v8027 = vpack.c.b16 %v4987, %v4971
        %v8028 = vpack.c.b16 %v4988, %v4972
        %v8029 = vpack.c.b16 %v4989, %v4973
        %v8030 = vpack.c.b16 %v5006, %v4990
        %v8031 = vpack.c.b16 %v5007, %v4991
        %v8032 = vpack.c.b16 %v5008, %v4992
        %v8033 = vpack.c.b16 %v5009, %v4993
        %v8034 = vpack.c.b16 %v5010, %v4994
        %v8035 = vpack.c.b16 %v5011, %v4995
        %v8036 = vpack.c.b16 %v5012, %v4996
        %v8037 = vpack.c.b16 %v5013, %v4997
        %v8038 = vpack.c.b16 %v5014, %v4998
        %v8039 = vpack.c.b16 %v5015, %v4999
        %v8040 = vpack.c.b16 %v5016, %v5000
        %v8041 = vpack.c.b16 %v5017, %v5001
        %v8042 = vpack.c.b16 %v5018, %v5002
        %v8043 = vpack.c.b16 %v5019, %v5003
        %v8044 = vpack.c.b16 %v5020, %v5004
        %v8045 = vpack.c.b16 %v5021, %v5005
        %v8046 = vpack.c.b16 %v5038, %v5022
        %v8047 = vpack.c.b16 %v5039, %v5023
        %v8048 = vpack.c.b16 %v5040, %v5024
        %v8049 = vpack.c.b16 %v5041, %v5025
        %v8050 = vpack.c.b16 %v5042, %v5026
        %v8051 = vpack.c.b16 %v5043, %v5027
        %v8052 = vpack.c.b16 %v5044, %v5028
        %v8053 = vpack.c.b16 %v5045, %v5029
        %v8054 = vpack.c.b16 %v5046, %v5030
        %v8055 = vpack.c.b16 %v5047, %v5031
        %v8056 = vpack.c.b16 %v5048, %v5032
        %v8057 = vpack.c.b16 %v5049, %v5033
        %v8058 = vpack.c.b16 %v5050, %v5034
        %v8059 = vpack.c.b16 %v5051, %v5035
        %v8060 = vpack.c.b16 %v5052, %v5036
        %v8061 = vpack.c.b16 %v5053, %v5037
        %v8062 = vpack.c.b16 %v5070, %v5054
        %v8063 = vpack.c.b16 %v5071, %v5055
        %v8064 = vpack.c.b16 %v5072, %v5056
        %v8065 = vpack.c.b16 %v5073, %v5057
        %v8066 = vpack.c.b16 %v5074, %v5058
        %v8067 = vpack.c.b16 %v5075, %v5059
        %v8068 = vpack.c.b16 %v5076, %v5060
        %v8069 = vpack.c.b16 %v5077, %v5061
        %v8070 = vpack.c.b16 %v5078, %v5062
        %v8071 = vpack.c.b16 %v5079, %v5063
        %v8072 = vpack.c.b16 %v5080, %v5064
        %v8073 = vpack.c.b16 %v5081, %v5065
        %v8074 = vpack.c.b16 %v5082, %v5066
        %v8075 = vpack.c.b16 %v5083, %v5067
        %v8076 = vpack.c.b16 %v5084, %v5068
        %v8077 = vpack.c.b16 %v5085, %v5069
        %v8078 = vpack.c.b16 %v5102, %v5086
        %v8079 = vpack.c.b16 %v5103, %v5087
        %v8080 = vpack.c.b16 %v5104, %v5088
        %v8081 = vpack.c.b16 %v5105, %v5089
        %v8082 = vpack.c.b16 %v5106, %v5090
        %v8083 = vpack.c.b16 %v5107, %v5091
        %v8084 = vpack.c.b16 %v5108, %v5092
        %v8085 = vpack.c.b16 %v5109, %v5093
        %v8086 = vpack.c.b16 %v5110, %v5094
        %v8087 = vpack.c.b16 %v5111, %v5095
        %v8088 = vpack.c.b16 %v5112, %v5096
        %v8089 = vpack.c.b16 %v5113, %v5097
        %v8090 = vpack.c.b16 %v5114, %v5098
        %v8091 = vpack.c.b16 %v5115, %v5099
        %v8092 = vpack.c.b16 %v5116, %v5100
        %v8093 = vpack.c.b16 %v5117, %v5101
        %v8094 = vpack.c.b16 %v5134, %v5118
        %v8095 = vpack.c.b16 %v5135, %v5119
        %v8096 = vpack.c.b16 %v5136, %v5120
        %v8097 = vpack.c.b16 %v5137, %v5121
        %v8098 = vpack.c.b16 %v5138, %v5122
        %v8099 = vpack.c.b16 %v5139, %v5123
        %v8100 = vpack.c.b16 %v5140, %v5124
        %v8101 = vpack.c.b16 %v5141, %v5125
        %v8102 = vpack.c.b16 %v5142, %v5126
        %v8103 = vpack.c.b16 %v5143, %v5127
        %v8104 = vpack.c.b16 %v5144, %v5128
        %v8105 = vpack.c.b16 %v5145, %v5129
        %v8106 = vpack.c.b16 %v5146, %v5130
        %v8107 = vpack.c.b16 %v5147, %v5131
        %v8108 = vpack.c.b16 %v5148, %v5132
        %v8109 = vpack.c.b16 %v5149, %v5133
        %v8110 = vpack.c.b16 %v5166, %v5150
        %v8111 = vpack.c.b16 %v5167, %v5151
        %v8112 = vpack.c.b16 %v5168, %v5152
        %v8113 = vpack.c.b16 %v5169, %v5153
        %v8114 = vpack.c.b16 %v5170, %v5154
        %v8115 = vpack.c.b16 %v5171, %v5155
        %v8116 = vpack.c.b16 %v5172, %v5156
        %v8117 = vpack.c.b16 %v5173, %v5157
        %v8118 = vpack.c.b16 %v5174, %v5158
        %v8119 = vpack.c.b16 %v5175, %v5159
        %v8120 = vpack.c.b16 %v5176, %v5160
        %v8121 = vpack.c.b16 %v5177, %v5161
        %v8122 = vpack.c.b16 %v5178, %v5162
        %v8123 = vpack.c.b16 %v5179, %v5163
        %v8124 = vpack.c.b16 %v5180, %v5164
        %v8125 = vpack.c.b16 %v5181, %v5165
        %v8126 = vpack.c.b16 %v5198, %v5182
        %v8127 = vpack.c.b16 %v5199, %v5183
        %v8128 = vpack.c.b16 %v5200, %v5184
        %v8129 = vpack.c.b16 %v5201, %v5185
        %v8130 = vpack.c.b16 %v5202, %v5186
        %v8131 = vpack.c.b16 %v5203, %v5187
        %v8132 = vpack.c.b16 %v5204, %v5188
        %v8133 = vpack.c.b16 %v5205, %v5189
        %v8134 = vpack.c.b16 %v5206, %v5190
        %v8135 = vpack.c.b16 %v5207, %v5191
        %v8136 = vpack.c.b16 %v5208, %v5192
        %v8137 = vpack.c.b16 %v5209, %v5193
        %v8138 = vpack.c.b16 %v5210, %v5194
        %v8139 = vpack.c.b16 %v5211, %v5195
        %v8140 = vpack.c.b16 %v5212, %v5196
        %v8141 = vpack.c.b16 %v5213, %v5197
        %v8142 = vpack.c.b16 %v5230, %v5214
        %v8143 = vpack.c.b16 %v5231, %v5215
        %v8144 = vpack.c.b16 %v5232, %v5216
        %v8145 = vpack.c.b16 %v5233, %v5217
        %v8146 = vpack.c.b16 %v5234, %v5218
        %v8147 = vpack.c.b16 %v5235, %v5219
        %v8148 = vpack.c.b16 %v5236, %v5220
        %v8149 = vpack.c.b16 %v5237, %v5221
        %v8150 = vpack.c.b16 %v5238, %v5222
        %v8151 = vpack.c.b16 %v5239, %v5223
        %v8152 = vpack.c.b16 %v5240, %v5224
        %v8153 = vpack.c.b16 %v5241, %v5225
        %v8154 = vpack.c.b16 %v5242, %v5226
        %v8155 = vpack.c.b16 %v5243, %v5227
        %v8156 = vpack.c.b16 %v5244, %v5228
        %v8157 = vpack.c.b16 %v5245, %v5229
        %v8158 = vpack.c.b16 %v5262, %v5246
        %v8159 = vpack.c.b16 %v5263, %v5247
        %v8160 = vpack.c.b16 %v5264, %v5248
        %v8161 = vpack.c.b16 %v5265, %v5249
        %v8162 = vpack.c.b16 %v5266, %v5250
        %v8163 = vpack.c.b16 %v5267, %v5251
        %v8164 = vpack.c.b16 %v5268, %v5252
        %v8165 = vpack.c.b16 %v5269, %v5253
        %v8166 = vpack.c.b16 %v5270, %v5254
        %v8167 = vpack.c.b16 %v5271, %v5255
        %v8168 = vpack.c.b16 %v5272, %v5256
        %v8169 = vpack.c.b16 %v5273, %v5257
        %v8170 = vpack.c.b16 %v5274, %v5258
        %v8171 = vpack.c.b16 %v5275, %v5259
        %v8172 = vpack.c.b16 %v5276, %v5260
        %v8173 = vpack.c.b16 %v5277, %v5261
        %v8174 = vpack.c.b16 %v5294, %v5278
        %v8175 = vpack.c.b16 %v5295, %v5279
        %v8176 = vpack.c.b16 %v5296, %v5280
        %v8177 = vpack.c.b16 %v5297, %v5281
        %v8178 = vpack.c.b16 %v5298, %v5282
        %v8179 = vpack.c.b16 %v5299, %v5283
        %v8180 = vpack.c.b16 %v5300, %v5284
        %v8181 = vpack.c.b16 %v5301, %v5285
        %v8182 = vpack.c.b16 %v5302, %v5286
        %v8183 = vpack.c.b16 %v5303, %v5287
        %v8184 = vpack.c.b16 %v5304, %v5288
        %v8185 = vpack.c.b16 %v5305, %v5289
        %v8186 = vpack.c.b16 %v5306, %v5290
        %v8187 = vpack.c.b16 %v5307, %v5291
        %v8188 = vpack.c.b16 %v5308, %v5292
        %v8189 = vpack.c.b16 %v5309, %v5293
        %v8190 = vpack.c.b16 %v5326, %v5310
        %v8191 = vpack.c.b16 %v5327, %v5311
        %v8192 = vpack.c.b16 %v5328, %v5312
        %v8193 = vpack.c.b16 %v5329, %v5313
        %v8194 = vpack.c.b16 %v5330, %v5314
        %v8195 = vpack.c.b16 %v5331, %v5315
        %v8196 = vpack.c.b16 %v5332, %v5316
        %v8197 = vpack.c.b16 %v5333, %v5317
        %v8198 = vpack.c.b16 %v5334, %v5318
        %v8199 = vpack.c.b16 %v5335, %v5319
        %v8200 = vpack.c.b16 %v5336, %v5320
        %v8201 = vpack.c.b16 %v5337, %v5321
        %v8202 = vpack.c.b16 %v5338, %v5322
        %v8203 = vpack.c.b16 %v5339, %v5323
        %v8204 = vpack.c.b16 %v5340, %v5324
        %v8205 = vpack.c.b16 %v5341, %v5325
        %v8206 = vpack.c.b16 %v5358, %v5342
        %v8207 = vpack.c.b16 %v5359, %v5343
        %v8208 = vpack.c.b16 %v5360, %v5344
        %v8209 = vpack.c.b16 %v5361, %v5345
        %v8210 = vpack.c.b16 %v5362, %v5346
        %v8211 = vpack.c.b16 %v5363, %v5347
        %v8212 = vpack.c.b16 %v5364, %v5348
        %v8213 = vpack.c.b16 %v5365, %v5349
        %v8214 = vpack.c.b16 %v5366, %v5350
        %v8215 = vpack.c.b16 %v5367, %v5351
        %v8216 = vpack.c.b16 %v5368, %v5352
        %v8217 = vpack.c.b16 %v5369, %v5353
        %v8218 = vpack.c.b16 %v5370, %v5354
        %v8219 = vpack.c.b16 %v5371, %v5355
        %v8220 = vpack.c.b16 %v5372, %v5356
        %v8221 = vpack.c.b16 %v5373, %v5357
        %v8222 = vpack.c.b16 %v5390, %v5374
        %v8223 = vpack.c.b16 %v5391, %v5375
        %v8224 = vpack.c.b16 %v5392, %v5376
        %v8225 = vpack.c.b16 %v5393, %v5377
        %v8226 = vpack.c.b16 %v5394, %v5378
        %v8227 = vpack.c.b16 %v5395, %v5379
        %v8228 = vpack.c.b16 %v5396, %v5380
        %v8229 = vpack.c.b16 %v5397, %v5381
        %v8230 = vpack.c.b16 %v5398, %v5382
        %v8231 = vpack.c.b16 %v5399, %v5383
        %v8232 = vpack.c.b16 %v5400, %v5384
        %v8233 = vpack.c.b16 %v5401, %v5385
        %v8234 = vpack.c.b16 %v5402, %v5386
        %v8235 = vpack.c.b16 %v5403, %v5387
        %v8236 = vpack.c.b16 %v5404, %v5388
        %v8237 = vpack.c.b16 %v5405, %v5389
        %v8238 = vpack.c.b16 %v5422, %v5406
        %v8239 = vpack.c.b16 %v5423, %v5407
        %v8240 = vpack.c.b16 %v5424, %v5408
        %v8241 = vpack.c.b16 %v5425, %v5409
        %v8242 = vpack.c.b16 %v5426, %v5410
        %v8243 = vpack.c.b16 %v5427, %v5411
        %v8244 = vpack.c.b16 %v5428, %v5412
        %v8245 = vpack.c.b16 %v5429, %v5413
        %v8246 = vpack.c.b16 %v5430, %v5414
        %v8247 = vpack.c.b16 %v5431, %v5415
        %v8248 = vpack.c.b16 %v5432, %v5416
        %v8249 = vpack.c.b16 %v5433, %v5417
        %v8250 = vpack.c.b16 %v5434, %v5418
        %v8251 = vpack.c.b16 %v5435, %v5419
        %v8252 = vpack.c.b16 %v5436, %v5420
        %v8253 = vpack.c.b16 %v5437, %v5421
        %v8254 = vpack.c.b16 %v5454, %v5438
        %v8255 = vpack.c.b16 %v5455, %v5439
        %v8256 = vpack.c.b16 %v5456, %v5440
        %v8257 = vpack.c.b16 %v5457, %v5441
        %v8258 = vpack.c.b16 %v5458, %v5442
        %v8259 = vpack.c.b16 %v5459, %v5443
        %v8260 = vpack.c.b16 %v5460, %v5444
        %v8261 = vpack.c.b16 %v5461, %v5445
        %v8262 = vpack.c.b16 %v5462, %v5446
        %v8263 = vpack.c.b16 %v5463, %v5447
        %v8264 = vpack.c.b16 %v5464, %v5448
        %v8265 = vpack.c.b16 %v5465, %v5449
        %v8266 = vpack.c.b16 %v5466, %v5450
        %v8267 = vpack.c.b16 %v5467, %v5451
        %v8268 = vpack.c.b16 %v5468, %v5452
        %v8269 = vpack.c.b16 %v5469, %v5453
        %v8270 = vpack.c.b16 %v5486, %v5470
        %v8271 = vpack.c.b16 %v5487, %v5471
        %v8272 = vpack.c.b16 %v5488, %v5472
        %v8273 = vpack.c.b16 %v5489, %v5473
        %v8274 = vpack.c.b16 %v5490, %v5474
        %v8275 = vpack.c.b16 %v5491, %v5475
        %v8276 = vpack.c.b16 %v5492, %v5476
        %v8277 = vpack.c.b16 %v5493, %v5477
        %v8278 = vpack.c.b16 %v5494, %v5478
        %v8279 = vpack.c.b16 %v5495, %v5479
        %v8280 = vpack.c.b16 %v5496, %v5480
        %v8281 = vpack.c.b16 %v5497, %v5481
        %v8282 = vpack.c.b16 %v5498, %v5482
        %v8283 = vpack.c.b16 %v5499, %v5483
        %v8284 = vpack.c.b16 %v5500, %v5484
        %v8285 = vpack.c.b16 %v5501, %v5485
        %v8286 = vpack.c.b16 %v5518, %v5502
        %v8287 = vpack.c.b16 %v5519, %v5503
        %v8288 = vpack.c.b16 %v5520, %v5504
        %v8289 = vpack.c.b16 %v5521, %v5505
        %v8290 = vpack.c.b16 %v5522, %v5506
        %v8291 = vpack.c.b16 %v5523, %v5507
        %v8292 = vpack.c.b16 %v5524, %v5508
        %v8293 = vpack.c.b16 %v5525, %v5509
        %v8294 = vpack.c.b16 %v5526, %v5510
        %v8295 = vpack.c.b16 %v5527, %v5511
        %v8296 = vpack.c.b16 %v5528, %v5512
        %v8297 = vpack.c.b16 %v5529, %v5513
        %v8298 = vpack.c.b16 %v5530, %v5514
        %v8299 = vpack.c.b16 %v5531, %v5515
        %v8300 = vpack.c.b16 %v5532, %v5516
        %v8301 = vpack.c.b16 %v5533, %v5517
        %v8302 = vpack.c.b16 %v5550, %v5534
        %v8303 = vpack.c.b16 %v5551, %v5535
        %v8304 = vpack.c.b16 %v5552, %v5536
        %v8305 = vpack.c.b16 %v5553, %v5537
        %v8306 = vpack.c.b16 %v5554, %v5538
        %v8307 = vpack.c.b16 %v5555, %v5539
        %v8308 = vpack.c.b16 %v5556, %v5540
        %v8309 = vpack.c.b16 %v5557, %v5541
        %v8310 = vpack.c.b16 %v5558, %v5542
        %v8311 = vpack.c.b16 %v5559, %v5543
        %v8312 = vpack.c.b16 %v5560, %v5544
        %v8313 = vpack.c.b16 %v5561, %v5545
        %v8314 = vpack.c.b16 %v5562, %v5546
        %v8315 = vpack.c.b16 %v5563, %v5547
        %v8316 = vpack.c.b16 %v5564, %v5548
        %v8317 = vpack.c.b16 %v5565, %v5549
        %v8318 = vpack.c.b16 %v5582, %v5566
        %v8319 = vpack.c.b16 %v5583, %v5567
        %v8320 = vpack.c.b16 %v5584, %v5568
        %v8321 = vpack.c.b16 %v5585, %v5569
        %v8322 = vpack.c.b16 %v5586, %v5570
        %v8323 = vpack.c.b16 %v5587, %v5571
        %v8324 = vpack.c.b16 %v5588, %v5572
        %v8325 = vpack.c.b16 %v5589, %v5573
        %v8326 = vpack.c.b16 %v5590, %v5574
        %v8327 = vpack.c.b16 %v5591, %v5575
        %v8328 = vpack.c.b16 %v5592, %v5576
        %v8329 = vpack.c.b16 %v5593, %v5577
        %v8330 = vpack.c.b16 %v5594, %v5578
        %v8331 = vpack.c.b16 %v5595, %v5579
        %v8332 = vpack.c.b16 %v5596, %v5580
        %v8333 = vpack.c.b16 %v5597, %v5581
        %v8334 = vpack.c.b16 %v5614, %v5598
        %v8335 = vpack.c.b16 %v5615, %v5599
        %v8336 = vpack.c.b16 %v5616, %v5600
        %v8337 = vpack.c.b16 %v5617, %v5601
        %v8338 = vpack.c.b16 %v5618, %v5602
        %v8339 = vpack.c.b16 %v5619, %v5603
        %v8340 = vpack.c.b16 %v5620, %v5604
        %v8341 = vpack.c.b16 %v5621, %v5605
        %v8342 = vpack.c.b16 %v5622, %v5606
        %v8343 = vpack.c.b16 %v5623, %v5607
        %v8344 = vpack.c.b16 %v5624, %v5608
        %v8345 = vpack.c.b16 %v5625, %v5609
        %v8346 = vpack.c.b16 %v5626, %v5610
        %v8347 = vpack.c.b16 %v5627, %v5611
        %v8348 = vpack.c.b16 %v5628, %v5612
        %v8349 = vpack.c.b16 %v5629, %v5613
        %v8350 = vpack.c.b16 %v5646, %v5630
        %v8351 = vpack.c.b16 %v5647, %v5631
        %v8352 = vpack.c.b16 %v5648, %v5632
        %v8353 = vpack.c.b16 %v5649, %v5633
        %v8354 = vpack.c.b16 %v5650, %v5634
        %v8355 = vpack.c.b16 %v5651, %v5635
        %v8356 = vpack.c.b16 %v5652, %v5636
        %v8357 = vpack.c.b16 %v5653, %v5637
        %v8358 = vpack.c.b16 %v5654, %v5638
        %v8359 = vpack.c.b16 %v5655, %v5639
        %v8360 = vpack.c.b16 %v5656, %v5640
        %v8361 = vpack.c.b16 %v5657, %v5641
        %v8362 = vpack.c.b16 %v5658, %v5642
        %v8363 = vpack.c.b16 %v5659, %v5643
        %v8364 = vpack.c.b16 %v5660, %v5644
        %v8365 = vpack.c.b16 %v5661, %v5645
        %v8366 = vpack.c.b16 %v5678, %v5662
        %v8367 = vpack.c.b16 %v5679, %v5663
        %v8368 = vpack.c.b16 %v5680, %v5664
        %v8369 = vpack.c.b16 %v5681, %v5665
        %v8370 = vpack.c.b16 %v5682, %v5666
        %v8371 = vpack.c.b16 %v5683, %v5667
        %v8372 = vpack.c.b16 %v5684, %v5668
        %v8373 = vpack.c.b16 %v5685, %v5669
        %v8374 = vpack.c.b16 %v5686, %v5670
        %v8375 = vpack.c.b16 %v5687, %v5671
        %v8376 = vpack.c.b16 %v5688, %v5672
        %v8377 = vpack.c.b16 %v5689, %v5673
        %v8378 = vpack.c.b16 %v5690, %v5674
        %v8379 = vpack.c.b16 %v5691, %v5675
        %v8380 = vpack.c.b16 %v5692, %v5676
        %v8381 = vpack.c.b16 %v5693, %v5677
        %v8382 = vpack.c.b16 %v5710, %v5694
        %v8383 = vpack.c.b16 %v5711, %v5695
        %v8384 = vpack.c.b16 %v5712, %v5696
        %v8385 = vpack.c.b16 %v5713, %v5697
        %v8386 = vpack.c.b16 %v5714, %v5698
        %v8387 = vpack.c.b16 %v5715, %v5699
        %v8388 = vpack.c.b16 %v5716, %v5700
        %v8389 = vpack.c.b16 %v5717, %v5701
        %v8390 = vpack.c.b16 %v5718, %v5702
        %v8391 = vpack.c.b16 %v5719, %v5703
        %v8392 = vpack.c.b16 %v5720, %v5704
        %v8393 = vpack.c.b16 %v5721, %v5705
        %v8394 = vpack.c.b16 %v5722, %v5706
        %v8395 = vpack.c.b16 %v5723, %v5707
        %v8396 = vpack.c.b16 %v5724, %v5708
        %v8397 = vpack.c.b16 %v5725, %v5709
        %v8398 = vpack.c.b16 %v5742, %v5726
        %v8399 = vpack.c.b16 %v5743, %v5727
        %v8400 = vpack.c.b16 %v5744, %v5728
        %v8401 = vpack.c.b16 %v5745, %v5729
        %v8402 = vpack.c.b16 %v5746, %v5730
        %v8403 = vpack.c.b16 %v5747, %v5731
        %v8404 = vpack.c.b16 %v5748, %v5732
        %v8405 = vpack.c.b16 %v5749, %v5733
        %v8406 = vpack.c.b16 %v5750, %v5734
        %v8407 = vpack.c.b16 %v5751, %v5735
        %v8408 = vpack.c.b16 %v5752, %v5736
        %v8409 = vpack.c.b16 %v5753, %v5737
        %v8410 = vpack.c.b16 %v5754, %v5738
        %v8411 = vpack.c.b16 %v5755, %v5739
        %v8412 = vpack.c.b16 %v5756, %v5740
        %v8413 = vpack.c.b16 %v5757, %v5741
        %v8414 = vpack.c.b16 %v5774, %v5758
        %v8415 = vpack.c.b16 %v5775, %v5759
        %v8416 = vpack.c.b16 %v5776, %v5760
        %v8417 = vpack.c.b16 %v5777, %v5761
        %v8418 = vpack.c.b16 %v5778, %v5762
        %v8419 = vpack.c.b16 %v5779, %v5763
        %v8420 = vpack.c.b16 %v5780, %v5764
        %v8421 = vpack.c.b16 %v5781, %v5765
        %v8422 = vpack.c.b16 %v5782, %v5766
        %v8423 = vpack.c.b16 %v5783, %v5767
        %v8424 = vpack.c.b16 %v5784, %v5768
        %v8425 = vpack.c.b16 %v5785, %v5769
        %v8426 = vpack.c.b16 %v5786, %v5770
        %v8427 = vpack.c.b16 %v5787, %v5771
        %v8428 = vpack.c.b16 %v5788, %v5772
        %v8429 = vpack.c.b16 %v5789, %v5773
        %v8430 = vpack.c.b16 %v5806, %v5790
        %v8431 = vpack.c.b16 %v5807, %v5791
        %v8432 = vpack.c.b16 %v5808, %v5792
        %v8433 = vpack.c.b16 %v5809, %v5793
        %v8434 = vpack.c.b16 %v5810, %v5794
        %v8435 = vpack.c.b16 %v5811, %v5795
        %v8436 = vpack.c.b16 %v5812, %v5796
        %v8437 = vpack.c.b16 %v5813, %v5797
        %v8438 = vpack.c.b16 %v5814, %v5798
        %v8439 = vpack.c.b16 %v5815, %v5799
        %v8440 = vpack.c.b16 %v5816, %v5800
        %v8441 = vpack.c.b16 %v5817, %v5801
        %v8442 = vpack.c.b16 %v5818, %v5802
        %v8443 = vpack.c.b16 %v5819, %v5803
        %v8444 = vpack.c.b16 %v5820, %v5804
        %v8445 = vpack.c.b16 %v5821, %v5805
        %v8446 = vpack.c.b16 %v5838, %v5822
        %v8447 = vpack.c.b16 %v5839, %v5823
        %v8448 = vpack.c.b16 %v5840, %v5824
        %v8449 = vpack.c.b16 %v5841, %v5825
        %v8450 = vpack.c.b16 %v5842, %v5826
        %v8451 = vpack.c.b16 %v5843, %v5827
        %v8452 = vpack.c.b16 %v5844, %v5828
        %v8453 = vpack.c.b16 %v5845, %v5829
        %v8454 = vpack.c.b16 %v5846, %v5830
        %v8455 = vpack.c.b16 %v5847, %v5831
        %v8456 = vpack.c.b16 %v5848, %v5832
        %v8457 = vpack.c.b16 %v5849, %v5833
        %v8458 = vpack.c.b16 %v5850, %v5834
        %v8459 = vpack.c.b16 %v5851, %v5835
        %v8460 = vpack.c.b16 %v5852, %v5836
        %v8461 = vpack.c.b16 %v5853, %v5837
        %v8462 = vpack.c.b16 %v5870, %v5854
        %v8463 = vpack.c.b16 %v5871, %v5855
        %v8464 = vpack.c.b16 %v5872, %v5856
        %v8465 = vpack.c.b16 %v5873, %v5857
        %v8466 = vpack.c.b16 %v5874, %v5858
        %v8467 = vpack.c.b16 %v5875, %v5859
        %v8468 = vpack.c.b16 %v5876, %v5860
        %v8469 = vpack.c.b16 %v5877, %v5861
        %v8470 = vpack.c.b16 %v5878, %v5862
        %v8471 = vpack.c.b16 %v5879, %v5863
        %v8472 = vpack.c.b16 %v5880, %v5864
        %v8473 = vpack.c.b16 %v5881, %v5865
        %v8474 = vpack.c.b16 %v5882, %v5866
        %v8475 = vpack.c.b16 %v5883, %v5867
        %v8476 = vpack.c.b16 %v5884, %v5868
        %v8477 = vpack.c.b16 %v5885, %v5869
        %v8478 = vpack.c.b16 %v5902, %v5886
        %v8479 = vpack.c.b16 %v5903, %v5887
        %v8480 = vpack.c.b16 %v5904, %v5888
        %v8481 = vpack.c.b16 %v5905, %v5889
        %v8482 = vpack.c.b16 %v5906, %v5890
        %v8483 = vpack.c.b16 %v5907, %v5891
        %v8484 = vpack.c.b16 %v5908, %v5892
        %v8485 = vpack.c.b16 %v5909, %v5893
        %v8486 = vpack.c.b16 %v5910, %v5894
        %v8487 = vpack.c.b16 %v5911, %v5895
        %v8488 = vpack.c.b16 %v5912, %v5896
        %v8489 = vpack.c.b16 %v5913, %v5897
        %v8490 = vpack.c.b16 %v5914, %v5898
        %v8491 = vpack.c.b16 %v5915, %v5899
        %v8492 = vpack.c.b16 %v5916, %v5900
        %v8493 = vpack.c.b16 %v5917, %v5901
        %v8494 = vpack.c.b16 %v5934, %v5918
        %v8495 = vpack.c.b16 %v5935, %v5919
        %v8496 = vpack.c.b16 %v5936, %v5920
        %v8497 = vpack.c.b16 %v5937, %v5921
        %v8498 = vpack.c.b16 %v5938, %v5922
        %v8499 = vpack.c.b16 %v5939, %v5923
        %v8500 = vpack.c.b16 %v5940, %v5924
        %v8501 = vpack.c.b16 %v5941, %v5925
        %v8502 = vpack.c.b16 %v5942, %v5926
        %v8503 = vpack.c.b16 %v5943, %v5927
        %v8504 = vpack.c.b16 %v5944, %v5928
        %v8505 = vpack.c.b16 %v5945, %v5929
        %v8506 = vpack.c.b16 %v5946, %v5930
        %v8507 = vpack.c.b16 %v5947, %v5931
        %v8508 = vpack.c.b16 %v5948, %v5932
        %v8509 = vpack.c.b16 %v5949, %v5933
        %v8510 = vpack.c.b16 %v5966, %v5950
        %v8511 = vpack.c.b16 %v5967, %v5951
        %v8512 = vpack.c.b16 %v5968, %v5952
        %v8513 = vpack.c.b16 %v5969, %v5953
        %v8514 = vpack.c.b16 %v5970, %v5954
        %v8515 = vpack.c.b16 %v5971, %v5955
        %v8516 = vpack.c.b16 %v5972, %v5956
        %v8517 = vpack.c.b16 %v5973, %v5957
        %v8518 = vpack.c.b16 %v5974, %v5958
        %v8519 = vpack.c.b16 %v5975, %v5959
        %v8520 = vpack.c.b16 %v5976, %v5960
        %v8521 = vpack.c.b16 %v5977, %v5961
        %v8522 = vpack.c.b16 %v5978, %v5962
        %v8523 = vpack.c.b16 %v5979, %v5963
        %v8524 = vpack.c.b16 %v5980, %v5964
        %v8525 = vpack.c.b16 %v5981, %v5965
        %v8526 = vpack.c.b16 %v5998, %v5982
        %v8527 = vpack.c.b16 %v5999, %v5983
        %v8528 = vpack.c.b16 %v6000, %v5984
        %v8529 = vpack.c.b16 %v6001, %v5985
        %v8530 = vpack.c.b16 %v6002, %v5986
        %v8531 = vpack.c.b16 %v6003, %v5987
        %v8532 = vpack.c.b16 %v6004, %v5988
        %v8533 = vpack.c.b16 %v6005, %v5989
        %v8534 = vpack.c.b16 %v6006, %v5990
        %v8535 = vpack.c.b16 %v6007, %v5991
        %v8536 = vpack.c.b16 %v6008, %v5992
        %v8537 = vpack.c.b16 %v6009, %v5993
        %v8538 = vpack.c.b16 %v6010, %v5994
        %v8539 = vpack.c.b16 %v6011, %v5995
        %v8540 = vpack.c.b16 %v6012, %v5996
        %v8541 = vpack.c.b16 %v6013, %v5997
        %v8542 = vpack.c.b16 %v6030, %v6014
        %v8543 = vpack.c.b16 %v6031, %v6015
        %v8544 = vpack.c.b16 %v6032, %v6016
        %v8545 = vpack.c.b16 %v6033, %v6017
        %v8546 = vpack.c.b16 %v6034, %v6018
        %v8547 = vpack.c.b16 %v6035, %v6019
        %v8548 = vpack.c.b16 %v6036, %v6020
        %v8549 = vpack.c.b16 %v6037, %v6021
        %v8550 = vpack.c.b16 %v6038, %v6022
        %v8551 = vpack.c.b16 %v6039, %v6023
        %v8552 = vpack.c.b16 %v6040, %v6024
        %v8553 = vpack.c.b16 %v6041, %v6025
        %v8554 = vpack.c.b16 %v6042, %v6026
        %v8555 = vpack.c.b16 %v6043, %v6027
        %v8556 = vpack.c.b16 %v6044, %v6028
        %v8557 = vpack.c.b16 %v6045, %v6029
        %v8558 = vpack.c.b16 %v6062, %v6046
        %v8559 = vpack.c.b16 %v6063, %v6047
        %v8560 = vpack.c.b16 %v6064, %v6048
        %v8561 = vpack.c.b16 %v6065, %v6049
        %v8562 = vpack.c.b16 %v6066, %v6050
        %v8563 = vpack.c.b16 %v6067, %v6051
        %v8564 = vpack.c.b16 %v6068, %v6052
        %v8565 = vpack.c.b16 %v6069, %v6053
        %v8566 = vpack.c.b16 %v6070, %v6054
        %v8567 = vpack.c.b16 %v6071, %v6055
        %v8568 = vpack.c.b16 %v6072, %v6056
        %v8569 = vpack.c.b16 %v6073, %v6057
        %v8570 = vpack.c.b16 %v6074, %v6058
        %v8571 = vpack.c.b16 %v6075, %v6059
        %v8572 = vpack.c.b16 %v6076, %v6060
        %v8573 = vpack.c.b16 %v6077, %v6061
        %v8574 = vpack.c.b16 %v6094, %v6078
        %v8575 = vpack.c.b16 %v6095, %v6079
        %v8576 = vpack.c.b16 %v6096, %v6080
        %v8577 = vpack.c.b16 %v6097, %v6081
        %v8578 = vpack.c.b16 %v6098, %v6082
        %v8579 = vpack.c.b16 %v6099, %v6083
        %v8580 = vpack.c.b16 %v6100, %v6084
        %v8581 = vpack.c.b16 %v6101, %v6085
        %v8582 = vpack.c.b16 %v6102, %v6086
        %v8583 = vpack.c.b16 %v6103, %v6087
        %v8584 = vpack.c.b16 %v6104, %v6088
        %v8585 = vpack.c.b16 %v6105, %v6089
        %v8586 = vpack.c.b16 %v6106, %v6090
        %v8587 = vpack.c.b16 %v6107, %v6091
        %v8588 = vpack.c.b16 %v6108, %v6092
        %v8589 = vpack.c.b16 %v6109, %v6093
        %v8590 = vpack.c.b16 %v6126, %v6110
        %v8591 = vpack.c.b16 %v6127, %v6111
        %v8592 = vpack.c.b16 %v6128, %v6112
        %v8593 = vpack.c.b16 %v6129, %v6113
        %v8594 = vpack.c.b16 %v6130, %v6114
        %v8595 = vpack.c.b16 %v6131, %v6115
        %v8596 = vpack.c.b16 %v6132, %v6116
        %v8597 = vpack.c.b16 %v6133, %v6117
        %v8598 = vpack.c.b16 %v6134, %v6118
        %v8599 = vpack.c.b16 %v6135, %v6119
        %v8600 = vpack.c.b16 %v6136, %v6120
        %v8601 = vpack.c.b16 %v6137, %v6121
        %v8602 = vpack.c.b16 %v6138, %v6122
        %v8603 = vpack.c.b16 %v6139, %v6123
        %v8604 = vpack.c.b16 %v6140, %v6124
        %v8605 = vpack.c.b16 %v6141, %v6125
        %v8606 = vpack.c.b16 %v6158, %v6142
        %v8607 = vpack.c.b16 %v6159, %v6143
        %v8608 = vpack.c.b16 %v6160, %v6144
        %v8609 = vpack.c.b16 %v6161, %v6145
        %v8610 = vpack.c.b16 %v6162, %v6146
        %v8611 = vpack.c.b16 %v6163, %v6147
        %v8612 = vpack.c.b16 %v6164, %v6148
        %v8613 = vpack.c.b16 %v6165, %v6149
        %v8614 = vpack.c.b16 %v6166, %v6150
        %v8615 = vpack.c.b16 %v6167, %v6151
        %v8616 = vpack.c.b16 %v6168, %v6152
        %v8617 = vpack.c.b16 %v6169, %v6153
        %v8618 = vpack.c.b16 %v6170, %v6154
        %v8619 = vpack.c.b16 %v6171, %v6155
        %v8620 = vpack.c.b16 %v6172, %v6156
        %v8621 = vpack.c.b16 %v6173, %v6157
        %v8622 = vpack.c.b16 %v6190, %v6174
        %v8623 = vpack.c.b16 %v6191, %v6175
        %v8624 = vpack.c.b16 %v6192, %v6176
        %v8625 = vpack.c.b16 %v6193, %v6177
        %v8626 = vpack.c.b16 %v6194, %v6178
        %v8627 = vpack.c.b16 %v6195, %v6179
        %v8628 = vpack.c.b16 %v6196, %v6180
        %v8629 = vpack.c.b16 %v6197, %v6181
        %v8630 = vpack.c.b16 %v6198, %v6182
        %v8631 = vpack.c.b16 %v6199, %v6183
        %v8632 = vpack.c.b16 %v6200, %v6184
        %v8633 = vpack.c.b16 %v6201, %v6185
        %v8634 = vpack.c.b16 %v6202, %v6186
        %v8635 = vpack.c.b16 %v6203, %v6187
        %v8636 = vpack.c.b16 %v6204, %v6188
        %v8637 = vpack.c.b16 %v6205, %v6189
        %v8638 = vpack.c.b16 %v6222, %v6206
        %v8639 = vpack.c.b16 %v6223, %v6207
        %v8640 = vpack.c.b16 %v6224, %v6208
        %v8641 = vpack.c.b16 %v6225, %v6209
        %v8642 = vpack.c.b16 %v6226, %v6210
        %v8643 = vpack.c.b16 %v6227, %v6211
        %v8644 = vpack.c.b16 %v6228, %v6212
        %v8645 = vpack.c.b16 %v6229, %v6213
        %v8646 = vpack.c.b16 %v6230, %v6214
        %v8647 = vpack.c.b16 %v6231, %v6215
        %v8648 = vpack.c.b16 %v6232, %v6216
        %v8649 = vpack.c.b16 %v6233, %v6217
        %v8650 = vpack.c.b16 %v6234, %v6218
        %v8651 = vpack.c.b16 %v6235, %v6219
        %v8652 = vpack.c.b16 %v6236, %v6220
        %v8653 = vpack.c.b16 %v6237, %v6221
        %v8654 = vpack.c.b16 %v6254, %v6238
        %v8655 = vpack.c.b16 %v6255, %v6239
        %v8656 = vpack.c.b16 %v6256, %v6240
        %v8657 = vpack.c.b16 %v6257, %v6241
        %v8658 = vpack.c.b16 %v6258, %v6242
        %v8659 = vpack.c.b16 %v6259, %v6243
        %v8660 = vpack.c.b16 %v6260, %v6244
        %v8661 = vpack.c.b16 %v6261, %v6245
        %v8662 = vpack.c.b16 %v6262, %v6246
        %v8663 = vpack.c.b16 %v6263, %v6247
        %v8664 = vpack.c.b16 %v6264, %v6248
        %v8665 = vpack.c.b16 %v6265, %v6249
        %v8666 = vpack.c.b16 %v6266, %v6250
        %v8667 = vpack.c.b16 %v6267, %v6251
        %v8668 = vpack.c.b16 %v6268, %v6252
        %v8669 = vpack.c.b16 %v6269, %v6253
        %v8670 = vpack.c.b16 %v6286, %v6270
        %v8671 = vpack.c.b16 %v6287, %v6271
        %v8672 = vpack.c.b16 %v6288, %v6272
        %v8673 = vpack.c.b16 %v6289, %v6273
        %v8674 = vpack.c.b16 %v6290, %v6274
        %v8675 = vpack.c.b16 %v6291, %v6275
        %v8676 = vpack.c.b16 %v6292, %v6276
        %v8677 = vpack.c.b16 %v6293, %v6277
        %v8678 = vpack.c.b16 %v6294, %v6278
        %v8679 = vpack.c.b16 %v6295, %v6279
        %v8680 = vpack.c.b16 %v6296, %v6280
        %v8681 = vpack.c.b16 %v6297, %v6281
        %v8682 = vpack.c.b16 %v6298, %v6282
        %v8683 = vpack.c.b16 %v6299, %v6283
        %v8684 = vpack.c.b16 %v6300, %v6284
        %v8685 = vpack.c.b16 %v6301, %v6285
        %v8686 = vpack.c.b16 %v6318, %v6302
        %v8687 = vpack.c.b16 %v6319, %v6303
        %v8688 = vpack.c.b16 %v6320, %v6304
        %v8689 = vpack.c.b16 %v6321, %v6305
        %v8690 = vpack.c.b16 %v6322, %v6306
        %v8691 = vpack.c.b16 %v6323, %v6307
        %v8692 = vpack.c.b16 %v6324, %v6308
        %v8693 = vpack.c.b16 %v6325, %v6309
        %v8694 = vpack.c.b16 %v6326, %v6310
        %v8695 = vpack.c.b16 %v6327, %v6311
        %v8696 = vpack.c.b16 %v6328, %v6312
        %v8697 = vpack.c.b16 %v6329, %v6313
        %v8698 = vpack.c.b16 %v6330, %v6314
        %v8699 = vpack.c.b16 %v6331, %v6315
        %v8700 = vpack.c.b16 %v6332, %v6316
        %v8701 = vpack.c.b16 %v6333, %v6317
        %v8702 = vpack.c.b16 %v6350, %v6334
        %v8703 = vpack.c.b16 %v6351, %v6335
        %v8704 = vpack.c.b16 %v6352, %v6336
        %v8705 = vpack.c.b16 %v6353, %v6337
        %v8706 = vpack.c.b16 %v6354, %v6338
        %v8707 = vpack.c.b16 %v6355, %v6339
        %v8708 = vpack.c.b16 %v6356, %v6340
        %v8709 = vpack.c.b16 %v6357, %v6341
        %v8710 = vpack.c.b16 %v6358, %v6342
        %v8711 = vpack.c.b16 %v6359, %v6343
        %v8712 = vpack.c.b16 %v6360, %v6344
        %v8713 = vpack.c.b16 %v6361, %v6345
        %v8714 = vpack.c.b16 %v6362, %v6346
        %v8715 = vpack.c.b16 %v6363, %v6347
        %v8716 = vpack.c.b16 %v6364, %v6348
        %v8717 = vpack.c.b16 %v6365, %v6349
        %v8718 = vpack.c.b16 %v6382, %v6366
        %v8719 = vpack.c.b16 %v6383, %v6367
        %v8720 = vpack.c.b16 %v6384, %v6368
        %v8721 = vpack.c.b16 %v6385, %v6369
        %v8722 = vpack.c.b16 %v6386, %v6370
        %v8723 = vpack.c.b16 %v6387, %v6371
        %v8724 = vpack.c.b16 %v6388, %v6372
        %v8725 = vpack.c.b16 %v6389, %v6373
        %v8726 = vpack.c.b16 %v6390, %v6374
        %v8727 = vpack.c.b16 %v6391, %v6375
        %v8728 = vpack.c.b16 %v6392, %v6376
        %v8729 = vpack.c.b16 %v6393, %v6377
        %v8730 = vpack.c.b16 %v6394, %v6378
        %v8731 = vpack.c.b16 %v6395, %v6379
        %v8732 = vpack.c.b16 %v6396, %v6380
        %v8733 = vpack.c.b16 %v6397, %v6381
        %v8734 = vpack.c.b16 %v6414, %v6398
        %v8735 = vpack.c.b16 %v6415, %v6399
        %v8736 = vpack.c.b16 %v6416, %v6400
        %v8737 = vpack.c.b16 %v6417, %v6401
        %v8738 = vpack.c.b16 %v6418, %v6402
        %v8739 = vpack.c.b16 %v6419, %v6403
        %v8740 = vpack.c.b16 %v6420, %v6404
        %v8741 = vpack.c.b16 %v6421, %v6405
        %v8742 = vpack.c.b16 %v6422, %v6406
        %v8743 = vpack.c.b16 %v6423, %v6407
        %v8744 = vpack.c.b16 %v6424, %v6408
        %v8745 = vpack.c.b16 %v6425, %v6409
        %v8746 = vpack.c.b16 %v6426, %v6410
        %v8747 = vpack.c.b16 %v6427, %v6411
        %v8748 = vpack.c.b16 %v6428, %v6412
        %v8749 = vpack.c.b16 %v6429, %v6413
        %v8750 = vpack.c.b16 %v6446, %v6430
        %v8751 = vpack.c.b16 %v6447, %v6431
        %v8752 = vpack.c.b16 %v6448, %v6432
        %v8753 = vpack.c.b16 %v6449, %v6433
        %v8754 = vpack.c.b16 %v6450, %v6434
        %v8755 = vpack.c.b16 %v6451, %v6435
        %v8756 = vpack.c.b16 %v6452, %v6436
        %v8757 = vpack.c.b16 %v6453, %v6437
        %v8758 = vpack.c.b16 %v6454, %v6438
        %v8759 = vpack.c.b16 %v6455, %v6439
        %v8760 = vpack.c.b16 %v6456, %v6440
        %v8761 = vpack.c.b16 %v6457, %v6441
        %v8762 = vpack.c.b16 %v6458, %v6442
        %v8763 = vpack.c.b16 %v6459, %v6443
        %v8764 = vpack.c.b16 %v6460, %v6444
        %v8765 = vpack.c.b16 %v6461, %v6445
        %v8766 = vpack.c.b16 %v6478, %v6462
        %v8767 = vpack.c.b16 %v6479, %v6463
        %v8768 = vpack.c.b16 %v6480, %v6464
        %v8769 = vpack.c.b16 %v6481, %v6465
        %v8770 = vpack.c.b16 %v6482, %v6466
        %v8771 = vpack.c.b16 %v6483, %v6467
        %v8772 = vpack.c.b16 %v6484, %v6468
        %v8773 = vpack.c.b16 %v6485, %v6469
        %v8774 = vpack.c.b16 %v6486, %v6470
        %v8775 = vpack.c.b16 %v6487, %v6471
        %v8776 = vpack.c.b16 %v6488, %v6472
        %v8777 = vpack.c.b16 %v6489, %v6473
        %v8778 = vpack.c.b16 %v6490, %v6474
        %v8779 = vpack.c.b16 %v6491, %v6475
        %v8780 = vpack.c.b16 %v6492, %v6476
        %v8781 = vpack.c.b16 %v6493, %v6477
        %v8782 = vpack.c.b16 %v6510, %v6494
        %v8783 = vpack.c.b16 %v6511, %v6495
        %v8784 = vpack.c.b16 %v6512, %v6496
        %v8785 = vpack.c.b16 %v6513, %v6497
        %v8786 = vpack.c.b16 %v6514, %v6498
        %v8787 = vpack.c.b16 %v6515, %v6499
        %v8788 = vpack.c.b16 %v6516, %v6500
        %v8789 = vpack.c.b16 %v6517, %v6501
        %v8790 = vpack.c.b16 %v6518, %v6502
        %v8791 = vpack.c.b16 %v6519, %v6503
        %v8792 = vpack.c.b16 %v6520, %v6504
        %v8793 = vpack.c.b16 %v6521, %v6505
        %v8794 = vpack.c.b16 %v6522, %v6506
        %v8795 = vpack.c.b16 %v6523, %v6507
        %v8796 = vpack.c.b16 %v6524, %v6508
        %v8797 = vpack.c.b16 %v6525, %v6509
        %v8798 = vpack.c.b16 %v6542, %v6526
        %v8799 = vpack.c.b16 %v6543, %v6527
        %v8800 = vpack.c.b16 %v6544, %v6528
        %v8801 = vpack.c.b16 %v6545, %v6529
        %v8802 = vpack.c.b16 %v6546, %v6530
        %v8803 = vpack.c.b16 %v6547, %v6531
        %v8804 = vpack.c.b16 %v6548, %v6532
        %v8805 = vpack.c.b16 %v6549, %v6533
        %v8806 = vpack.c.b16 %v6550, %v6534
        %v8807 = vpack.c.b16 %v6551, %v6535
        %v8808 = vpack.c.b16 %v6552, %v6536
        %v8809 = vpack.c.b16 %v6553, %v6537
        %v8810 = vpack.c.b16 %v6554, %v6538
        %v8811 = vpack.c.b16 %v6555, %v6539
        %v8812 = vpack.c.b16 %v6556, %v6540
        %v8813 = vpack.c.b16 %v6557, %v6541
        %v8814 = vpack.c.b16 %v6574, %v6558
        %v8815 = vpack.c.b16 %v6575, %v6559
        %v8816 = vpack.c.b16 %v6576, %v6560
        %v8817 = vpack.c.b16 %v6577, %v6561
        %v8818 = vpack.c.b16 %v6578, %v6562
        %v8819 = vpack.c.b16 %v6579, %v6563
        %v8820 = vpack.c.b16 %v6580, %v6564
        %v8821 = vpack.c.b16 %v6581, %v6565
        %v8822 = vpack.c.b16 %v6582, %v6566
        %v8823 = vpack.c.b16 %v6583, %v6567
        %v8824 = vpack.c.b16 %v6584, %v6568
        %v8825 = vpack.c.b16 %v6585, %v6569
        %v8826 = vpack.c.b16 %v6586, %v6570
        %v8827 = vpack.c.b16 %v6587, %v6571
        %v8828 = vpack.c.b16 %v6588, %v6572
        %v8829 = vpack.c.b16 %v6589, %v6573
        %v8830 = vpack.c.b16 %v6606, %v6590
        %v8831 = vpack.c.b16 %v6607, %v6591
        %v8832 = vpack.c.b16 %v6608, %v6592
        %v8833 = vpack.c.b16 %v6609, %v6593
        %v8834 = vpack.c.b16 %v6610, %v6594
        %v8835 = vpack.c.b16 %v6611, %v6595
        %v8836 = vpack.c.b16 %v6612, %v6596
        %v8837 = vpack.c.b16 %v6613, %v6597
        %v8838 = vpack.c.b16 %v6614, %v6598
        %v8839 = vpack.c.b16 %v6615, %v6599
        %v8840 = vpack.c.b16 %v6616, %v6600
        %v8841 = vpack.c.b16 %v6617, %v6601
        %v8842 = vpack.c.b16 %v6618, %v6602
        %v8843 = vpack.c.b16 %v6619, %v6603
        %v8844 = vpack.c.b16 %v6620, %v6604
        %v8845 = vpack.c.b16 %v6621, %v6605
        %v8846 = vpack.c.b16 %v6638, %v6622
        %v8847 = vpack.c.b16 %v6639, %v6623
        %v8848 = vpack.c.b16 %v6640, %v6624
        %v8849 = vpack.c.b16 %v6641, %v6625
        %v8850 = vpack.c.b16 %v6642, %v6626
        %v8851 = vpack.c.b16 %v6643, %v6627
        %v8852 = vpack.c.b16 %v6644, %v6628
        %v8853 = vpack.c.b16 %v6645, %v6629
        %v8854 = vpack.c.b16 %v6646, %v6630
        %v8855 = vpack.c.b16 %v6647, %v6631
        %v8856 = vpack.c.b16 %v6648, %v6632
        %v8857 = vpack.c.b16 %v6649, %v6633
        %v8858 = vpack.c.b16 %v6650, %v6634
        %v8859 = vpack.c.b16 %v6651, %v6635
        %v8860 = vpack.c.b16 %v6652, %v6636
        %v8861 = vpack.c.b16 %v6653, %v6637
        %v8862 = vpack.c.b16 %v6670, %v6654
        %v8863 = vpack.c.b16 %v6671, %v6655
        %v8864 = vpack.c.b16 %v6672, %v6656
        %v8865 = vpack.c.b16 %v6673, %v6657
        %v8866 = vpack.c.b16 %v6674, %v6658
        %v8867 = vpack.c.b16 %v6675, %v6659
        %v8868 = vpack.c.b16 %v6676, %v6660
        %v8869 = vpack.c.b16 %v6677, %v6661
        %v8870 = vpack.c.b16 %v6678, %v6662
        %v8871 = vpack.c.b16 %v6679, %v6663
        %v8872 = vpack.c.b16 %v6680, %v6664
        %v8873 = vpack.c.b16 %v6681, %v6665
        %v8874 = vpack.c.b16 %v6682, %v6666
        %v8875 = vpack.c.b16 %v6683, %v6667
        %v8876 = vpack.c.b16 %v6684, %v6668
        %v8877 = vpack.c.b16 %v6685, %v6669
        %v8878 = vpack.c.b16 %v6702, %v6686
        %v8879 = vpack.c.b16 %v6703, %v6687
        %v8880 = vpack.c.b16 %v6704, %v6688
        %v8881 = vpack.c.b16 %v6705, %v6689
        %v8882 = vpack.c.b16 %v6706, %v6690
        %v8883 = vpack.c.b16 %v6707, %v6691
        %v8884 = vpack.c.b16 %v6708, %v6692
        %v8885 = vpack.c.b16 %v6709, %v6693
        %v8886 = vpack.c.b16 %v6710, %v6694
        %v8887 = vpack.c.b16 %v6711, %v6695
        %v8888 = vpack.c.b16 %v6712, %v6696
        %v8889 = vpack.c.b16 %v6713, %v6697
        %v8890 = vpack.c.b16 %v6714, %v6698
        %v8891 = vpack.c.b16 %v6715, %v6699
        %v8892 = vpack.c.b16 %v6716, %v6700
        %v8893 = vpack.c.b16 %v6717, %v6701
        %v8894 = vpack.c.b16 %v6734, %v6718
        %v8895 = vpack.c.b16 %v6735, %v6719
        %v8896 = vpack.c.b16 %v6736, %v6720
        %v8897 = vpack.c.b16 %v6737, %v6721
        %v8898 = vpack.c.b16 %v6738, %v6722
        %v8899 = vpack.c.b16 %v6739, %v6723
        %v8900 = vpack.c.b16 %v6740, %v6724
        %v8901 = vpack.c.b16 %v6741, %v6725
        %v8902 = vpack.c.b16 %v6742, %v6726
        %v8903 = vpack.c.b16 %v6743, %v6727
        %v8904 = vpack.c.b16 %v6744, %v6728
        %v8905 = vpack.c.b16 %v6745, %v6729
        %v8906 = vpack.c.b16 %v6746, %v6730
        %v8907 = vpack.c.b16 %v6747, %v6731
        %v8908 = vpack.c.b16 %v6748, %v6732
        %v8909 = vpack.c.b16 %v6749, %v6733
        %v8910 = vpack.c.b16 %v6766, %v6750
        %v8911 = vpack.c.b16 %v6767, %v6751
        %v8912 = vpack.c.b16 %v6768, %v6752
        %v8913 = vpack.c.b16 %v6769, %v6753
        %v8914 = vpack.c.b16 %v6770, %v6754
        %v8915 = vpack.c.b16 %v6771, %v6755
        %v8916 = vpack.c.b16 %v6772, %v6756
        %v8917 = vpack.c.b16 %v6773, %v6757
        %v8918 = vpack.c.b16 %v6774, %v6758
        %v8919 = vpack.c.b16 %v6775, %v6759
        %v8920 = vpack.c.b16 %v6776, %v6760
        %v8921 = vpack.c.b16 %v6777, %v6761
        %v8922 = vpack.c.b16 %v6778, %v6762
        %v8923 = vpack.c.b16 %v6779, %v6763
        %v8924 = vpack.c.b16 %v6780, %v6764
        %v8925 = vpack.c.b16 %v6781, %v6765
        %v8926 = vpack.c.b16 %v6798, %v6782
        %v8927 = vpack.c.b16 %v6799, %v6783
        %v8928 = vpack.c.b16 %v6800, %v6784
        %v8929 = vpack.c.b16 %v6801, %v6785
        %v8930 = vpack.c.b16 %v6802, %v6786
        %v8931 = vpack.c.b16 %v6803, %v6787
        %v8932 = vpack.c.b16 %v6804, %v6788
        %v8933 = vpack.c.b16 %v6805, %v6789
        %v8934 = vpack.c.b16 %v6806, %v6790
        %v8935 = vpack.c.b16 %v6807, %v6791
        %v8936 = vpack.c.b16 %v6808, %v6792
        %v8937 = vpack.c.b16 %v6809, %v6793
        %v8938 = vpack.c.b16 %v6810, %v6794
        %v8939 = vpack.c.b16 %v6811, %v6795
        %v8940 = vpack.c.b16 %v6812, %v6796
        %v8941 = vpack.c.b16 %v6813, %v6797
        %v8942 = vpack.c.b16 %v6830, %v6814
        %v8943 = vpack.c.b16 %v6831, %v6815
        %v8944 = vpack.c.b16 %v6832, %v6816
        %v8945 = vpack.c.b16 %v6833, %v6817
        %v8946 = vpack.c.b16 %v6834, %v6818
        %v8947 = vpack.c.b16 %v6835, %v6819
        %v8948 = vpack.c.b16 %v6836, %v6820
        %v8949 = vpack.c.b16 %v6837, %v6821
        %v8950 = vpack.c.b16 %v6838, %v6822
        %v8951 = vpack.c.b16 %v6839, %v6823
        %v8952 = vpack.c.b16 %v6840, %v6824
        %v8953 = vpack.c.b16 %v6841, %v6825
        %v8954 = vpack.c.b16 %v6842, %v6826
        %v8955 = vpack.c.b16 %v6843, %v6827
        %v8956 = vpack.c.b16 %v6844, %v6828
        %v8957 = vpack.c.b16 %v6845, %v6829
        %v8958 = vpack.c.b16 %v6862, %v6846
        %v8959 = vpack.c.b16 %v6863, %v6847
        %v8960 = vpack.c.b16 %v6864, %v6848
        %v8961 = vpack.c.b16 %v6865, %v6849
        %v8962 = vpack.c.b16 %v6866, %v6850
        %v8963 = vpack.c.b16 %v6867, %v6851
        %v8964 = vpack.c.b16 %v6868, %v6852
        %v8965 = vpack.c.b16 %v6869, %v6853
        %v8966 = vpack.c.b16 %v6870, %v6854
        %v8967 = vpack.c.b16 %v6871, %v6855
        %v8968 = vpack.c.b16 %v6872, %v6856
        %v8969 = vpack.c.b16 %v6873, %v6857
        %v8970 = vpack.c.b16 %v6874, %v6858
        %v8971 = vpack.c.b16 %v6875, %v6859
        %v8972 = vpack.c.b16 %v6876, %v6860
        %v8973 = vpack.c.b16 %v6877, %v6861
        %v8974 = vpack.c.b16 %v6894, %v6878
        %v8975 = vpack.c.b16 %v6895, %v6879
        %v8976 = vpack.c.b16 %v6896, %v6880
        %v8977 = vpack.c.b16 %v6897, %v6881
        %v8978 = vpack.c.b16 %v6898, %v6882
        %v8979 = vpack.c.b16 %v6899, %v6883
        %v8980 = vpack.c.b16 %v6900, %v6884
        %v8981 = vpack.c.b16 %v6901, %v6885
        %v8982 = vpack.c.b16 %v6902, %v6886
        %v8983 = vpack.c.b16 %v6903, %v6887
        %v8984 = vpack.c.b16 %v6904, %v6888
        %v8985 = vpack.c.b16 %v6905, %v6889
        %v8986 = vpack.c.b16 %v6906, %v6890
        %v8987 = vpack.c.b16 %v6907, %v6891
        %v8988 = vpack.c.b16 %v6908, %v6892
        %v8989 = vpack.c.b16 %v6909, %v6893
        %v8990 = vpack.c.b16 %v6926, %v6910
        %v8991 = vpack.c.b16 %v6927, %v6911
        %v8992 = vpack.c.b16 %v6928, %v6912
        %v8993 = vpack.c.b16 %v6929, %v6913
        %v8994 = vpack.c.b16 %v6930, %v6914
        %v8995 = vpack.c.b16 %v6931, %v6915
        %v8996 = vpack.c.b16 %v6932, %v6916
        %v8997 = vpack.c.b16 %v6933, %v6917
        %v8998 = vpack.c.b16 %v6934, %v6918
        %v8999 = vpack.c.b16 %v6935, %v6919
        %v9000 = vpack.c.b16 %v6936, %v6920
        %v9001 = vpack.c.b16 %v6937, %v6921
        %v9002 = vpack.c.b16 %v6938, %v6922
        %v9003 = vpack.c.b16 %v6939, %v6923
        %v9004 = vpack.c.b16 %v6940, %v6924
        %v9005 = vpack.c.b16 %v6941, %v6925
        %v9006 = vpack.c.b16 %v6958, %v6942
        %v9007 = vpack.c.b16 %v6959, %v6943
        %v9008 = vpack.c.b16 %v6960, %v6944
        %v9009 = vpack.c.b16 %v6961, %v6945
        %v9010 = vpack.c.b16 %v6962, %v6946
        %v9011 = vpack.c.b16 %v6963, %v6947
        %v9012 = vpack.c.b16 %v6964, %v6948
        %v9013 = vpack.c.b16 %v6965, %v6949
        %v9014 = vpack.c.b16 %v6966, %v6950
        %v9015 = vpack.c.b16 %v6967, %v6951
        %v9016 = vpack.c.b16 %v6968, %v6952
        %v9017 = vpack.c.b16 %v6969, %v6953
        %v9018 = vpack.c.b16 %v6970, %v6954
        %v9019 = vpack.c.b16 %v6971, %v6955
        %v9020 = vpack.c.b16 %v6972, %v6956
        %v9021 = vpack.c.b16 %v6973, %v6957
        %v9022 = vpack.c.b16 %v6990, %v6974
        %v9023 = vpack.c.b16 %v6991, %v6975
        %v9024 = vpack.c.b16 %v6992, %v6976
        %v9025 = vpack.c.b16 %v6993, %v6977
        %v9026 = vpack.c.b16 %v6994, %v6978
        %v9027 = vpack.c.b16 %v6995, %v6979
        %v9028 = vpack.c.b16 %v6996, %v6980
        %v9029 = vpack.c.b16 %v6997, %v6981
        %v9030 = vpack.c.b16 %v6998, %v6982
        %v9031 = vpack.c.b16 %v6999, %v6983
        %v9032 = vpack.c.b16 %v7000, %v6984
        %v9033 = vpack.c.b16 %v7001, %v6985
        %v9034 = vpack.c.b16 %v7002, %v6986
        %v9035 = vpack.c.b16 %v7003, %v6987
        %v9036 = vpack.c.b16 %v7004, %v6988
        %v9037 = vpack.c.b16 %v7005, %v6989
        %v9038 = vpack.c.b16 %v7022, %v7006
        %v9039 = vpack.c.b16 %v7023, %v7007
        %v9040 = vpack.c.b16 %v7024, %v7008
        %v9041 = vpack.c.b16 %v7025, %v7009
        %v9042 = vpack.c.b16 %v7026, %v7010
        %v9043 = vpack.c.b16 %v7027, %v7011
        %v9044 = vpack.c.b16 %v7028, %v7012
        %v9045 = vpack.c.b16 %v7029, %v7013
        %v9046 = vpack.c.b16 %v7030, %v7014
        %v9047 = vpack.c.b16 %v7031, %v7015
        %v9048 = vpack.c.b16 %v7032, %v7016
        %v9049 = vpack.c.b16 %v7033, %v7017
        %v9050 = vpack.c.b16 %v7034, %v7018
        %v9051 = vpack.c.b16 %v7035, %v7019
        %v9052 = vpack.c.b16 %v7036, %v7020
        %v9053 = vpack.c.b16 %v7037, %v7021
        %v9054 = vpack.c.b16 %v7054, %v7038
        %v9055 = vpack.c.b16 %v7055, %v7039
        %v9056 = vpack.c.b16 %v7056, %v7040
        %v9057 = vpack.c.b16 %v7057, %v7041
        %v9058 = vpack.c.b16 %v7058, %v7042
        %v9059 = vpack.c.b16 %v7059, %v7043
        %v9060 = vpack.c.b16 %v7060, %v7044
        %v9061 = vpack.c.b16 %v7061, %v7045
        %v9062 = vpack.c.b16 %v7062, %v7046
        %v9063 = vpack.c.b16 %v7063, %v7047
        %v9064 = vpack.c.b16 %v7064, %v7048
        %v9065 = vpack.c.b16 %v7065, %v7049
        %v9066 = vpack.c.b16 %v7066, %v7050
        %v9067 = vpack.c.b16 %v7067, %v7051
        %v9068 = vpack.c.b16 %v7068, %v7052
        %v9069 = vpack.c.b16 %v7069, %v7053
        %v9070 = vpack.c.b16 %v7086, %v7070
        %v9071 = vpack.c.b16 %v7087, %v7071
        %v9072 = vpack.c.b16 %v7088, %v7072
        %v9073 = vpack.c.b16 %v7089, %v7073
        %v9074 = vpack.c.b16 %v7090, %v7074
        %v9075 = vpack.c.b16 %v7091, %v7075
        %v9076 = vpack.c.b16 %v7092, %v7076
        %v9077 = vpack.c.b16 %v7093, %v7077
        %v9078 = vpack.c.b16 %v7094, %v7078
        %v9079 = vpack.c.b16 %v7095, %v7079
        %v9080 = vpack.c.b16 %v7096, %v7080
        %v9081 = vpack.c.b16 %v7097, %v7081
        %v9082 = vpack.c.b16 %v7098, %v7082
        %v9083 = vpack.c.b16 %v7099, %v7083
        %v9084 = vpack.c.b16 %v7100, %v7084
        %v9085 = vpack.c.b16 %v7101, %v7085
        %v9086 = vpack.c.b16 %v7118, %v7102
        %v9087 = vpack.c.b16 %v7119, %v7103
        %v9088 = vpack.c.b16 %v7120, %v7104
        %v9089 = vpack.c.b16 %v7121, %v7105
        %v9090 = vpack.c.b16 %v7122, %v7106
        %v9091 = vpack.c.b16 %v7123, %v7107
        %v9092 = vpack.c.b16 %v7124, %v7108
        %v9093 = vpack.c.b16 %v7125, %v7109
        %v9094 = vpack.c.b16 %v7126, %v7110
        %v9095 = vpack.c.b16 %v7127, %v7111
        %v9096 = vpack.c.b16 %v7128, %v7112
        %v9097 = vpack.c.b16 %v7129, %v7113
        %v9098 = vpack.c.b16 %v7130, %v7114
        %v9099 = vpack.c.b16 %v7131, %v7115
        %v9100 = vpack.c.b16 %v7132, %v7116
        %v9101 = vpack.c.b16 %v7133, %v7117
        %v9102 = vpack.c.b16 %v7150, %v7134
        %v9103 = vpack.c.b16 %v7151, %v7135
        %v9104 = vpack.c.b16 %v7152, %v7136
        %v9105 = vpack.c.b16 %v7153, %v7137
        %v9106 = vpack.c.b16 %v7154, %v7138
        %v9107 = vpack.c.b16 %v7155, %v7139
        %v9108 = vpack.c.b16 %v7156, %v7140
        %v9109 = vpack.c.b16 %v7157, %v7141
        %v9110 = vpack.c.b16 %v7158, %v7142
        %v9111 = vpack.c.b16 %v7159, %v7143
        %v9112 = vpack.c.b16 %v7160, %v7144
        %v9113 = vpack.c.b16 %v7161, %v7145
        %v9114 = vpack.c.b16 %v7162, %v7146
        %v9115 = vpack.c.b16 %v7163, %v7147
        %v9116 = vpack.c.b16 %v7164, %v7148
        %v9117 = vpack.c.b16 %v7165, %v7149
        %v9118 = vpack.c.b16 %v7182, %v7166
        %v9119 = vpack.c.b16 %v7183, %v7167
        %v9120 = vpack.c.b16 %v7184, %v7168
        %v9121 = vpack.c.b16 %v7185, %v7169
        %v9122 = vpack.c.b16 %v7186, %v7170
        %v9123 = vpack.c.b16 %v7187, %v7171
        %v9124 = vpack.c.b16 %v7188, %v7172
        %v9125 = vpack.c.b16 %v7189, %v7173
        %v9126 = vpack.c.b16 %v7190, %v7174
        %v9127 = vpack.c.b16 %v7191, %v7175
        %v9128 = vpack.c.b16 %v7192, %v7176
        %v9129 = vpack.c.b16 %v7193, %v7177
        %v9130 = vpack.c.b16 %v7194, %v7178
        %v9131 = vpack.c.b16 %v7195, %v7179
        %v9132 = vpack.c.b16 %v7196, %v7180
        %v9133 = vpack.c.b16 %v7197, %v7181
        %v9134 = vpack.c.b16 %v7214, %v7198
        %v9135 = vpack.c.b16 %v7215, %v7199
        %v9136 = vpack.c.b16 %v7216, %v7200
        %v9137 = vpack.c.b16 %v7217, %v7201
        %v9138 = vpack.c.b16 %v7218, %v7202
        %v9139 = vpack.c.b16 %v7219, %v7203
        %v9140 = vpack.c.b16 %v7220, %v7204
        %v9141 = vpack.c.b16 %v7221, %v7205
        %v9142 = vpack.c.b16 %v7222, %v7206
        %v9143 = vpack.c.b16 %v7223, %v7207
        %v9144 = vpack.c.b16 %v7224, %v7208
        %v9145 = vpack.c.b16 %v7225, %v7209
        %v9146 = vpack.c.b16 %v7226, %v7210
        %v9147 = vpack.c.b16 %v7227, %v7211
        %v9148 = vpack.c.b16 %v7228, %v7212
        %v9149 = vpack.c.b16 %v7229, %v7213
        %v9150 = vpack.c.b16 %v7246, %v7230
        %v9151 = vpack.c.b16 %v7247, %v7231
        %v9152 = vpack.c.b16 %v7248, %v7232
        %v9153 = vpack.c.b16 %v7249, %v7233
        %v9154 = vpack.c.b16 %v7250, %v7234
        %v9155 = vpack.c.b16 %v7251, %v7235
        %v9156 = vpack.c.b16 %v7252, %v7236
        %v9157 = vpack.c.b16 %v7253, %v7237
        %v9158 = vpack.c.b16 %v7254, %v7238
        %v9159 = vpack.c.b16 %v7255, %v7239
        %v9160 = vpack.c.b16 %v7256, %v7240
        %v9161 = vpack.c.b16 %v7257, %v7241
        %v9162 = vpack.c.b16 %v7258, %v7242
        %v9163 = vpack.c.b16 %v7259, %v7243
        %v9164 = vpack.c.b16 %v7260, %v7244
        %v9165 = vpack.c.b16 %v7261, %v7245
        %v9166 = vpack.c.b16 %v7278, %v7262
        %v9167 = vpack.c.b16 %v7279, %v7263
        %v9168 = vpack.c.b16 %v7280, %v7264
        %v9169 = vpack.c.b16 %v7281, %v7265
        %v9170 = vpack.c.b16 %v7282, %v7266
        %v9171 = vpack.c.b16 %v7283, %v7267
        %v9172 = vpack.c.b16 %v7284, %v7268
        %v9173 = vpack.c.b16 %v7285, %v7269
        %v9174 = vpack.c.b16 %v7286, %v7270
        %v9175 = vpack.c.b16 %v7287, %v7271
        %v9176 = vpack.c.b16 %v7288, %v7272
        %v9177 = vpack.c.b16 %v7289, %v7273
        %v9178 = vpack.c.b16 %v7290, %v7274
        %v9179 = vpack.c.b16 %v7291, %v7275
        %v9180 = vpack.c.b16 %v7292, %v7276
        %v9181 = vpack.c.b16 %v7293, %v7277
        %v9182 = vpack.c.b16 %v7310, %v7294
        %v9183 = vpack.c.b16 %v7311, %v7295
        %v9184 = vpack.c.b16 %v7312, %v7296
        %v9185 = vpack.c.b16 %v7313, %v7297
        %v9186 = vpack.c.b16 %v7314, %v7298
        %v9187 = vpack.c.b16 %v7315, %v7299
        %v9188 = vpack.c.b16 %v7316, %v7300
        %v9189 = vpack.c.b16 %v7317, %v7301
        %v9190 = vpack.c.b16 %v7318, %v7302
        %v9191 = vpack.c.b16 %v7319, %v7303
        %v9192 = vpack.c.b16 %v7320, %v7304
        %v9193 = vpack.c.b16 %v7321, %v7305
        %v9194 = vpack.c.b16 %v7322, %v7306
        %v9195 = vpack.c.b16 %v7323, %v7307
        %v9196 = vpack.c.b16 %v7324, %v7308
        %v9197 = vpack.c.b16 %v7325, %v7309
        %v9198 = vpack.c.b16 %v7342, %v7326
        %v9199 = vpack.c.b16 %v7343, %v7327
        %v9200 = vpack.c.b16 %v7344, %v7328
        %v9201 = vpack.c.b16 %v7345, %v7329
        %v9202 = vpack.c.b16 %v7346, %v7330
        %v9203 = vpack.c.b16 %v7347, %v7331
        %v9204 = vpack.c.b16 %v7348, %v7332
        %v9205 = vpack.c.b16 %v7349, %v7333
        %v9206 = vpack.c.b16 %v7350, %v7334
        %v9207 = vpack.c.b16 %v7351, %v7335
        %v9208 = vpack.c.b16 %v7352, %v7336
        %v9209 = vpack.c.b16 %v7353, %v7337
        %v9210 = vpack.c.b16 %v7354, %v7338
        %v9211 = vpack.c.b16 %v7355, %v7339
        %v9212 = vpack.c.b16 %v7356, %v7340
        %v9213 = vpack.c.b16 %v7357, %v7341
        %v9214 = vpack.c.b16 %v7374, %v7358
        %v9215 = vpack.c.b16 %v7375, %v7359
        %v9216 = vpack.c.b16 %v7376, %v7360
        %v9217 = vpack.c.b16 %v7377, %v7361
        %v9218 = vpack.c.b16 %v7378, %v7362
        %v9219 = vpack.c.b16 %v7379, %v7363
        %v9220 = vpack.c.b16 %v7380, %v7364
        %v9221 = vpack.c.b16 %v7381, %v7365
        %v9222 = vpack.c.b16 %v7382, %v7366
        %v9223 = vpack.c.b16 %v7383, %v7367
        %v9224 = vpack.c.b16 %v7384, %v7368
        %v9225 = vpack.c.b16 %v7385, %v7369
        %v9226 = vpack.c.b16 %v7386, %v7370
        %v9227 = vpack.c.b16 %v7387, %v7371
        %v9228 = vpack.c.b16 %v7388, %v7372
        %v9229 = vpack.c.b16 %v7389, %v7373
        %v9230 = vpack.c.b16 %v7406, %v7390
        %v9231 = vpack.c.b16 %v7407, %v7391
        %v9232 = vpack.c.b16 %v7408, %v7392
        %v9233 = vpack.c.b16 %v7409, %v7393
        %v9234 = vpack.c.b16 %v7410, %v7394
        %v9235 = vpack.c.b16 %v7411, %v7395
        %v9236 = vpack.c.b16 %v7412, %v7396
        %v9237 = vpack.c.b16 %v7413, %v7397
        %v9238 = vpack.c.b16 %v7414, %v7398
        %v9239 = vpack.c.b16 %v7415, %v7399
        %v9240 = vpack.c.b16 %v7416, %v7400
        %v9241 = vpack.c.b16 %v7417, %v7401
        %v9242 = vpack.c.b16 %v7418, %v7402
        %v9243 = vpack.c.b16 %v7419, %v7403
        %v9244 = vpack.c.b16 %v7420, %v7404
        %v9245 = vpack.c.b16 %v7421, %v7405
        %v9246 = vpack.c.b16 %v7438, %v7422
        %v9247 = vpack.c.b16 %v7439, %v7423
        %v9248 = vpack.c.b16 %v7440, %v7424
        %v9249 = vpack.c.b16 %v7441, %v7425
        %v9250 = vpack.c.b16 %v7442, %v7426
        %v9251 = vpack.c.b16 %v7443, %v7427
        %v9252 = vpack.c.b16 %v7444, %v7428
        %v9253 = vpack.c.b16 %v7445, %v7429
        %v9254 = vpack.c.b16 %v7446, %v7430
        %v9255 = vpack.c.b16 %v7447, %v7431
        %v9256 = vpack.c.b16 %v7448, %v7432
        %v9257 = vpack.c.b16 %v7449, %v7433
        %v9258 = vpack.c.b16 %v7450, %v7434
        %v9259 = vpack.c.b16 %v7451, %v7435
        %v9260 = vpack.c.b16 %v7452, %v7436
        %v9261 = vpack.c.b16 %v7453, %v7437
        %v9262 = vpack.c.b16 %v7470, %v7454
        %v9263 = vpack.c.b16 %v7471, %v7455
        %v9264 = vpack.c.b16 %v7472, %v7456
        %v9265 = vpack.c.b16 %v7473, %v7457
        %v9266 = vpack.c.b16 %v7474, %v7458
        %v9267 = vpack.c.b16 %v7475, %v7459
        %v9268 = vpack.c.b16 %v7476, %v7460
        %v9269 = vpack.c.b16 %v7477, %v7461
        %v9270 = vpack.c.b16 %v7478, %v7462
        %v9271 = vpack.c.b16 %v7479, %v7463
        %v9272 = vpack.c.b16 %v7480, %v7464
        %v9273 = vpack.c.b16 %v7481, %v7465
        %v9274 = vpack.c.b16 %v7482, %v7466
        %v9275 = vpack.c.b16 %v7483, %v7467
        %v9276 = vpack.c.b16 %v7484, %v7468
        %v9277 = vpack.c.b16 %v7485, %v7469
        %11070 = vmatprep.subr.bf16.mxu0 %v7599
        %11071 = vmatpush1.bf16.msra.mxu0 %v7598
        %11072 = vmatprep.subr.bf16.mxu0 %v7583
        %11073 = vmatpush1.bf16.msra.mxu0 %v7582
        %11074 = vmatprep.subr.bf16.mxu0 %v7567
        %11075 = vmatpush1.bf16.msra.mxu0 %v7566
        %11076 = vmatprep.subr.bf16.mxu0 %v7551
        %11077 = vmatpush1.bf16.msra.mxu0 %v7550
        %11078 = vmatprep.subr.bf16.mxu0 %v7535
        %11079 = vmatpush1.bf16.msra.mxu0 %v7534
        %11080 = vmatprep.subr.bf16.mxu0 %v7519
        %11081 = vmatpush1.bf16.msra.mxu0 %v7518
        %11082 = vmatprep.subr.bf16.mxu0 %v7503
        %11083 = vmatpush1.bf16.msra.mxu0 %v7502
        %11084 = vmatprep.subr.bf16.mxu0 %v7487
        %11085 = vmatpush1.bf16.msra.mxu0 %v7486
        %11086 = vmatprep.subr.bf16.mxu0 %v7727
        %11087 = vmatpush2.bf16.msra.mxu0 %v7726
        %11088 = vmatprep.subr.bf16.mxu0 %v7711
        %11089 = vmatpush2.bf16.msra.mxu0 %v7710
        %11090 = vmatprep.subr.bf16.mxu0 %v7695
        %11091 = vmatpush2.bf16.msra.mxu0 %v7694
        %11092 = vmatprep.subr.bf16.mxu0 %v7679
        %11093 = vmatpush2.bf16.msra.mxu0 %v7678
        %11094 = vmatprep.subr.bf16.mxu0 %v7663
        %11095 = vmatpush2.bf16.msra.mxu0 %v7662
        %11096 = vmatprep.subr.bf16.mxu0 %v7647
        %11097 = vmatpush2.bf16.msra.mxu0 %v7646
        %11098 = vmatprep.subr.bf16.mxu0 %v7631
        %11099 = vmatpush2.bf16.msra.mxu0 %v7630
        %11100 = vmatprep.subr.bf16.mxu0 %v7615
        %11101 = vmatpush2.bf16.msra.mxu0 %v7614
        %11102 = vmatprep.mubr.bf16.mxu0 %v2083
        %11103 = vmatmul.mubr.bf16.gmra.mxu0 %v2082
        %v11104 = vpop.f32.mrf.mxu0
        %v11105 = vadd.f32 0.0, %v11104
        %v11106 = vpop.f32.mrf.mxu0
        %v11107 = vadd.f32 0.0, %v11106
        %v11108 = vpop.f32.mrf.mxu0
        %v11109 = vpop.f32.mrf.mxu0
        %11110 = vdwg.mxu0
        %11111 = vmatprep.subr.bf16.mxu0 %v7855
        %11112 = vmatpush1.bf16.msra.mxu0 %v7854
        %11113 = vmatprep.subr.bf16.mxu0 %v7839
        %11114 = vmatpush1.bf16.msra.mxu0 %v7838
        %11115 = vmatprep.subr.bf16.mxu0 %v7823
        %11116 = vmatpush1.bf16.msra.mxu0 %v7822
        %11117 = vmatprep.subr.bf16.mxu0 %v7807
        %11118 = vmatpush1.bf16.msra.mxu0 %v7806
        %11119 = vmatprep.subr.bf16.mxu0 %v7791
        %11120 = vmatpush1.bf16.msra.mxu0 %v7790
        %11121 = vmatprep.subr.bf16.mxu0 %v7775
        %11122 = vmatpush1.bf16.msra.mxu0 %v7774
        %11123 = vmatprep.subr.bf16.mxu0 %v7759
        %11124 = vmatpush1.bf16.msra.mxu0 %v7758
        %11125 = vmatprep.subr.bf16.mxu0 %v7743
        %11126 = vmatpush1.bf16.msra.mxu0 %v7742
        %11127 = vmatprep.subr.bf16.mxu0 %v7983
        %11128 = vmatpush2.bf16.msra.mxu0 %v7982
        %11129 = vmatprep.subr.bf16.mxu0 %v7967
        %11130 = vmatpush2.bf16.msra.mxu0 %v7966
        %11131 = vmatprep.subr.bf16.mxu0 %v7951
        %11132 = vmatpush2.bf16.msra.mxu0 %v7950
        %11133 = vmatprep.subr.bf16.mxu0 %v7935
        %11134 = vmatpush2.bf16.msra.mxu0 %v7934
        %11135 = vmatprep.subr.bf16.mxu0 %v7919
        %11136 = vmatpush2.bf16.msra.mxu0 %v7918
        %11137 = vmatprep.subr.bf16.mxu0 %v7903
        %11138 = vmatpush2.bf16.msra.mxu0 %v7902
        %11139 = vmatprep.subr.bf16.mxu0 %v7887
        %11140 = vmatpush2.bf16.msra.mxu0 %v7886
        %11141 = vmatprep.subr.bf16.mxu0 %v7871
        %11142 = vmatpush2.bf16.msra.mxu0 %v7870
        %11143 = vmatprep.mubr.bf16.mxu0 %v2085
        %11144 = vmatmul.mubr.bf16.gmra.mxu0 %v2084
        %v11145 = vpop.f32.mrf.mxu0
        %v11146 = vadd.f32 %v11105, %v11145
        %v11147 = vpop.f32.mrf.mxu0
        %v11148 = vadd.f32 %v11107, %v11147
        %v11149 = vpop.f32.mrf.mxu0
        %v11150 = vpop.f32.mrf.mxu0
        %11151 = vdwg.mxu0
        %11152 = vmatprep.subr.bf16.mxu0 %v8111
        %11153 = vmatpush1.bf16.msra.mxu0 %v8110
        %11154 = vmatprep.subr.bf16.mxu0 %v8095
        %11155 = vmatpush1.bf16.msra.mxu0 %v8094
        %11156 = vmatprep.subr.bf16.mxu0 %v8079
        %11157 = vmatpush1.bf16.msra.mxu0 %v8078
        %11158 = vmatprep.subr.bf16.mxu0 %v8063
        %11159 = vmatpush1.bf16.msra.mxu0 %v8062
        %11160 = vmatprep.subr.bf16.mxu0 %v8047
        %11161 = vmatpush1.bf16.msra.mxu0 %v8046
        %11162 = vmatprep.subr.bf16.mxu0 %v8031
        %11163 = vmatpush1.bf16.msra.mxu0 %v8030
        %11164 = vmatprep.subr.bf16.mxu0 %v8015
        %11165 = vmatpush1.bf16.msra.mxu0 %v8014
        %11166 = vmatprep.subr.bf16.mxu0 %v7999
        %11167 = vmatpush1.bf16.msra.mxu0 %v7998
        %11168 = vmatprep.subr.bf16.mxu0 %v8239
        %11169 = vmatpush2.bf16.msra.mxu0 %v8238
        %11170 = vmatprep.subr.bf16.mxu0 %v8223
        %11171 = vmatpush2.bf16.msra.mxu0 %v8222
        %11172 = vmatprep.subr.bf16.mxu0 %v8207
        %11173 = vmatpush2.bf16.msra.mxu0 %v8206
        %11174 = vmatprep.subr.bf16.mxu0 %v8191
        %11175 = vmatpush2.bf16.msra.mxu0 %v8190
        %11176 = vmatprep.subr.bf16.mxu0 %v8175
        %11177 = vmatpush2.bf16.msra.mxu0 %v8174
        %11178 = vmatprep.subr.bf16.mxu0 %v8159
        %11179 = vmatpush2.bf16.msra.mxu0 %v8158
        %11180 = vmatprep.subr.bf16.mxu0 %v8143
        %11181 = vmatpush2.bf16.msra.mxu0 %v8142
        %11182 = vmatprep.subr.bf16.mxu0 %v8127
        %11183 = vmatpush2.bf16.msra.mxu0 %v8126
        %11184 = vmatprep.mubr.bf16.mxu0 %v2087
        %11185 = vmatmul.mubr.bf16.gmra.mxu0 %v2086
        %v11186 = vpop.f32.mrf.mxu0
        %v11187 = vadd.f32 %v11146, %v11186
        %v11188 = vpop.f32.mrf.mxu0
        %v11189 = vadd.f32 %v11148, %v11188
        %v11190 = vpop.f32.mrf.mxu0
        %v11191 = vpop.f32.mrf.mxu0
        %11192 = vdwg.mxu0
        %11193 = vmatprep.subr.bf16.mxu0 %v8367
        %11194 = vmatpush1.bf16.msra.mxu0 %v8366
        %11195 = vmatprep.subr.bf16.mxu0 %v8351
        %11196 = vmatpush1.bf16.msra.mxu0 %v8350
        %11197 = vmatprep.subr.bf16.mxu0 %v8335
        %11198 = vmatpush1.bf16.msra.mxu0 %v8334
        %11199 = vmatprep.subr.bf16.mxu0 %v8319
        %11200 = vmatpush1.bf16.msra.mxu0 %v8318
        %11201 = vmatprep.subr.bf16.mxu0 %v8303
        %11202 = vmatpush1.bf16.msra.mxu0 %v8302
        %11203 = vmatprep.subr.bf16.mxu0 %v8287
        %11204 = vmatpush1.bf16.msra.mxu0 %v8286
        %11205 = vmatprep.subr.bf16.mxu0 %v8271
        %11206 = vmatpush1.bf16.msra.mxu0 %v8270
        %11207 = vmatprep.subr.bf16.mxu0 %v8255
        %11208 = vmatpush1.bf16.msra.mxu0 %v8254
        %11209 = vmatprep.subr.bf16.mxu0 %v8495
        %11210 = vmatpush2.bf16.msra.mxu0 %v8494
        %11211 = vmatprep.subr.bf16.mxu0 %v8479
        %11212 = vmatpush2.bf16.msra.mxu0 %v8478
        %11213 = vmatprep.subr.bf16.mxu0 %v8463
        %11214 = vmatpush2.bf16.msra.mxu0 %v8462
        %11215 = vmatprep.subr.bf16.mxu0 %v8447
        %11216 = vmatpush2.bf16.msra.mxu0 %v8446
        %11217 = vmatprep.subr.bf16.mxu0 %v8431
        %11218 = vmatpush2.bf16.msra.mxu0 %v8430
        %11219 = vmatprep.subr.bf16.mxu0 %v8415
        %11220 = vmatpush2.bf16.msra.mxu0 %v8414
        %11221 = vmatprep.subr.bf16.mxu0 %v8399
        %11222 = vmatpush2.bf16.msra.mxu0 %v8398
        %11223 = vmatprep.subr.bf16.mxu0 %v8383
        %11224 = vmatpush2.bf16.msra.mxu0 %v8382
        %11225 = vmatprep.mubr.bf16.mxu0 %v2089
        %11226 = vmatmul.mubr.bf16.gmra.mxu0 %v2088
        %v11227 = vpop.f32.mrf.mxu0
        %v11228 = vadd.f32 %v11187, %v11227
        %v11229 = vpop.f32.mrf.mxu0
        %v11230 = vadd.f32 %v11189, %v11229
        %v11231 = vpop.f32.mrf.mxu0
        %v11232 = vpop.f32.mrf.mxu0
        %11233 = vdwg.mxu0
        %11234 = vmatprep.subr.bf16.mxu0 %v8623
        %11235 = vmatpush1.bf16.msra.mxu0 %v8622
        %11236 = vmatprep.subr.bf16.mxu0 %v8607
        %11237 = vmatpush1.bf16.msra.mxu0 %v8606
        %11238 = vmatprep.subr.bf16.mxu0 %v8591
        %11239 = vmatpush1.bf16.msra.mxu0 %v8590
        %11240 = vmatprep.subr.bf16.mxu0 %v8575
        %11241 = vmatpush1.bf16.msra.mxu0 %v8574
        %11242 = vmatprep.subr.bf16.mxu0 %v8559
        %11243 = vmatpush1.bf16.msra.mxu0 %v8558
        %11244 = vmatprep.subr.bf16.mxu0 %v8543
        %11245 = vmatpush1.bf16.msra.mxu0 %v8542
        %11246 = vmatprep.subr.bf16.mxu0 %v8527
        %11247 = vmatpush1.bf16.msra.mxu0 %v8526
        %11248 = vmatprep.subr.bf16.mxu0 %v8511
        %11249 = vmatpush1.bf16.msra.mxu0 %v8510
        %11250 = vmatprep.subr.bf16.mxu0 %v8751
        %11251 = vmatpush2.bf16.msra.mxu0 %v8750
        %11252 = vmatprep.subr.bf16.mxu0 %v8735
        %11253 = vmatpush2.bf16.msra.mxu0 %v8734
        %11254 = vmatprep.subr.bf16.mxu0 %v8719
        %11255 = vmatpush2.bf16.msra.mxu0 %v8718
        %11256 = vmatprep.subr.bf16.mxu0 %v8703
        %11257 = vmatpush2.bf16.msra.mxu0 %v8702
        %11258 = vmatprep.subr.bf16.mxu0 %v8687
        %11259 = vmatpush2.bf16.msra.mxu0 %v8686
        %11260 = vmatprep.subr.bf16.mxu0 %v8671
        %11261 = vmatpush2.bf16.msra.mxu0 %v8670
        %11262 = vmatprep.subr.bf16.mxu0 %v8655
        %11263 = vmatpush2.bf16.msra.mxu0 %v8654
        %11264 = vmatprep.subr.bf16.mxu0 %v8639
        %11265 = vmatpush2.bf16.msra.mxu0 %v8638
        %11266 = vmatprep.mubr.bf16.mxu0 %v2091
        %11267 = vmatmul.mubr.bf16.gmra.mxu0 %v2090
        %v11268 = vpop.f32.mrf.mxu0
        %v11269 = vadd.f32 %v11228, %v11268
        %v11270 = vpop.f32.mrf.mxu0
        %v11271 = vadd.f32 %v11230, %v11270
        %v11272 = vpop.f32.mrf.mxu0
        %v11273 = vpop.f32.mrf.mxu0
        %11274 = vdwg.mxu0
        %11275 = vmatprep.subr.bf16.mxu0 %v8879
        %11276 = vmatpush1.bf16.msra.mxu0 %v8878
        %11277 = vmatprep.subr.bf16.mxu0 %v8863
        %11278 = vmatpush1.bf16.msra.mxu0 %v8862
        %11279 = vmatprep.subr.bf16.mxu0 %v8847
        %11280 = vmatpush1.bf16.msra.mxu0 %v8846
        %11281 = vmatprep.subr.bf16.mxu0 %v8831
        %11282 = vmatpush1.bf16.msra.mxu0 %v8830
        %11283 = vmatprep.subr.bf16.mxu0 %v8815
        %11284 = vmatpush1.bf16.msra.mxu0 %v8814
        %11285 = vmatprep.subr.bf16.mxu0 %v8799
        %11286 = vmatpush1.bf16.msra.mxu0 %v8798
        %11287 = vmatprep.subr.bf16.mxu0 %v8783
        %11288 = vmatpush1.bf16.msra.mxu0 %v8782
        %11289 = vmatprep.subr.bf16.mxu0 %v8767
        %11290 = vmatpush1.bf16.msra.mxu0 %v8766
        %11291 = vmatprep.subr.bf16.mxu0 %v9007
        %11292 = vmatpush2.bf16.msra.mxu0 %v9006
        %11293 = vmatprep.subr.bf16.mxu0 %v8991
        %11294 = vmatpush2.bf16.msra.mxu0 %v8990
        %11295 = vmatprep.subr.bf16.mxu0 %v8975
        %11296 = vmatpush2.bf16.msra.mxu0 %v8974
        %11297 = vmatprep.subr.bf16.mxu0 %v8959
        %11298 = vmatpush2.bf16.msra.mxu0 %v8958
        %11299 = vmatprep.subr.bf16.mxu0 %v8943
        %11300 = vmatpush2.bf16.msra.mxu0 %v8942
        %11301 = vmatprep.subr.bf16.mxu0 %v8927
        %11302 = vmatpush2.bf16.msra.mxu0 %v8926
        %11303 = vmatprep.subr.bf16.mxu0 %v8911
        %11304 = vmatpush2.bf16.msra.mxu0 %v8910
        %11305 = vmatprep.subr.bf16.mxu0 %v8895
        %11306 = vmatpush2.bf16.msra.mxu0 %v8894
        %11307 = vmatprep.mubr.bf16.mxu0 %v2093
        %11308 = vmatmul.mubr.bf16.gmra.mxu0 %v2092
        %v11309 = vpop.f32.mrf.mxu0
        %v11310 = vadd.f32 %v11269, %v11309
        %v11311 = vpop.f32.mrf.mxu0
        %v11312 = vadd.f32 %v11271, %v11311
        %v11313 = vpop.f32.mrf.mxu0
        %v11314 = vpop.f32.mrf.mxu0
        %11315 = vdwg.mxu0
        %11316 = vmatprep.subr.bf16.mxu0 %v9135
        %11317 = vmatpush1.bf16.msra.mxu0 %v9134
        %11318 = vmatprep.subr.bf16.mxu0 %v9119
        %11319 = vmatpush1.bf16.msra.mxu0 %v9118
        %11320 = vmatprep.subr.bf16.mxu0 %v9103
        %11321 = vmatpush1.bf16.msra.mxu0 %v9102
        %11322 = vmatprep.subr.bf16.mxu0 %v9087
        %11323 = vmatpush1.bf16.msra.mxu0 %v9086
        %11324 = vmatprep.subr.bf16.mxu0 %v9071
        %11325 = vmatpush1.bf16.msra.mxu0 %v9070
        %11326 = vmatprep.subr.bf16.mxu0 %v9055
        %11327 = vmatpush1.bf16.msra.mxu0 %v9054
        %11328 = vmatprep.subr.bf16.mxu0 %v9039
        %11329 = vmatpush1.bf16.msra.mxu0 %v9038
        %11330 = vmatprep.subr.bf16.mxu0 %v9023
        %11331 = vmatpush1.bf16.msra.mxu0 %v9022
        %11332 = vmatprep.subr.bf16.mxu0 %v9263
        %11333 = vmatpush2.bf16.msra.mxu0 %v9262
        %11334 = vmatprep.subr.bf16.mxu0 %v9247
        %11335 = vmatpush2.bf16.msra.mxu0 %v9246
        %11336 = vmatprep.subr.bf16.mxu0 %v9231
        %11337 = vmatpush2.bf16.msra.mxu0 %v9230
        %11338 = vmatprep.subr.bf16.mxu0 %v9215
        %11339 = vmatpush2.bf16.msra.mxu0 %v9214
        %11340 = vmatprep.subr.bf16.mxu0 %v9199
        %11341 = vmatpush2.bf16.msra.mxu0 %v9198
        %11342 = vmatprep.subr.bf16.mxu0 %v9183
        %11343 = vmatpush2.bf16.msra.mxu0 %v9182
        %11344 = vmatprep.subr.bf16.mxu0 %v9167
        %11345 = vmatpush2.bf16.msra.mxu0 %v9166
        %11346 = vmatprep.subr.bf16.mxu0 %v9151
        %11347 = vmatpush2.bf16.msra.mxu0 %v9150
        %11348 = vmatprep.mubr.bf16.mxu0 %v2095
        %11349 = vmatmul.mubr.bf16.gmra.mxu0 %v2094
        %v11350 = vpop.f32.mrf.mxu0
        %v11351 = vadd.f32 %v11310, %v11350
        %v11352 = vpop.f32.mrf.mxu0
        %v11353 = vadd.f32 %v11312, %v11352
        %v11354 = vpop.f32.mrf.mxu0
        %v11355 = vpop.f32.mrf.mxu0
        %11356 = vdwg.mxu0
        %11357 = vmatprep.subr.bf16.mxu0 %v7601
        %11358 = vmatpush1.bf16.msra.mxu0 %v7600
        %11359 = vmatprep.subr.bf16.mxu0 %v7585
        %11360 = vmatpush1.bf16.msra.mxu0 %v7584
        %11361 = vmatprep.subr.bf16.mxu0 %v7569
        %11362 = vmatpush1.bf16.msra.mxu0 %v7568
        %11363 = vmatprep.subr.bf16.mxu0 %v7553
        %11364 = vmatpush1.bf16.msra.mxu0 %v7552
        %11365 = vmatprep.subr.bf16.mxu0 %v7537
        %11366 = vmatpush1.bf16.msra.mxu0 %v7536
        %11367 = vmatprep.subr.bf16.mxu0 %v7521
        %11368 = vmatpush1.bf16.msra.mxu0 %v7520
        %11369 = vmatprep.subr.bf16.mxu0 %v7505
        %11370 = vmatpush1.bf16.msra.mxu0 %v7504
        %11371 = vmatprep.subr.bf16.mxu0 %v7489
        %11372 = vmatpush1.bf16.msra.mxu0 %v7488
        %11373 = vmatprep.subr.bf16.mxu0 %v7729
        %11374 = vmatpush2.bf16.msra.mxu0 %v7728
        %11375 = vmatprep.subr.bf16.mxu0 %v7713
        %11376 = vmatpush2.bf16.msra.mxu0 %v7712
        %11377 = vmatprep.subr.bf16.mxu0 %v7697
        %11378 = vmatpush2.bf16.msra.mxu0 %v7696
        %11379 = vmatprep.subr.bf16.mxu0 %v7681
        %11380 = vmatpush2.bf16.msra.mxu0 %v7680
        %11381 = vmatprep.subr.bf16.mxu0 %v7665
        %11382 = vmatpush2.bf16.msra.mxu0 %v7664
        %11383 = vmatprep.subr.bf16.mxu0 %v7649
        %11384 = vmatpush2.bf16.msra.mxu0 %v7648
        %11385 = vmatprep.subr.bf16.mxu0 %v7633
        %11386 = vmatpush2.bf16.msra.mxu0 %v7632
        %11387 = vmatprep.subr.bf16.mxu0 %v7617
        %11388 = vmatpush2.bf16.msra.mxu0 %v7616
        %11389 = vmatprep.mubr.bf16.mxu0 %v2083
        %11390 = vmatmul.mubr.bf16.gmra.mxu0 %v2082
        %v11391 = vpop.f32.mrf.mxu0
        %v11392 = vadd.f32 0.0, %v11391
        %v11393 = vpop.f32.mrf.mxu0
        %v11394 = vadd.f32 0.0, %v11393
        %v11395 = vpop.f32.mrf.mxu0
        %v11396 = vpop.f32.mrf.mxu0
        %11397 = vdwg.mxu0
        %11398 = vmatprep.subr.bf16.mxu0 %v7857
        %11399 = vmatpush1.bf16.msra.mxu0 %v7856
        %11400 = vmatprep.subr.bf16.mxu0 %v7841
        %11401 = vmatpush1.bf16.msra.mxu0 %v7840
        %11402 = vmatprep.subr.bf16.mxu0 %v7825
        %11403 = vmatpush1.bf16.msra.mxu0 %v7824
        %11404 = vmatprep.subr.bf16.mxu0 %v7809
        %11405 = vmatpush1.bf16.msra.mxu0 %v7808
        %11406 = vmatprep.subr.bf16.mxu0 %v7793
        %11407 = vmatpush1.bf16.msra.mxu0 %v7792
        %11408 = vmatprep.subr.bf16.mxu0 %v7777
        %11409 = vmatpush1.bf16.msra.mxu0 %v7776
        %11410 = vmatprep.subr.bf16.mxu0 %v7761
        %11411 = vmatpush1.bf16.msra.mxu0 %v7760
        %11412 = vmatprep.subr.bf16.mxu0 %v7745
        %11413 = vmatpush1.bf16.msra.mxu0 %v7744
        %11414 = vmatprep.subr.bf16.mxu0 %v7985
        %11415 = vmatpush2.bf16.msra.mxu0 %v7984
        %11416 = vmatprep.subr.bf16.mxu0 %v7969
        %11417 = vmatpush2.bf16.msra.mxu0 %v7968
        %11418 = vmatprep.subr.bf16.mxu0 %v7953
        %11419 = vmatpush2.bf16.msra.mxu0 %v7952
        %11420 = vmatprep.subr.bf16.mxu0 %v7937
        %11421 = vmatpush2.bf16.msra.mxu0 %v7936
        %11422 = vmatprep.subr.bf16.mxu0 %v7921
        %11423 = vmatpush2.bf16.msra.mxu0 %v7920
        %11424 = vmatprep.subr.bf16.mxu0 %v7905
        %11425 = vmatpush2.bf16.msra.mxu0 %v7904
        %11426 = vmatprep.subr.bf16.mxu0 %v7889
        %11427 = vmatpush2.bf16.msra.mxu0 %v7888
        %11428 = vmatprep.subr.bf16.mxu0 %v7873
        %11429 = vmatpush2.bf16.msra.mxu0 %v7872
        %11430 = vmatprep.mubr.bf16.mxu0 %v2085
        %11431 = vmatmul.mubr.bf16.gmra.mxu0 %v2084
        %v11432 = vpop.f32.mrf.mxu0
        %v11433 = vadd.f32 %v11392, %v11432
        %v11434 = vpop.f32.mrf.mxu0
        %v11435 = vadd.f32 %v11394, %v11434
        %v11436 = vpop.f32.mrf.mxu0
        %v11437 = vpop.f32.mrf.mxu0
        %11438 = vdwg.mxu0
        %11439 = vmatprep.subr.bf16.mxu0 %v8113
        %11440 = vmatpush1.bf16.msra.mxu0 %v8112
        %11441 = vmatprep.subr.bf16.mxu0 %v8097
        %11442 = vmatpush1.bf16.msra.mxu0 %v8096
        %11443 = vmatprep.subr.bf16.mxu0 %v8081
        %11444 = vmatpush1.bf16.msra.mxu0 %v8080
        %11445 = vmatprep.subr.bf16.mxu0 %v8065
        %11446 = vmatpush1.bf16.msra.mxu0 %v8064
        %11447 = vmatprep.subr.bf16.mxu0 %v8049
        %11448 = vmatpush1.bf16.msra.mxu0 %v8048
        %11449 = vmatprep.subr.bf16.mxu0 %v8033
        %11450 = vmatpush1.bf16.msra.mxu0 %v8032
        %11451 = vmatprep.subr.bf16.mxu0 %v8017
        %11452 = vmatpush1.bf16.msra.mxu0 %v8016
        %11453 = vmatprep.subr.bf16.mxu0 %v8001
        %11454 = vmatpush1.bf16.msra.mxu0 %v8000
        %11455 = vmatprep.subr.bf16.mxu0 %v8241
        %11456 = vmatpush2.bf16.msra.mxu0 %v8240
        %11457 = vmatprep.subr.bf16.mxu0 %v8225
        %11458 = vmatpush2.bf16.msra.mxu0 %v8224
        %11459 = vmatprep.subr.bf16.mxu0 %v8209
        %11460 = vmatpush2.bf16.msra.mxu0 %v8208
        %11461 = vmatprep.subr.bf16.mxu0 %v8193
        %11462 = vmatpush2.bf16.msra.mxu0 %v8192
        %11463 = vmatprep.subr.bf16.mxu0 %v8177
        %11464 = vmatpush2.bf16.msra.mxu0 %v8176
        %11465 = vmatprep.subr.bf16.mxu0 %v8161
        %11466 = vmatpush2.bf16.msra.mxu0 %v8160
        %11467 = vmatprep.subr.bf16.mxu0 %v8145
        %11468 = vmatpush2.bf16.msra.mxu0 %v8144
        %11469 = vmatprep.subr.bf16.mxu0 %v8129
        %11470 = vmatpush2.bf16.msra.mxu0 %v8128
        %11471 = vmatprep.mubr.bf16.mxu0 %v2087
        %11472 = vmatmul.mubr.bf16.gmra.mxu0 %v2086
        %v11473 = vpop.f32.mrf.mxu0
        %v11474 = vadd.f32 %v11433, %v11473
        %v11475 = vpop.f32.mrf.mxu0
        %v11476 = vadd.f32 %v11435, %v11475
        %v11477 = vpop.f32.mrf.mxu0
        %v11478 = vpop.f32.mrf.mxu0
        %11479 = vdwg.mxu0
        %11480 = vmatprep.subr.bf16.mxu0 %v8369
        %11481 = vmatpush1.bf16.msra.mxu0 %v8368
        %11482 = vmatprep.subr.bf16.mxu0 %v8353
        %11483 = vmatpush1.bf16.msra.mxu0 %v8352
        %11484 = vmatprep.subr.bf16.mxu0 %v8337
        %11485 = vmatpush1.bf16.msra.mxu0 %v8336
        %11486 = vmatprep.subr.bf16.mxu0 %v8321
        %11487 = vmatpush1.bf16.msra.mxu0 %v8320
        %11488 = vmatprep.subr.bf16.mxu0 %v8305
        %11489 = vmatpush1.bf16.msra.mxu0 %v8304
        %11490 = vmatprep.subr.bf16.mxu0 %v8289
        %11491 = vmatpush1.bf16.msra.mxu0 %v8288
        %11492 = vmatprep.subr.bf16.mxu0 %v8273
        %11493 = vmatpush1.bf16.msra.mxu0 %v8272
        %11494 = vmatprep.subr.bf16.mxu0 %v8257
        %11495 = vmatpush1.bf16.msra.mxu0 %v8256
        %11496 = vmatprep.subr.bf16.mxu0 %v8497
        %11497 = vmatpush2.bf16.msra.mxu0 %v8496
        %11498 = vmatprep.subr.bf16.mxu0 %v8481
        %11499 = vmatpush2.bf16.msra.mxu0 %v8480
        %11500 = vmatprep.subr.bf16.mxu0 %v8465
        %11501 = vmatpush2.bf16.msra.mxu0 %v8464
        %11502 = vmatprep.subr.bf16.mxu0 %v8449
        %11503 = vmatpush2.bf16.msra.mxu0 %v8448
        %11504 = vmatprep.subr.bf16.mxu0 %v8433
        %11505 = vmatpush2.bf16.msra.mxu0 %v8432
        %11506 = vmatprep.subr.bf16.mxu0 %v8417
        %11507 = vmatpush2.bf16.msra.mxu0 %v8416
        %11508 = vmatprep.subr.bf16.mxu0 %v8401
        %11509 = vmatpush2.bf16.msra.mxu0 %v8400
        %11510 = vmatprep.subr.bf16.mxu0 %v8385
        %11511 = vmatpush2.bf16.msra.mxu0 %v8384
        %11512 = vmatprep.mubr.bf16.mxu0 %v2089
        %11513 = vmatmul.mubr.bf16.gmra.mxu0 %v2088
        %v11514 = vpop.f32.mrf.mxu0
        %v11515 = vadd.f32 %v11474, %v11514
        %v11516 = vpop.f32.mrf.mxu0
        %v11517 = vadd.f32 %v11476, %v11516
        %v11518 = vpop.f32.mrf.mxu0
        %v11519 = vpop.f32.mrf.mxu0
        %11520 = vdwg.mxu0
        %11521 = vmatprep.subr.bf16.mxu0 %v8625
        %11522 = vmatpush1.bf16.msra.mxu0 %v8624
        %11523 = vmatprep.subr.bf16.mxu0 %v8609
        %11524 = vmatpush1.bf16.msra.mxu0 %v8608
        %11525 = vmatprep.subr.bf16.mxu0 %v8593
        %11526 = vmatpush1.bf16.msra.mxu0 %v8592
        %11527 = vmatprep.subr.bf16.mxu0 %v8577
        %11528 = vmatpush1.bf16.msra.mxu0 %v8576
        %11529 = vmatprep.subr.bf16.mxu0 %v8561
        %11530 = vmatpush1.bf16.msra.mxu0 %v8560
        %11531 = vmatprep.subr.bf16.mxu0 %v8545
        %11532 = vmatpush1.bf16.msra.mxu0 %v8544
        %11533 = vmatprep.subr.bf16.mxu0 %v8529
        %11534 = vmatpush1.bf16.msra.mxu0 %v8528
        %11535 = vmatprep.subr.bf16.mxu0 %v8513
        %11536 = vmatpush1.bf16.msra.mxu0 %v8512
        %11537 = vmatprep.subr.bf16.mxu0 %v8753
        %11538 = vmatpush2.bf16.msra.mxu0 %v8752
        %11539 = vmatprep.subr.bf16.mxu0 %v8737
        %11540 = vmatpush2.bf16.msra.mxu0 %v8736
        %11541 = vmatprep.subr.bf16.mxu0 %v8721
        %11542 = vmatpush2.bf16.msra.mxu0 %v8720
        %11543 = vmatprep.subr.bf16.mxu0 %v8705
        %11544 = vmatpush2.bf16.msra.mxu0 %v8704
        %11545 = vmatprep.subr.bf16.mxu0 %v8689
        %11546 = vmatpush2.bf16.msra.mxu0 %v8688
        %11547 = vmatprep.subr.bf16.mxu0 %v8673
        %11548 = vmatpush2.bf16.msra.mxu0 %v8672
        %11549 = vmatprep.subr.bf16.mxu0 %v8657
        %11550 = vmatpush2.bf16.msra.mxu0 %v8656
        %11551 = vmatprep.subr.bf16.mxu0 %v8641
        %11552 = vmatpush2.bf16.msra.mxu0 %v8640
        %11553 = vmatprep.mubr.bf16.mxu0 %v2091
        %11554 = vmatmul.mubr.bf16.gmra.mxu0 %v2090
        %v11555 = vpop.f32.mrf.mxu0
        %v11556 = vadd.f32 %v11515, %v11555
        %v11557 = vpop.f32.mrf.mxu0
        %v11558 = vadd.f32 %v11517, %v11557
        %v11559 = vpop.f32.mrf.mxu0
        %v11560 = vpop.f32.mrf.mxu0
        %11561 = vdwg.mxu0
        %11562 = vmatprep.subr.bf16.mxu0 %v8881
        %11563 = vmatpush1.bf16.msra.mxu0 %v8880
        %11564 = vmatprep.subr.bf16.mxu0 %v8865
        %11565 = vmatpush1.bf16.msra.mxu0 %v8864
        %11566 = vmatprep.subr.bf16.mxu0 %v8849
        %11567 = vmatpush1.bf16.msra.mxu0 %v8848
        %11568 = vmatprep.subr.bf16.mxu0 %v8833
        %11569 = vmatpush1.bf16.msra.mxu0 %v8832
        %11570 = vmatprep.subr.bf16.mxu0 %v8817
        %11571 = vmatpush1.bf16.msra.mxu0 %v8816
        %11572 = vmatprep.subr.bf16.mxu0 %v8801
        %11573 = vmatpush1.bf16.msra.mxu0 %v8800
        %11574 = vmatprep.subr.bf16.mxu0 %v8785
        %11575 = vmatpush1.bf16.msra.mxu0 %v8784
        %11576 = vmatprep.subr.bf16.mxu0 %v8769
        %11577 = vmatpush1.bf16.msra.mxu0 %v8768
        %11578 = vmatprep.subr.bf16.mxu0 %v9009
        %11579 = vmatpush2.bf16.msra.mxu0 %v9008
        %11580 = vmatprep.subr.bf16.mxu0 %v8993
        %11581 = vmatpush2.bf16.msra.mxu0 %v8992
        %11582 = vmatprep.subr.bf16.mxu0 %v8977
        %11583 = vmatpush2.bf16.msra.mxu0 %v8976
        %11584 = vmatprep.subr.bf16.mxu0 %v8961
        %11585 = vmatpush2.bf16.msra.mxu0 %v8960
        %11586 = vmatprep.subr.bf16.mxu0 %v8945
        %11587 = vmatpush2.bf16.msra.mxu0 %v8944
        %11588 = vmatprep.subr.bf16.mxu0 %v8929
        %11589 = vmatpush2.bf16.msra.mxu0 %v8928
        %11590 = vmatprep.subr.bf16.mxu0 %v8913
        %11591 = vmatpush2.bf16.msra.mxu0 %v8912
        %11592 = vmatprep.subr.bf16.mxu0 %v8897
        %11593 = vmatpush2.bf16.msra.mxu0 %v8896
        %11594 = vmatprep.mubr.bf16.mxu0 %v2093
        %11595 = vmatmul.mubr.bf16.gmra.mxu0 %v2092
        %v11596 = vpop.f32.mrf.mxu0
        %v11597 = vadd.f32 %v11556, %v11596
        %v11598 = vpop.f32.mrf.mxu0
        %v11599 = vadd.f32 %v11558, %v11598
        %v11600 = vpop.f32.mrf.mxu0
        %v11601 = vpop.f32.mrf.mxu0
        %11602 = vdwg.mxu0
        %11603 = vmatprep.subr.bf16.mxu0 %v9137
        %11604 = vmatpush1.bf16.msra.mxu0 %v9136
        %11605 = vmatprep.subr.bf16.mxu0 %v9121
        %11606 = vmatpush1.bf16.msra.mxu0 %v9120
        %11607 = vmatprep.subr.bf16.mxu0 %v9105
        %11608 = vmatpush1.bf16.msra.mxu0 %v9104
        %11609 = vmatprep.subr.bf16.mxu0 %v9089
        %11610 = vmatpush1.bf16.msra.mxu0 %v9088
        %11611 = vmatprep.subr.bf16.mxu0 %v9073
        %11612 = vmatpush1.bf16.msra.mxu0 %v9072
        %11613 = vmatprep.subr.bf16.mxu0 %v9057
        %11614 = vmatpush1.bf16.msra.mxu0 %v9056
        %11615 = vmatprep.subr.bf16.mxu0 %v9041
        %11616 = vmatpush1.bf16.msra.mxu0 %v9040
        %11617 = vmatprep.subr.bf16.mxu0 %v9025
        %11618 = vmatpush1.bf16.msra.mxu0 %v9024
        %11619 = vmatprep.subr.bf16.mxu0 %v9265
        %11620 = vmatpush2.bf16.msra.mxu0 %v9264
        %11621 = vmatprep.subr.bf16.mxu0 %v9249
        %11622 = vmatpush2.bf16.msra.mxu0 %v9248
        %11623 = vmatprep.subr.bf16.mxu0 %v9233
        %11624 = vmatpush2.bf16.msra.mxu0 %v9232
        %11625 = vmatprep.subr.bf16.mxu0 %v9217
        %11626 = vmatpush2.bf16.msra.mxu0 %v9216
        %11627 = vmatprep.subr.bf16.mxu0 %v9201
        %11628 = vmatpush2.bf16.msra.mxu0 %v9200
        %11629 = vmatprep.subr.bf16.mxu0 %v9185
        %11630 = vmatpush2.bf16.msra.mxu0 %v9184
        %11631 = vmatprep.subr.bf16.mxu0 %v9169
        %11632 = vmatpush2.bf16.msra.mxu0 %v9168
        %11633 = vmatprep.subr.bf16.mxu0 %v9153
        %11634 = vmatpush2.bf16.msra.mxu0 %v9152
        %11635 = vmatprep.mubr.bf16.mxu0 %v2095
        %11636 = vmatmul.mubr.bf16.gmra.mxu0 %v2094
        %v11637 = vpop.f32.mrf.mxu0
        %v11638 = vadd.f32 %v11597, %v11637
        %v11639 = vpop.f32.mrf.mxu0
        %v11640 = vadd.f32 %v11599, %v11639
        %v11641 = vpop.f32.mrf.mxu0
        %v11642 = vpop.f32.mrf.mxu0
        %11643 = vdwg.mxu0
        %11644 = vmatprep.subr.bf16.mxu0 %v7603
        %11645 = vmatpush1.bf16.msra.mxu0 %v7602
        %11646 = vmatprep.subr.bf16.mxu0 %v7587
        %11647 = vmatpush1.bf16.msra.mxu0 %v7586
        %11648 = vmatprep.subr.bf16.mxu0 %v7571
        %11649 = vmatpush1.bf16.msra.mxu0 %v7570
        %11650 = vmatprep.subr.bf16.mxu0 %v7555
        %11651 = vmatpush1.bf16.msra.mxu0 %v7554
        %11652 = vmatprep.subr.bf16.mxu0 %v7539
        %11653 = vmatpush1.bf16.msra.mxu0 %v7538
        %11654 = vmatprep.subr.bf16.mxu0 %v7523
        %11655 = vmatpush1.bf16.msra.mxu0 %v7522
        %11656 = vmatprep.subr.bf16.mxu0 %v7507
        %11657 = vmatpush1.bf16.msra.mxu0 %v7506
        %11658 = vmatprep.subr.bf16.mxu0 %v7491
        %11659 = vmatpush1.bf16.msra.mxu0 %v7490
        %11660 = vmatprep.subr.bf16.mxu0 %v7731
        %11661 = vmatpush2.bf16.msra.mxu0 %v7730
        %11662 = vmatprep.subr.bf16.mxu0 %v7715
        %11663 = vmatpush2.bf16.msra.mxu0 %v7714
        %11664 = vmatprep.subr.bf16.mxu0 %v7699
        %11665 = vmatpush2.bf16.msra.mxu0 %v7698
        %11666 = vmatprep.subr.bf16.mxu0 %v7683
        %11667 = vmatpush2.bf16.msra.mxu0 %v7682
        %11668 = vmatprep.subr.bf16.mxu0 %v7667
        %11669 = vmatpush2.bf16.msra.mxu0 %v7666
        %11670 = vmatprep.subr.bf16.mxu0 %v7651
        %11671 = vmatpush2.bf16.msra.mxu0 %v7650
        %11672 = vmatprep.subr.bf16.mxu0 %v7635
        %11673 = vmatpush2.bf16.msra.mxu0 %v7634
        %11674 = vmatprep.subr.bf16.mxu0 %v7619
        %11675 = vmatpush2.bf16.msra.mxu0 %v7618
        %11676 = vmatprep.mubr.bf16.mxu0 %v2083
        %11677 = vmatmul.mubr.bf16.gmra.mxu0 %v2082
        %v11678 = vpop.f32.mrf.mxu0
        %v11679 = vadd.f32 0.0, %v11678
        %v11680 = vpop.f32.mrf.mxu0
        %v11681 = vadd.f32 0.0, %v11680
        %v11682 = vpop.f32.mrf.mxu0
        %v11683 = vpop.f32.mrf.mxu0
        %11684 = vdwg.mxu0
        %11685 = vmatprep.subr.bf16.mxu0 %v7859
        %11686 = vmatpush1.bf16.msra.mxu0 %v7858
        %11687 = vmatprep.subr.bf16.mxu0 %v7843
        %11688 = vmatpush1.bf16.msra.mxu0 %v7842
        %11689 = vmatprep.subr.bf16.mxu0 %v7827
        %11690 = vmatpush1.bf16.msra.mxu0 %v7826
        %11691 = vmatprep.subr.bf16.mxu0 %v7811
        %11692 = vmatpush1.bf16.msra.mxu0 %v7810
        %11693 = vmatprep.subr.bf16.mxu0 %v7795
        %11694 = vmatpush1.bf16.msra.mxu0 %v7794
        %11695 = vmatprep.subr.bf16.mxu0 %v7779
        %11696 = vmatpush1.bf16.msra.mxu0 %v7778
        %11697 = vmatprep.subr.bf16.mxu0 %v7763
        %11698 = vmatpush1.bf16.msra.mxu0 %v7762
        %11699 = vmatprep.subr.bf16.mxu0 %v7747
        %11700 = vmatpush1.bf16.msra.mxu0 %v7746
        %11701 = vmatprep.subr.bf16.mxu0 %v7987
        %11702 = vmatpush2.bf16.msra.mxu0 %v7986
        %11703 = vmatprep.subr.bf16.mxu0 %v7971
        %11704 = vmatpush2.bf16.msra.mxu0 %v7970
        %11705 = vmatprep.subr.bf16.mxu0 %v7955
        %11706 = vmatpush2.bf16.msra.mxu0 %v7954
        %11707 = vmatprep.subr.bf16.mxu0 %v7939
        %11708 = vmatpush2.bf16.msra.mxu0 %v7938
        %11709 = vmatprep.subr.bf16.mxu0 %v7923
        %11710 = vmatpush2.bf16.msra.mxu0 %v7922
        %11711 = vmatprep.subr.bf16.mxu0 %v7907
        %11712 = vmatpush2.bf16.msra.mxu0 %v7906
        %11713 = vmatprep.subr.bf16.mxu0 %v7891
        %11714 = vmatpush2.bf16.msra.mxu0 %v7890
        %11715 = vmatprep.subr.bf16.mxu0 %v7875
        %11716 = vmatpush2.bf16.msra.mxu0 %v7874
        %11717 = vmatprep.mubr.bf16.mxu0 %v2085
        %11718 = vmatmul.mubr.bf16.gmra.mxu0 %v2084
        %v11719 = vpop.f32.mrf.mxu0
        %v11720 = vadd.f32 %v11679, %v11719
        %v11721 = vpop.f32.mrf.mxu0
        %v11722 = vadd.f32 %v11681, %v11721
        %v11723 = vpop.f32.mrf.mxu0
        %v11724 = vpop.f32.mrf.mxu0
        %11725 = vdwg.mxu0
        %11726 = vmatprep.subr.bf16.mxu0 %v8115
        %11727 = vmatpush1.bf16.msra.mxu0 %v8114
        %11728 = vmatprep.subr.bf16.mxu0 %v8099
        %11729 = vmatpush1.bf16.msra.mxu0 %v8098
        %11730 = vmatprep.subr.bf16.mxu0 %v8083
        %11731 = vmatpush1.bf16.msra.mxu0 %v8082
        %11732 = vmatprep.subr.bf16.mxu0 %v8067
        %11733 = vmatpush1.bf16.msra.mxu0 %v8066
        %11734 = vmatprep.subr.bf16.mxu0 %v8051
        %11735 = vmatpush1.bf16.msra.mxu0 %v8050
        %11736 = vmatprep.subr.bf16.mxu0 %v8035
        %11737 = vmatpush1.bf16.msra.mxu0 %v8034
        %11738 = vmatprep.subr.bf16.mxu0 %v8019
        %11739 = vmatpush1.bf16.msra.mxu0 %v8018
        %11740 = vmatprep.subr.bf16.mxu0 %v8003
        %11741 = vmatpush1.bf16.msra.mxu0 %v8002
        %11742 = vmatprep.subr.bf16.mxu0 %v8243
        %11743 = vmatpush2.bf16.msra.mxu0 %v8242
        %11744 = vmatprep.subr.bf16.mxu0 %v8227
        %11745 = vmatpush2.bf16.msra.mxu0 %v8226
        %11746 = vmatprep.subr.bf16.mxu0 %v8211
        %11747 = vmatpush2.bf16.msra.mxu0 %v8210
        %11748 = vmatprep.subr.bf16.mxu0 %v8195
        %11749 = vmatpush2.bf16.msra.mxu0 %v8194
        %11750 = vmatprep.subr.bf16.mxu0 %v8179
        %11751 = vmatpush2.bf16.msra.mxu0 %v8178
        %11752 = vmatprep.subr.bf16.mxu0 %v8163
        %11753 = vmatpush2.bf16.msra.mxu0 %v8162
        %11754 = vmatprep.subr.bf16.mxu0 %v8147
        %11755 = vmatpush2.bf16.msra.mxu0 %v8146
        %11756 = vmatprep.subr.bf16.mxu0 %v8131
        %11757 = vmatpush2.bf16.msra.mxu0 %v8130
        %11758 = vmatprep.mubr.bf16.mxu0 %v2087
        %11759 = vmatmul.mubr.bf16.gmra.mxu0 %v2086
        %v11760 = vpop.f32.mrf.mxu0
        %v11761 = vadd.f32 %v11720, %v11760
        %v11762 = vpop.f32.mrf.mxu0
        %v11763 = vadd.f32 %v11722, %v11762
        %v11764 = vpop.f32.mrf.mxu0
        %v11765 = vpop.f32.mrf.mxu0
        %11766 = vdwg.mxu0
        %11767 = vmatprep.subr.bf16.mxu0 %v8371
        %11768 = vmatpush1.bf16.msra.mxu0 %v8370
        %11769 = vmatprep.subr.bf16.mxu0 %v8355
        %11770 = vmatpush1.bf16.msra.mxu0 %v8354
        %11771 = vmatprep.subr.bf16.mxu0 %v8339
        %11772 = vmatpush1.bf16.msra.mxu0 %v8338
        %11773 = vmatprep.subr.bf16.mxu0 %v8323
        %11774 = vmatpush1.bf16.msra.mxu0 %v8322
        %11775 = vmatprep.subr.bf16.mxu0 %v8307
        %11776 = vmatpush1.bf16.msra.mxu0 %v8306
        %11777 = vmatprep.subr.bf16.mxu0 %v8291
        %11778 = vmatpush1.bf16.msra.mxu0 %v8290
        %11779 = vmatprep.subr.bf16.mxu0 %v8275
        %11780 = vmatpush1.bf16.msra.mxu0 %v8274
        %11781 = vmatprep.subr.bf16.mxu0 %v8259
        %11782 = vmatpush1.bf16.msra.mxu0 %v8258
        %11783 = vmatprep.subr.bf16.mxu0 %v8499
        %11784 = vmatpush2.bf16.msra.mxu0 %v8498
        %11785 = vmatprep.subr.bf16.mxu0 %v8483
        %11786 = vmatpush2.bf16.msra.mxu0 %v8482
        %11787 = vmatprep.subr.bf16.mxu0 %v8467
        %11788 = vmatpush2.bf16.msra.mxu0 %v8466
        %11789 = vmatprep.subr.bf16.mxu0 %v8451
        %11790 = vmatpush2.bf16.msra.mxu0 %v8450
        %11791 = vmatprep.subr.bf16.mxu0 %v8435
        %11792 = vmatpush2.bf16.msra.mxu0 %v8434
        %11793 = vmatprep.subr.bf16.mxu0 %v8419
        %11794 = vmatpush2.bf16.msra.mxu0 %v8418
        %11795 = vmatprep.subr.bf16.mxu0 %v8403
        %11796 = vmatpush2.bf16.msra.mxu0 %v8402
        %11797 = vmatprep.subr.bf16.mxu0 %v8387
        %11798 = vmatpush2.bf16.msra.mxu0 %v8386
        %11799 = vmatprep.mubr.bf16.mxu0 %v2089
        %11800 = vmatmul.mubr.bf16.gmra.mxu0 %v2088
        %v11801 = vpop.f32.mrf.mxu0
        %v11802 = vadd.f32 %v11761, %v11801
        %v11803 = vpop.f32.mrf.mxu0
        %v11804 = vadd.f32 %v11763, %v11803
        %v11805 = vpop.f32.mrf.mxu0
        %v11806 = vpop.f32.mrf.mxu0
        %11807 = vdwg.mxu0
        %11808 = vmatprep.subr.bf16.mxu0 %v8627
        %11809 = vmatpush1.bf16.msra.mxu0 %v8626
        %11810 = vmatprep.subr.bf16.mxu0 %v8611
        %11811 = vmatpush1.bf16.msra.mxu0 %v8610
        %11812 = vmatprep.subr.bf16.mxu0 %v8595
        %11813 = vmatpush1.bf16.msra.mxu0 %v8594
        %11814 = vmatprep.subr.bf16.mxu0 %v8579
        %11815 = vmatpush1.bf16.msra.mxu0 %v8578
        %11816 = vmatprep.subr.bf16.mxu0 %v8563
        %11817 = vmatpush1.bf16.msra.mxu0 %v8562
        %11818 = vmatprep.subr.bf16.mxu0 %v8547
        %11819 = vmatpush1.bf16.msra.mxu0 %v8546
        %11820 = vmatprep.subr.bf16.mxu0 %v8531
        %11821 = vmatpush1.bf16.msra.mxu0 %v8530
        %11822 = vmatprep.subr.bf16.mxu0 %v8515
        %11823 = vmatpush1.bf16.msra.mxu0 %v8514
        %11824 = vmatprep.subr.bf16.mxu0 %v8755
        %11825 = vmatpush2.bf16.msra.mxu0 %v8754
        %11826 = vmatprep.subr.bf16.mxu0 %v8739
        %11827 = vmatpush2.bf16.msra.mxu0 %v8738
        %11828 = vmatprep.subr.bf16.mxu0 %v8723
        %11829 = vmatpush2.bf16.msra.mxu0 %v8722
        %11830 = vmatprep.subr.bf16.mxu0 %v8707
        %11831 = vmatpush2.bf16.msra.mxu0 %v8706
        %11832 = vmatprep.subr.bf16.mxu0 %v8691
        %11833 = vmatpush2.bf16.msra.mxu0 %v8690
        %11834 = vmatprep.subr.bf16.mxu0 %v8675
        %11835 = vmatpush2.bf16.msra.mxu0 %v8674
        %11836 = vmatprep.subr.bf16.mxu0 %v8659
        %11837 = vmatpush2.bf16.msra.mxu0 %v8658
        %11838 = vmatprep.subr.bf16.mxu0 %v8643
        %11839 = vmatpush2.bf16.msra.mxu0 %v8642
        %11840 = vmatprep.mubr.bf16.mxu0 %v2091
        %11841 = vmatmul.mubr.bf16.gmra.mxu0 %v2090
        %v11842 = vpop.f32.mrf.mxu0
        %v11843 = vadd.f32 %v11802, %v11842
        %v11844 = vpop.f32.mrf.mxu0
        %v11845 = vadd.f32 %v11804, %v11844
        %v11846 = vpop.f32.mrf.mxu0
        %v11847 = vpop.f32.mrf.mxu0
        %11848 = vdwg.mxu0
        %11849 = vmatprep.subr.bf16.mxu0 %v8883
        %11850 = vmatpush1.bf16.msra.mxu0 %v8882
        %11851 = vmatprep.subr.bf16.mxu0 %v8867
        %11852 = vmatpush1.bf16.msra.mxu0 %v8866
        %11853 = vmatprep.subr.bf16.mxu0 %v8851
        %11854 = vmatpush1.bf16.msra.mxu0 %v8850
        %11855 = vmatprep.subr.bf16.mxu0 %v8835
        %11856 = vmatpush1.bf16.msra.mxu0 %v8834
        %11857 = vmatprep.subr.bf16.mxu0 %v8819
        %11858 = vmatpush1.bf16.msra.mxu0 %v8818
        %11859 = vmatprep.subr.bf16.mxu0 %v8803
        %11860 = vmatpush1.bf16.msra.mxu0 %v8802
        %11861 = vmatprep.subr.bf16.mxu0 %v8787
        %11862 = vmatpush1.bf16.msra.mxu0 %v8786
        %11863 = vmatprep.subr.bf16.mxu0 %v8771
        %11864 = vmatpush1.bf16.msra.mxu0 %v8770
        %11865 = vmatprep.subr.bf16.mxu0 %v9011
        %11866 = vmatpush2.bf16.msra.mxu0 %v9010
        %11867 = vmatprep.subr.bf16.mxu0 %v8995
        %11868 = vmatpush2.bf16.msra.mxu0 %v8994
        %11869 = vmatprep.subr.bf16.mxu0 %v8979
        %11870 = vmatpush2.bf16.msra.mxu0 %v8978
        %11871 = vmatprep.subr.bf16.mxu0 %v8963
        %11872 = vmatpush2.bf16.msra.mxu0 %v8962
        %11873 = vmatprep.subr.bf16.mxu0 %v8947
        %11874 = vmatpush2.bf16.msra.mxu0 %v8946
        %11875 = vmatprep.subr.bf16.mxu0 %v8931
        %11876 = vmatpush2.bf16.msra.mxu0 %v8930
        %11877 = vmatprep.subr.bf16.mxu0 %v8915
        %11878 = vmatpush2.bf16.msra.mxu0 %v8914
        %11879 = vmatprep.subr.bf16.mxu0 %v8899
        %11880 = vmatpush2.bf16.msra.mxu0 %v8898
        %11881 = vmatprep.mubr.bf16.mxu0 %v2093
        %11882 = vmatmul.mubr.bf16.gmra.mxu0 %v2092
        %v11883 = vpop.f32.mrf.mxu0
        %v11884 = vadd.f32 %v11843, %v11883
        %v11885 = vpop.f32.mrf.mxu0
        %v11886 = vadd.f32 %v11845, %v11885
        %v11887 = vpop.f32.mrf.mxu0
        %v11888 = vpop.f32.mrf.mxu0
        %11889 = vdwg.mxu0
        %11890 = vmatprep.subr.bf16.mxu0 %v9139
        %11891 = vmatpush1.bf16.msra.mxu0 %v9138
        %11892 = vmatprep.subr.bf16.mxu0 %v9123
        %11893 = vmatpush1.bf16.msra.mxu0 %v9122
        %11894 = vmatprep.subr.bf16.mxu0 %v9107
        %11895 = vmatpush1.bf16.msra.mxu0 %v9106
        %11896 = vmatprep.subr.bf16.mxu0 %v9091
        %11897 = vmatpush1.bf16.msra.mxu0 %v9090
        %11898 = vmatprep.subr.bf16.mxu0 %v9075
        %11899 = vmatpush1.bf16.msra.mxu0 %v9074
        %11900 = vmatprep.subr.bf16.mxu0 %v9059
        %11901 = vmatpush1.bf16.msra.mxu0 %v9058
        %11902 = vmatprep.subr.bf16.mxu0 %v9043
        %11903 = vmatpush1.bf16.msra.mxu0 %v9042
        %11904 = vmatprep.subr.bf16.mxu0 %v9027
        %11905 = vmatpush1.bf16.msra.mxu0 %v9026
        %11906 = vmatprep.subr.bf16.mxu0 %v9267
        %11907 = vmatpush2.bf16.msra.mxu0 %v9266
        %11908 = vmatprep.subr.bf16.mxu0 %v9251
        %11909 = vmatpush2.bf16.msra.mxu0 %v9250
        %11910 = vmatprep.subr.bf16.mxu0 %v9235
        %11911 = vmatpush2.bf16.msra.mxu0 %v9234
        %11912 = vmatprep.subr.bf16.mxu0 %v9219
        %11913 = vmatpush2.bf16.msra.mxu0 %v9218
        %11914 = vmatprep.subr.bf16.mxu0 %v9203
        %11915 = vmatpush2.bf16.msra.mxu0 %v9202
        %11916 = vmatprep.subr.bf16.mxu0 %v9187
        %11917 = vmatpush2.bf16.msra.mxu0 %v9186
        %11918 = vmatprep.subr.bf16.mxu0 %v9171
        %11919 = vmatpush2.bf16.msra.mxu0 %v9170
        %11920 = vmatprep.subr.bf16.mxu0 %v9155
        %11921 = vmatpush2.bf16.msra.mxu0 %v9154
        %11922 = vmatprep.mubr.bf16.mxu0 %v2095
        %11923 = vmatmul.mubr.bf16.gmra.mxu0 %v2094
        %v11924 = vpop.f32.mrf.mxu0
        %v11925 = vadd.f32 %v11884, %v11924
        %v11926 = vpop.f32.mrf.mxu0
        %v11927 = vadd.f32 %v11886, %v11926
        %v11928 = vpop.f32.mrf.mxu0
        %v11929 = vpop.f32.mrf.mxu0
        %11930 = vdwg.mxu0
        %11931 = vmatprep.subr.bf16.mxu0 %v7605
        %11932 = vmatpush1.bf16.msra.mxu0 %v7604
        %11933 = vmatprep.subr.bf16.mxu0 %v7589
        %11934 = vmatpush1.bf16.msra.mxu0 %v7588
        %11935 = vmatprep.subr.bf16.mxu0 %v7573
        %11936 = vmatpush1.bf16.msra.mxu0 %v7572
        %11937 = vmatprep.subr.bf16.mxu0 %v7557
        %11938 = vmatpush1.bf16.msra.mxu0 %v7556
        %11939 = vmatprep.subr.bf16.mxu0 %v7541
        %11940 = vmatpush1.bf16.msra.mxu0 %v7540
        %11941 = vmatprep.subr.bf16.mxu0 %v7525
        %11942 = vmatpush1.bf16.msra.mxu0 %v7524
        %11943 = vmatprep.subr.bf16.mxu0 %v7509
        %11944 = vmatpush1.bf16.msra.mxu0 %v7508
        %11945 = vmatprep.subr.bf16.mxu0 %v7493
        %11946 = vmatpush1.bf16.msra.mxu0 %v7492
        %11947 = vmatprep.subr.bf16.mxu0 %v7733
        %11948 = vmatpush2.bf16.msra.mxu0 %v7732
        %11949 = vmatprep.subr.bf16.mxu0 %v7717
        %11950 = vmatpush2.bf16.msra.mxu0 %v7716
        %11951 = vmatprep.subr.bf16.mxu0 %v7701
        %11952 = vmatpush2.bf16.msra.mxu0 %v7700
        %11953 = vmatprep.subr.bf16.mxu0 %v7685
        %11954 = vmatpush2.bf16.msra.mxu0 %v7684
        %11955 = vmatprep.subr.bf16.mxu0 %v7669
        %11956 = vmatpush2.bf16.msra.mxu0 %v7668
        %11957 = vmatprep.subr.bf16.mxu0 %v7653
        %11958 = vmatpush2.bf16.msra.mxu0 %v7652
        %11959 = vmatprep.subr.bf16.mxu0 %v7637
        %11960 = vmatpush2.bf16.msra.mxu0 %v7636
        %11961 = vmatprep.subr.bf16.mxu0 %v7621
        %11962 = vmatpush2.bf16.msra.mxu0 %v7620
        %11963 = vmatprep.mubr.bf16.mxu0 %v2083
        %11964 = vmatmul.mubr.bf16.gmra.mxu0 %v2082
        %v11965 = vpop.f32.mrf.mxu0
        %v11966 = vadd.f32 0.0, %v11965
        %v11967 = vpop.f32.mrf.mxu0
        %v11968 = vadd.f32 0.0, %v11967
        %v11969 = vpop.f32.mrf.mxu0
        %v11970 = vpop.f32.mrf.mxu0
        %11971 = vdwg.mxu0
        %11972 = vmatprep.subr.bf16.mxu0 %v7861
        %11973 = vmatpush1.bf16.msra.mxu0 %v7860
        %11974 = vmatprep.subr.bf16.mxu0 %v7845
        %11975 = vmatpush1.bf16.msra.mxu0 %v7844
        %11976 = vmatprep.subr.bf16.mxu0 %v7829
        %11977 = vmatpush1.bf16.msra.mxu0 %v7828
        %11978 = vmatprep.subr.bf16.mxu0 %v7813
        %11979 = vmatpush1.bf16.msra.mxu0 %v7812
        %11980 = vmatprep.subr.bf16.mxu0 %v7797
        %11981 = vmatpush1.bf16.msra.mxu0 %v7796
        %11982 = vmatprep.subr.bf16.mxu0 %v7781
        %11983 = vmatpush1.bf16.msra.mxu0 %v7780
        %11984 = vmatprep.subr.bf16.mxu0 %v7765
        %11985 = vmatpush1.bf16.msra.mxu0 %v7764
        %11986 = vmatprep.subr.bf16.mxu0 %v7749
        %11987 = vmatpush1.bf16.msra.mxu0 %v7748
        %11988 = vmatprep.subr.bf16.mxu0 %v7989
        %11989 = vmatpush2.bf16.msra.mxu0 %v7988
        %11990 = vmatprep.subr.bf16.mxu0 %v7973
        %11991 = vmatpush2.bf16.msra.mxu0 %v7972
        %11992 = vmatprep.subr.bf16.mxu0 %v7957
        %11993 = vmatpush2.bf16.msra.mxu0 %v7956
        %11994 = vmatprep.subr.bf16.mxu0 %v7941
        %11995 = vmatpush2.bf16.msra.mxu0 %v7940
        %11996 = vmatprep.subr.bf16.mxu0 %v7925
        %11997 = vmatpush2.bf16.msra.mxu0 %v7924
        %11998 = vmatprep.subr.bf16.mxu0 %v7909
        %11999 = vmatpush2.bf16.msra.mxu0 %v7908
        %12000 = vmatprep.subr.bf16.mxu0 %v7893
        %12001 = vmatpush2.bf16.msra.mxu0 %v7892
        %12002 = vmatprep.subr.bf16.mxu0 %v7877
        %12003 = vmatpush2.bf16.msra.mxu0 %v7876
        %12004 = vmatprep.mubr.bf16.mxu0 %v2085
        %12005 = vmatmul.mubr.bf16.gmra.mxu0 %v2084
        %v12006 = vpop.f32.mrf.mxu0
        %v12007 = vadd.f32 %v11966, %v12006
        %v12008 = vpop.f32.mrf.mxu0
        %v12009 = vadd.f32 %v11968, %v12008
        %v12010 = vpop.f32.mrf.mxu0
        %v12011 = vpop.f32.mrf.mxu0
        %12012 = vdwg.mxu0
        %12013 = vmatprep.subr.bf16.mxu0 %v8117
        %12014 = vmatpush1.bf16.msra.mxu0 %v8116
        %12015 = vmatprep.subr.bf16.mxu0 %v8101
        %12016 = vmatpush1.bf16.msra.mxu0 %v8100
        %12017 = vmatprep.subr.bf16.mxu0 %v8085
        %12018 = vmatpush1.bf16.msra.mxu0 %v8084
        %12019 = vmatprep.subr.bf16.mxu0 %v8069
        %12020 = vmatpush1.bf16.msra.mxu0 %v8068
        %12021 = vmatprep.subr.bf16.mxu0 %v8053
        %12022 = vmatpush1.bf16.msra.mxu0 %v8052
        %12023 = vmatprep.subr.bf16.mxu0 %v8037
        %12024 = vmatpush1.bf16.msra.mxu0 %v8036
        %12025 = vmatprep.subr.bf16.mxu0 %v8021
        %12026 = vmatpush1.bf16.msra.mxu0 %v8020
        %12027 = vmatprep.subr.bf16.mxu0 %v8005
        %12028 = vmatpush1.bf16.msra.mxu0 %v8004
        %12029 = vmatprep.subr.bf16.mxu0 %v8245
        %12030 = vmatpush2.bf16.msra.mxu0 %v8244
        %12031 = vmatprep.subr.bf16.mxu0 %v8229
        %12032 = vmatpush2.bf16.msra.mxu0 %v8228
        %12033 = vmatprep.subr.bf16.mxu0 %v8213
        %12034 = vmatpush2.bf16.msra.mxu0 %v8212
        %12035 = vmatprep.subr.bf16.mxu0 %v8197
        %12036 = vmatpush2.bf16.msra.mxu0 %v8196
        %12037 = vmatprep.subr.bf16.mxu0 %v8181
        %12038 = vmatpush2.bf16.msra.mxu0 %v8180
        %12039 = vmatprep.subr.bf16.mxu0 %v8165
        %12040 = vmatpush2.bf16.msra.mxu0 %v8164
        %12041 = vmatprep.subr.bf16.mxu0 %v8149
        %12042 = vmatpush2.bf16.msra.mxu0 %v8148
        %12043 = vmatprep.subr.bf16.mxu0 %v8133
        %12044 = vmatpush2.bf16.msra.mxu0 %v8132
        %12045 = vmatprep.mubr.bf16.mxu0 %v2087
        %12046 = vmatmul.mubr.bf16.gmra.mxu0 %v2086
        %v12047 = vpop.f32.mrf.mxu0
        %v12048 = vadd.f32 %v12007, %v12047
        %v12049 = vpop.f32.mrf.mxu0
        %v12050 = vadd.f32 %v12009, %v12049
        %v12051 = vpop.f32.mrf.mxu0
        %v12052 = vpop.f32.mrf.mxu0
        %12053 = vdwg.mxu0
        %12054 = vmatprep.subr.bf16.mxu0 %v8373
        %12055 = vmatpush1.bf16.msra.mxu0 %v8372
        %12056 = vmatprep.subr.bf16.mxu0 %v8357
        %12057 = vmatpush1.bf16.msra.mxu0 %v8356
        %12058 = vmatprep.subr.bf16.mxu0 %v8341
        %12059 = vmatpush1.bf16.msra.mxu0 %v8340
        %12060 = vmatprep.subr.bf16.mxu0 %v8325
        %12061 = vmatpush1.bf16.msra.mxu0 %v8324
        %12062 = vmatprep.subr.bf16.mxu0 %v8309
        %12063 = vmatpush1.bf16.msra.mxu0 %v8308
        %12064 = vmatprep.subr.bf16.mxu0 %v8293
        %12065 = vmatpush1.bf16.msra.mxu0 %v8292
        %12066 = vmatprep.subr.bf16.mxu0 %v8277
        %12067 = vmatpush1.bf16.msra.mxu0 %v8276
        %12068 = vmatprep.subr.bf16.mxu0 %v8261
        %12069 = vmatpush1.bf16.msra.mxu0 %v8260
        %12070 = vmatprep.subr.bf16.mxu0 %v8501
        %12071 = vmatpush2.bf16.msra.mxu0 %v8500
        %12072 = vmatprep.subr.bf16.mxu0 %v8485
        %12073 = vmatpush2.bf16.msra.mxu0 %v8484
        %12074 = vmatprep.subr.bf16.mxu0 %v8469
        %12075 = vmatpush2.bf16.msra.mxu0 %v8468
        %12076 = vmatprep.subr.bf16.mxu0 %v8453
        %12077 = vmatpush2.bf16.msra.mxu0 %v8452
        %12078 = vmatprep.subr.bf16.mxu0 %v8437
        %12079 = vmatpush2.bf16.msra.mxu0 %v8436
        %12080 = vmatprep.subr.bf16.mxu0 %v8421
        %12081 = vmatpush2.bf16.msra.mxu0 %v8420
        %12082 = vmatprep.subr.bf16.mxu0 %v8405
        %12083 = vmatpush2.bf16.msra.mxu0 %v8404
        %12084 = vmatprep.subr.bf16.mxu0 %v8389
        %12085 = vmatpush2.bf16.msra.mxu0 %v8388
        %12086 = vmatprep.mubr.bf16.mxu0 %v2089
        %12087 = vmatmul.mubr.bf16.gmra.mxu0 %v2088
        %v12088 = vpop.f32.mrf.mxu0
        %v12089 = vadd.f32 %v12048, %v12088
        %v12090 = vpop.f32.mrf.mxu0
        %v12091 = vadd.f32 %v12050, %v12090
        %v12092 = vpop.f32.mrf.mxu0
        %v12093 = vpop.f32.mrf.mxu0
        %12094 = vdwg.mxu0
        %12095 = vmatprep.subr.bf16.mxu0 %v8629
        %12096 = vmatpush1.bf16.msra.mxu0 %v8628
        %12097 = vmatprep.subr.bf16.mxu0 %v8613
        %12098 = vmatpush1.bf16.msra.mxu0 %v8612
        %12099 = vmatprep.subr.bf16.mxu0 %v8597
        %12100 = vmatpush1.bf16.msra.mxu0 %v8596
        %12101 = vmatprep.subr.bf16.mxu0 %v8581
        %12102 = vmatpush1.bf16.msra.mxu0 %v8580
        %12103 = vmatprep.subr.bf16.mxu0 %v8565
        %12104 = vmatpush1.bf16.msra.mxu0 %v8564
        %12105 = vmatprep.subr.bf16.mxu0 %v8549
        %12106 = vmatpush1.bf16.msra.mxu0 %v8548
        %12107 = vmatprep.subr.bf16.mxu0 %v8533
        %12108 = vmatpush1.bf16.msra.mxu0 %v8532
        %12109 = vmatprep.subr.bf16.mxu0 %v8517
        %12110 = vmatpush1.bf16.msra.mxu0 %v8516
        %12111 = vmatprep.subr.bf16.mxu0 %v8757
        %12112 = vmatpush2.bf16.msra.mxu0 %v8756
        %12113 = vmatprep.subr.bf16.mxu0 %v8741
        %12114 = vmatpush2.bf16.msra.mxu0 %v8740
        %12115 = vmatprep.subr.bf16.mxu0 %v8725
        %12116 = vmatpush2.bf16.msra.mxu0 %v8724
        %12117 = vmatprep.subr.bf16.mxu0 %v8709
        %12118 = vmatpush2.bf16.msra.mxu0 %v8708
        %12119 = vmatprep.subr.bf16.mxu0 %v8693
        %12120 = vmatpush2.bf16.msra.mxu0 %v8692
        %12121 = vmatprep.subr.bf16.mxu0 %v8677
        %12122 = vmatpush2.bf16.msra.mxu0 %v8676
        %12123 = vmatprep.subr.bf16.mxu0 %v8661
        %12124 = vmatpush2.bf16.msra.mxu0 %v8660
        %12125 = vmatprep.subr.bf16.mxu0 %v8645
        %12126 = vmatpush2.bf16.msra.mxu0 %v8644
        %12127 = vmatprep.mubr.bf16.mxu0 %v2091
        %12128 = vmatmul.mubr.bf16.gmra.mxu0 %v2090
        %v12129 = vpop.f32.mrf.mxu0
        %v12130 = vadd.f32 %v12089, %v12129
        %v12131 = vpop.f32.mrf.mxu0
        %v12132 = vadd.f32 %v12091, %v12131
        %v12133 = vpop.f32.mrf.mxu0
        %v12134 = vpop.f32.mrf.mxu0
        %12135 = vdwg.mxu0
        %12136 = vmatprep.subr.bf16.mxu0 %v8885
        %12137 = vmatpush1.bf16.msra.mxu0 %v8884
        %12138 = vmatprep.subr.bf16.mxu0 %v8869
        %12139 = vmatpush1.bf16.msra.mxu0 %v8868
        %12140 = vmatprep.subr.bf16.mxu0 %v8853
        %12141 = vmatpush1.bf16.msra.mxu0 %v8852
        %12142 = vmatprep.subr.bf16.mxu0 %v8837
        %12143 = vmatpush1.bf16.msra.mxu0 %v8836
        %12144 = vmatprep.subr.bf16.mxu0 %v8821
        %12145 = vmatpush1.bf16.msra.mxu0 %v8820
        %12146 = vmatprep.subr.bf16.mxu0 %v8805
        %12147 = vmatpush1.bf16.msra.mxu0 %v8804
        %12148 = vmatprep.subr.bf16.mxu0 %v8789
        %12149 = vmatpush1.bf16.msra.mxu0 %v8788
        %12150 = vmatprep.subr.bf16.mxu0 %v8773
        %12151 = vmatpush1.bf16.msra.mxu0 %v8772
        %12152 = vmatprep.subr.bf16.mxu0 %v9013
        %12153 = vmatpush2.bf16.msra.mxu0 %v9012
        %12154 = vmatprep.subr.bf16.mxu0 %v8997
        %12155 = vmatpush2.bf16.msra.mxu0 %v8996
        %12156 = vmatprep.subr.bf16.mxu0 %v8981
        %12157 = vmatpush2.bf16.msra.mxu0 %v8980
        %12158 = vmatprep.subr.bf16.mxu0 %v8965
        %12159 = vmatpush2.bf16.msra.mxu0 %v8964
        %12160 = vmatprep.subr.bf16.mxu0 %v8949
        %12161 = vmatpush2.bf16.msra.mxu0 %v8948
        %12162 = vmatprep.subr.bf16.mxu0 %v8933
        %12163 = vmatpush2.bf16.msra.mxu0 %v8932
        %12164 = vmatprep.subr.bf16.mxu0 %v8917
        %12165 = vmatpush2.bf16.msra.mxu0 %v8916
        %12166 = vmatprep.subr.bf16.mxu0 %v8901
        %12167 = vmatpush2.bf16.msra.mxu0 %v8900
        %12168 = vmatprep.mubr.bf16.mxu0 %v2093
        %12169 = vmatmul.mubr.bf16.gmra.mxu0 %v2092
        %v12170 = vpop.f32.mrf.mxu0
        %v12171 = vadd.f32 %v12130, %v12170
        %v12172 = vpop.f32.mrf.mxu0
        %v12173 = vadd.f32 %v12132, %v12172
        %v12174 = vpop.f32.mrf.mxu0
        %v12175 = vpop.f32.mrf.mxu0
        %12176 = vdwg.mxu0
        %12177 = vmatprep.subr.bf16.mxu0 %v9141
        %12178 = vmatpush1.bf16.msra.mxu0 %v9140
        %12179 = vmatprep.subr.bf16.mxu0 %v9125
        %12180 = vmatpush1.bf16.msra.mxu0 %v9124
        %12181 = vmatprep.subr.bf16.mxu0 %v9109
        %12182 = vmatpush1.bf16.msra.mxu0 %v9108
        %12183 = vmatprep.subr.bf16.mxu0 %v9093
        %12184 = vmatpush1.bf16.msra.mxu0 %v9092
        %12185 = vmatprep.subr.bf16.mxu0 %v9077
        %12186 = vmatpush1.bf16.msra.mxu0 %v9076
        %12187 = vmatprep.subr.bf16.mxu0 %v9061
        %12188 = vmatpush1.bf16.msra.mxu0 %v9060
        %12189 = vmatprep.subr.bf16.mxu0 %v9045
        %12190 = vmatpush1.bf16.msra.mxu0 %v9044
        %12191 = vmatprep.subr.bf16.mxu0 %v9029
        %12192 = vmatpush1.bf16.msra.mxu0 %v9028
        %12193 = vmatprep.subr.bf16.mxu0 %v9269
        %12194 = vmatpush2.bf16.msra.mxu0 %v9268
        %12195 = vmatprep.subr.bf16.mxu0 %v9253
        %12196 = vmatpush2.bf16.msra.mxu0 %v9252
        %12197 = vmatprep.subr.bf16.mxu0 %v9237
        %12198 = vmatpush2.bf16.msra.mxu0 %v9236
        %12199 = vmatprep.subr.bf16.mxu0 %v9221
        %12200 = vmatpush2.bf16.msra.mxu0 %v9220
        %12201 = vmatprep.subr.bf16.mxu0 %v9205
        %12202 = vmatpush2.bf16.msra.mxu0 %v9204
        %12203 = vmatprep.subr.bf16.mxu0 %v9189
        %12204 = vmatpush2.bf16.msra.mxu0 %v9188
        %12205 = vmatprep.subr.bf16.mxu0 %v9173
        %12206 = vmatpush2.bf16.msra.mxu0 %v9172
        %12207 = vmatprep.subr.bf16.mxu0 %v9157
        %12208 = vmatpush2.bf16.msra.mxu0 %v9156
        %12209 = vmatprep.mubr.bf16.mxu0 %v2095
        %12210 = vmatmul.mubr.bf16.gmra.mxu0 %v2094
        %v12211 = vpop.f32.mrf.mxu0
        %v12212 = vadd.f32 %v12171, %v12211
        %v12213 = vpop.f32.mrf.mxu0
        %v12214 = vadd.f32 %v12173, %v12213
        %v12215 = vpop.f32.mrf.mxu0
        %v12216 = vpop.f32.mrf.mxu0
        %12217 = vdwg.mxu0
        %12218 = vmatprep.subr.bf16.mxu0 %v7607
        %12219 = vmatpush1.bf16.msra.mxu0 %v7606
        %12220 = vmatprep.subr.bf16.mxu0 %v7591
        %12221 = vmatpush1.bf16.msra.mxu0 %v7590
        %12222 = vmatprep.subr.bf16.mxu0 %v7575
        %12223 = vmatpush1.bf16.msra.mxu0 %v7574
        %12224 = vmatprep.subr.bf16.mxu0 %v7559
        %12225 = vmatpush1.bf16.msra.mxu0 %v7558
        %12226 = vmatprep.subr.bf16.mxu0 %v7543
        %12227 = vmatpush1.bf16.msra.mxu0 %v7542
        %12228 = vmatprep.subr.bf16.mxu0 %v7527
        %12229 = vmatpush1.bf16.msra.mxu0 %v7526
        %12230 = vmatprep.subr.bf16.mxu0 %v7511
        %12231 = vmatpush1.bf16.msra.mxu0 %v7510
        %12232 = vmatprep.subr.bf16.mxu0 %v7495
        %12233 = vmatpush1.bf16.msra.mxu0 %v7494
        %12234 = vmatprep.subr.bf16.mxu0 %v7735
        %12235 = vmatpush2.bf16.msra.mxu0 %v7734
        %12236 = vmatprep.subr.bf16.mxu0 %v7719
        %12237 = vmatpush2.bf16.msra.mxu0 %v7718
        %12238 = vmatprep.subr.bf16.mxu0 %v7703
        %12239 = vmatpush2.bf16.msra.mxu0 %v7702
        %12240 = vmatprep.subr.bf16.mxu0 %v7687
        %12241 = vmatpush2.bf16.msra.mxu0 %v7686
        %12242 = vmatprep.subr.bf16.mxu0 %v7671
        %12243 = vmatpush2.bf16.msra.mxu0 %v7670
        %12244 = vmatprep.subr.bf16.mxu0 %v7655
        %12245 = vmatpush2.bf16.msra.mxu0 %v7654
        %12246 = vmatprep.subr.bf16.mxu0 %v7639
        %12247 = vmatpush2.bf16.msra.mxu0 %v7638
        %12248 = vmatprep.subr.bf16.mxu0 %v7623
        %12249 = vmatpush2.bf16.msra.mxu0 %v7622
        %12250 = vmatprep.mubr.bf16.mxu0 %v2083
        %12251 = vmatmul.mubr.bf16.gmra.mxu0 %v2082
        %v12252 = vpop.f32.mrf.mxu0
        %v12253 = vadd.f32 0.0, %v12252
        %v12254 = vpop.f32.mrf.mxu0
        %v12255 = vadd.f32 0.0, %v12254
        %v12256 = vpop.f32.mrf.mxu0
        %v12257 = vpop.f32.mrf.mxu0
        %12258 = vdwg.mxu0
        %12259 = vmatprep.subr.bf16.mxu0 %v7863
        %12260 = vmatpush1.bf16.msra.mxu0 %v7862
        %12261 = vmatprep.subr.bf16.mxu0 %v7847
        %12262 = vmatpush1.bf16.msra.mxu0 %v7846
        %12263 = vmatprep.subr.bf16.mxu0 %v7831
        %12264 = vmatpush1.bf16.msra.mxu0 %v7830
        %12265 = vmatprep.subr.bf16.mxu0 %v7815
        %12266 = vmatpush1.bf16.msra.mxu0 %v7814
        %12267 = vmatprep.subr.bf16.mxu0 %v7799
        %12268 = vmatpush1.bf16.msra.mxu0 %v7798
        %12269 = vmatprep.subr.bf16.mxu0 %v7783
        %12270 = vmatpush1.bf16.msra.mxu0 %v7782
        %12271 = vmatprep.subr.bf16.mxu0 %v7767
        %12272 = vmatpush1.bf16.msra.mxu0 %v7766
        %12273 = vmatprep.subr.bf16.mxu0 %v7751
        %12274 = vmatpush1.bf16.msra.mxu0 %v7750
        %12275 = vmatprep.subr.bf16.mxu0 %v7991
        %12276 = vmatpush2.bf16.msra.mxu0 %v7990
        %12277 = vmatprep.subr.bf16.mxu0 %v7975
        %12278 = vmatpush2.bf16.msra.mxu0 %v7974
        %12279 = vmatprep.subr.bf16.mxu0 %v7959
        %12280 = vmatpush2.bf16.msra.mxu0 %v7958
        %12281 = vmatprep.subr.bf16.mxu0 %v7943
        %12282 = vmatpush2.bf16.msra.mxu0 %v7942
        %12283 = vmatprep.subr.bf16.mxu0 %v7927
        %12284 = vmatpush2.bf16.msra.mxu0 %v7926
        %12285 = vmatprep.subr.bf16.mxu0 %v7911
        %12286 = vmatpush2.bf16.msra.mxu0 %v7910
        %12287 = vmatprep.subr.bf16.mxu0 %v7895
        %12288 = vmatpush2.bf16.msra.mxu0 %v7894
        %12289 = vmatprep.subr.bf16.mxu0 %v7879
        %12290 = vmatpush2.bf16.msra.mxu0 %v7878
        %12291 = vmatprep.mubr.bf16.mxu0 %v2085
        %12292 = vmatmul.mubr.bf16.gmra.mxu0 %v2084
        %v12293 = vpop.f32.mrf.mxu0
        %v12294 = vadd.f32 %v12253, %v12293
        %v12295 = vpop.f32.mrf.mxu0
        %v12296 = vadd.f32 %v12255, %v12295
        %v12297 = vpop.f32.mrf.mxu0
        %v12298 = vpop.f32.mrf.mxu0
        %12299 = vdwg.mxu0
        %12300 = vmatprep.subr.bf16.mxu0 %v8119
        %12301 = vmatpush1.bf16.msra.mxu0 %v8118
        %12302 = vmatprep.subr.bf16.mxu0 %v8103
        %12303 = vmatpush1.bf16.msra.mxu0 %v8102
        %12304 = vmatprep.subr.bf16.mxu0 %v8087
        %12305 = vmatpush1.bf16.msra.mxu0 %v8086
        %12306 = vmatprep.subr.bf16.mxu0 %v8071
        %12307 = vmatpush1.bf16.msra.mxu0 %v8070
        %12308 = vmatprep.subr.bf16.mxu0 %v8055
        %12309 = vmatpush1.bf16.msra.mxu0 %v8054
        %12310 = vmatprep.subr.bf16.mxu0 %v8039
        %12311 = vmatpush1.bf16.msra.mxu0 %v8038
        %12312 = vmatprep.subr.bf16.mxu0 %v8023
        %12313 = vmatpush1.bf16.msra.mxu0 %v8022
        %12314 = vmatprep.subr.bf16.mxu0 %v8007
        %12315 = vmatpush1.bf16.msra.mxu0 %v8006
        %12316 = vmatprep.subr.bf16.mxu0 %v8247
        %12317 = vmatpush2.bf16.msra.mxu0 %v8246
        %12318 = vmatprep.subr.bf16.mxu0 %v8231
        %12319 = vmatpush2.bf16.msra.mxu0 %v8230
        %12320 = vmatprep.subr.bf16.mxu0 %v8215
        %12321 = vmatpush2.bf16.msra.mxu0 %v8214
        %12322 = vmatprep.subr.bf16.mxu0 %v8199
        %12323 = vmatpush2.bf16.msra.mxu0 %v8198
        %12324 = vmatprep.subr.bf16.mxu0 %v8183
        %12325 = vmatpush2.bf16.msra.mxu0 %v8182
        %12326 = vmatprep.subr.bf16.mxu0 %v8167
        %12327 = vmatpush2.bf16.msra.mxu0 %v8166
        %12328 = vmatprep.subr.bf16.mxu0 %v8151
        %12329 = vmatpush2.bf16.msra.mxu0 %v8150
        %12330 = vmatprep.subr.bf16.mxu0 %v8135
        %12331 = vmatpush2.bf16.msra.mxu0 %v8134
        %12332 = vmatprep.mubr.bf16.mxu0 %v2087
        %12333 = vmatmul.mubr.bf16.gmra.mxu0 %v2086
        %v12334 = vpop.f32.mrf.mxu0
        %v12335 = vadd.f32 %v12294, %v12334
        %v12336 = vpop.f32.mrf.mxu0
        %v12337 = vadd.f32 %v12296, %v12336
        %v12338 = vpop.f32.mrf.mxu0
        %v12339 = vpop.f32.mrf.mxu0
        %12340 = vdwg.mxu0
        %12341 = vmatprep.subr.bf16.mxu0 %v8375
        %12342 = vmatpush1.bf16.msra.mxu0 %v8374
        %12343 = vmatprep.subr.bf16.mxu0 %v8359
        %12344 = vmatpush1.bf16.msra.mxu0 %v8358
        %12345 = vmatprep.subr.bf16.mxu0 %v8343
        %12346 = vmatpush1.bf16.msra.mxu0 %v8342
        %12347 = vmatprep.subr.bf16.mxu0 %v8327
        %12348 = vmatpush1.bf16.msra.mxu0 %v8326
        %12349 = vmatprep.subr.bf16.mxu0 %v8311
        %12350 = vmatpush1.bf16.msra.mxu0 %v8310
        %12351 = vmatprep.subr.bf16.mxu0 %v8295
        %12352 = vmatpush1.bf16.msra.mxu0 %v8294
        %12353 = vmatprep.subr.bf16.mxu0 %v8279
        %12354 = vmatpush1.bf16.msra.mxu0 %v8278
        %12355 = vmatprep.subr.bf16.mxu0 %v8263
        %12356 = vmatpush1.bf16.msra.mxu0 %v8262
        %12357 = vmatprep.subr.bf16.mxu0 %v8503
        %12358 = vmatpush2.bf16.msra.mxu0 %v8502
        %12359 = vmatprep.subr.bf16.mxu0 %v8487
        %12360 = vmatpush2.bf16.msra.mxu0 %v8486
        %12361 = vmatprep.subr.bf16.mxu0 %v8471
        %12362 = vmatpush2.bf16.msra.mxu0 %v8470
        %12363 = vmatprep.subr.bf16.mxu0 %v8455
        %12364 = vmatpush2.bf16.msra.mxu0 %v8454
        %12365 = vmatprep.subr.bf16.mxu0 %v8439
        %12366 = vmatpush2.bf16.msra.mxu0 %v8438
        %12367 = vmatprep.subr.bf16.mxu0 %v8423
        %12368 = vmatpush2.bf16.msra.mxu0 %v8422
        %12369 = vmatprep.subr.bf16.mxu0 %v8407
        %12370 = vmatpush2.bf16.msra.mxu0 %v8406
        %12371 = vmatprep.subr.bf16.mxu0 %v8391
        %12372 = vmatpush2.bf16.msra.mxu0 %v8390
        %12373 = vmatprep.mubr.bf16.mxu0 %v2089
        %12374 = vmatmul.mubr.bf16.gmra.mxu0 %v2088
        %v12375 = vpop.f32.mrf.mxu0
        %v12376 = vadd.f32 %v12335, %v12375
        %v12377 = vpop.f32.mrf.mxu0
        %v12378 = vadd.f32 %v12337, %v12377
        %v12379 = vpop.f32.mrf.mxu0
        %v12380 = vpop.f32.mrf.mxu0
        %12381 = vdwg.mxu0
        %12382 = vmatprep.subr.bf16.mxu0 %v8631
        %12383 = vmatpush1.bf16.msra.mxu0 %v8630
        %12384 = vmatprep.subr.bf16.mxu0 %v8615
        %12385 = vmatpush1.bf16.msra.mxu0 %v8614
        %12386 = vmatprep.subr.bf16.mxu0 %v8599
        %12387 = vmatpush1.bf16.msra.mxu0 %v8598
        %12388 = vmatprep.subr.bf16.mxu0 %v8583
        %12389 = vmatpush1.bf16.msra.mxu0 %v8582
        %12390 = vmatprep.subr.bf16.mxu0 %v8567
        %12391 = vmatpush1.bf16.msra.mxu0 %v8566
        %12392 = vmatprep.subr.bf16.mxu0 %v8551
        %12393 = vmatpush1.bf16.msra.mxu0 %v8550
        %12394 = vmatprep.subr.bf16.mxu0 %v8535
        %12395 = vmatpush1.bf16.msra.mxu0 %v8534
        %12396 = vmatprep.subr.bf16.mxu0 %v8519
        %12397 = vmatpush1.bf16.msra.mxu0 %v8518
        %12398 = vmatprep.subr.bf16.mxu0 %v8759
        %12399 = vmatpush2.bf16.msra.mxu0 %v8758
        %12400 = vmatprep.subr.bf16.mxu0 %v8743
        %12401 = vmatpush2.bf16.msra.mxu0 %v8742
        %12402 = vmatprep.subr.bf16.mxu0 %v8727
        %12403 = vmatpush2.bf16.msra.mxu0 %v8726
        %12404 = vmatprep.subr.bf16.mxu0 %v8711
        %12405 = vmatpush2.bf16.msra.mxu0 %v8710
        %12406 = vmatprep.subr.bf16.mxu0 %v8695
        %12407 = vmatpush2.bf16.msra.mxu0 %v8694
        %12408 = vmatprep.subr.bf16.mxu0 %v8679
        %12409 = vmatpush2.bf16.msra.mxu0 %v8678
        %12410 = vmatprep.subr.bf16.mxu0 %v8663
        %12411 = vmatpush2.bf16.msra.mxu0 %v8662
        %12412 = vmatprep.subr.bf16.mxu0 %v8647
        %12413 = vmatpush2.bf16.msra.mxu0 %v8646
        %12414 = vmatprep.mubr.bf16.mxu0 %v2091
        %12415 = vmatmul.mubr.bf16.gmra.mxu0 %v2090
        %v12416 = vpop.f32.mrf.mxu0
        %v12417 = vadd.f32 %v12376, %v12416
        %v12418 = vpop.f32.mrf.mxu0
        %v12419 = vadd.f32 %v12378, %v12418
        %v12420 = vpop.f32.mrf.mxu0
        %v12421 = vpop.f32.mrf.mxu0
        %12422 = vdwg.mxu0
        %12423 = vmatprep.subr.bf16.mxu0 %v8887
        %12424 = vmatpush1.bf16.msra.mxu0 %v8886
        %12425 = vmatprep.subr.bf16.mxu0 %v8871
        %12426 = vmatpush1.bf16.msra.mxu0 %v8870
        %12427 = vmatprep.subr.bf16.mxu0 %v8855
        %12428 = vmatpush1.bf16.msra.mxu0 %v8854
        %12429 = vmatprep.subr.bf16.mxu0 %v8839
        %12430 = vmatpush1.bf16.msra.mxu0 %v8838
        %12431 = vmatprep.subr.bf16.mxu0 %v8823
        %12432 = vmatpush1.bf16.msra.mxu0 %v8822
        %12433 = vmatprep.subr.bf16.mxu0 %v8807
        %12434 = vmatpush1.bf16.msra.mxu0 %v8806
        %12435 = vmatprep.subr.bf16.mxu0 %v8791
        %12436 = vmatpush1.bf16.msra.mxu0 %v8790
        %12437 = vmatprep.subr.bf16.mxu0 %v8775
        %12438 = vmatpush1.bf16.msra.mxu0 %v8774
        %12439 = vmatprep.subr.bf16.mxu0 %v9015
        %12440 = vmatpush2.bf16.msra.mxu0 %v9014
        %12441 = vmatprep.subr.bf16.mxu0 %v8999
        %12442 = vmatpush2.bf16.msra.mxu0 %v8998
        %12443 = vmatprep.subr.bf16.mxu0 %v8983
        %12444 = vmatpush2.bf16.msra.mxu0 %v8982
        %12445 = vmatprep.subr.bf16.mxu0 %v8967
        %12446 = vmatpush2.bf16.msra.mxu0 %v8966
        %12447 = vmatprep.subr.bf16.mxu0 %v8951
        %12448 = vmatpush2.bf16.msra.mxu0 %v8950
        %12449 = vmatprep.subr.bf16.mxu0 %v8935
        %12450 = vmatpush2.bf16.msra.mxu0 %v8934
        %12451 = vmatprep.subr.bf16.mxu0 %v8919
        %12452 = vmatpush2.bf16.msra.mxu0 %v8918
        %12453 = vmatprep.subr.bf16.mxu0 %v8903
        %12454 = vmatpush2.bf16.msra.mxu0 %v8902
        %12455 = vmatprep.mubr.bf16.mxu0 %v2093
        %12456 = vmatmul.mubr.bf16.gmra.mxu0 %v2092
        %v12457 = vpop.f32.mrf.mxu0
        %v12458 = vadd.f32 %v12417, %v12457
        %v12459 = vpop.f32.mrf.mxu0
        %v12460 = vadd.f32 %v12419, %v12459
        %v12461 = vpop.f32.mrf.mxu0
        %v12462 = vpop.f32.mrf.mxu0
        %12463 = vdwg.mxu0
        %12464 = vmatprep.subr.bf16.mxu0 %v9143
        %12465 = vmatpush1.bf16.msra.mxu0 %v9142
        %12466 = vmatprep.subr.bf16.mxu0 %v9127
        %12467 = vmatpush1.bf16.msra.mxu0 %v9126
        %12468 = vmatprep.subr.bf16.mxu0 %v9111
        %12469 = vmatpush1.bf16.msra.mxu0 %v9110
        %12470 = vmatprep.subr.bf16.mxu0 %v9095
        %12471 = vmatpush1.bf16.msra.mxu0 %v9094
        %12472 = vmatprep.subr.bf16.mxu0 %v9079
        %12473 = vmatpush1.bf16.msra.mxu0 %v9078
        %12474 = vmatprep.subr.bf16.mxu0 %v9063
        %12475 = vmatpush1.bf16.msra.mxu0 %v9062
        %12476 = vmatprep.subr.bf16.mxu0 %v9047
        %12477 = vmatpush1.bf16.msra.mxu0 %v9046
        %12478 = vmatprep.subr.bf16.mxu0 %v9031
        %12479 = vmatpush1.bf16.msra.mxu0 %v9030
        %12480 = vmatprep.subr.bf16.mxu0 %v9271
        %12481 = vmatpush2.bf16.msra.mxu0 %v9270
        %12482 = vmatprep.subr.bf16.mxu0 %v9255
        %12483 = vmatpush2.bf16.msra.mxu0 %v9254
        %12484 = vmatprep.subr.bf16.mxu0 %v9239
        %12485 = vmatpush2.bf16.msra.mxu0 %v9238
        %12486 = vmatprep.subr.bf16.mxu0 %v9223
        %12487 = vmatpush2.bf16.msra.mxu0 %v9222
        %12488 = vmatprep.subr.bf16.mxu0 %v9207
        %12489 = vmatpush2.bf16.msra.mxu0 %v9206
        %12490 = vmatprep.subr.bf16.mxu0 %v9191
        %12491 = vmatpush2.bf16.msra.mxu0 %v9190
        %12492 = vmatprep.subr.bf16.mxu0 %v9175
        %12493 = vmatpush2.bf16.msra.mxu0 %v9174
        %12494 = vmatprep.subr.bf16.mxu0 %v9159
        %12495 = vmatpush2.bf16.msra.mxu0 %v9158
        %12496 = vmatprep.mubr.bf16.mxu0 %v2095
        %12497 = vmatmul.mubr.bf16.gmra.mxu0 %v2094
        %v12498 = vpop.f32.mrf.mxu0
        %v12499 = vadd.f32 %v12458, %v12498
        %v12500 = vpop.f32.mrf.mxu0
        %v12501 = vadd.f32 %v12460, %v12500
        %v12502 = vpop.f32.mrf.mxu0
        %v12503 = vpop.f32.mrf.mxu0
        %12504 = vdwg.mxu0
        %12505 = vmatprep.subr.bf16.mxu0 %v7609
        %12506 = vmatpush1.bf16.msra.mxu0 %v7608
        %12507 = vmatprep.subr.bf16.mxu0 %v7593
        %12508 = vmatpush1.bf16.msra.mxu0 %v7592
        %12509 = vmatprep.subr.bf16.mxu0 %v7577
        %12510 = vmatpush1.bf16.msra.mxu0 %v7576
        %12511 = vmatprep.subr.bf16.mxu0 %v7561
        %12512 = vmatpush1.bf16.msra.mxu0 %v7560
        %12513 = vmatprep.subr.bf16.mxu0 %v7545
        %12514 = vmatpush1.bf16.msra.mxu0 %v7544
        %12515 = vmatprep.subr.bf16.mxu0 %v7529
        %12516 = vmatpush1.bf16.msra.mxu0 %v7528
        %12517 = vmatprep.subr.bf16.mxu0 %v7513
        %12518 = vmatpush1.bf16.msra.mxu0 %v7512
        %12519 = vmatprep.subr.bf16.mxu0 %v7497
        %12520 = vmatpush1.bf16.msra.mxu0 %v7496
        %12521 = vmatprep.subr.bf16.mxu0 %v7737
        %12522 = vmatpush2.bf16.msra.mxu0 %v7736
        %12523 = vmatprep.subr.bf16.mxu0 %v7721
        %12524 = vmatpush2.bf16.msra.mxu0 %v7720
        %12525 = vmatprep.subr.bf16.mxu0 %v7705
        %12526 = vmatpush2.bf16.msra.mxu0 %v7704
        %12527 = vmatprep.subr.bf16.mxu0 %v7689
        %12528 = vmatpush2.bf16.msra.mxu0 %v7688
        %12529 = vmatprep.subr.bf16.mxu0 %v7673
        %12530 = vmatpush2.bf16.msra.mxu0 %v7672
        %12531 = vmatprep.subr.bf16.mxu0 %v7657
        %12532 = vmatpush2.bf16.msra.mxu0 %v7656
        %12533 = vmatprep.subr.bf16.mxu0 %v7641
        %12534 = vmatpush2.bf16.msra.mxu0 %v7640
        %12535 = vmatprep.subr.bf16.mxu0 %v7625
        %12536 = vmatpush2.bf16.msra.mxu0 %v7624
        %12537 = vmatprep.mubr.bf16.mxu0 %v2083
        %12538 = vmatmul.mubr.bf16.gmra.mxu0 %v2082
        %v12539 = vpop.f32.mrf.mxu0
        %v12540 = vadd.f32 0.0, %v12539
        %v12541 = vpop.f32.mrf.mxu0
        %v12542 = vadd.f32 0.0, %v12541
        %v12543 = vpop.f32.mrf.mxu0
        %v12544 = vpop.f32.mrf.mxu0
        %12545 = vdwg.mxu0
        %12546 = vmatprep.subr.bf16.mxu0 %v7865
        %12547 = vmatpush1.bf16.msra.mxu0 %v7864
        %12548 = vmatprep.subr.bf16.mxu0 %v7849
        %12549 = vmatpush1.bf16.msra.mxu0 %v7848
        %12550 = vmatprep.subr.bf16.mxu0 %v7833
        %12551 = vmatpush1.bf16.msra.mxu0 %v7832
        %12552 = vmatprep.subr.bf16.mxu0 %v7817
        %12553 = vmatpush1.bf16.msra.mxu0 %v7816
        %12554 = vmatprep.subr.bf16.mxu0 %v7801
        %12555 = vmatpush1.bf16.msra.mxu0 %v7800
        %12556 = vmatprep.subr.bf16.mxu0 %v7785
        %12557 = vmatpush1.bf16.msra.mxu0 %v7784
        %12558 = vmatprep.subr.bf16.mxu0 %v7769
        %12559 = vmatpush1.bf16.msra.mxu0 %v7768
        %12560 = vmatprep.subr.bf16.mxu0 %v7753
        %12561 = vmatpush1.bf16.msra.mxu0 %v7752
        %12562 = vmatprep.subr.bf16.mxu0 %v7993
        %12563 = vmatpush2.bf16.msra.mxu0 %v7992
        %12564 = vmatprep.subr.bf16.mxu0 %v7977
        %12565 = vmatpush2.bf16.msra.mxu0 %v7976
        %12566 = vmatprep.subr.bf16.mxu0 %v7961
        %12567 = vmatpush2.bf16.msra.mxu0 %v7960
        %12568 = vmatprep.subr.bf16.mxu0 %v7945
        %12569 = vmatpush2.bf16.msra.mxu0 %v7944
        %12570 = vmatprep.subr.bf16.mxu0 %v7929
        %12571 = vmatpush2.bf16.msra.mxu0 %v7928
        %12572 = vmatprep.subr.bf16.mxu0 %v7913
        %12573 = vmatpush2.bf16.msra.mxu0 %v7912
        %12574 = vmatprep.subr.bf16.mxu0 %v7897
        %12575 = vmatpush2.bf16.msra.mxu0 %v7896
        %12576 = vmatprep.subr.bf16.mxu0 %v7881
        %12577 = vmatpush2.bf16.msra.mxu0 %v7880
        %12578 = vmatprep.mubr.bf16.mxu0 %v2085
        %12579 = vmatmul.mubr.bf16.gmra.mxu0 %v2084
        %v12580 = vpop.f32.mrf.mxu0
        %v12581 = vadd.f32 %v12540, %v12580
        %v12582 = vpop.f32.mrf.mxu0
        %v12583 = vadd.f32 %v12542, %v12582
        %v12584 = vpop.f32.mrf.mxu0
        %v12585 = vpop.f32.mrf.mxu0
        %12586 = vdwg.mxu0
        %12587 = vmatprep.subr.bf16.mxu0 %v8121
        %12588 = vmatpush1.bf16.msra.mxu0 %v8120
        %12589 = vmatprep.subr.bf16.mxu0 %v8105
        %12590 = vmatpush1.bf16.msra.mxu0 %v8104
        %12591 = vmatprep.subr.bf16.mxu0 %v8089
        %12592 = vmatpush1.bf16.msra.mxu0 %v8088
        %12593 = vmatprep.subr.bf16.mxu0 %v8073
        %12594 = vmatpush1.bf16.msra.mxu0 %v8072
        %12595 = vmatprep.subr.bf16.mxu0 %v8057
        %12596 = vmatpush1.bf16.msra.mxu0 %v8056
        %12597 = vmatprep.subr.bf16.mxu0 %v8041
        %12598 = vmatpush1.bf16.msra.mxu0 %v8040
        %12599 = vmatprep.subr.bf16.mxu0 %v8025
        %12600 = vmatpush1.bf16.msra.mxu0 %v8024
        %12601 = vmatprep.subr.bf16.mxu0 %v8009
        %12602 = vmatpush1.bf16.msra.mxu0 %v8008
        %12603 = vmatprep.subr.bf16.mxu0 %v8249
        %12604 = vmatpush2.bf16.msra.mxu0 %v8248
        %12605 = vmatprep.subr.bf16.mxu0 %v8233
        %12606 = vmatpush2.bf16.msra.mxu0 %v8232
        %12607 = vmatprep.subr.bf16.mxu0 %v8217
        %12608 = vmatpush2.bf16.msra.mxu0 %v8216
        %12609 = vmatprep.subr.bf16.mxu0 %v8201
        %12610 = vmatpush2.bf16.msra.mxu0 %v8200
        %12611 = vmatprep.subr.bf16.mxu0 %v8185
        %12612 = vmatpush2.bf16.msra.mxu0 %v8184
        %12613 = vmatprep.subr.bf16.mxu0 %v8169
        %12614 = vmatpush2.bf16.msra.mxu0 %v8168
        %12615 = vmatprep.subr.bf16.mxu0 %v8153
        %12616 = vmatpush2.bf16.msra.mxu0 %v8152
        %12617 = vmatprep.subr.bf16.mxu0 %v8137
        %12618 = vmatpush2.bf16.msra.mxu0 %v8136
        %12619 = vmatprep.mubr.bf16.mxu0 %v2087
        %12620 = vmatmul.mubr.bf16.gmra.mxu0 %v2086
        %v12621 = vpop.f32.mrf.mxu0
        %v12622 = vadd.f32 %v12581, %v12621
        %v12623 = vpop.f32.mrf.mxu0
        %v12624 = vadd.f32 %v12583, %v12623
        %v12625 = vpop.f32.mrf.mxu0
        %v12626 = vpop.f32.mrf.mxu0
        %12627 = vdwg.mxu0
        %12628 = vmatprep.subr.bf16.mxu0 %v8377
        %12629 = vmatpush1.bf16.msra.mxu0 %v8376
        %12630 = vmatprep.subr.bf16.mxu0 %v8361
        %12631 = vmatpush1.bf16.msra.mxu0 %v8360
        %12632 = vmatprep.subr.bf16.mxu0 %v8345
        %12633 = vmatpush1.bf16.msra.mxu0 %v8344
        %12634 = vmatprep.subr.bf16.mxu0 %v8329
        %12635 = vmatpush1.bf16.msra.mxu0 %v8328
        %12636 = vmatprep.subr.bf16.mxu0 %v8313
        %12637 = vmatpush1.bf16.msra.mxu0 %v8312
        %12638 = vmatprep.subr.bf16.mxu0 %v8297
        %12639 = vmatpush1.bf16.msra.mxu0 %v8296
        %12640 = vmatprep.subr.bf16.mxu0 %v8281
        %12641 = vmatpush1.bf16.msra.mxu0 %v8280
        %12642 = vmatprep.subr.bf16.mxu0 %v8265
        %12643 = vmatpush1.bf16.msra.mxu0 %v8264
        %12644 = vmatprep.subr.bf16.mxu0 %v8505
        %12645 = vmatpush2.bf16.msra.mxu0 %v8504
        %12646 = vmatprep.subr.bf16.mxu0 %v8489
        %12647 = vmatpush2.bf16.msra.mxu0 %v8488
        %12648 = vmatprep.subr.bf16.mxu0 %v8473
        %12649 = vmatpush2.bf16.msra.mxu0 %v8472
        %12650 = vmatprep.subr.bf16.mxu0 %v8457
        %12651 = vmatpush2.bf16.msra.mxu0 %v8456
        %12652 = vmatprep.subr.bf16.mxu0 %v8441
        %12653 = vmatpush2.bf16.msra.mxu0 %v8440
        %12654 = vmatprep.subr.bf16.mxu0 %v8425
        %12655 = vmatpush2.bf16.msra.mxu0 %v8424
        %12656 = vmatprep.subr.bf16.mxu0 %v8409
        %12657 = vmatpush2.bf16.msra.mxu0 %v8408
        %12658 = vmatprep.subr.bf16.mxu0 %v8393
        %12659 = vmatpush2.bf16.msra.mxu0 %v8392
        %12660 = vmatprep.mubr.bf16.mxu0 %v2089
        %12661 = vmatmul.mubr.bf16.gmra.mxu0 %v2088
        %v12662 = vpop.f32.mrf.mxu0
        %v12663 = vadd.f32 %v12622, %v12662
        %v12664 = vpop.f32.mrf.mxu0
        %v12665 = vadd.f32 %v12624, %v12664
        %v12666 = vpop.f32.mrf.mxu0
        %v12667 = vpop.f32.mrf.mxu0
        %12668 = vdwg.mxu0
        %12669 = vmatprep.subr.bf16.mxu0 %v8633
        %12670 = vmatpush1.bf16.msra.mxu0 %v8632
        %12671 = vmatprep.subr.bf16.mxu0 %v8617
        %12672 = vmatpush1.bf16.msra.mxu0 %v8616
        %12673 = vmatprep.subr.bf16.mxu0 %v8601
        %12674 = vmatpush1.bf16.msra.mxu0 %v8600
        %12675 = vmatprep.subr.bf16.mxu0 %v8585
        %12676 = vmatpush1.bf16.msra.mxu0 %v8584
        %12677 = vmatprep.subr.bf16.mxu0 %v8569
        %12678 = vmatpush1.bf16.msra.mxu0 %v8568
        %12679 = vmatprep.subr.bf16.mxu0 %v8553
        %12680 = vmatpush1.bf16.msra.mxu0 %v8552
        %12681 = vmatprep.subr.bf16.mxu0 %v8537
        %12682 = vmatpush1.bf16.msra.mxu0 %v8536
        %12683 = vmatprep.subr.bf16.mxu0 %v8521
        %12684 = vmatpush1.bf16.msra.mxu0 %v8520
        %12685 = vmatprep.subr.bf16.mxu0 %v8761
        %12686 = vmatpush2.bf16.msra.mxu0 %v8760
        %12687 = vmatprep.subr.bf16.mxu0 %v8745
        %12688 = vmatpush2.bf16.msra.mxu0 %v8744
        %12689 = vmatprep.subr.bf16.mxu0 %v8729
        %12690 = vmatpush2.bf16.msra.mxu0 %v8728
        %12691 = vmatprep.subr.bf16.mxu0 %v8713
        %12692 = vmatpush2.bf16.msra.mxu0 %v8712
        %12693 = vmatprep.subr.bf16.mxu0 %v8697
        %12694 = vmatpush2.bf16.msra.mxu0 %v8696
        %12695 = vmatprep.subr.bf16.mxu0 %v8681
        %12696 = vmatpush2.bf16.msra.mxu0 %v8680
        %12697 = vmatprep.subr.bf16.mxu0 %v8665
        %12698 = vmatpush2.bf16.msra.mxu0 %v8664
        %12699 = vmatprep.subr.bf16.mxu0 %v8649
        %12700 = vmatpush2.bf16.msra.mxu0 %v8648
        %12701 = vmatprep.mubr.bf16.mxu0 %v2091
        %12702 = vmatmul.mubr.bf16.gmra.mxu0 %v2090
        %v12703 = vpop.f32.mrf.mxu0
        %v12704 = vadd.f32 %v12663, %v12703
        %v12705 = vpop.f32.mrf.mxu0
        %v12706 = vadd.f32 %v12665, %v12705
        %v12707 = vpop.f32.mrf.mxu0
        %v12708 = vpop.f32.mrf.mxu0
        %12709 = vdwg.mxu0
        %12710 = vmatprep.subr.bf16.mxu0 %v8889
        %12711 = vmatpush1.bf16.msra.mxu0 %v8888
        %12712 = vmatprep.subr.bf16.mxu0 %v8873
        %12713 = vmatpush1.bf16.msra.mxu0 %v8872
        %12714 = vmatprep.subr.bf16.mxu0 %v8857
        %12715 = vmatpush1.bf16.msra.mxu0 %v8856
        %12716 = vmatprep.subr.bf16.mxu0 %v8841
        %12717 = vmatpush1.bf16.msra.mxu0 %v8840
        %12718 = vmatprep.subr.bf16.mxu0 %v8825
        %12719 = vmatpush1.bf16.msra.mxu0 %v8824
        %12720 = vmatprep.subr.bf16.mxu0 %v8809
        %12721 = vmatpush1.bf16.msra.mxu0 %v8808
        %12722 = vmatprep.subr.bf16.mxu0 %v8793
        %12723 = vmatpush1.bf16.msra.mxu0 %v8792
        %12724 = vmatprep.subr.bf16.mxu0 %v8777
        %12725 = vmatpush1.bf16.msra.mxu0 %v8776
        %12726 = vmatprep.subr.bf16.mxu0 %v9017
        %12727 = vmatpush2.bf16.msra.mxu0 %v9016
        %12728 = vmatprep.subr.bf16.mxu0 %v9001
        %12729 = vmatpush2.bf16.msra.mxu0 %v9000
        %12730 = vmatprep.subr.bf16.mxu0 %v8985
        %12731 = vmatpush2.bf16.msra.mxu0 %v8984
        %12732 = vmatprep.subr.bf16.mxu0 %v8969
        %12733 = vmatpush2.bf16.msra.mxu0 %v8968
        %12734 = vmatprep.subr.bf16.mxu0 %v8953
        %12735 = vmatpush2.bf16.msra.mxu0 %v8952
        %12736 = vmatprep.subr.bf16.mxu0 %v8937
        %12737 = vmatpush2.bf16.msra.mxu0 %v8936
        %12738 = vmatprep.subr.bf16.mxu0 %v8921
        %12739 = vmatpush2.bf16.msra.mxu0 %v8920
        %12740 = vmatprep.subr.bf16.mxu0 %v8905
        %12741 = vmatpush2.bf16.msra.mxu0 %v8904
        %12742 = vmatprep.mubr.bf16.mxu0 %v2093
        %12743 = vmatmul.mubr.bf16.gmra.mxu0 %v2092
        %v12744 = vpop.f32.mrf.mxu0
        %v12745 = vadd.f32 %v12704, %v12744
        %v12746 = vpop.f32.mrf.mxu0
        %v12747 = vadd.f32 %v12706, %v12746
        %v12748 = vpop.f32.mrf.mxu0
        %v12749 = vpop.f32.mrf.mxu0
        %12750 = vdwg.mxu0
        %12751 = vmatprep.subr.bf16.mxu0 %v9145
        %12752 = vmatpush1.bf16.msra.mxu0 %v9144
        %12753 = vmatprep.subr.bf16.mxu0 %v9129
        %12754 = vmatpush1.bf16.msra.mxu0 %v9128
        %12755 = vmatprep.subr.bf16.mxu0 %v9113
        %12756 = vmatpush1.bf16.msra.mxu0 %v9112
        %12757 = vmatprep.subr.bf16.mxu0 %v9097
        %12758 = vmatpush1.bf16.msra.mxu0 %v9096
        %12759 = vmatprep.subr.bf16.mxu0 %v9081
        %12760 = vmatpush1.bf16.msra.mxu0 %v9080
        %12761 = vmatprep.subr.bf16.mxu0 %v9065
        %12762 = vmatpush1.bf16.msra.mxu0 %v9064
        %12763 = vmatprep.subr.bf16.mxu0 %v9049
        %12764 = vmatpush1.bf16.msra.mxu0 %v9048
        %12765 = vmatprep.subr.bf16.mxu0 %v9033
        %12766 = vmatpush1.bf16.msra.mxu0 %v9032
        %12767 = vmatprep.subr.bf16.mxu0 %v9273
        %12768 = vmatpush2.bf16.msra.mxu0 %v9272
        %12769 = vmatprep.subr.bf16.mxu0 %v9257
        %12770 = vmatpush2.bf16.msra.mxu0 %v9256
        %12771 = vmatprep.subr.bf16.mxu0 %v9241
        %12772 = vmatpush2.bf16.msra.mxu0 %v9240
        %12773 = vmatprep.subr.bf16.mxu0 %v9225
        %12774 = vmatpush2.bf16.msra.mxu0 %v9224
        %12775 = vmatprep.subr.bf16.mxu0 %v9209
        %12776 = vmatpush2.bf16.msra.mxu0 %v9208
        %12777 = vmatprep.subr.bf16.mxu0 %v9193
        %12778 = vmatpush2.bf16.msra.mxu0 %v9192
        %12779 = vmatprep.subr.bf16.mxu0 %v9177
        %12780 = vmatpush2.bf16.msra.mxu0 %v9176
        %12781 = vmatprep.subr.bf16.mxu0 %v9161
        %12782 = vmatpush2.bf16.msra.mxu0 %v9160
        %12783 = vmatprep.mubr.bf16.mxu0 %v2095
        %12784 = vmatmul.mubr.bf16.gmra.mxu0 %v2094
        %v12785 = vpop.f32.mrf.mxu0
        %v12786 = vadd.f32 %v12745, %v12785
        %v12787 = vpop.f32.mrf.mxu0
        %v12788 = vadd.f32 %v12747, %v12787
        %v12789 = vpop.f32.mrf.mxu0
        %v12790 = vpop.f32.mrf.mxu0
        %12791 = vdwg.mxu0
        %12792 = vmatprep.subr.bf16.mxu0 %v7611
        %12793 = vmatpush1.bf16.msra.mxu0 %v7610
        %12794 = vmatprep.subr.bf16.mxu0 %v7595
        %12795 = vmatpush1.bf16.msra.mxu0 %v7594
        %12796 = vmatprep.subr.bf16.mxu0 %v7579
        %12797 = vmatpush1.bf16.msra.mxu0 %v7578
        %12798 = vmatprep.subr.bf16.mxu0 %v7563
        %12799 = vmatpush1.bf16.msra.mxu0 %v7562
        %12800 = vmatprep.subr.bf16.mxu0 %v7547
        %12801 = vmatpush1.bf16.msra.mxu0 %v7546
        %12802 = vmatprep.subr.bf16.mxu0 %v7531
        %12803 = vmatpush1.bf16.msra.mxu0 %v7530
        %12804 = vmatprep.subr.bf16.mxu0 %v7515
        %12805 = vmatpush1.bf16.msra.mxu0 %v7514
        %12806 = vmatprep.subr.bf16.mxu0 %v7499
        %12807 = vmatpush1.bf16.msra.mxu0 %v7498
        %12808 = vmatprep.subr.bf16.mxu0 %v7739
        %12809 = vmatpush2.bf16.msra.mxu0 %v7738
        %12810 = vmatprep.subr.bf16.mxu0 %v7723
        %12811 = vmatpush2.bf16.msra.mxu0 %v7722
        %12812 = vmatprep.subr.bf16.mxu0 %v7707
        %12813 = vmatpush2.bf16.msra.mxu0 %v7706
        %12814 = vmatprep.subr.bf16.mxu0 %v7691
        %12815 = vmatpush2.bf16.msra.mxu0 %v7690
        %12816 = vmatprep.subr.bf16.mxu0 %v7675
        %12817 = vmatpush2.bf16.msra.mxu0 %v7674
        %12818 = vmatprep.subr.bf16.mxu0 %v7659
        %12819 = vmatpush2.bf16.msra.mxu0 %v7658
        %12820 = vmatprep.subr.bf16.mxu0 %v7643
        %12821 = vmatpush2.bf16.msra.mxu0 %v7642
        %12822 = vmatprep.subr.bf16.mxu0 %v7627
        %12823 = vmatpush2.bf16.msra.mxu0 %v7626
        %12824 = vmatprep.mubr.bf16.mxu0 %v2083
        %12825 = vmatmul.mubr.bf16.gmra.mxu0 %v2082
        %v12826 = vpop.f32.mrf.mxu0
        %v12827 = vadd.f32 0.0, %v12826
        %v12828 = vpop.f32.mrf.mxu0
        %v12829 = vadd.f32 0.0, %v12828
        %v12830 = vpop.f32.mrf.mxu0
        %v12831 = vpop.f32.mrf.mxu0
        %12832 = vdwg.mxu0
        %12833 = vmatprep.subr.bf16.mxu0 %v7867
        %12834 = vmatpush1.bf16.msra.mxu0 %v7866
        %12835 = vmatprep.subr.bf16.mxu0 %v7851
        %12836 = vmatpush1.bf16.msra.mxu0 %v7850
        %12837 = vmatprep.subr.bf16.mxu0 %v7835
        %12838 = vmatpush1.bf16.msra.mxu0 %v7834
        %12839 = vmatprep.subr.bf16.mxu0 %v7819
        %12840 = vmatpush1.bf16.msra.mxu0 %v7818
        %12841 = vmatprep.subr.bf16.mxu0 %v7803
        %12842 = vmatpush1.bf16.msra.mxu0 %v7802
        %12843 = vmatprep.subr.bf16.mxu0 %v7787
        %12844 = vmatpush1.bf16.msra.mxu0 %v7786
        %12845 = vmatprep.subr.bf16.mxu0 %v7771
        %12846 = vmatpush1.bf16.msra.mxu0 %v7770
        %12847 = vmatprep.subr.bf16.mxu0 %v7755
        %12848 = vmatpush1.bf16.msra.mxu0 %v7754
        %12849 = vmatprep.subr.bf16.mxu0 %v7995
        %12850 = vmatpush2.bf16.msra.mxu0 %v7994
        %12851 = vmatprep.subr.bf16.mxu0 %v7979
        %12852 = vmatpush2.bf16.msra.mxu0 %v7978
        %12853 = vmatprep.subr.bf16.mxu0 %v7963
        %12854 = vmatpush2.bf16.msra.mxu0 %v7962
        %12855 = vmatprep.subr.bf16.mxu0 %v7947
        %12856 = vmatpush2.bf16.msra.mxu0 %v7946
        %12857 = vmatprep.subr.bf16.mxu0 %v7931
        %12858 = vmatpush2.bf16.msra.mxu0 %v7930
        %12859 = vmatprep.subr.bf16.mxu0 %v7915
        %12860 = vmatpush2.bf16.msra.mxu0 %v7914
        %12861 = vmatprep.subr.bf16.mxu0 %v7899
        %12862 = vmatpush2.bf16.msra.mxu0 %v7898
        %12863 = vmatprep.subr.bf16.mxu0 %v7883
        %12864 = vmatpush2.bf16.msra.mxu0 %v7882
        %12865 = vmatprep.mubr.bf16.mxu0 %v2085
        %12866 = vmatmul.mubr.bf16.gmra.mxu0 %v2084
        %v12867 = vpop.f32.mrf.mxu0
        %v12868 = vadd.f32 %v12827, %v12867
        %v12869 = vpop.f32.mrf.mxu0
        %v12870 = vadd.f32 %v12829, %v12869
        %v12871 = vpop.f32.mrf.mxu0
        %v12872 = vpop.f32.mrf.mxu0
        %12873 = vdwg.mxu0
        %12874 = vmatprep.subr.bf16.mxu0 %v8123
        %12875 = vmatpush1.bf16.msra.mxu0 %v8122
        %12876 = vmatprep.subr.bf16.mxu0 %v8107
        %12877 = vmatpush1.bf16.msra.mxu0 %v8106
        %12878 = vmatprep.subr.bf16.mxu0 %v8091
        %12879 = vmatpush1.bf16.msra.mxu0 %v8090
        %12880 = vmatprep.subr.bf16.mxu0 %v8075
        %12881 = vmatpush1.bf16.msra.mxu0 %v8074
        %12882 = vmatprep.subr.bf16.mxu0 %v8059
        %12883 = vmatpush1.bf16.msra.mxu0 %v8058
        %12884 = vmatprep.subr.bf16.mxu0 %v8043
        %12885 = vmatpush1.bf16.msra.mxu0 %v8042
        %12886 = vmatprep.subr.bf16.mxu0 %v8027
        %12887 = vmatpush1.bf16.msra.mxu0 %v8026
        %12888 = vmatprep.subr.bf16.mxu0 %v8011
        %12889 = vmatpush1.bf16.msra.mxu0 %v8010
        %12890 = vmatprep.subr.bf16.mxu0 %v8251
        %12891 = vmatpush2.bf16.msra.mxu0 %v8250
        %12892 = vmatprep.subr.bf16.mxu0 %v8235
        %12893 = vmatpush2.bf16.msra.mxu0 %v8234
        %12894 = vmatprep.subr.bf16.mxu0 %v8219
        %12895 = vmatpush2.bf16.msra.mxu0 %v8218
        %12896 = vmatprep.subr.bf16.mxu0 %v8203
        %12897 = vmatpush2.bf16.msra.mxu0 %v8202
        %12898 = vmatprep.subr.bf16.mxu0 %v8187
        %12899 = vmatpush2.bf16.msra.mxu0 %v8186
        %12900 = vmatprep.subr.bf16.mxu0 %v8171
        %12901 = vmatpush2.bf16.msra.mxu0 %v8170
        %12902 = vmatprep.subr.bf16.mxu0 %v8155
        %12903 = vmatpush2.bf16.msra.mxu0 %v8154
        %12904 = vmatprep.subr.bf16.mxu0 %v8139
        %12905 = vmatpush2.bf16.msra.mxu0 %v8138
        %12906 = vmatprep.mubr.bf16.mxu0 %v2087
        %12907 = vmatmul.mubr.bf16.gmra.mxu0 %v2086
        %v12908 = vpop.f32.mrf.mxu0
        %v12909 = vadd.f32 %v12868, %v12908
        %v12910 = vpop.f32.mrf.mxu0
        %v12911 = vadd.f32 %v12870, %v12910
        %v12912 = vpop.f32.mrf.mxu0
        %v12913 = vpop.f32.mrf.mxu0
        %12914 = vdwg.mxu0
        %12915 = vmatprep.subr.bf16.mxu0 %v8379
        %12916 = vmatpush1.bf16.msra.mxu0 %v8378
        %12917 = vmatprep.subr.bf16.mxu0 %v8363
        %12918 = vmatpush1.bf16.msra.mxu0 %v8362
        %12919 = vmatprep.subr.bf16.mxu0 %v8347
        %12920 = vmatpush1.bf16.msra.mxu0 %v8346
        %12921 = vmatprep.subr.bf16.mxu0 %v8331
        %12922 = vmatpush1.bf16.msra.mxu0 %v8330
        %12923 = vmatprep.subr.bf16.mxu0 %v8315
        %12924 = vmatpush1.bf16.msra.mxu0 %v8314
        %12925 = vmatprep.subr.bf16.mxu0 %v8299
        %12926 = vmatpush1.bf16.msra.mxu0 %v8298
        %12927 = vmatprep.subr.bf16.mxu0 %v8283
        %12928 = vmatpush1.bf16.msra.mxu0 %v8282
        %12929 = vmatprep.subr.bf16.mxu0 %v8267
        %12930 = vmatpush1.bf16.msra.mxu0 %v8266
        %12931 = vmatprep.subr.bf16.mxu0 %v8507
        %12932 = vmatpush2.bf16.msra.mxu0 %v8506
        %12933 = vmatprep.subr.bf16.mxu0 %v8491
        %12934 = vmatpush2.bf16.msra.mxu0 %v8490
        %12935 = vmatprep.subr.bf16.mxu0 %v8475
        %12936 = vmatpush2.bf16.msra.mxu0 %v8474
        %12937 = vmatprep.subr.bf16.mxu0 %v8459
        %12938 = vmatpush2.bf16.msra.mxu0 %v8458
        %12939 = vmatprep.subr.bf16.mxu0 %v8443
        %12940 = vmatpush2.bf16.msra.mxu0 %v8442
        %12941 = vmatprep.subr.bf16.mxu0 %v8427
        %12942 = vmatpush2.bf16.msra.mxu0 %v8426
        %12943 = vmatprep.subr.bf16.mxu0 %v8411
        %12944 = vmatpush2.bf16.msra.mxu0 %v8410
        %12945 = vmatprep.subr.bf16.mxu0 %v8395
        %12946 = vmatpush2.bf16.msra.mxu0 %v8394
        %12947 = vmatprep.mubr.bf16.mxu0 %v2089
        %12948 = vmatmul.mubr.bf16.gmra.mxu0 %v2088
        %v12949 = vpop.f32.mrf.mxu0
        %v12950 = vadd.f32 %v12909, %v12949
        %v12951 = vpop.f32.mrf.mxu0
        %v12952 = vadd.f32 %v12911, %v12951
        %v12953 = vpop.f32.mrf.mxu0
        %v12954 = vpop.f32.mrf.mxu0
        %12955 = vdwg.mxu0
        %12956 = vmatprep.subr.bf16.mxu0 %v8635
        %12957 = vmatpush1.bf16.msra.mxu0 %v8634
        %12958 = vmatprep.subr.bf16.mxu0 %v8619
        %12959 = vmatpush1.bf16.msra.mxu0 %v8618
        %12960 = vmatprep.subr.bf16.mxu0 %v8603
        %12961 = vmatpush1.bf16.msra.mxu0 %v8602
        %12962 = vmatprep.subr.bf16.mxu0 %v8587
        %12963 = vmatpush1.bf16.msra.mxu0 %v8586
        %12964 = vmatprep.subr.bf16.mxu0 %v8571
        %12965 = vmatpush1.bf16.msra.mxu0 %v8570
        %12966 = vmatprep.subr.bf16.mxu0 %v8555
        %12967 = vmatpush1.bf16.msra.mxu0 %v8554
        %12968 = vmatprep.subr.bf16.mxu0 %v8539
        %12969 = vmatpush1.bf16.msra.mxu0 %v8538
        %12970 = vmatprep.subr.bf16.mxu0 %v8523
        %12971 = vmatpush1.bf16.msra.mxu0 %v8522
        %12972 = vmatprep.subr.bf16.mxu0 %v8763
        %12973 = vmatpush2.bf16.msra.mxu0 %v8762
        %12974 = vmatprep.subr.bf16.mxu0 %v8747
        %12975 = vmatpush2.bf16.msra.mxu0 %v8746
        %12976 = vmatprep.subr.bf16.mxu0 %v8731
        %12977 = vmatpush2.bf16.msra.mxu0 %v8730
        %12978 = vmatprep.subr.bf16.mxu0 %v8715
        %12979 = vmatpush2.bf16.msra.mxu0 %v8714
        %12980 = vmatprep.subr.bf16.mxu0 %v8699
        %12981 = vmatpush2.bf16.msra.mxu0 %v8698
        %12982 = vmatprep.subr.bf16.mxu0 %v8683
        %12983 = vmatpush2.bf16.msra.mxu0 %v8682
        %12984 = vmatprep.subr.bf16.mxu0 %v8667
        %12985 = vmatpush2.bf16.msra.mxu0 %v8666
        %12986 = vmatprep.subr.bf16.mxu0 %v8651
        %12987 = vmatpush2.bf16.msra.mxu0 %v8650
        %12988 = vmatprep.mubr.bf16.mxu0 %v2091
        %12989 = vmatmul.mubr.bf16.gmra.mxu0 %v2090
        %v12990 = vpop.f32.mrf.mxu0
        %v12991 = vadd.f32 %v12950, %v12990
        %v12992 = vpop.f32.mrf.mxu0
        %v12993 = vadd.f32 %v12952, %v12992
        %v12994 = vpop.f32.mrf.mxu0
        %v12995 = vpop.f32.mrf.mxu0
        %12996 = vdwg.mxu0
        %12997 = vmatprep.subr.bf16.mxu0 %v8891
        %12998 = vmatpush1.bf16.msra.mxu0 %v8890
        %12999 = vmatprep.subr.bf16.mxu0 %v8875
        %13000 = vmatpush1.bf16.msra.mxu0 %v8874
        %13001 = vmatprep.subr.bf16.mxu0 %v8859
        %13002 = vmatpush1.bf16.msra.mxu0 %v8858
        %13003 = vmatprep.subr.bf16.mxu0 %v8843
        %13004 = vmatpush1.bf16.msra.mxu0 %v8842
        %13005 = vmatprep.subr.bf16.mxu0 %v8827
        %13006 = vmatpush1.bf16.msra.mxu0 %v8826
        %13007 = vmatprep.subr.bf16.mxu0 %v8811
        %13008 = vmatpush1.bf16.msra.mxu0 %v8810
        %13009 = vmatprep.subr.bf16.mxu0 %v8795
        %13010 = vmatpush1.bf16.msra.mxu0 %v8794
        %13011 = vmatprep.subr.bf16.mxu0 %v8779
        %13012 = vmatpush1.bf16.msra.mxu0 %v8778
        %13013 = vmatprep.subr.bf16.mxu0 %v9019
        %13014 = vmatpush2.bf16.msra.mxu0 %v9018
        %13015 = vmatprep.subr.bf16.mxu0 %v9003
        %13016 = vmatpush2.bf16.msra.mxu0 %v9002
        %13017 = vmatprep.subr.bf16.mxu0 %v8987
        %13018 = vmatpush2.bf16.msra.mxu0 %v8986
        %13019 = vmatprep.subr.bf16.mxu0 %v8971
        %13020 = vmatpush2.bf16.msra.mxu0 %v8970
        %13021 = vmatprep.subr.bf16.mxu0 %v8955
        %13022 = vmatpush2.bf16.msra.mxu0 %v8954
        %13023 = vmatprep.subr.bf16.mxu0 %v8939
        %13024 = vmatpush2.bf16.msra.mxu0 %v8938
        %13025 = vmatprep.subr.bf16.mxu0 %v8923
        %13026 = vmatpush2.bf16.msra.mxu0 %v8922
        %13027 = vmatprep.subr.bf16.mxu0 %v8907
        %13028 = vmatpush2.bf16.msra.mxu0 %v8906
        %13029 = vmatprep.mubr.bf16.mxu0 %v2093
        %13030 = vmatmul.mubr.bf16.gmra.mxu0 %v2092
        %v13031 = vpop.f32.mrf.mxu0
        %v13032 = vadd.f32 %v12991, %v13031
        %v13033 = vpop.f32.mrf.mxu0
        %v13034 = vadd.f32 %v12993, %v13033
        %v13035 = vpop.f32.mrf.mxu0
        %v13036 = vpop.f32.mrf.mxu0
        %13037 = vdwg.mxu0
        %13038 = vmatprep.subr.bf16.mxu0 %v9147
        %13039 = vmatpush1.bf16.msra.mxu0 %v9146
        %13040 = vmatprep.subr.bf16.mxu0 %v9131
        %13041 = vmatpush1.bf16.msra.mxu0 %v9130
        %13042 = vmatprep.subr.bf16.mxu0 %v9115
        %13043 = vmatpush1.bf16.msra.mxu0 %v9114
        %13044 = vmatprep.subr.bf16.mxu0 %v9099
        %13045 = vmatpush1.bf16.msra.mxu0 %v9098
        %13046 = vmatprep.subr.bf16.mxu0 %v9083
        %13047 = vmatpush1.bf16.msra.mxu0 %v9082
        %13048 = vmatprep.subr.bf16.mxu0 %v9067
        %13049 = vmatpush1.bf16.msra.mxu0 %v9066
        %13050 = vmatprep.subr.bf16.mxu0 %v9051
        %13051 = vmatpush1.bf16.msra.mxu0 %v9050
        %13052 = vmatprep.subr.bf16.mxu0 %v9035
        %13053 = vmatpush1.bf16.msra.mxu0 %v9034
        %13054 = vmatprep.subr.bf16.mxu0 %v9275
        %13055 = vmatpush2.bf16.msra.mxu0 %v9274
        %13056 = vmatprep.subr.bf16.mxu0 %v9259
        %13057 = vmatpush2.bf16.msra.mxu0 %v9258
        %13058 = vmatprep.subr.bf16.mxu0 %v9243
        %13059 = vmatpush2.bf16.msra.mxu0 %v9242
        %13060 = vmatprep.subr.bf16.mxu0 %v9227
        %13061 = vmatpush2.bf16.msra.mxu0 %v9226
        %13062 = vmatprep.subr.bf16.mxu0 %v9211
        %13063 = vmatpush2.bf16.msra.mxu0 %v9210
        %13064 = vmatprep.subr.bf16.mxu0 %v9195
        %13065 = vmatpush2.bf16.msra.mxu0 %v9194
        %13066 = vmatprep.subr.bf16.mxu0 %v9179
        %13067 = vmatpush2.bf16.msra.mxu0 %v9178
        %13068 = vmatprep.subr.bf16.mxu0 %v9163
        %13069 = vmatpush2.bf16.msra.mxu0 %v9162
        %13070 = vmatprep.mubr.bf16.mxu0 %v2095
        %13071 = vmatmul.mubr.bf16.gmra.mxu0 %v2094
        %v13072 = vpop.f32.mrf.mxu0
        %v13073 = vadd.f32 %v13032, %v13072
        %v13074 = vpop.f32.mrf.mxu0
        %v13075 = vadd.f32 %v13034, %v13074
        %v13076 = vpop.f32.mrf.mxu0
        %v13077 = vpop.f32.mrf.mxu0
        %13078 = vdwg.mxu0
        %13079 = vmatprep.subr.bf16.mxu0 %v7613
        %13080 = vmatpush1.bf16.msra.mxu0 %v7612
        %13081 = vmatprep.subr.bf16.mxu0 %v7597
        %13082 = vmatpush1.bf16.msra.mxu0 %v7596
        %13083 = vmatprep.subr.bf16.mxu0 %v7581
        %13084 = vmatpush1.bf16.msra.mxu0 %v7580
        %13085 = vmatprep.subr.bf16.mxu0 %v7565
        %13086 = vmatpush1.bf16.msra.mxu0 %v7564
        %13087 = vmatprep.subr.bf16.mxu0 %v7549
        %13088 = vmatpush1.bf16.msra.mxu0 %v7548
        %13089 = vmatprep.subr.bf16.mxu0 %v7533
        %13090 = vmatpush1.bf16.msra.mxu0 %v7532
        %13091 = vmatprep.subr.bf16.mxu0 %v7517
        %13092 = vmatpush1.bf16.msra.mxu0 %v7516
        %13093 = vmatprep.subr.bf16.mxu0 %v7501
        %13094 = vmatpush1.bf16.msra.mxu0 %v7500
        %13095 = vmatprep.subr.bf16.mxu0 %v7741
        %13096 = vmatpush2.bf16.msra.mxu0 %v7740
        %13097 = vmatprep.subr.bf16.mxu0 %v7725
        %13098 = vmatpush2.bf16.msra.mxu0 %v7724
        %13099 = vmatprep.subr.bf16.mxu0 %v7709
        %13100 = vmatpush2.bf16.msra.mxu0 %v7708
        %13101 = vmatprep.subr.bf16.mxu0 %v7693
        %13102 = vmatpush2.bf16.msra.mxu0 %v7692
        %13103 = vmatprep.subr.bf16.mxu0 %v7677
        %13104 = vmatpush2.bf16.msra.mxu0 %v7676
        %13105 = vmatprep.subr.bf16.mxu0 %v7661
        %13106 = vmatpush2.bf16.msra.mxu0 %v7660
        %13107 = vmatprep.subr.bf16.mxu0 %v7645
        %13108 = vmatpush2.bf16.msra.mxu0 %v7644
        %13109 = vmatprep.subr.bf16.mxu0 %v7629
        %13110 = vmatpush2.bf16.msra.mxu0 %v7628
        %13111 = vmatprep.mubr.bf16.mxu0 %v2083
        %13112 = vmatmul.mubr.bf16.gmra.mxu0 %v2082
        %v13113 = vpop.f32.mrf.mxu0
        %v13114 = vadd.f32 0.0, %v13113
        %v13115 = vpop.f32.mrf.mxu0
        %v13116 = vadd.f32 0.0, %v13115
        %v13117 = vpop.f32.mrf.mxu0
        %v13118 = vpop.f32.mrf.mxu0
        %13119 = vdwg.mxu0
        %13120 = vmatprep.subr.bf16.mxu0 %v7869
        %13121 = vmatpush1.bf16.msra.mxu0 %v7868
        %13122 = vmatprep.subr.bf16.mxu0 %v7853
        %13123 = vmatpush1.bf16.msra.mxu0 %v7852
        %13124 = vmatprep.subr.bf16.mxu0 %v7837
        %13125 = vmatpush1.bf16.msra.mxu0 %v7836
        %13126 = vmatprep.subr.bf16.mxu0 %v7821
        %13127 = vmatpush1.bf16.msra.mxu0 %v7820
        %13128 = vmatprep.subr.bf16.mxu0 %v7805
        %13129 = vmatpush1.bf16.msra.mxu0 %v7804
        %13130 = vmatprep.subr.bf16.mxu0 %v7789
        %13131 = vmatpush1.bf16.msra.mxu0 %v7788
        %13132 = vmatprep.subr.bf16.mxu0 %v7773
        %13133 = vmatpush1.bf16.msra.mxu0 %v7772
        %13134 = vmatprep.subr.bf16.mxu0 %v7757
        %13135 = vmatpush1.bf16.msra.mxu0 %v7756
        %13136 = vmatprep.subr.bf16.mxu0 %v7997
        %13137 = vmatpush2.bf16.msra.mxu0 %v7996
        %13138 = vmatprep.subr.bf16.mxu0 %v7981
        %13139 = vmatpush2.bf16.msra.mxu0 %v7980
        %13140 = vmatprep.subr.bf16.mxu0 %v7965
        %13141 = vmatpush2.bf16.msra.mxu0 %v7964
        %13142 = vmatprep.subr.bf16.mxu0 %v7949
        %13143 = vmatpush2.bf16.msra.mxu0 %v7948
        %13144 = vmatprep.subr.bf16.mxu0 %v7933
        %13145 = vmatpush2.bf16.msra.mxu0 %v7932
        %13146 = vmatprep.subr.bf16.mxu0 %v7917
        %13147 = vmatpush2.bf16.msra.mxu0 %v7916
        %13148 = vmatprep.subr.bf16.mxu0 %v7901
        %13149 = vmatpush2.bf16.msra.mxu0 %v7900
        %13150 = vmatprep.subr.bf16.mxu0 %v7885
        %13151 = vmatpush2.bf16.msra.mxu0 %v7884
        %13152 = vmatprep.mubr.bf16.mxu0 %v2085
        %13153 = vmatmul.mubr.bf16.gmra.mxu0 %v2084
        %v13154 = vpop.f32.mrf.mxu0
        %v13155 = vadd.f32 %v13114, %v13154
        %v13156 = vpop.f32.mrf.mxu0
        %v13157 = vadd.f32 %v13116, %v13156
        %v13158 = vpop.f32.mrf.mxu0
        %v13159 = vpop.f32.mrf.mxu0
        %13160 = vdwg.mxu0
        %13161 = vmatprep.subr.bf16.mxu0 %v8125
        %13162 = vmatpush1.bf16.msra.mxu0 %v8124
        %13163 = vmatprep.subr.bf16.mxu0 %v8109
        %13164 = vmatpush1.bf16.msra.mxu0 %v8108
        %13165 = vmatprep.subr.bf16.mxu0 %v8093
        %13166 = vmatpush1.bf16.msra.mxu0 %v8092
        %13167 = vmatprep.subr.bf16.mxu0 %v8077
        %13168 = vmatpush1.bf16.msra.mxu0 %v8076
        %13169 = vmatprep.subr.bf16.mxu0 %v8061
        %13170 = vmatpush1.bf16.msra.mxu0 %v8060
        %13171 = vmatprep.subr.bf16.mxu0 %v8045
        %13172 = vmatpush1.bf16.msra.mxu0 %v8044
        %13173 = vmatprep.subr.bf16.mxu0 %v8029
        %13174 = vmatpush1.bf16.msra.mxu0 %v8028
        %13175 = vmatprep.subr.bf16.mxu0 %v8013
        %13176 = vmatpush1.bf16.msra.mxu0 %v8012
        %13177 = vmatprep.subr.bf16.mxu0 %v8253
        %13178 = vmatpush2.bf16.msra.mxu0 %v8252
        %13179 = vmatprep.subr.bf16.mxu0 %v8237
        %13180 = vmatpush2.bf16.msra.mxu0 %v8236
        %13181 = vmatprep.subr.bf16.mxu0 %v8221
        %13182 = vmatpush2.bf16.msra.mxu0 %v8220
        %13183 = vmatprep.subr.bf16.mxu0 %v8205
        %13184 = vmatpush2.bf16.msra.mxu0 %v8204
        %13185 = vmatprep.subr.bf16.mxu0 %v8189
        %13186 = vmatpush2.bf16.msra.mxu0 %v8188
        %13187 = vmatprep.subr.bf16.mxu0 %v8173
        %13188 = vmatpush2.bf16.msra.mxu0 %v8172
        %13189 = vmatprep.subr.bf16.mxu0 %v8157
        %13190 = vmatpush2.bf16.msra.mxu0 %v8156
        %13191 = vmatprep.subr.bf16.mxu0 %v8141
        %13192 = vmatpush2.bf16.msra.mxu0 %v8140
        %13193 = vmatprep.mubr.bf16.mxu0 %v2087
        %13194 = vmatmul.mubr.bf16.gmra.mxu0 %v2086
        %v13195 = vpop.f32.mrf.mxu0
        %v13196 = vadd.f32 %v13155, %v13195
        %v13197 = vpop.f32.mrf.mxu0
        %v13198 = vadd.f32 %v13157, %v13197
        %v13199 = vpop.f32.mrf.mxu0
        %v13200 = vpop.f32.mrf.mxu0
        %13201 = vdwg.mxu0
        %13202 = vmatprep.subr.bf16.mxu0 %v8381
        %13203 = vmatpush1.bf16.msra.mxu0 %v8380
        %13204 = vmatprep.subr.bf16.mxu0 %v8365
        %13205 = vmatpush1.bf16.msra.mxu0 %v8364
        %13206 = vmatprep.subr.bf16.mxu0 %v8349
        %13207 = vmatpush1.bf16.msra.mxu0 %v8348
        %13208 = vmatprep.subr.bf16.mxu0 %v8333
        %13209 = vmatpush1.bf16.msra.mxu0 %v8332
        %13210 = vmatprep.subr.bf16.mxu0 %v8317
        %13211 = vmatpush1.bf16.msra.mxu0 %v8316
        %13212 = vmatprep.subr.bf16.mxu0 %v8301
        %13213 = vmatpush1.bf16.msra.mxu0 %v8300
        %13214 = vmatprep.subr.bf16.mxu0 %v8285
        %13215 = vmatpush1.bf16.msra.mxu0 %v8284
        %13216 = vmatprep.subr.bf16.mxu0 %v8269
        %13217 = vmatpush1.bf16.msra.mxu0 %v8268
        %13218 = vmatprep.subr.bf16.mxu0 %v8509
        %13219 = vmatpush2.bf16.msra.mxu0 %v8508
        %13220 = vmatprep.subr.bf16.mxu0 %v8493
        %13221 = vmatpush2.bf16.msra.mxu0 %v8492
        %13222 = vmatprep.subr.bf16.mxu0 %v8477
        %13223 = vmatpush2.bf16.msra.mxu0 %v8476
        %13224 = vmatprep.subr.bf16.mxu0 %v8461
        %13225 = vmatpush2.bf16.msra.mxu0 %v8460
        %13226 = vmatprep.subr.bf16.mxu0 %v8445
        %13227 = vmatpush2.bf16.msra.mxu0 %v8444
        %13228 = vmatprep.subr.bf16.mxu0 %v8429
        %13229 = vmatpush2.bf16.msra.mxu0 %v8428
        %13230 = vmatprep.subr.bf16.mxu0 %v8413
        %13231 = vmatpush2.bf16.msra.mxu0 %v8412
        %13232 = vmatprep.subr.bf16.mxu0 %v8397
        %13233 = vmatpush2.bf16.msra.mxu0 %v8396
        %13234 = vmatprep.mubr.bf16.mxu0 %v2089
        %13235 = vmatmul.mubr.bf16.gmra.mxu0 %v2088
        %v13236 = vpop.f32.mrf.mxu0
        %v13237 = vadd.f32 %v13196, %v13236
        %v13238 = vpop.f32.mrf.mxu0
        %v13239 = vadd.f32 %v13198, %v13238
        %v13240 = vpop.f32.mrf.mxu0
        %v13241 = vpop.f32.mrf.mxu0
        %13242 = vdwg.mxu0
        %13243 = vmatprep.subr.bf16.mxu0 %v8637
        %13244 = vmatpush1.bf16.msra.mxu0 %v8636
        %13245 = vmatprep.subr.bf16.mxu0 %v8621
        %13246 = vmatpush1.bf16.msra.mxu0 %v8620
        %13247 = vmatprep.subr.bf16.mxu0 %v8605
        %13248 = vmatpush1.bf16.msra.mxu0 %v8604
        %13249 = vmatprep.subr.bf16.mxu0 %v8589
        %13250 = vmatpush1.bf16.msra.mxu0 %v8588
        %13251 = vmatprep.subr.bf16.mxu0 %v8573
        %13252 = vmatpush1.bf16.msra.mxu0 %v8572
        %13253 = vmatprep.subr.bf16.mxu0 %v8557
        %13254 = vmatpush1.bf16.msra.mxu0 %v8556
        %13255 = vmatprep.subr.bf16.mxu0 %v8541
        %13256 = vmatpush1.bf16.msra.mxu0 %v8540
        %13257 = vmatprep.subr.bf16.mxu0 %v8525
        %13258 = vmatpush1.bf16.msra.mxu0 %v8524
        %13259 = vmatprep.subr.bf16.mxu0 %v8765
        %13260 = vmatpush2.bf16.msra.mxu0 %v8764
        %13261 = vmatprep.subr.bf16.mxu0 %v8749
        %13262 = vmatpush2.bf16.msra.mxu0 %v8748
        %13263 = vmatprep.subr.bf16.mxu0 %v8733
        %13264 = vmatpush2.bf16.msra.mxu0 %v8732
        %13265 = vmatprep.subr.bf16.mxu0 %v8717
        %13266 = vmatpush2.bf16.msra.mxu0 %v8716
        %13267 = vmatprep.subr.bf16.mxu0 %v8701
        %13268 = vmatpush2.bf16.msra.mxu0 %v8700
        %13269 = vmatprep.subr.bf16.mxu0 %v8685
        %13270 = vmatpush2.bf16.msra.mxu0 %v8684
        %13271 = vmatprep.subr.bf16.mxu0 %v8669
        %13272 = vmatpush2.bf16.msra.mxu0 %v8668
        %13273 = vmatprep.subr.bf16.mxu0 %v8653
        %13274 = vmatpush2.bf16.msra.mxu0 %v8652
        %13275 = vmatprep.mubr.bf16.mxu0 %v2091
        %13276 = vmatmul.mubr.bf16.gmra.mxu0 %v2090
        %v13277 = vpop.f32.mrf.mxu0
        %v13278 = vadd.f32 %v13237, %v13277
        %v13279 = vpop.f32.mrf.mxu0
        %v13280 = vadd.f32 %v13239, %v13279
        %v13281 = vpop.f32.mrf.mxu0
        %v13282 = vpop.f32.mrf.mxu0
        %13283 = vdwg.mxu0
        %13284 = vmatprep.subr.bf16.mxu0 %v8893
        %13285 = vmatpush1.bf16.msra.mxu0 %v8892
        %13286 = vmatprep.subr.bf16.mxu0 %v8877
        %13287 = vmatpush1.bf16.msra.mxu0 %v8876
        %13288 = vmatprep.subr.bf16.mxu0 %v8861
        %13289 = vmatpush1.bf16.msra.mxu0 %v8860
        %13290 = vmatprep.subr.bf16.mxu0 %v8845
        %13291 = vmatpush1.bf16.msra.mxu0 %v8844
        %13292 = vmatprep.subr.bf16.mxu0 %v8829
        %13293 = vmatpush1.bf16.msra.mxu0 %v8828
        %13294 = vmatprep.subr.bf16.mxu0 %v8813
        %13295 = vmatpush1.bf16.msra.mxu0 %v8812
        %13296 = vmatprep.subr.bf16.mxu0 %v8797
        %13297 = vmatpush1.bf16.msra.mxu0 %v8796
        %13298 = vmatprep.subr.bf16.mxu0 %v8781
        %13299 = vmatpush1.bf16.msra.mxu0 %v8780
        %13300 = vmatprep.subr.bf16.mxu0 %v9021
        %13301 = vmatpush2.bf16.msra.mxu0 %v9020
        %13302 = vmatprep.subr.bf16.mxu0 %v9005
        %13303 = vmatpush2.bf16.msra.mxu0 %v9004
        %13304 = vmatprep.subr.bf16.mxu0 %v8989
        %13305 = vmatpush2.bf16.msra.mxu0 %v8988
        %13306 = vmatprep.subr.bf16.mxu0 %v8973
        %13307 = vmatpush2.bf16.msra.mxu0 %v8972
        %13308 = vmatprep.subr.bf16.mxu0 %v8957
        %13309 = vmatpush2.bf16.msra.mxu0 %v8956
        %13310 = vmatprep.subr.bf16.mxu0 %v8941
        %13311 = vmatpush2.bf16.msra.mxu0 %v8940
        %13312 = vmatprep.subr.bf16.mxu0 %v8925
        %13313 = vmatpush2.bf16.msra.mxu0 %v8924
        %13314 = vmatprep.subr.bf16.mxu0 %v8909
        %13315 = vmatpush2.bf16.msra.mxu0 %v8908
        %13316 = vmatprep.mubr.bf16.mxu0 %v2093
        %13317 = vmatmul.mubr.bf16.gmra.mxu0 %v2092
        %v13318 = vpop.f32.mrf.mxu0
        %v13319 = vadd.f32 %v13278, %v13318
        %v13320 = vpop.f32.mrf.mxu0
        %v13321 = vadd.f32 %v13280, %v13320
        %v13322 = vpop.f32.mrf.mxu0
        %v13323 = vpop.f32.mrf.mxu0
        %13324 = vdwg.mxu0
        %13325 = vmatprep.subr.bf16.mxu0 %v9149
        %13326 = vmatpush1.bf16.msra.mxu0 %v9148
        %13327 = vmatprep.subr.bf16.mxu0 %v9133
        %13328 = vmatpush1.bf16.msra.mxu0 %v9132
        %13329 = vmatprep.subr.bf16.mxu0 %v9117
        %13330 = vmatpush1.bf16.msra.mxu0 %v9116
        %13331 = vmatprep.subr.bf16.mxu0 %v9101
        %13332 = vmatpush1.bf16.msra.mxu0 %v9100
        %13333 = vmatprep.subr.bf16.mxu0 %v9085
        %13334 = vmatpush1.bf16.msra.mxu0 %v9084
        %13335 = vmatprep.subr.bf16.mxu0 %v9069
        %13336 = vmatpush1.bf16.msra.mxu0 %v9068
        %13337 = vmatprep.subr.bf16.mxu0 %v9053
        %13338 = vmatpush1.bf16.msra.mxu0 %v9052
        %13339 = vmatprep.subr.bf16.mxu0 %v9037
        %13340 = vmatpush1.bf16.msra.mxu0 %v9036
        %13341 = vmatprep.subr.bf16.mxu0 %v9277
        %13342 = vmatpush2.bf16.msra.mxu0 %v9276
        %13343 = vmatprep.subr.bf16.mxu0 %v9261
        %13344 = vmatpush2.bf16.msra.mxu0 %v9260
        %13345 = vmatprep.subr.bf16.mxu0 %v9245
        %13346 = vmatpush2.bf16.msra.mxu0 %v9244
        %13347 = vmatprep.subr.bf16.mxu0 %v9229
        %13348 = vmatpush2.bf16.msra.mxu0 %v9228
        %13349 = vmatprep.subr.bf16.mxu0 %v9213
        %13350 = vmatpush2.bf16.msra.mxu0 %v9212
        %13351 = vmatprep.subr.bf16.mxu0 %v9197
        %13352 = vmatpush2.bf16.msra.mxu0 %v9196
        %13353 = vmatprep.subr.bf16.mxu0 %v9181
        %13354 = vmatpush2.bf16.msra.mxu0 %v9180
        %13355 = vmatprep.subr.bf16.mxu0 %v9165
        %13356 = vmatpush2.bf16.msra.mxu0 %v9164
        %13357 = vmatprep.mubr.bf16.mxu0 %v2095
        %13358 = vmatmul.mubr.bf16.gmra.mxu0 %v2094
        %v13359 = vpop.f32.mrf.mxu0
        %v13360 = vadd.f32 %v13319, %v13359
        %v13361 = vpop.f32.mrf.mxu0
        %v13362 = vadd.f32 %v13321, %v13361
        %v13363 = vpop.f32.mrf.mxu0
        %v13364 = vpop.f32.mrf.mxu0
        %13365 = vdwg.mxu0
        %p13366 = scmp.eq.s32.totalorder %s26, 0
        // Predicated region
        $region45: #{tpu_custom_call.1} parent=31 // pred_check
          %p13367 = pneg %p13366
        $region46: #{tpu_custom_call.1} parent=31 // pred_check_branch
          %13369 = sbr.rel (%p13367) target = $region48
        $region47: #{tpu_custom_call.1} parent=31 // pred_region
          %13370 = vst [vmem:[#allocation2] sm:$0xff] 0.0
          %13371 = vst [vmem:[#allocation2 + $0x8] sm:$0xff] 0.0
          %13372 = vst [vmem:[#allocation2 + $0x10] sm:$0xff] 0.0
          %13373 = vst [vmem:[#allocation2 + $0x18] sm:$0xff] 0.0
          %13374 = vst [vmem:[#allocation2 + $0x20] sm:$0xff] 0.0
          %13375 = vst [vmem:[#allocation2 + $0x28] sm:$0xff] 0.0
          %13376 = vst [vmem:[#allocation2 + $0x30] sm:$0xff] 0.0
          %13377 = vst [vmem:[#allocation2 + $0x38] sm:$0xff] 0.0
          %13378 = vst [vmem:[#allocation2 + $0x40] sm:$0xff] 0.0
          %13379 = vst [vmem:[#allocation2 + $0x48] sm:$0xff] 0.0
          %13380 = vst [vmem:[#allocation2 + $0x50] sm:$0xff] 0.0
          %13381 = vst [vmem:[#allocation2 + $0x58] sm:$0xff] 0.0
          %13382 = vst [vmem:[#allocation2 + $0x60] sm:$0xff] 0.0
          %13383 = vst [vmem:[#allocation2 + $0x68] sm:$0xff] 0.0
          %13384 = vst [vmem:[#allocation2 + $0x70] sm:$0xff] 0.0
          %13385 = vst [vmem:[#allocation2 + $0x78] sm:$0xff] 0.0
        $region48: #{tpu_custom_call.1} parent=31 // pred_fallthru
          _
        %v13386 = vld [vmem:[#allocation2] sm:$0xff]
        %v13387 = vld [vmem:[#allocation2 + $0x8] sm:$0xff]
        %v13388 = vld [vmem:[#allocation2 + $0x10] sm:$0xff]
        %v13389 = vld [vmem:[#allocation2 + $0x18] sm:$0xff]
        %v13390 = vld [vmem:[#allocation2 + $0x20] sm:$0xff]
        %v13391 = vld [vmem:[#allocation2 + $0x28] sm:$0xff]
        %v13392 = vld [vmem:[#allocation2 + $0x30] sm:$0xff]
        %v13393 = vld [vmem:[#allocation2 + $0x38] sm:$0xff]
        %v13394 = vld [vmem:[#allocation2 + $0x40] sm:$0xff]
        %v13395 = vld [vmem:[#allocation2 + $0x48] sm:$0xff]
        %v13396 = vld [vmem:[#allocation2 + $0x50] sm:$0xff]
        %v13397 = vld [vmem:[#allocation2 + $0x58] sm:$0xff]
        %v13398 = vld [vmem:[#allocation2 + $0x60] sm:$0xff]
        %v13399 = vld [vmem:[#allocation2 + $0x68] sm:$0xff]
        %v13400 = vld [vmem:[#allocation2 + $0x70] sm:$0xff]
        %v13401 = vld [vmem:[#allocation2 + $0x78] sm:$0xff]
        %v13402 = vadd.f32 %v13386, %v11351
        %v13403 = vadd.f32 %v13387, %v11353
        %v13404 = vadd.f32 %v13388, %v11638
        %v13405 = vadd.f32 %v13389, %v11640
        %v13406 = vadd.f32 %v13390, %v11925
        %v13407 = vadd.f32 %v13391, %v11927
        %v13408 = vadd.f32 %v13392, %v12212
        %v13409 = vadd.f32 %v13393, %v12214
        %v13410 = vadd.f32 %v13394, %v12499
        %v13411 = vadd.f32 %v13395, %v12501
        %v13412 = vadd.f32 %v13396, %v12786
        %v13413 = vadd.f32 %v13397, %v12788
        %v13414 = vadd.f32 %v13398, %v13073
        %v13415 = vadd.f32 %v13399, %v13075
        %v13416 = vadd.f32 %v13400, %v13360
        %v13417 = vadd.f32 %v13401, %v13362
        %13418 = vst [vmem:[#allocation2] sm:$0xff] %v13402
        %13419 = vst [vmem:[#allocation2 + $0x8] sm:$0xff] %v13403
        %13420 = vst [vmem:[#allocation2 + $0x10] sm:$0xff] %v13404
        %13421 = vst [vmem:[#allocation2 + $0x18] sm:$0xff] %v13405
        %13422 = vst [vmem:[#allocation2 + $0x20] sm:$0xff] %v13406
        %13423 = vst [vmem:[#allocation2 + $0x28] sm:$0xff] %v13407
        %13424 = vst [vmem:[#allocation2 + $0x30] sm:$0xff] %v13408
        %13425 = vst [vmem:[#allocation2 + $0x38] sm:$0xff] %v13409
        %13426 = vst [vmem:[#allocation2 + $0x40] sm:$0xff] %v13410
        %13427 = vst [vmem:[#allocation2 + $0x48] sm:$0xff] %v13411
        %13428 = vst [vmem:[#allocation2 + $0x50] sm:$0xff] %v13412
        %13429 = vst [vmem:[#allocation2 + $0x58] sm:$0xff] %v13413
        %13430 = vst [vmem:[#allocation2 + $0x60] sm:$0xff] %v13414
        %13431 = vst [vmem:[#allocation2 + $0x68] sm:$0xff] %v13415
        %13432 = vst [vmem:[#allocation2 + $0x70] sm:$0xff] %v13416
        %13433 = vst [vmem:[#allocation2 + $0x78] sm:$0xff] %v13417
        %p13434 = scmp.eq.s32.totalorder %s26, 13
        // Predicated region
        $region49: #{tpu_custom_call.1} parent=31 // pred_check
          %p13435 = pneg %p13434
        $region50: #{tpu_custom_call.1} parent=31 // pred_check_branch
          %13437 = sbr.rel (%p13435) target = $region52
        $region51: #{tpu_custom_call.1} parent=31 // pred_region
          %v13438 = vld [vmem:[#allocation2] sm:$0xff]
          %v13439 = vld [vmem:[#allocation2 + $0x8] sm:$0xff]
          %v13440 = vld [vmem:[#allocation2 + $0x10] sm:$0xff]
          %v13441 = vld [vmem:[#allocation2 + $0x18] sm:$0xff]
          %v13442 = vld [vmem:[#allocation2 + $0x20] sm:$0xff]
          %v13443 = vld [vmem:[#allocation2 + $0x28] sm:$0xff]
          %v13444 = vld [vmem:[#allocation2 + $0x30] sm:$0xff]
          %v13445 = vld [vmem:[#allocation2 + $0x38] sm:$0xff]
          %v13446 = vld [vmem:[#allocation2 + $0x40] sm:$0xff]
          %v13447 = vld [vmem:[#allocation2 + $0x48] sm:$0xff]
          %v13448 = vld [vmem:[#allocation2 + $0x50] sm:$0xff]
          %v13449 = vld [vmem:[#allocation2 + $0x58] sm:$0xff]
          %v13450 = vld [vmem:[#allocation2 + $0x60] sm:$0xff]
          %v13451 = vld [vmem:[#allocation2 + $0x68] sm:$0xff]
          %v13452 = vld [vmem:[#allocation2 + $0x70] sm:$0xff]
          %v13453 = vld [vmem:[#allocation2 + $0x78] sm:$0xff]
          %v13454 = vld [vmem:[%s228] sm:$0xff]
          %v13455 = vld [vmem:[%s228 + $0x8] sm:$0xff]
          %v13458 = vlaneseq
          %v13459 = vshrl.u32 %v13458, 7
          %v13460 = vsub.s32 0, %v13459
          %v13461 = vrot.slane %v13454, %v13460
          %v13462 = vlaneseq
          %v13463 = vshrl.u32 %v13462, 7
          %v13464 = vsub.s32 1, %v13463
          %v13465 = vrot.slane %v13454, %v13464
          %v13466 = vlaneseq
          %v13467 = vshrl.u32 %v13466, 7
          %v13468 = vsub.s32 2, %v13467
          %v13469 = vrot.slane %v13454, %v13468
          %v13470 = vlaneseq
          %v13471 = vshrl.u32 %v13470, 7
          %v13472 = vsub.s32 3, %v13471
          %v13473 = vrot.slane %v13454, %v13472
          %v13474 = vlaneseq
          %v13475 = vshrl.u32 %v13474, 7
          %v13476 = vsub.s32 4, %v13475
          %v13477 = vrot.slane %v13454, %v13476
          %v13478 = vlaneseq
          %v13479 = vshrl.u32 %v13478, 7
          %v13480 = vsub.s32 5, %v13479
          %v13481 = vrot.slane %v13454, %v13480
          %v13482 = vlaneseq
          %v13483 = vshrl.u32 %v13482, 7
          %v13484 = vsub.s32 6, %v13483
          %v13485 = vrot.slane %v13454, %v13484
          %v13486 = vlaneseq
          %v13487 = vshrl.u32 %v13486, 7
          %v13488 = vsub.s32 7, %v13487
          %v13489 = vrot.slane %v13454, %v13488
          %v13490 = vlaneseq
          %v13491 = vshrl.u32 %v13490, 7
          %v13492 = vsub.s32 0, %v13491
          %v13493 = vrot.slane %v13455, %v13492
          %v13494 = vlaneseq
          %v13495 = vshrl.u32 %v13494, 7
          %v13496 = vsub.s32 1, %v13495
          %v13497 = vrot.slane %v13455, %v13496
          %v13498 = vlaneseq
          %v13499 = vshrl.u32 %v13498, 7
          %v13500 = vsub.s32 2, %v13499
          %v13501 = vrot.slane %v13455, %v13500
          %v13502 = vlaneseq
          %v13503 = vshrl.u32 %v13502, 7
          %v13504 = vsub.s32 3, %v13503
          %v13505 = vrot.slane %v13455, %v13504
          %v13506 = vlaneseq
          %v13507 = vshrl.u32 %v13506, 7
          %v13508 = vsub.s32 4, %v13507
          %v13509 = vrot.slane %v13455, %v13508
          %v13510 = vlaneseq
          %v13511 = vshrl.u32 %v13510, 7
          %v13512 = vsub.s32 5, %v13511
          %v13513 = vrot.slane %v13455, %v13512
          %v13514 = vlaneseq
          %v13515 = vshrl.u32 %v13514, 7
          %v13516 = vsub.s32 6, %v13515
          %v13517 = vrot.slane %v13455, %v13516
          %v13518 = vlaneseq
          %v13519 = vshrl.u32 %v13518, 7
          %v13520 = vsub.s32 7, %v13519
          %v13521 = vrot.slane %v13455, %v13520
          %v13538 = vadd.f32 %v13438, %v13461
          %v13539 = vadd.f32 %v13439, %v13465
          %v13540 = vadd.f32 %v13440, %v13469
          %v13541 = vadd.f32 %v13441, %v13473
          %v13542 = vadd.f32 %v13442, %v13477
          %v13543 = vadd.f32 %v13443, %v13481
          %v13544 = vadd.f32 %v13444, %v13485
          %v13545 = vadd.f32 %v13445, %v13489
          %v13546 = vadd.f32 %v13446, %v13493
          %v13547 = vadd.f32 %v13447, %v13497
          %v13548 = vadd.f32 %v13448, %v13501
          %v13549 = vadd.f32 %v13449, %v13505
          %v13550 = vadd.f32 %v13450, %v13509
          %v13551 = vadd.f32 %v13451, %v13513
          %v13552 = vadd.f32 %v13452, %v13517
          %v13553 = vadd.f32 %v13453, %v13521
          %v13554 = vmax.f32 %v13538, 0.0
          %v13555 = vmax.f32 %v13539, 0.0
          %v13556 = vmax.f32 %v13540, 0.0
          %v13557 = vmax.f32 %v13541, 0.0
          %v13558 = vmax.f32 %v13542, 0.0
          %v13559 = vmax.f32 %v13543, 0.0
          %v13560 = vmax.f32 %v13544, 0.0
          %v13561 = vmax.f32 %v13545, 0.0
          %v13562 = vmax.f32 %v13546, 0.0
          %v13563 = vmax.f32 %v13547, 0.0
          %v13564 = vmax.f32 %v13548, 0.0
          %v13565 = vmax.f32 %v13549, 0.0
          %v13566 = vmax.f32 %v13550, 0.0
          %v13567 = vmax.f32 %v13551, 0.0
          %v13568 = vmax.f32 %v13552, 0.0
          %v13569 = vmax.f32 %v13553, 0.0
          %v13570 = vpack.c.bf16 %v13554, %v13554
          %v13571 = vpack.c.bf16 %v13555, %v13555
          %v13572 = vpack.c.bf16 %v13556, %v13556
          %v13573 = vpack.c.bf16 %v13557, %v13557
          %v13574 = vpack.c.bf16 %v13558, %v13558
          %v13575 = vpack.c.bf16 %v13559, %v13559
          %v13576 = vpack.c.bf16 %v13560, %v13560
          %v13577 = vpack.c.bf16 %v13561, %v13561
          %v13578 = vpack.c.bf16 %v13562, %v13562
          %v13579 = vpack.c.bf16 %v13563, %v13563
          %v13580 = vpack.c.bf16 %v13564, %v13564
          %v13581 = vpack.c.bf16 %v13565, %v13565
          %v13582 = vpack.c.bf16 %v13566, %v13566
          %v13583 = vpack.c.bf16 %v13567, %v13567
          %v13584 = vpack.c.bf16 %v13568, %v13568
          %v13585 = vpack.c.bf16 %v13569, %v13569
          %v13602 = vunpack.c.l.b16 %v13570
          %v13603 = vunpack.c.l.b16 %v13571
          %v13604 = vunpack.c.l.b16 %v13572
          %v13605 = vunpack.c.l.b16 %v13573
          %v13606 = vunpack.c.l.b16 %v13574
          %v13607 = vunpack.c.l.b16 %v13575
          %v13608 = vunpack.c.l.b16 %v13576
          %v13609 = vunpack.c.l.b16 %v13577
          %v13610 = vunpack.c.l.b16 %v13578
          %v13611 = vunpack.c.l.b16 %v13579
          %v13612 = vunpack.c.l.b16 %v13580
          %v13613 = vunpack.c.l.b16 %v13581
          %v13614 = vunpack.c.l.b16 %v13582
          %v13615 = vunpack.c.l.b16 %v13583
          %v13616 = vunpack.c.l.b16 %v13584
          %v13617 = vunpack.c.l.b16 %v13585
          %v13618 = vpack.c.b16 %v13603, %v13602
          %v13619 = vpack.c.b16 %v13605, %v13604
          %v13620 = vpack.c.b16 %v13607, %v13606
          %v13621 = vpack.c.b16 %v13609, %v13608
          %v13622 = vpack.c.b16 %v13611, %v13610
          %v13623 = vpack.c.b16 %v13613, %v13612
          %v13624 = vpack.c.b16 %v13615, %v13614
          %v13625 = vpack.c.b16 %v13617, %v13616
          %13634 = vst [vmem:[%s255] sm:$0xff] %v13618
          %13635 = vst [vmem:[%s255 + $0x8] sm:$0xff] %v13619
          %13636 = vst [vmem:[%s255 + $0x10] sm:$0xff] %v13620
          %13637 = vst [vmem:[%s255 + $0x18] sm:$0xff] %v13621
          %13638 = vst [vmem:[%s255 + $0x20] sm:$0xff] %v13622
          %13639 = vst [vmem:[%s255 + $0x28] sm:$0xff] %v13623
          %13640 = vst [vmem:[%s255 + $0x30] sm:$0xff] %v13624
          %13641 = vst [vmem:[%s255 + $0x38] sm:$0xff] %v13625
        $region52: #{tpu_custom_call.1} parent=31 // pred_fallthru
          _
        %s13642 = sand.u32 %s116, 1
        %s13643 = scalar_lea.sflag [#allocation5], %s13642
        %s13644 = sand.u32 %s116, 1
        %s13645 = smul.addr %s13644, 64
        %s13646 = scalar_lea.vmem [#allocation9], %s13645
        // Predicated region
        $region53: #{tpu_custom_call.1} parent=31 // pred_check
          %p13647 = pneg %p126
        $region54: #{tpu_custom_call.1} parent=31 // pred_check_branch
          %13649 = sbr.rel (%p13647) target = $region56
        $region55: #{tpu_custom_call.1} parent=31 // pred_region
          %s13650 = smul.u32 16, %s25
          %s13652 = ssub.s32 1024, 1024
          %13653 = vsyncadd %s13643, %s13652
          %s13654 = smul.addr %s13650, 64
          %s13655 = scalar_lea.hbm %s3, %s13654
          %s13657 = sshll.u32 %s13646, 4
          %s13658 = int_to_ptr.vmem [resolvable:$true] %s13657
          %13660 = dma.vmem_to_hbm [thread:$0]  %s13658, 1024, %s13655, %s13643
        $region56: #{tpu_custom_call.1} parent=31 // pred_fallthru
          _
      $region32: #{tpu_custom_call.1} parent=5 // pred_fallthru
        _
      %p13661 = scmp.le.s32.totalorder 2, %s16
      // Predicated region
      $region57: #{tpu_custom_call.1} parent=5 // pred_check
        %p13662 = pneg %p13661
      $region58: #{tpu_custom_call.1} parent=5 // pred_check_branch
        %13664 = sbr.rel (%p13662) target = $region60
      $region59: #{tpu_custom_call.1} parent=5 // pred_region
        %s13665 = ssub.s32 %s16, 2
        // Predicated region
        $region61: #{tpu_custom_call.1} parent=59 // pred_check
          %p13666 = pneg %p132
        $region62: #{tpu_custom_call.1} parent=59 // pred_check_branch
          %13668 = sbr.rel (%p13666) target = $region64
        $region63: #{tpu_custom_call.1} parent=59 // pred_region
          %s13669 = sand.u32 %s117, 1
          %s13670 = scalar_lea.sflag [#allocation5], %s13669
          %s13671 = sand.u32 %s117, 1
          %s13672 = smul.addr %s13671, 64
          %s13673 = scalar_lea.vmem [#allocation9], %s13672
          %13674 = dma.done %s13670, 1024
        $region64: #{tpu_custom_call.1} parent=59 // pred_fallthru
          _
      $region60: #{tpu_custom_call.1} parent=5 // pred_fallthru
        _
    $region6: #{tpu_custom_call.1} parent=1 // loop_footer
      %s20 = sadd.s32 1, %s16
    $region7: #{tpu_custom_call.1} parent=1 // loop_footer_branch
      %15 = sbr.rel target = $region3
    $region8: #{tpu_custom_call.1} parent=1 // loop_exit
      _
    %13675 = vsyncpa [#allocation4], 1
    %s13676 = scalar_lea.sflag [#allocation4], 1
    %13677 = vsyncpa %s13676, 1
    %13678 = vsyncpa [#allocation7], 1
    %s13679 = scalar_lea.sflag [#allocation7], 1
    %13680 = vsyncpa %s13679, 1
    %13681 = vsyncpa [#allocation5], 1
    %s13682 = scalar_lea.sflag [#allocation5], 1
    %13683 = vsyncpa %s13682, 1

</llo_original>
